<compile_context>
chip_gen: v6e
topology: v6e:2x2x1
jax: 0.10.0
libtpu: 0.0.40
codegen_flags: <defaults>
</compile_context>

<pallas_src>
import functools

import jax
import jax.numpy as jnp
import numpy as np
from jax.experimental import pallas as pl
from jax.experimental.pallas import tpu as pltpu


# ----------------------------------------------------------------------------
# In-kernel helpers (operate on loaded VMEM values, f32 math, f32 accumulation)
# ----------------------------------------------------------------------------

def _layer_norm(z, ln, eps):
    """z: (L, D) f32.  ln: (2, D) packed [gamma; beta]."""
    gamma = ln[0:1, :].astype(jnp.float32)
    beta = ln[1:2, :].astype(jnp.float32)
    mean = jnp.mean(z, axis=-1, keepdims=True)
    var = jnp.mean(jnp.square(z - mean), axis=-1, keepdims=True)
    return (z - mean) * jax.lax.rsqrt(var + eps) * gamma + beta


_TRANS_B = (((1,), (1,)), ((), ()))   # contract last dims: q @ k^T without a transpose op


def _multi_head_attention(q, k, v, wo_t, bo, nhead):
    """q:(Lq,D), k,v:(Lk,D) already projected (f32). wo_t:(D,D) pre-transposed.

    Heads are contiguous lane slices; each head's context is folded straight through the
    matching rows of the output projection and accumulated (no concatenate / relayout).
    """
    f32 = jnp.float32
    D = q.shape[-1]
    dh = D // nhead
    scale = 1.0 / float(np.sqrt(dh))
    cdt = wo_t.dtype                       # matmul operand dtype (f32 or bf16)
    acc = None
    for h in range(nhead):                 # static unroll (nhead is small)
        sl = slice(h * dh, (h + 1) * dh)
        qh = (q[:, sl] * scale).astype(cdt)
        kh = k[:, sl].astype(cdt)
        vh = v[:, sl].astype(cdt)
        s = jax.lax.dot_general(qh, kh, _TRANS_B, preferred_element_type=f32)  # (Lq, Lk)
        s = s - jnp.max(s, axis=-1, keepdims=True)
        p = jnp.exp(s)
        p = p * pl.reciprocal(jnp.sum(p, axis=-1, keepdims=True), approx=True)
        ctx = jnp.dot(p.astype(cdt), vh, preferred_element_type=f32)           # (Lq, dh)
        part = jnp.dot(ctx.astype(cdt), wo_t[sl, :], preferred_element_type=f32)
        acc = part if acc is None else acc + part
    return acc + bo.astype(f32)


def _self_attn_ln(x, pos, wqk_t, bqk, wv_t, bv, wo_t, bo, ln, *, nhead, eps):
    """LayerNorm(x + SelfAttn(q=k=x+pos, v=x)).  Fused (D,2D) QK projection."""
    f32 = jnp.float32
    D = x.shape[-1]
    cdt = wqk_t.dtype
    qk_in = x + pos
    qk = jnp.dot(qk_in.astype(cdt), wqk_t, preferred_element_type=f32) + bqk   # (L, 2D)
    q = qk[:, :D]
    k = qk[:, D:]
    v = jnp.dot(x.astype(cdt), wv_t, preferred_element_type=f32) + bv
    attn = _multi_head_attention(q, k, v, wo_t, bo, nhead)
    return _layer_norm(x + attn, ln, eps)


def _cross_attn_ffn(x, pos_q, y, pos_k,
                    wq_t, bq, wk_t, bk, wv_t, bv, wo_t, bo, ln_attn,
                    w1_t, b1, w2_t, b2, ln_ffn, *, nhead, eps):
    """LayerNorm(z + FFN(z)) where z = LayerNorm(x + CrossAttn(q=x+pos_q, k=y+pos_k, v=y))."""
    f32 = jnp.float32
    cdt = wq_t.dtype
    q = jnp.dot((x + pos_q).astype(cdt), wq_t, preferred_element_type=f32) + bq
    k = jnp.dot((y + pos_k).astype(cdt), wk_t, preferred_element_type=f32) + bk
    v = jnp.dot(y.astype(cdt), wv_t, preferred_element_type=f32) + bv
    attn = _multi_head_attention(q, k, v, wo_t, bo, nhead)
    z = _layer_norm(x + attn, ln_attn, eps)
    h = jnp.maximum(jnp.dot(z.astype(cdt), w1_t, preferred_element_type=f32) + b1, 0.0)
    ffn = jnp.dot(h.astype(cdt), w2_t, preferred_element_type=f32) + b2
    return _layer_norm(z + ffn, ln_ffn, eps)


# ----------------------------------------------------------------------------
# The single fused kernel: one grid step = one batch element, whole layer.
# ----------------------------------------------------------------------------

def _fusion_kernel(
    # activations (one batch element each)
    src1_ref, pos1_ref, src2_ref, pos2_ref,
    # self-attn 1 + norm11
    s1_wqk_ref, s1_bqk_ref, s1_wv_ref, s1_bv_ref, s1_wo_ref, s1_bo_ref, ln11_ref,
    # self-attn 2 + norm21
    s2_wqk_ref, s2_bqk_ref, s2_wv_ref, s2_bv_ref, s2_wo_ref, s2_bo_ref, ln21_ref,
    # cross-attn 1 + norm12, FFN1 + norm13
    c1_wq_ref, c1_bq_ref, c1_wk_ref, c1_bk_ref, c1_wv_ref, c1_bv_ref,
    c1_wo_ref, c1_bo_ref, ln12_ref,
    f1_w1_ref, f1_b1_ref, f1_w2_ref, f1_b2_ref, ln13_ref,
    # cross-attn 2 + norm22, FFN2 + norm23
    c2_wq_ref, c2_bq_ref, c2_wk_ref, c2_bk_ref, c2_wv_ref, c2_bv_ref,
    c2_wo_ref, c2_bo_ref, ln22_ref,
    f2_w1_ref, f2_b1_ref, f2_w2_ref, f2_b2_ref, ln23_ref,
    # outputs
    out1_ref, out2_ref,
    *, nhead, eps):
    f32 = jnp.float32
    x1 = src1_ref[0].astype(f32)
    p1 = pos1_ref[0].astype(f32)
    x2 = src2_ref[0].astype(f32)
    p2 = pos2_ref[0].astype(f32)

    # --- self-attention + residual + LN for both branches ---
    s1 = _self_attn_ln(x1, p1, s1_wqk_ref[...], s1_bqk_ref[...],
                       s1_wv_ref[...], s1_bv_ref[...],
                       s1_wo_ref[...], s1_bo_ref[...], ln11_ref[...],
                       nhead=nhead, eps=eps)
    s2 = _self_attn_ln(x2, p2, s2_wqk_ref[...], s2_bqk_ref[...],
                       s2_wv_ref[...], s2_bv_ref[...],
                       s2_wo_ref[...], s2_bo_ref[...], ln21_ref[...],
                       nhead=nhead, eps=eps)

    # --- cross-attention + LN + FFN + LN for branch 1 ---
    o1 = _cross_attn_ffn(s1, p1, s2, p2,
                         c1_wq_ref[...], c1_bq_ref[...], c1_wk_ref[...], c1_bk_ref[...],
                         c1_wv_ref[...], c1_bv_ref[...], c1_wo_ref[...], c1_bo_ref[...],
                         ln12_ref[...],
                         f1_w1_ref[...], f1_b1_ref[...], f1_w2_ref[...], f1_b2_ref[...],
                         ln13_ref[...], nhead=nhead, eps=eps)

    # --- cross-attention + LN + FFN + LN for branch 2 ---
    o2 = _cross_attn_ffn(s2, p2, s1, p1,
                         c2_wq_ref[...], c2_bq_ref[...], c2_wk_ref[...], c2_bk_ref[...],
                         c2_wv_ref[...], c2_bv_ref[...], c2_wo_ref[...], c2_bo_ref[...],
                         ln22_ref[...],
                         f2_w1_ref[...], f2_b1_ref[...], f2_w2_ref[...], f2_b2_ref[...],
                         ln23_ref[...], nhead=nhead, eps=eps)

    out1_ref[0] = o1.astype(out1_ref.dtype)
    out2_ref[0] = o2.astype(out2_ref.dtype)


# ----------------------------------------------------------------------------
# Host-side parameter preparation (one-time transposes / packing; outside kernel)
# ----------------------------------------------------------------------------

def _prepare_params(params, matmul_dtype):
    """Return a flat list of arrays in EXACTLY the order of _fusion_kernel's weight args."""
    def wt(w):      # torch (out, in) -> pre-transposed (in, out) in matmul dtype
        return jnp.asarray(w).T.astype(matmul_dtype)

    def fb(v):      # biases / LN params stay f32
        return jnp.asarray(v).astype(jnp.float32)

    def self_attn(p):
        wqk = jnp.concatenate([wt(p["wq"]), wt(p["wk"])], axis=1)      # (D, 2D)
        bqk = jnp.concatenate([fb(p["bq"]), fb(p["bk"])], axis=1)      # (1, 2D)
        return [wqk, bqk, wt(p["wv"]), fb(p["bv"]), wt(p["wo"]), fb(p["bo"])]

    def cross_attn(p):
        return [wt(p["wq"]), fb(p["bq"]), wt(p["wk"]), fb(p["bk"]),
                wt(p["wv"]), fb(p["bv"]), wt(p["wo"]), fb(p["bo"])]

    def ln(p):      # pack gamma/beta into one (2, D) array
        return [jnp.concatenate([fb(p["gamma"]), fb(p["beta"])], axis=0)]

    def ffn(l1, l2):
        return [wt(l1["w"]), fb(l1["b"]), wt(l2["w"]), fb(l2["b"])]

    return (self_attn(params["self_attn1"]) + ln(params["norm11"])
            + self_attn(params["self_attn2"]) + ln(params["norm21"])
            + cross_attn(params["multihead_attn1"]) + ln(params["norm12"])
            + ffn(params["linear11"], params["linear12"]) + ln(params["norm13"])
            + cross_attn(params["multihead_attn2"]) + ln(params["norm22"])
            + ffn(params["linear21"], params["linear22"]) + ln(params["norm23"]))


# ----------------------------------------------------------------------------
# Public wrapper: one pallas_call for the whole FeatureFusionLayer forward
# ----------------------------------------------------------------------------

def feature_fusion_layer(src1, src2, params, nhead,
                         pos_src1=None, pos_src2=None,
                         *, eps=1e-5, matmul_dtype=jnp.float32,
                         vmem_limit_bytes=32 * 1024 * 1024):
    B, L1, D = src1.shape
    _, L2, _ = src2.shape
    assert D % nhead == 0, "d_model must be divisible by nhead"
    if pos_src1 is None:
        pos_src1 = jnp.zeros_like(src1)
    if pos_src2 is None:
        pos_src2 = jnp.zeros_like(src2)

    weights = _prepare_params(params, matmul_dtype)

    def act_spec(L):
        return pl.BlockSpec((1, L, D), lambda b: (b, 0, 0))

    def invariant_spec(arr):
        return pl.BlockSpec(arr.shape, lambda b, nd=arr.ndim: (0,) * nd)

    in_specs = ([act_spec(L1), act_spec(L1), act_spec(L2), act_spec(L2)]
                + [invariant_spec(w) for w in weights])
    out_specs = (act_spec(L1), act_spec(L2))

    kernel = functools.partial(_fusion_kernel, nhead=nhead, eps=eps)
    out1, out2 = pl.pallas_call(
        kernel,
        out_shape=(jax.ShapeDtypeStruct((B, L1, D), src1.dtype),
                   jax.ShapeDtypeStruct((B, L2, D), src2.dtype)),
        grid=(B,),
        in_specs=in_specs,
        out_specs=out_specs,
        compiler_params=pltpu.CompilerParams(
            dimension_semantics=("parallel",),
            vmem_limit_bytes=vmem_limit_bytes),
    )(src1, pos_src1, src2, pos_src2, *weights)
    return out1, out2


# ----------------------------------------------------------------------------
# Deterministic synthetic parameter init (torch Linear convention: w is (out, in))
# ----------------------------------------------------------------------------

def init_params(key, d_model, dim_feedforward):
    keys = iter(jax.random.split(key, 64))

    def lin(out_d, in_d):
        s = 1.0 / np.sqrt(in_d)
        return {"w": jax.random.uniform(next(keys), (out_d, in_d), jnp.float32, -s, s),
                "b": jax.random.uniform(next(keys), (1, out_d), jnp.float32, -s, s)}

    def attn():
        s = 1.0 / np.sqrt(d_model)
        u = lambda shp: jax.random.uniform(next(keys), shp, jnp.float32, -s, s)
        return {"wq": u((d_model, d_model)), "wk": u((d_model, d_model)),
                "wv": u((d_model, d_model)),
                "bq": u((1, d_model)), "bk": u((1, d_model)), "bv": u((1, d_model)),
                "wo": u((d_model, d_model)), "bo": u((1, d_model))}

    def ln():
        return {"gamma": jnp.ones((1, d_model), jnp.float32),
                "beta": jnp.zeros((1, d_model), jnp.float32)}

    return {
        "self_attn1": attn(), "self_attn2": attn(),
        "multihead_attn1": attn(), "multihead_attn2": attn(),
        "linear11": lin(dim_feedforward, d_model),
        "linear12": lin(d_model, dim_feedforward),
        "linear21": lin(dim_feedforward, d_model),
        "linear22": lin(d_model, dim_feedforward),
        "norm11": ln(), "norm12": ln(), "norm13": ln(),
        "norm21": ln(), "norm22": ln(), "norm23": ln(),
    }


# ----------------------------------------------------------------------------
# Pure-JAX reference (matches the PyTorch forward_post in eval mode)
# ----------------------------------------------------------------------------

def _ref_mha(q, k, v, p, nhead):
    B, Lq, D = q.shape
    dh = D // nhead
    Q = jnp.einsum("bld,ed->ble", q, p["wq"]) + p["bq"][0]
    K = jnp.einsum("bld,ed->ble", k, p["wk"]) + p["bk"][0]
    V = jnp.einsum("bld,ed->ble", v, p["wv"]) + p["bv"][0]
    Q = Q.reshape(B, Lq, nhead, dh).transpose(0, 2, 1, 3) / np.sqrt(dh)
    K = K.reshape(B, -1, nhead, dh).transpose(0, 2, 1, 3)
    V = V.reshape(B, -1, nhead, dh).transpose(0, 2, 1, 3)
    s = jnp.einsum("bhqd,bhkd->bhqk", Q, K)
    p_attn = jax.nn.softmax(s, axis=-1)
    ctx = jnp.einsum("bhqk,bhkd->bhqd", p_attn, V)
    ctx = ctx.transpose(0, 2, 1, 3).reshape(B, Lq, D)
    return jnp.einsum("bld,ed->ble", ctx, p["wo"]) + p["bo"][0]


def _ref_ln(x, p, eps=1e-5):
    m = x.mean(-1, keepdims=True)
    v = ((x - m) ** 2).mean(-1, keepdims=True)
    return (x - m) / jnp.sqrt(v + eps) * p["gamma"][0] + p["beta"][0]


def _ref_forward(src1, src2, params, nhead, pos1, pos2):
    wp = lambda t, pos: t if pos is None else t + pos
    s12 = _ref_mha(wp(src1, pos1), wp(src1, pos1), src1, params["self_attn1"], nhead)
    src1 = _ref_ln(src1 + s12, params["norm11"])
    s22 = _ref_mha(wp(src2, pos2), wp(src2, pos2), src2, params["self_attn2"], nhead)
    src2 = _ref_ln(src2 + s22, params["norm21"])
    s12 = _ref_mha(wp(src1, pos1), wp(src2, pos2), src2, params["multihead_attn1"], nhead)
    s22 = _ref_mha(wp(src2, pos2), wp(src1, pos1), src1, params["multihead_attn2"], nhead)
    src1 = _ref_ln(src1 + s12, params["norm12"])
    ff1 = jnp.maximum(jnp.einsum("bld,fd->blf", src1, params["linear11"]["w"])
                      + params["linear11"]["b"][0], 0)
    ff1 = jnp.einsum("blf,df->bld", ff1, params["linear12"]["w"]) + params["linear12"]["b"][0]
    src1 = _ref_ln(src1 + ff1, params["norm13"])
    src2 = _ref_ln(src2 + s22, params["norm22"])
    ff2 = jnp.maximum(jnp.einsum("bld,fd->blf", src2, params["linear21"]["w"])
                      + params["linear21"]["b"][0], 0)
    ff2 = jnp.einsum("blf,df->bld", ff2, params["linear22"]["w"]) + params["linear22"]["b"][0]
    src2 = _ref_ln(src2 + ff2, params["norm23"])
    return src1, src2


# ----------------------------------------------------------------------------

if __name__ == "__main__":
    B, L1, L2 = 2, 8, 8
    d_model, nhead, dim_ff = 32, 4, 64

    root = jax.random.PRNGKey(0)
    kp, k1, k2, k3, k4 = jax.random.split(root, 5)
    params = init_params(kp, d_model, dim_ff)

    src1 = jax.random.normal(k1, (B, L1, d_model), jnp.float32)
    src2 = jax.random.normal(k2, (B, L2, d_model), jnp.float32)
    pos_src1 = jax.random.normal(k3, (B, L1, d_model), jnp.float32)
    pos_src2 = jax.random.normal(k4, (B, L2, d_model), jnp.float32)

    out1, out2 = feature_fusion_layer(src1, src2, params, nhead,
                                      pos_src1=pos_src1, pos_src2=pos_src2)
    jax.block_until_ready((out1, out2))

    ref1, ref2 = _ref_forward(src1, src2, params, nhead, pos_src1, pos_src2)
    # approx reciprocal in the softmax introduces ~1e-4 relative error; keep a small margin.
    np.testing.assert_allclose(np.asarray(out1), np.asarray(ref1), rtol=5e-3, atol=5e-3)
    np.testing.assert_allclose(np.asarray(out2), np.asarray(ref2), rtol=5e-3, atol=5e-3)

    print("KERNEL_OK")
</pallas_src>

<mosaic_0001>
module attributes {stable_mosaic.version = 11 : i64} {
  func.func @_fusion_kernel(%arg0: i32, %arg1: memref<1x8x32xf32, #tpu.memory_space<vmem>>, %arg2: memref<1x8x32xf32, #tpu.memory_space<vmem>>, %arg3: memref<1x8x32xf32, #tpu.memory_space<vmem>>, %arg4: memref<1x8x32xf32, #tpu.memory_space<vmem>>, %arg5: memref<32x64xf32, #tpu.memory_space<vmem>>, %arg6: memref<1x64xf32, #tpu.memory_space<vmem>>, %arg7: memref<32x32xf32, #tpu.memory_space<vmem>>, %arg8: memref<1x32xf32, #tpu.memory_space<vmem>>, %arg9: memref<32x32xf32, #tpu.memory_space<vmem>>, %arg10: memref<1x32xf32, #tpu.memory_space<vmem>>, %arg11: memref<2x32xf32, #tpu.memory_space<vmem>>, %arg12: memref<32x64xf32, #tpu.memory_space<vmem>>, %arg13: memref<1x64xf32, #tpu.memory_space<vmem>>, %arg14: memref<32x32xf32, #tpu.memory_space<vmem>>, %arg15: memref<1x32xf32, #tpu.memory_space<vmem>>, %arg16: memref<32x32xf32, #tpu.memory_space<vmem>>, %arg17: memref<1x32xf32, #tpu.memory_space<vmem>>, %arg18: memref<2x32xf32, #tpu.memory_space<vmem>>, %arg19: memref<32x32xf32, #tpu.memory_space<vmem>>, %arg20: memref<1x32xf32, #tpu.memory_space<vmem>>, %arg21: memref<32x32xf32, #tpu.memory_space<vmem>>, %arg22: memref<1x32xf32, #tpu.memory_space<vmem>>, %arg23: memref<32x32xf32, #tpu.memory_space<vmem>>, %arg24: memref<1x32xf32, #tpu.memory_space<vmem>>, %arg25: memref<32x32xf32, #tpu.memory_space<vmem>>, %arg26: memref<1x32xf32, #tpu.memory_space<vmem>>, %arg27: memref<2x32xf32, #tpu.memory_space<vmem>>, %arg28: memref<32x64xf32, #tpu.memory_space<vmem>>, %arg29: memref<1x64xf32, #tpu.memory_space<vmem>>, %arg30: memref<64x32xf32, #tpu.memory_space<vmem>>, %arg31: memref<1x32xf32, #tpu.memory_space<vmem>>, %arg32: memref<2x32xf32, #tpu.memory_space<vmem>>, %arg33: memref<32x32xf32, #tpu.memory_space<vmem>>, %arg34: memref<1x32xf32, #tpu.memory_space<vmem>>, %arg35: memref<32x32xf32, #tpu.memory_space<vmem>>, %arg36: memref<1x32xf32, #tpu.memory_space<vmem>>, %arg37: memref<32x32xf32, #tpu.memory_space<vmem>>, %arg38: memref<1x32xf32, #tpu.memory_space<vmem>>, %arg39: memref<32x32xf32, #tpu.memory_space<vmem>>, %arg40: memref<1x32xf32, #tpu.memory_space<vmem>>, %arg41: memref<2x32xf32, #tpu.memory_space<vmem>>, %arg42: memref<32x64xf32, #tpu.memory_space<vmem>>, %arg43: memref<1x64xf32, #tpu.memory_space<vmem>>, %arg44: memref<64x32xf32, #tpu.memory_space<vmem>>, %arg45: memref<1x32xf32, #tpu.memory_space<vmem>>, %arg46: memref<2x32xf32, #tpu.memory_space<vmem>>, %arg47: memref<1x8x32xf32, #tpu.memory_space<vmem>>, %arg48: memref<1x8x32xf32, #tpu.memory_space<vmem>>) attributes {dimension_semantics = [#tpu.dimension_semantics<parallel>], iteration_bounds = array<i64: 2>, scalar_prefetch = 0 : i64, scratch_operands = 0 : i64, tpu.core_type = #tpu.core_type<tc>, window_params = [{transform_indices = @transform_0, window_bounds = array<i64: 1, 8, 32>}, {transform_indices = @transform_1, window_bounds = array<i64: 1, 8, 32>}, {transform_indices = @transform_2, window_bounds = array<i64: 1, 8, 32>}, {transform_indices = @transform_3, window_bounds = array<i64: 1, 8, 32>}, {pipeline_mode = #tpu.pipeline_mode<synchronous>, transform_indices = @transform_4, window_bounds = array<i64: 32, 64>}, {pipeline_mode = #tpu.pipeline_mode<synchronous>, transform_indices = @transform_5, window_bounds = array<i64: 1, 64>}, {pipeline_mode = #tpu.pipeline_mode<synchronous>, transform_indices = @transform_6, window_bounds = array<i64: 32, 32>}, {pipeline_mode = #tpu.pipeline_mode<synchronous>, transform_indices = @transform_7, window_bounds = array<i64: 1, 32>}, {pipeline_mode = #tpu.pipeline_mode<synchronous>, transform_indices = @transform_8, window_bounds = array<i64: 32, 32>}, {pipeline_mode = #tpu.pipeline_mode<synchronous>, transform_indices = @transform_9, window_bounds = array<i64: 1, 32>}, {pipeline_mode = #tpu.pipeline_mode<synchronous>, transform_indices = @transform_10, window_bounds = array<i64: 2, 32>}, {pipeline_mode = #tpu.pipeline_mode<synchronous>, transform_indices = @transform_11, window_bounds = array<i64: 32, 64>}, {pipeline_mode = #tpu.pipeline_mode<synchronous>, transform_indices = @transform_12, window_bounds = array<i64: 1, 64>}, {pipeline_mode = #tpu.pipeline_mode<synchronous>, transform_indices = @transform_13, window_bounds = array<i64: 32, 32>}, {pipeline_mode = #tpu.pipeline_mode<synchronous>, transform_indices = @transform_14, window_bounds = array<i64: 1, 32>}, {pipeline_mode = #tpu.pipeline_mode<synchronous>, transform_indices = @transform_15, window_bounds = array<i64: 32, 32>}, {pipeline_mode = #tpu.pipeline_mode<synchronous>, transform_indices = @transform_16, window_bounds = array<i64: 1, 32>}, {pipeline_mode = #tpu.pipeline_mode<synchronous>, transform_indices = @transform_17, window_bounds = array<i64: 2, 32>}, {pipeline_mode = #tpu.pipeline_mode<synchronous>, transform_indices = @transform_18, window_bounds = array<i64: 32, 32>}, {pipeline_mode = #tpu.pipeline_mode<synchronous>, transform_indices = @transform_19, window_bounds = array<i64: 1, 32>}, {pipeline_mode = #tpu.pipeline_mode<synchronous>, transform_indices = @transform_20, window_bounds = array<i64: 32, 32>}, {pipeline_mode = #tpu.pipeline_mode<synchronous>, transform_indices = @transform_21, window_bounds = array<i64: 1, 32>}, {pipeline_mode = #tpu.pipeline_mode<synchronous>, transform_indices = @transform_22, window_bounds = array<i64: 32, 32>}, {pipeline_mode = #tpu.pipeline_mode<synchronous>, transform_indices = @transform_23, window_bounds = array<i64: 1, 32>}, {pipeline_mode = #tpu.pipeline_mode<synchronous>, transform_indices = @transform_24, window_bounds = array<i64: 32, 32>}, {pipeline_mode = #tpu.pipeline_mode<synchronous>, transform_indices = @transform_25, window_bounds = array<i64: 1, 32>}, {pipeline_mode = #tpu.pipeline_mode<synchronous>, transform_indices = @transform_26, window_bounds = array<i64: 2, 32>}, {pipeline_mode = #tpu.pipeline_mode<synchronous>, transform_indices = @transform_27, window_bounds = array<i64: 32, 64>}, {pipeline_mode = #tpu.pipeline_mode<synchronous>, transform_indices = @transform_28, window_bounds = array<i64: 1, 64>}, {pipeline_mode = #tpu.pipeline_mode<synchronous>, transform_indices = @transform_29, window_bounds = array<i64: 64, 32>}, {pipeline_mode = #tpu.pipeline_mode<synchronous>, transform_indices = @transform_30, window_bounds = array<i64: 1, 32>}, {pipeline_mode = #tpu.pipeline_mode<synchronous>, transform_indices = @transform_31, window_bounds = array<i64: 2, 32>}, {pipeline_mode = #tpu.pipeline_mode<synchronous>, transform_indices = @transform_32, window_bounds = array<i64: 32, 32>}, {pipeline_mode = #tpu.pipeline_mode<synchronous>, transform_indices = @transform_33, window_bounds = array<i64: 1, 32>}, {pipeline_mode = #tpu.pipeline_mode<synchronous>, transform_indices = @transform_34, window_bounds = array<i64: 32, 32>}, {pipeline_mode = #tpu.pipeline_mode<synchronous>, transform_indices = @transform_35, window_bounds = array<i64: 1, 32>}, {pipeline_mode = #tpu.pipeline_mode<synchronous>, transform_indices = @transform_36, window_bounds = array<i64: 32, 32>}, {pipeline_mode = #tpu.pipeline_mode<synchronous>, transform_indices = @transform_37, window_bounds = array<i64: 1, 32>}, {pipeline_mode = #tpu.pipeline_mode<synchronous>, transform_indices = @transform_38, window_bounds = array<i64: 32, 32>}, {pipeline_mode = #tpu.pipeline_mode<synchronous>, transform_indices = @transform_39, window_bounds = array<i64: 1, 32>}, {pipeline_mode = #tpu.pipeline_mode<synchronous>, transform_indices = @transform_40, window_bounds = array<i64: 2, 32>}, {pipeline_mode = #tpu.pipeline_mode<synchronous>, transform_indices = @transform_41, window_bounds = array<i64: 32, 64>}, {pipeline_mode = #tpu.pipeline_mode<synchronous>, transform_indices = @transform_42, window_bounds = array<i64: 1, 64>}, {pipeline_mode = #tpu.pipeline_mode<synchronous>, transform_indices = @transform_43, window_bounds = array<i64: 64, 32>}, {pipeline_mode = #tpu.pipeline_mode<synchronous>, transform_indices = @transform_44, window_bounds = array<i64: 1, 32>}, {pipeline_mode = #tpu.pipeline_mode<synchronous>, transform_indices = @transform_45, window_bounds = array<i64: 2, 32>}, {transform_indices = @transform_46, window_bounds = array<i64: 1, 8, 32>}, {transform_indices = @transform_47, window_bounds = array<i64: 1, 8, 32>}]} {
    %c0 = arith.constant 0 : index
    %c0_0 = arith.constant 0 : index
    %c0_1 = arith.constant 0 : index
    %0 = vector.load %arg1[%c0, %c0_0, %c0_1] : memref<1x8x32xf32, #tpu.memory_space<vmem>>, vector<1x8x32xf32>
    %1 = vector.shape_cast %0 : vector<1x8x32xf32> to vector<8x32xf32>
    %c0_2 = arith.constant 0 : index
    %c0_3 = arith.constant 0 : index
    %c0_4 = arith.constant 0 : index
    %2 = vector.load %arg2[%c0_2, %c0_3, %c0_4] : memref<1x8x32xf32, #tpu.memory_space<vmem>>, vector<1x8x32xf32>
    %3 = vector.shape_cast %2 : vector<1x8x32xf32> to vector<8x32xf32>
    %c0_5 = arith.constant 0 : index
    %c0_6 = arith.constant 0 : index
    %c0_7 = arith.constant 0 : index
    %4 = vector.load %arg3[%c0_5, %c0_6, %c0_7] : memref<1x8x32xf32, #tpu.memory_space<vmem>>, vector<1x8x32xf32>
    %5 = vector.shape_cast %4 : vector<1x8x32xf32> to vector<8x32xf32>
    %c0_8 = arith.constant 0 : index
    %c0_9 = arith.constant 0 : index
    %c0_10 = arith.constant 0 : index
    %6 = vector.load %arg4[%c0_8, %c0_9, %c0_10] : memref<1x8x32xf32, #tpu.memory_space<vmem>>, vector<1x8x32xf32>
    %7 = vector.shape_cast %6 : vector<1x8x32xf32> to vector<8x32xf32>
    %c0_11 = arith.constant 0 : index
    %c0_12 = arith.constant 0 : index
    %8 = vector.load %arg5[%c0_11, %c0_12] : memref<32x64xf32, #tpu.memory_space<vmem>>, vector<32x64xf32>
    %c0_13 = arith.constant 0 : index
    %c0_14 = arith.constant 0 : index
    %9 = vector.load %arg6[%c0_13, %c0_14] : memref<1x64xf32, #tpu.memory_space<vmem>>, vector<1x64xf32>
    %c0_15 = arith.constant 0 : index
    %c0_16 = arith.constant 0 : index
    %10 = vector.load %arg7[%c0_15, %c0_16] : memref<32x32xf32, #tpu.memory_space<vmem>>, vector<32x32xf32>
    %c0_17 = arith.constant 0 : index
    %c0_18 = arith.constant 0 : index
    %11 = vector.load %arg8[%c0_17, %c0_18] : memref<1x32xf32, #tpu.memory_space<vmem>>, vector<1x32xf32>
    %c0_19 = arith.constant 0 : index
    %c0_20 = arith.constant 0 : index
    %12 = vector.load %arg9[%c0_19, %c0_20] : memref<32x32xf32, #tpu.memory_space<vmem>>, vector<32x32xf32>
    %c0_21 = arith.constant 0 : index
    %c0_22 = arith.constant 0 : index
    %13 = vector.load %arg10[%c0_21, %c0_22] : memref<1x32xf32, #tpu.memory_space<vmem>>, vector<1x32xf32>
    %c0_23 = arith.constant 0 : index
    %c0_24 = arith.constant 0 : index
    %14 = vector.load %arg11[%c0_23, %c0_24] : memref<2x32xf32, #tpu.memory_space<vmem>>, vector<2x32xf32>
    %15 = arith.addf %1, %3 : vector<8x32xf32>
    %cst = arith.constant dense<0.000000e+00> : vector<8x64xf32>
    %16 = tpu.matmul %15, %8, %cst {dimension_numbers = #tpu.dot_dimension_numbers<[1], [0], [0], [1], [0, 0, 1, 1], [], []>} : vector<8x32xf32>, vector<32x64xf32>, vector<8x64xf32> -> vector<8x64xf32>
    %17 = vector.broadcast %9 : vector<1x64xf32> to vector<8x64xf32>
    %18 = arith.addf %16, %17 : vector<8x64xf32>
    %19 = vector.extract_strided_slice %18 {offsets = [0, 0], sizes = [8, 32], strides = [1, 1]} : vector<8x64xf32> to vector<8x32xf32>
    %20 = vector.extract_strided_slice %18 {offsets = [0, 32], sizes = [8, 32], strides = [1, 1]} : vector<8x64xf32> to vector<8x32xf32>
    %cst_25 = arith.constant dense<0.000000e+00> : vector<8x32xf32>
    %21 = tpu.matmul %1, %10, %cst_25 {dimension_numbers = #tpu.dot_dimension_numbers<[1], [0], [0], [1], [0, 0, 1, 1], [], []>} : vector<8x32xf32>, vector<32x32xf32>, vector<8x32xf32> -> vector<8x32xf32>
    %22 = vector.broadcast %11 : vector<1x32xf32> to vector<8x32xf32>
    %23 = arith.addf %21, %22 : vector<8x32xf32>
    %24 = vector.extract_strided_slice %19 {offsets = [0, 0], sizes = [8, 8], strides = [1, 1]} : vector<8x32xf32> to vector<8x8xf32>
    %cst_26 = arith.constant 0.353553385 : f32
    %25 = vector.broadcast %cst_26 : f32 to vector<8x8xf32>
    %26 = arith.mulf %24, %25 : vector<8x8xf32>
    %27 = vector.extract_strided_slice %20 {offsets = [0, 0], sizes = [8, 8], strides = [1, 1]} : vector<8x32xf32> to vector<8x8xf32>
    %28 = vector.extract_strided_slice %23 {offsets = [0, 0], sizes = [8, 8], strides = [1, 1]} : vector<8x32xf32> to vector<8x8xf32>
    %cst_27 = arith.constant dense<0.000000e+00> : vector<8x8xf32>
    %29 = tpu.matmul %26, %27, %cst_27 {dimension_numbers = #tpu.dot_dimension_numbers<[1], [1], [0], [0], [0, 0, 1, 0], [], []>} : vector<8x8xf32>, vector<8x8xf32>, vector<8x8xf32> -> vector<8x8xf32>
    %cst_28 = arith.constant dense<0xFF800000> : vector<8xf32>
    %30 = vector.multi_reduction <maximumf>, %29, %cst_28 [1] : vector<8x8xf32> to vector<8xf32>
    %31 = vector.shape_cast %30 : vector<8xf32> to vector<8x1xf32>
    %32 = vector.broadcast %31 : vector<8x1xf32> to vector<8x8xf32>
    %33 = arith.subf %29, %32 : vector<8x8xf32>
    %34 = math.exp %33 : vector<8x8xf32>
    %cst_29 = arith.constant dense<0.000000e+00> : vector<8xf32>
    %35 = vector.multi_reduction <add>, %34, %cst_29 [1] : vector<8x8xf32> to vector<8xf32>
    %36 = vector.shape_cast %35 : vector<8xf32> to vector<8x1xf32>
    %37 = tpu.reciprocal %36 {approx = true} : vector<8x1xf32> -> vector<8x1xf32>
    %38 = vector.broadcast %37 : vector<8x1xf32> to vector<8x8xf32>
    %39 = arith.mulf %34, %38 : vector<8x8xf32>
    %cst_30 = arith.constant dense<0.000000e+00> : vector<8x8xf32>
    %40 = tpu.matmul %39, %28, %cst_30 {dimension_numbers = #tpu.dot_dimension_numbers<[1], [0], [0], [1], [0, 0, 1, 1], [], []>} : vector<8x8xf32>, vector<8x8xf32>, vector<8x8xf32> -> vector<8x8xf32>
    %41 = vector.extract_strided_slice %12 {offsets = [0, 0], sizes = [8, 32], strides = [1, 1]} : vector<32x32xf32> to vector<8x32xf32>
    %cst_31 = arith.constant dense<0.000000e+00> : vector<8x32xf32>
    %42 = tpu.matmul %40, %41, %cst_31 {dimension_numbers = #tpu.dot_dimension_numbers<[1], [0], [0], [1], [0, 0, 1, 1], [], []>} : vector<8x8xf32>, vector<8x32xf32>, vector<8x32xf32> -> vector<8x32xf32>
    %43 = vector.extract_strided_slice %19 {offsets = [0, 8], sizes = [8, 8], strides = [1, 1]} : vector<8x32xf32> to vector<8x8xf32>
    %cst_32 = arith.constant 0.353553385 : f32
    %44 = vector.broadcast %cst_32 : f32 to vector<8x8xf32>
    %45 = arith.mulf %43, %44 : vector<8x8xf32>
    %46 = vector.extract_strided_slice %20 {offsets = [0, 8], sizes = [8, 8], strides = [1, 1]} : vector<8x32xf32> to vector<8x8xf32>
    %47 = vector.extract_strided_slice %23 {offsets = [0, 8], sizes = [8, 8], strides = [1, 1]} : vector<8x32xf32> to vector<8x8xf32>
    %cst_33 = arith.constant dense<0.000000e+00> : vector<8x8xf32>
    %48 = tpu.matmul %45, %46, %cst_33 {dimension_numbers = #tpu.dot_dimension_numbers<[1], [1], [0], [0], [0, 0, 1, 0], [], []>} : vector<8x8xf32>, vector<8x8xf32>, vector<8x8xf32> -> vector<8x8xf32>
    %cst_34 = arith.constant dense<0xFF800000> : vector<8xf32>
    %49 = vector.multi_reduction <maximumf>, %48, %cst_34 [1] : vector<8x8xf32> to vector<8xf32>
    %50 = vector.shape_cast %49 : vector<8xf32> to vector<8x1xf32>
    %51 = vector.broadcast %50 : vector<8x1xf32> to vector<8x8xf32>
    %52 = arith.subf %48, %51 : vector<8x8xf32>
    %53 = math.exp %52 : vector<8x8xf32>
    %cst_35 = arith.constant dense<0.000000e+00> : vector<8xf32>
    %54 = vector.multi_reduction <add>, %53, %cst_35 [1] : vector<8x8xf32> to vector<8xf32>
    %55 = vector.shape_cast %54 : vector<8xf32> to vector<8x1xf32>
    %56 = tpu.reciprocal %55 {approx = true} : vector<8x1xf32> -> vector<8x1xf32>
    %57 = vector.broadcast %56 : vector<8x1xf32> to vector<8x8xf32>
    %58 = arith.mulf %53, %57 : vector<8x8xf32>
    %cst_36 = arith.constant dense<0.000000e+00> : vector<8x8xf32>
    %59 = tpu.matmul %58, %47, %cst_36 {dimension_numbers = #tpu.dot_dimension_numbers<[1], [0], [0], [1], [0, 0, 1, 1], [], []>} : vector<8x8xf32>, vector<8x8xf32>, vector<8x8xf32> -> vector<8x8xf32>
    %60 = vector.extract_strided_slice %12 {offsets = [8, 0], sizes = [8, 32], strides = [1, 1]} : vector<32x32xf32> to vector<8x32xf32>
    %cst_37 = arith.constant dense<0.000000e+00> : vector<8x32xf32>
    %61 = tpu.matmul %59, %60, %cst_37 {dimension_numbers = #tpu.dot_dimension_numbers<[1], [0], [0], [1], [0, 0, 1, 1], [], []>} : vector<8x8xf32>, vector<8x32xf32>, vector<8x32xf32> -> vector<8x32xf32>
    %62 = arith.addf %42, %61 : vector<8x32xf32>
    %63 = vector.extract_strided_slice %19 {offsets = [0, 16], sizes = [8, 8], strides = [1, 1]} : vector<8x32xf32> to vector<8x8xf32>
    %cst_38 = arith.constant 0.353553385 : f32
    %64 = vector.broadcast %cst_38 : f32 to vector<8x8xf32>
    %65 = arith.mulf %63, %64 : vector<8x8xf32>
    %66 = vector.extract_strided_slice %20 {offsets = [0, 16], sizes = [8, 8], strides = [1, 1]} : vector<8x32xf32> to vector<8x8xf32>
    %67 = vector.extract_strided_slice %23 {offsets = [0, 16], sizes = [8, 8], strides = [1, 1]} : vector<8x32xf32> to vector<8x8xf32>
    %cst_39 = arith.constant dense<0.000000e+00> : vector<8x8xf32>
    %68 = tpu.matmul %65, %66, %cst_39 {dimension_numbers = #tpu.dot_dimension_numbers<[1], [1], [0], [0], [0, 0, 1, 0], [], []>} : vector<8x8xf32>, vector<8x8xf32>, vector<8x8xf32> -> vector<8x8xf32>
    %cst_40 = arith.constant dense<0xFF800000> : vector<8xf32>
    %69 = vector.multi_reduction <maximumf>, %68, %cst_40 [1] : vector<8x8xf32> to vector<8xf32>
    %70 = vector.shape_cast %69 : vector<8xf32> to vector<8x1xf32>
    %71 = vector.broadcast %70 : vector<8x1xf32> to vector<8x8xf32>
    %72 = arith.subf %68, %71 : vector<8x8xf32>
    %73 = math.exp %72 : vector<8x8xf32>
    %cst_41 = arith.constant dense<0.000000e+00> : vector<8xf32>
    %74 = vector.multi_reduction <add>, %73, %cst_41 [1] : vector<8x8xf32> to vector<8xf32>
    %75 = vector.shape_cast %74 : vector<8xf32> to vector<8x1xf32>
    %76 = tpu.reciprocal %75 {approx = true} : vector<8x1xf32> -> vector<8x1xf32>
    %77 = vector.broadcast %76 : vector<8x1xf32> to vector<8x8xf32>
    %78 = arith.mulf %73, %77 : vector<8x8xf32>
    %cst_42 = arith.constant dense<0.000000e+00> : vector<8x8xf32>
    %79 = tpu.matmul %78, %67, %cst_42 {dimension_numbers = #tpu.dot_dimension_numbers<[1], [0], [0], [1], [0, 0, 1, 1], [], []>} : vector<8x8xf32>, vector<8x8xf32>, vector<8x8xf32> -> vector<8x8xf32>
    %80 = vector.extract_strided_slice %12 {offsets = [16, 0], sizes = [8, 32], strides = [1, 1]} : vector<32x32xf32> to vector<8x32xf32>
    %cst_43 = arith.constant dense<0.000000e+00> : vector<8x32xf32>
    %81 = tpu.matmul %79, %80, %cst_43 {dimension_numbers = #tpu.dot_dimension_numbers<[1], [0], [0], [1], [0, 0, 1, 1], [], []>} : vector<8x8xf32>, vector<8x32xf32>, vector<8x32xf32> -> vector<8x32xf32>
    %82 = arith.addf %62, %81 : vector<8x32xf32>
    %83 = vector.extract_strided_slice %19 {offsets = [0, 24], sizes = [8, 8], strides = [1, 1]} : vector<8x32xf32> to vector<8x8xf32>
    %cst_44 = arith.constant 0.353553385 : f32
    %84 = vector.broadcast %cst_44 : f32 to vector<8x8xf32>
    %85 = arith.mulf %83, %84 : vector<8x8xf32>
    %86 = vector.extract_strided_slice %20 {offsets = [0, 24], sizes = [8, 8], strides = [1, 1]} : vector<8x32xf32> to vector<8x8xf32>
    %87 = vector.extract_strided_slice %23 {offsets = [0, 24], sizes = [8, 8], strides = [1, 1]} : vector<8x32xf32> to vector<8x8xf32>
    %cst_45 = arith.constant dense<0.000000e+00> : vector<8x8xf32>
    %88 = tpu.matmul %85, %86, %cst_45 {dimension_numbers = #tpu.dot_dimension_numbers<[1], [1], [0], [0], [0, 0, 1, 0], [], []>} : vector<8x8xf32>, vector<8x8xf32>, vector<8x8xf32> -> vector<8x8xf32>
    %cst_46 = arith.constant dense<0xFF800000> : vector<8xf32>
    %89 = vector.multi_reduction <maximumf>, %88, %cst_46 [1] : vector<8x8xf32> to vector<8xf32>
    %90 = vector.shape_cast %89 : vector<8xf32> to vector<8x1xf32>
    %91 = vector.broadcast %90 : vector<8x1xf32> to vector<8x8xf32>
    %92 = arith.subf %88, %91 : vector<8x8xf32>
    %93 = math.exp %92 : vector<8x8xf32>
    %cst_47 = arith.constant dense<0.000000e+00> : vector<8xf32>
    %94 = vector.multi_reduction <add>, %93, %cst_47 [1] : vector<8x8xf32> to vector<8xf32>
    %95 = vector.shape_cast %94 : vector<8xf32> to vector<8x1xf32>
    %96 = tpu.reciprocal %95 {approx = true} : vector<8x1xf32> -> vector<8x1xf32>
    %97 = vector.broadcast %96 : vector<8x1xf32> to vector<8x8xf32>
    %98 = arith.mulf %93, %97 : vector<8x8xf32>
    %cst_48 = arith.constant dense<0.000000e+00> : vector<8x8xf32>
    %99 = tpu.matmul %98, %87, %cst_48 {dimension_numbers = #tpu.dot_dimension_numbers<[1], [0], [0], [1], [0, 0, 1, 1], [], []>} : vector<8x8xf32>, vector<8x8xf32>, vector<8x8xf32> -> vector<8x8xf32>
    %100 = vector.extract_strided_slice %12 {offsets = [24, 0], sizes = [8, 32], strides = [1, 1]} : vector<32x32xf32> to vector<8x32xf32>
    %cst_49 = arith.constant dense<0.000000e+00> : vector<8x32xf32>
    %101 = tpu.matmul %99, %100, %cst_49 {dimension_numbers = #tpu.dot_dimension_numbers<[1], [0], [0], [1], [0, 0, 1, 1], [], []>} : vector<8x8xf32>, vector<8x32xf32>, vector<8x32xf32> -> vector<8x32xf32>
    %102 = arith.addf %82, %101 : vector<8x32xf32>
    %103 = vector.broadcast %13 : vector<1x32xf32> to vector<8x32xf32>
    %104 = arith.addf %102, %103 : vector<8x32xf32>
    %105 = arith.addf %1, %104 : vector<8x32xf32>
    %106 = vector.extract_strided_slice %14 {offsets = [0, 0], sizes = [1, 32], strides = [1, 1]} : vector<2x32xf32> to vector<1x32xf32>
    %107 = vector.extract_strided_slice %14 {offsets = [1, 0], sizes = [1, 32], strides = [1, 1]} : vector<2x32xf32> to vector<1x32xf32>
    %cst_50 = arith.constant dense<0.000000e+00> : vector<8xf32>
    %108 = vector.multi_reduction <add>, %105, %cst_50 [1] : vector<8x32xf32> to vector<8xf32>
    %109 = vector.shape_cast %108 : vector<8xf32> to vector<8x1xf32>
    %cst_51 = arith.constant 3.200000e+01 : f32
    %110 = vector.broadcast %cst_51 : f32 to vector<8x1xf32>
    %111 = arith.divf %109, %110 : vector<8x1xf32>
    %112 = vector.broadcast %111 : vector<8x1xf32> to vector<8x32xf32>
    %113 = arith.subf %105, %112 : vector<8x32xf32>
    %114 = arith.mulf %113, %113 : vector<8x32xf32>
    %cst_52 = arith.constant dense<0.000000e+00> : vector<8xf32>
    %115 = vector.multi_reduction <add>, %114, %cst_52 [1] : vector<8x32xf32> to vector<8xf32>
    %116 = vector.shape_cast %115 : vector<8xf32> to vector<8x1xf32>
    %cst_53 = arith.constant 3.200000e+01 : f32
    %117 = vector.broadcast %cst_53 : f32 to vector<8x1xf32>
    %118 = arith.divf %116, %117 : vector<8x1xf32>
    %119 = vector.broadcast %111 : vector<8x1xf32> to vector<8x32xf32>
    %120 = arith.subf %105, %119 : vector<8x32xf32>
    %cst_54 = arith.constant 9.99999974E-6 : f32
    %121 = vector.broadcast %cst_54 : f32 to vector<8x1xf32>
    %122 = arith.addf %118, %121 : vector<8x1xf32>
    %123 = math.rsqrt %122 : vector<8x1xf32>
    %124 = vector.broadcast %123 : vector<8x1xf32> to vector<8x32xf32>
    %125 = arith.mulf %120, %124 : vector<8x32xf32>
    %126 = vector.broadcast %106 : vector<1x32xf32> to vector<8x32xf32>
    %127 = arith.mulf %125, %126 : vector<8x32xf32>
    %128 = vector.broadcast %107 : vector<1x32xf32> to vector<8x32xf32>
    %129 = arith.addf %127, %128 : vector<8x32xf32>
    %c0_55 = arith.constant 0 : index
    %c0_56 = arith.constant 0 : index
    %130 = vector.load %arg12[%c0_55, %c0_56] : memref<32x64xf32, #tpu.memory_space<vmem>>, vector<32x64xf32>
    %c0_57 = arith.constant 0 : index
    %c0_58 = arith.constant 0 : index
    %131 = vector.load %arg13[%c0_57, %c0_58] : memref<1x64xf32, #tpu.memory_space<vmem>>, vector<1x64xf32>
    %c0_59 = arith.constant 0 : index
    %c0_60 = arith.constant 0 : index
    %132 = vector.load %arg14[%c0_59, %c0_60] : memref<32x32xf32, #tpu.memory_space<vmem>>, vector<32x32xf32>
    %c0_61 = arith.constant 0 : index
    %c0_62 = arith.constant 0 : index
    %133 = vector.load %arg15[%c0_61, %c0_62] : memref<1x32xf32, #tpu.memory_space<vmem>>, vector<1x32xf32>
    %c0_63 = arith.constant 0 : index
    %c0_64 = arith.constant 0 : index
    %134 = vector.load %arg16[%c0_63, %c0_64] : memref<32x32xf32, #tpu.memory_space<vmem>>, vector<32x32xf32>
    %c0_65 = arith.constant 0 : index
    %c0_66 = arith.constant 0 : index
    %135 = vector.load %arg17[%c0_65, %c0_66] : memref<1x32xf32, #tpu.memory_space<vmem>>, vector<1x32xf32>
    %c0_67 = arith.constant 0 : index
    %c0_68 = arith.constant 0 : index
    %136 = vector.load %arg18[%c0_67, %c0_68] : memref<2x32xf32, #tpu.memory_space<vmem>>, vector<2x32xf32>
    %137 = arith.addf %5, %7 : vector<8x32xf32>
    %cst_69 = arith.constant dense<0.000000e+00> : vector<8x64xf32>
    %138 = tpu.matmul %137, %130, %cst_69 {dimension_numbers = #tpu.dot_dimension_numbers<[1], [0], [0], [1], [0, 0, 1, 1], [], []>} : vector<8x32xf32>, vector<32x64xf32>, vector<8x64xf32> -> vector<8x64xf32>
    %139 = vector.broadcast %131 : vector<1x64xf32> to vector<8x64xf32>
    %140 = arith.addf %138, %139 : vector<8x64xf32>
    %141 = vector.extract_strided_slice %140 {offsets = [0, 0], sizes = [8, 32], strides = [1, 1]} : vector<8x64xf32> to vector<8x32xf32>
    %142 = vector.extract_strided_slice %140 {offsets = [0, 32], sizes = [8, 32], strides = [1, 1]} : vector<8x64xf32> to vector<8x32xf32>
    %cst_70 = arith.constant dense<0.000000e+00> : vector<8x32xf32>
    %143 = tpu.matmul %5, %132, %cst_70 {dimension_numbers = #tpu.dot_dimension_numbers<[1], [0], [0], [1], [0, 0, 1, 1], [], []>} : vector<8x32xf32>, vector<32x32xf32>, vector<8x32xf32> -> vector<8x32xf32>
    %144 = vector.broadcast %133 : vector<1x32xf32> to vector<8x32xf32>
    %145 = arith.addf %143, %144 : vector<8x32xf32>
    %146 = vector.extract_strided_slice %141 {offsets = [0, 0], sizes = [8, 8], strides = [1, 1]} : vector<8x32xf32> to vector<8x8xf32>
    %cst_71 = arith.constant 0.353553385 : f32
    %147 = vector.broadcast %cst_71 : f32 to vector<8x8xf32>
    %148 = arith.mulf %146, %147 : vector<8x8xf32>
    %149 = vector.extract_strided_slice %142 {offsets = [0, 0], sizes = [8, 8], strides = [1, 1]} : vector<8x32xf32> to vector<8x8xf32>
    %150 = vector.extract_strided_slice %145 {offsets = [0, 0], sizes = [8, 8], strides = [1, 1]} : vector<8x32xf32> to vector<8x8xf32>
    %cst_72 = arith.constant dense<0.000000e+00> : vector<8x8xf32>
    %151 = tpu.matmul %148, %149, %cst_72 {dimension_numbers = #tpu.dot_dimension_numbers<[1], [1], [0], [0], [0, 0, 1, 0], [], []>} : vector<8x8xf32>, vector<8x8xf32>, vector<8x8xf32> -> vector<8x8xf32>
    %cst_73 = arith.constant dense<0xFF800000> : vector<8xf32>
    %152 = vector.multi_reduction <maximumf>, %151, %cst_73 [1] : vector<8x8xf32> to vector<8xf32>
    %153 = vector.shape_cast %152 : vector<8xf32> to vector<8x1xf32>
    %154 = vector.broadcast %153 : vector<8x1xf32> to vector<8x8xf32>
    %155 = arith.subf %151, %154 : vector<8x8xf32>
    %156 = math.exp %155 : vector<8x8xf32>
    %cst_74 = arith.constant dense<0.000000e+00> : vector<8xf32>
    %157 = vector.multi_reduction <add>, %156, %cst_74 [1] : vector<8x8xf32> to vector<8xf32>
    %158 = vector.shape_cast %157 : vector<8xf32> to vector<8x1xf32>
    %159 = tpu.reciprocal %158 {approx = true} : vector<8x1xf32> -> vector<8x1xf32>
    %160 = vector.broadcast %159 : vector<8x1xf32> to vector<8x8xf32>
    %161 = arith.mulf %156, %160 : vector<8x8xf32>
    %cst_75 = arith.constant dense<0.000000e+00> : vector<8x8xf32>
    %162 = tpu.matmul %161, %150, %cst_75 {dimension_numbers = #tpu.dot_dimension_numbers<[1], [0], [0], [1], [0, 0, 1, 1], [], []>} : vector<8x8xf32>, vector<8x8xf32>, vector<8x8xf32> -> vector<8x8xf32>
    %163 = vector.extract_strided_slice %134 {offsets = [0, 0], sizes = [8, 32], strides = [1, 1]} : vector<32x32xf32> to vector<8x32xf32>
    %cst_76 = arith.constant dense<0.000000e+00> : vector<8x32xf32>
    %164 = tpu.matmul %162, %163, %cst_76 {dimension_numbers = #tpu.dot_dimension_numbers<[1], [0], [0], [1], [0, 0, 1, 1], [], []>} : vector<8x8xf32>, vector<8x32xf32>, vector<8x32xf32> -> vector<8x32xf32>
    %165 = vector.extract_strided_slice %141 {offsets = [0, 8], sizes = [8, 8], strides = [1, 1]} : vector<8x32xf32> to vector<8x8xf32>
    %cst_77 = arith.constant 0.353553385 : f32
    %166 = vector.broadcast %cst_77 : f32 to vector<8x8xf32>
    %167 = arith.mulf %165, %166 : vector<8x8xf32>
    %168 = vector.extract_strided_slice %142 {offsets = [0, 8], sizes = [8, 8], strides = [1, 1]} : vector<8x32xf32> to vector<8x8xf32>
    %169 = vector.extract_strided_slice %145 {offsets = [0, 8], sizes = [8, 8], strides = [1, 1]} : vector<8x32xf32> to vector<8x8xf32>
    %cst_78 = arith.constant dense<0.000000e+00> : vector<8x8xf32>
    %170 = tpu.matmul %167, %168, %cst_78 {dimension_numbers = #tpu.dot_dimension_numbers<[1], [1], [0], [0], [0, 0, 1, 0], [], []>} : vector<8x8xf32>, vector<8x8xf32>, vector<8x8xf32> -> vector<8x8xf32>
    %cst_79 = arith.constant dense<0xFF800000> : vector<8xf32>
    %171 = vector.multi_reduction <maximumf>, %170, %cst_79 [1] : vector<8x8xf32> to vector<8xf32>
    %172 = vector.shape_cast %171 : vector<8xf32> to vector<8x1xf32>
    %173 = vector.broadcast %172 : vector<8x1xf32> to vector<8x8xf32>
    %174 = arith.subf %170, %173 : vector<8x8xf32>
    %175 = math.exp %174 : vector<8x8xf32>
    %cst_80 = arith.constant dense<0.000000e+00> : vector<8xf32>
    %176 = vector.multi_reduction <add>, %175, %cst_80 [1] : vector<8x8xf32> to vector<8xf32>
    %177 = vector.shape_cast %176 : vector<8xf32> to vector<8x1xf32>
    %178 = tpu.reciprocal %177 {approx = true} : vector<8x1xf32> -> vector<8x1xf32>
    %179 = vector.broadcast %178 : vector<8x1xf32> to vector<8x8xf32>
    %180 = arith.mulf %175, %179 : vector<8x8xf32>
    %cst_81 = arith.constant dense<0.000000e+00> : vector<8x8xf32>
    %181 = tpu.matmul %180, %169, %cst_81 {dimension_numbers = #tpu.dot_dimension_numbers<[1], [0], [0], [1], [0, 0, 1, 1], [], []>} : vector<8x8xf32>, vector<8x8xf32>, vector<8x8xf32> -> vector<8x8xf32>
    %182 = vector.extract_strided_slice %134 {offsets = [8, 0], sizes = [8, 32], strides = [1, 1]} : vector<32x32xf32> to vector<8x32xf32>
    %cst_82 = arith.constant dense<0.000000e+00> : vector<8x32xf32>
    %183 = tpu.matmul %181, %182, %cst_82 {dimension_numbers = #tpu.dot_dimension_numbers<[1], [0], [0], [1], [0, 0, 1, 1], [], []>} : vector<8x8xf32>, vector<8x32xf32>, vector<8x32xf32> -> vector<8x32xf32>
    %184 = arith.addf %164, %183 : vector<8x32xf32>
    %185 = vector.extract_strided_slice %141 {offsets = [0, 16], sizes = [8, 8], strides = [1, 1]} : vector<8x32xf32> to vector<8x8xf32>
    %cst_83 = arith.constant 0.353553385 : f32
    %186 = vector.broadcast %cst_83 : f32 to vector<8x8xf32>
    %187 = arith.mulf %185, %186 : vector<8x8xf32>
    %188 = vector.extract_strided_slice %142 {offsets = [0, 16], sizes = [8, 8], strides = [1, 1]} : vector<8x32xf32> to vector<8x8xf32>
    %189 = vector.extract_strided_slice %145 {offsets = [0, 16], sizes = [8, 8], strides = [1, 1]} : vector<8x32xf32> to vector<8x8xf32>
    %cst_84 = arith.constant dense<0.000000e+00> : vector<8x8xf32>
    %190 = tpu.matmul %187, %188, %cst_84 {dimension_numbers = #tpu.dot_dimension_numbers<[1], [1], [0], [0], [0, 0, 1, 0], [], []>} : vector<8x8xf32>, vector<8x8xf32>, vector<8x8xf32> -> vector<8x8xf32>
    %cst_85 = arith.constant dense<0xFF800000> : vector<8xf32>
    %191 = vector.multi_reduction <maximumf>, %190, %cst_85 [1] : vector<8x8xf32> to vector<8xf32>
    %192 = vector.shape_cast %191 : vector<8xf32> to vector<8x1xf32>
    %193 = vector.broadcast %192 : vector<8x1xf32> to vector<8x8xf32>
    %194 = arith.subf %190, %193 : vector<8x8xf32>
    %195 = math.exp %194 : vector<8x8xf32>
    %cst_86 = arith.constant dense<0.000000e+00> : vector<8xf32>
    %196 = vector.multi_reduction <add>, %195, %cst_86 [1] : vector<8x8xf32> to vector<8xf32>
    %197 = vector.shape_cast %196 : vector<8xf32> to vector<8x1xf32>
    %198 = tpu.reciprocal %197 {approx = true} : vector<8x1xf32> -> vector<8x1xf32>
    %199 = vector.broadcast %198 : vector<8x1xf32> to vector<8x8xf32>
    %200 = arith.mulf %195, %199 : vector<8x8xf32>
    %cst_87 = arith.constant dense<0.000000e+00> : vector<8x8xf32>
    %201 = tpu.matmul %200, %189, %cst_87 {dimension_numbers = #tpu.dot_dimension_numbers<[1], [0], [0], [1], [0, 0, 1, 1], [], []>} : vector<8x8xf32>, vector<8x8xf32>, vector<8x8xf32> -> vector<8x8xf32>
    %202 = vector.extract_strided_slice %134 {offsets = [16, 0], sizes = [8, 32], strides = [1, 1]} : vector<32x32xf32> to vector<8x32xf32>
    %cst_88 = arith.constant dense<0.000000e+00> : vector<8x32xf32>
    %203 = tpu.matmul %201, %202, %cst_88 {dimension_numbers = #tpu.dot_dimension_numbers<[1], [0], [0], [1], [0, 0, 1, 1], [], []>} : vector<8x8xf32>, vector<8x32xf32>, vector<8x32xf32> -> vector<8x32xf32>
    %204 = arith.addf %184, %203 : vector<8x32xf32>
    %205 = vector.extract_strided_slice %141 {offsets = [0, 24], sizes = [8, 8], strides = [1, 1]} : vector<8x32xf32> to vector<8x8xf32>
    %cst_89 = arith.constant 0.353553385 : f32
    %206 = vector.broadcast %cst_89 : f32 to vector<8x8xf32>
    %207 = arith.mulf %205, %206 : vector<8x8xf32>
    %208 = vector.extract_strided_slice %142 {offsets = [0, 24], sizes = [8, 8], strides = [1, 1]} : vector<8x32xf32> to vector<8x8xf32>
    %209 = vector.extract_strided_slice %145 {offsets = [0, 24], sizes = [8, 8], strides = [1, 1]} : vector<8x32xf32> to vector<8x8xf32>
    %cst_90 = arith.constant dense<0.000000e+00> : vector<8x8xf32>
    %210 = tpu.matmul %207, %208, %cst_90 {dimension_numbers = #tpu.dot_dimension_numbers<[1], [1], [0], [0], [0, 0, 1, 0], [], []>} : vector<8x8xf32>, vector<8x8xf32>, vector<8x8xf32> -> vector<8x8xf32>
    %cst_91 = arith.constant dense<0xFF800000> : vector<8xf32>
    %211 = vector.multi_reduction <maximumf>, %210, %cst_91 [1] : vector<8x8xf32> to vector<8xf32>
    %212 = vector.shape_cast %211 : vector<8xf32> to vector<8x1xf32>
    %213 = vector.broadcast %212 : vector<8x1xf32> to vector<8x8xf32>
    %214 = arith.subf %210, %213 : vector<8x8xf32>
    %215 = math.exp %214 : vector<8x8xf32>
    %cst_92 = arith.constant dense<0.000000e+00> : vector<8xf32>
    %216 = vector.multi_reduction <add>, %215, %cst_92 [1] : vector<8x8xf32> to vector<8xf32>
    %217 = vector.shape_cast %216 : vector<8xf32> to vector<8x1xf32>
    %218 = tpu.reciprocal %217 {approx = true} : vector<8x1xf32> -> vector<8x1xf32>
    %219 = vector.broadcast %218 : vector<8x1xf32> to vector<8x8xf32>
    %220 = arith.mulf %215, %219 : vector<8x8xf32>
    %cst_93 = arith.constant dense<0.000000e+00> : vector<8x8xf32>
    %221 = tpu.matmul %220, %209, %cst_93 {dimension_numbers = #tpu.dot_dimension_numbers<[1], [0], [0], [1], [0, 0, 1, 1], [], []>} : vector<8x8xf32>, vector<8x8xf32>, vector<8x8xf32> -> vector<8x8xf32>
    %222 = vector.extract_strided_slice %134 {offsets = [24, 0], sizes = [8, 32], strides = [1, 1]} : vector<32x32xf32> to vector<8x32xf32>
    %cst_94 = arith.constant dense<0.000000e+00> : vector<8x32xf32>
    %223 = tpu.matmul %221, %222, %cst_94 {dimension_numbers = #tpu.dot_dimension_numbers<[1], [0], [0], [1], [0, 0, 1, 1], [], []>} : vector<8x8xf32>, vector<8x32xf32>, vector<8x32xf32> -> vector<8x32xf32>
    %224 = arith.addf %204, %223 : vector<8x32xf32>
    %225 = vector.broadcast %135 : vector<1x32xf32> to vector<8x32xf32>
    %226 = arith.addf %224, %225 : vector<8x32xf32>
    %227 = arith.addf %5, %226 : vector<8x32xf32>
    %228 = vector.extract_strided_slice %136 {offsets = [0, 0], sizes = [1, 32], strides = [1, 1]} : vector<2x32xf32> to vector<1x32xf32>
    %229 = vector.extract_strided_slice %136 {offsets = [1, 0], sizes = [1, 32], strides = [1, 1]} : vector<2x32xf32> to vector<1x32xf32>
    %cst_95 = arith.constant dense<0.000000e+00> : vector<8xf32>
    %230 = vector.multi_reduction <add>, %227, %cst_95 [1] : vector<8x32xf32> to vector<8xf32>
    %231 = vector.shape_cast %230 : vector<8xf32> to vector<8x1xf32>
    %cst_96 = arith.constant 3.200000e+01 : f32
    %232 = vector.broadcast %cst_96 : f32 to vector<8x1xf32>
    %233 = arith.divf %231, %232 : vector<8x1xf32>
    %234 = vector.broadcast %233 : vector<8x1xf32> to vector<8x32xf32>
    %235 = arith.subf %227, %234 : vector<8x32xf32>
    %236 = arith.mulf %235, %235 : vector<8x32xf32>
    %cst_97 = arith.constant dense<0.000000e+00> : vector<8xf32>
    %237 = vector.multi_reduction <add>, %236, %cst_97 [1] : vector<8x32xf32> to vector<8xf32>
    %238 = vector.shape_cast %237 : vector<8xf32> to vector<8x1xf32>
    %cst_98 = arith.constant 3.200000e+01 : f32
    %239 = vector.broadcast %cst_98 : f32 to vector<8x1xf32>
    %240 = arith.divf %238, %239 : vector<8x1xf32>
    %241 = vector.broadcast %233 : vector<8x1xf32> to vector<8x32xf32>
    %242 = arith.subf %227, %241 : vector<8x32xf32>
    %cst_99 = arith.constant 9.99999974E-6 : f32
    %243 = vector.broadcast %cst_99 : f32 to vector<8x1xf32>
    %244 = arith.addf %240, %243 : vector<8x1xf32>
    %245 = math.rsqrt %244 : vector<8x1xf32>
    %246 = vector.broadcast %245 : vector<8x1xf32> to vector<8x32xf32>
    %247 = arith.mulf %242, %246 : vector<8x32xf32>
    %248 = vector.broadcast %228 : vector<1x32xf32> to vector<8x32xf32>
    %249 = arith.mulf %247, %248 : vector<8x32xf32>
    %250 = vector.broadcast %229 : vector<1x32xf32> to vector<8x32xf32>
    %251 = arith.addf %249, %250 : vector<8x32xf32>
    %c0_100 = arith.constant 0 : index
    %c0_101 = arith.constant 0 : index
    %252 = vector.load %arg19[%c0_100, %c0_101] : memref<32x32xf32, #tpu.memory_space<vmem>>, vector<32x32xf32>
    %c0_102 = arith.constant 0 : index
    %c0_103 = arith.constant 0 : index
    %253 = vector.load %arg20[%c0_102, %c0_103] : memref<1x32xf32, #tpu.memory_space<vmem>>, vector<1x32xf32>
    %c0_104 = arith.constant 0 : index
    %c0_105 = arith.constant 0 : index
    %254 = vector.load %arg21[%c0_104, %c0_105] : memref<32x32xf32, #tpu.memory_space<vmem>>, vector<32x32xf32>
    %c0_106 = arith.constant 0 : index
    %c0_107 = arith.constant 0 : index
    %255 = vector.load %arg22[%c0_106, %c0_107] : memref<1x32xf32, #tpu.memory_space<vmem>>, vector<1x32xf32>
    %c0_108 = arith.constant 0 : index
    %c0_109 = arith.constant 0 : index
    %256 = vector.load %arg23[%c0_108, %c0_109] : memref<32x32xf32, #tpu.memory_space<vmem>>, vector<32x32xf32>
    %c0_110 = arith.constant 0 : index
    %c0_111 = arith.constant 0 : index
    %257 = vector.load %arg24[%c0_110, %c0_111] : memref<1x32xf32, #tpu.memory_space<vmem>>, vector<1x32xf32>
    %c0_112 = arith.constant 0 : index
    %c0_113 = arith.constant 0 : index
    %258 = vector.load %arg25[%c0_112, %c0_113] : memref<32x32xf32, #tpu.memory_space<vmem>>, vector<32x32xf32>
    %c0_114 = arith.constant 0 : index
    %c0_115 = arith.constant 0 : index
    %259 = vector.load %arg26[%c0_114, %c0_115] : memref<1x32xf32, #tpu.memory_space<vmem>>, vector<1x32xf32>
    %c0_116 = arith.constant 0 : index
    %c0_117 = arith.constant 0 : index
    %260 = vector.load %arg27[%c0_116, %c0_117] : memref<2x32xf32, #tpu.memory_space<vmem>>, vector<2x32xf32>
    %c0_118 = arith.constant 0 : index
    %c0_119 = arith.constant 0 : index
    %261 = vector.load %arg28[%c0_118, %c0_119] : memref<32x64xf32, #tpu.memory_space<vmem>>, vector<32x64xf32>
    %c0_120 = arith.constant 0 : index
    %c0_121 = arith.constant 0 : index
    %262 = vector.load %arg29[%c0_120, %c0_121] : memref<1x64xf32, #tpu.memory_space<vmem>>, vector<1x64xf32>
    %c0_122 = arith.constant 0 : index
    %c0_123 = arith.constant 0 : index
    %263 = vector.load %arg30[%c0_122, %c0_123] : memref<64x32xf32, #tpu.memory_space<vmem>>, vector<64x32xf32>
    %c0_124 = arith.constant 0 : index
    %c0_125 = arith.constant 0 : index
    %264 = vector.load %arg31[%c0_124, %c0_125] : memref<1x32xf32, #tpu.memory_space<vmem>>, vector<1x32xf32>
    %c0_126 = arith.constant 0 : index
    %c0_127 = arith.constant 0 : index
    %265 = vector.load %arg32[%c0_126, %c0_127] : memref<2x32xf32, #tpu.memory_space<vmem>>, vector<2x32xf32>
    %266 = arith.addf %129, %3 : vector<8x32xf32>
    %cst_128 = arith.constant dense<0.000000e+00> : vector<8x32xf32>
    %267 = tpu.matmul %266, %252, %cst_128 {dimension_numbers = #tpu.dot_dimension_numbers<[1], [0], [0], [1], [0, 0, 1, 1], [], []>} : vector<8x32xf32>, vector<32x32xf32>, vector<8x32xf32> -> vector<8x32xf32>
    %268 = vector.broadcast %253 : vector<1x32xf32> to vector<8x32xf32>
    %269 = arith.addf %267, %268 : vector<8x32xf32>
    %270 = arith.addf %251, %7 : vector<8x32xf32>
    %cst_129 = arith.constant dense<0.000000e+00> : vector<8x32xf32>
    %271 = tpu.matmul %270, %254, %cst_129 {dimension_numbers = #tpu.dot_dimension_numbers<[1], [0], [0], [1], [0, 0, 1, 1], [], []>} : vector<8x32xf32>, vector<32x32xf32>, vector<8x32xf32> -> vector<8x32xf32>
    %272 = vector.broadcast %255 : vector<1x32xf32> to vector<8x32xf32>
    %273 = arith.addf %271, %272 : vector<8x32xf32>
    %cst_130 = arith.constant dense<0.000000e+00> : vector<8x32xf32>
    %274 = tpu.matmul %251, %256, %cst_130 {dimension_numbers = #tpu.dot_dimension_numbers<[1], [0], [0], [1], [0, 0, 1, 1], [], []>} : vector<8x32xf32>, vector<32x32xf32>, vector<8x32xf32> -> vector<8x32xf32>
    %275 = vector.broadcast %257 : vector<1x32xf32> to vector<8x32xf32>
    %276 = arith.addf %274, %275 : vector<8x32xf32>
    %277 = vector.extract_strided_slice %269 {offsets = [0, 0], sizes = [8, 8], strides = [1, 1]} : vector<8x32xf32> to vector<8x8xf32>
    %cst_131 = arith.constant 0.353553385 : f32
    %278 = vector.broadcast %cst_131 : f32 to vector<8x8xf32>
    %279 = arith.mulf %277, %278 : vector<8x8xf32>
    %280 = vector.extract_strided_slice %273 {offsets = [0, 0], sizes = [8, 8], strides = [1, 1]} : vector<8x32xf32> to vector<8x8xf32>
    %281 = vector.extract_strided_slice %276 {offsets = [0, 0], sizes = [8, 8], strides = [1, 1]} : vector<8x32xf32> to vector<8x8xf32>
    %cst_132 = arith.constant dense<0.000000e+00> : vector<8x8xf32>
    %282 = tpu.matmul %279, %280, %cst_132 {dimension_numbers = #tpu.dot_dimension_numbers<[1], [1], [0], [0], [0, 0, 1, 0], [], []>} : vector<8x8xf32>, vector<8x8xf32>, vector<8x8xf32> -> vector<8x8xf32>
    %cst_133 = arith.constant dense<0xFF800000> : vector<8xf32>
    %283 = vector.multi_reduction <maximumf>, %282, %cst_133 [1] : vector<8x8xf32> to vector<8xf32>
    %284 = vector.shape_cast %283 : vector<8xf32> to vector<8x1xf32>
    %285 = vector.broadcast %284 : vector<8x1xf32> to vector<8x8xf32>
    %286 = arith.subf %282, %285 : vector<8x8xf32>
    %287 = math.exp %286 : vector<8x8xf32>
    %cst_134 = arith.constant dense<0.000000e+00> : vector<8xf32>
    %288 = vector.multi_reduction <add>, %287, %cst_134 [1] : vector<8x8xf32> to vector<8xf32>
    %289 = vector.shape_cast %288 : vector<8xf32> to vector<8x1xf32>
    %290 = tpu.reciprocal %289 {approx = true} : vector<8x1xf32> -> vector<8x1xf32>
    %291 = vector.broadcast %290 : vector<8x1xf32> to vector<8x8xf32>
    %292 = arith.mulf %287, %291 : vector<8x8xf32>
    %cst_135 = arith.constant dense<0.000000e+00> : vector<8x8xf32>
    %293 = tpu.matmul %292, %281, %cst_135 {dimension_numbers = #tpu.dot_dimension_numbers<[1], [0], [0], [1], [0, 0, 1, 1], [], []>} : vector<8x8xf32>, vector<8x8xf32>, vector<8x8xf32> -> vector<8x8xf32>
    %294 = vector.extract_strided_slice %258 {offsets = [0, 0], sizes = [8, 32], strides = [1, 1]} : vector<32x32xf32> to vector<8x32xf32>
    %cst_136 = arith.constant dense<0.000000e+00> : vector<8x32xf32>
    %295 = tpu.matmul %293, %294, %cst_136 {dimension_numbers = #tpu.dot_dimension_numbers<[1], [0], [0], [1], [0, 0, 1, 1], [], []>} : vector<8x8xf32>, vector<8x32xf32>, vector<8x32xf32> -> vector<8x32xf32>
    %296 = vector.extract_strided_slice %269 {offsets = [0, 8], sizes = [8, 8], strides = [1, 1]} : vector<8x32xf32> to vector<8x8xf32>
    %cst_137 = arith.constant 0.353553385 : f32
    %297 = vector.broadcast %cst_137 : f32 to vector<8x8xf32>
    %298 = arith.mulf %296, %297 : vector<8x8xf32>
    %299 = vector.extract_strided_slice %273 {offsets = [0, 8], sizes = [8, 8], strides = [1, 1]} : vector<8x32xf32> to vector<8x8xf32>
    %300 = vector.extract_strided_slice %276 {offsets = [0, 8], sizes = [8, 8], strides = [1, 1]} : vector<8x32xf32> to vector<8x8xf32>
    %cst_138 = arith.constant dense<0.000000e+00> : vector<8x8xf32>
    %301 = tpu.matmul %298, %299, %cst_138 {dimension_numbers = #tpu.dot_dimension_numbers<[1], [1], [0], [0], [0, 0, 1, 0], [], []>} : vector<8x8xf32>, vector<8x8xf32>, vector<8x8xf32> -> vector<8x8xf32>
    %cst_139 = arith.constant dense<0xFF800000> : vector<8xf32>
    %302 = vector.multi_reduction <maximumf>, %301, %cst_139 [1] : vector<8x8xf32> to vector<8xf32>
    %303 = vector.shape_cast %302 : vector<8xf32> to vector<8x1xf32>
    %304 = vector.broadcast %303 : vector<8x1xf32> to vector<8x8xf32>
    %305 = arith.subf %301, %304 : vector<8x8xf32>
    %306 = math.exp %305 : vector<8x8xf32>
    %cst_140 = arith.constant dense<0.000000e+00> : vector<8xf32>
    %307 = vector.multi_reduction <add>, %306, %cst_140 [1] : vector<8x8xf32> to vector<8xf32>
    %308 = vector.shape_cast %307 : vector<8xf32> to vector<8x1xf32>
    %309 = tpu.reciprocal %308 {approx = true} : vector<8x1xf32> -> vector<8x1xf32>
    %310 = vector.broadcast %309 : vector<8x1xf32> to vector<8x8xf32>
    %311 = arith.mulf %306, %310 : vector<8x8xf32>
    %cst_141 = arith.constant dense<0.000000e+00> : vector<8x8xf32>
    %312 = tpu.matmul %311, %300, %cst_141 {dimension_numbers = #tpu.dot_dimension_numbers<[1], [0], [0], [1], [0, 0, 1, 1], [], []>} : vector<8x8xf32>, vector<8x8xf32>, vector<8x8xf32> -> vector<8x8xf32>
    %313 = vector.extract_strided_slice %258 {offsets = [8, 0], sizes = [8, 32], strides = [1, 1]} : vector<32x32xf32> to vector<8x32xf32>
    %cst_142 = arith.constant dense<0.000000e+00> : vector<8x32xf32>
    %314 = tpu.matmul %312, %313, %cst_142 {dimension_numbers = #tpu.dot_dimension_numbers<[1], [0], [0], [1], [0, 0, 1, 1], [], []>} : vector<8x8xf32>, vector<8x32xf32>, vector<8x32xf32> -> vector<8x32xf32>
    %315 = arith.addf %295, %314 : vector<8x32xf32>
    %316 = vector.extract_strided_slice %269 {offsets = [0, 16], sizes = [8, 8], strides = [1, 1]} : vector<8x32xf32> to vector<8x8xf32>
    %cst_143 = arith.constant 0.353553385 : f32
    %317 = vector.broadcast %cst_143 : f32 to vector<8x8xf32>
    %318 = arith.mulf %316, %317 : vector<8x8xf32>
    %319 = vector.extract_strided_slice %273 {offsets = [0, 16], sizes = [8, 8], strides = [1, 1]} : vector<8x32xf32> to vector<8x8xf32>
    %320 = vector.extract_strided_slice %276 {offsets = [0, 16], sizes = [8, 8], strides = [1, 1]} : vector<8x32xf32> to vector<8x8xf32>
    %cst_144 = arith.constant dense<0.000000e+00> : vector<8x8xf32>
    %321 = tpu.matmul %318, %319, %cst_144 {dimension_numbers = #tpu.dot_dimension_numbers<[1], [1], [0], [0], [0, 0, 1, 0], [], []>} : vector<8x8xf32>, vector<8x8xf32>, vector<8x8xf32> -> vector<8x8xf32>
    %cst_145 = arith.constant dense<0xFF800000> : vector<8xf32>
    %322 = vector.multi_reduction <maximumf>, %321, %cst_145 [1] : vector<8x8xf32> to vector<8xf32>
    %323 = vector.shape_cast %322 : vector<8xf32> to vector<8x1xf32>
    %324 = vector.broadcast %323 : vector<8x1xf32> to vector<8x8xf32>
    %325 = arith.subf %321, %324 : vector<8x8xf32>
    %326 = math.exp %325 : vector<8x8xf32>
    %cst_146 = arith.constant dense<0.000000e+00> : vector<8xf32>
    %327 = vector.multi_reduction <add>, %326, %cst_146 [1] : vector<8x8xf32> to vector<8xf32>
    %328 = vector.shape_cast %327 : vector<8xf32> to vector<8x1xf32>
    %329 = tpu.reciprocal %328 {approx = true} : vector<8x1xf32> -> vector<8x1xf32>
    %330 = vector.broadcast %329 : vector<8x1xf32> to vector<8x8xf32>
    %331 = arith.mulf %326, %330 : vector<8x8xf32>
    %cst_147 = arith.constant dense<0.000000e+00> : vector<8x8xf32>
    %332 = tpu.matmul %331, %320, %cst_147 {dimension_numbers = #tpu.dot_dimension_numbers<[1], [0], [0], [1], [0, 0, 1, 1], [], []>} : vector<8x8xf32>, vector<8x8xf32>, vector<8x8xf32> -> vector<8x8xf32>
    %333 = vector.extract_strided_slice %258 {offsets = [16, 0], sizes = [8, 32], strides = [1, 1]} : vector<32x32xf32> to vector<8x32xf32>
    %cst_148 = arith.constant dense<0.000000e+00> : vector<8x32xf32>
    %334 = tpu.matmul %332, %333, %cst_148 {dimension_numbers = #tpu.dot_dimension_numbers<[1], [0], [0], [1], [0, 0, 1, 1], [], []>} : vector<8x8xf32>, vector<8x32xf32>, vector<8x32xf32> -> vector<8x32xf32>
    %335 = arith.addf %315, %334 : vector<8x32xf32>
    %336 = vector.extract_strided_slice %269 {offsets = [0, 24], sizes = [8, 8], strides = [1, 1]} : vector<8x32xf32> to vector<8x8xf32>
    %cst_149 = arith.constant 0.353553385 : f32
    %337 = vector.broadcast %cst_149 : f32 to vector<8x8xf32>
    %338 = arith.mulf %336, %337 : vector<8x8xf32>
    %339 = vector.extract_strided_slice %273 {offsets = [0, 24], sizes = [8, 8], strides = [1, 1]} : vector<8x32xf32> to vector<8x8xf32>
    %340 = vector.extract_strided_slice %276 {offsets = [0, 24], sizes = [8, 8], strides = [1, 1]} : vector<8x32xf32> to vector<8x8xf32>
    %cst_150 = arith.constant dense<0.000000e+00> : vector<8x8xf32>
    %341 = tpu.matmul %338, %339, %cst_150 {dimension_numbers = #tpu.dot_dimension_numbers<[1], [1], [0], [0], [0, 0, 1, 0], [], []>} : vector<8x8xf32>, vector<8x8xf32>, vector<8x8xf32> -> vector<8x8xf32>
    %cst_151 = arith.constant dense<0xFF800000> : vector<8xf32>
    %342 = vector.multi_reduction <maximumf>, %341, %cst_151 [1] : vector<8x8xf32> to vector<8xf32>
    %343 = vector.shape_cast %342 : vector<8xf32> to vector<8x1xf32>
    %344 = vector.broadcast %343 : vector<8x1xf32> to vector<8x8xf32>
    %345 = arith.subf %341, %344 : vector<8x8xf32>
    %346 = math.exp %345 : vector<8x8xf32>
    %cst_152 = arith.constant dense<0.000000e+00> : vector<8xf32>
    %347 = vector.multi_reduction <add>, %346, %cst_152 [1] : vector<8x8xf32> to vector<8xf32>
    %348 = vector.shape_cast %347 : vector<8xf32> to vector<8x1xf32>
    %349 = tpu.reciprocal %348 {approx = true} : vector<8x1xf32> -> vector<8x1xf32>
    %350 = vector.broadcast %349 : vector<8x1xf32> to vector<8x8xf32>
    %351 = arith.mulf %346, %350 : vector<8x8xf32>
    %cst_153 = arith.constant dense<0.000000e+00> : vector<8x8xf32>
    %352 = tpu.matmul %351, %340, %cst_153 {dimension_numbers = #tpu.dot_dimension_numbers<[1], [0], [0], [1], [0, 0, 1, 1], [], []>} : vector<8x8xf32>, vector<8x8xf32>, vector<8x8xf32> -> vector<8x8xf32>
    %353 = vector.extract_strided_slice %258 {offsets = [24, 0], sizes = [8, 32], strides = [1, 1]} : vector<32x32xf32> to vector<8x32xf32>
    %cst_154 = arith.constant dense<0.000000e+00> : vector<8x32xf32>
    %354 = tpu.matmul %352, %353, %cst_154 {dimension_numbers = #tpu.dot_dimension_numbers<[1], [0], [0], [1], [0, 0, 1, 1], [], []>} : vector<8x8xf32>, vector<8x32xf32>, vector<8x32xf32> -> vector<8x32xf32>
    %355 = arith.addf %335, %354 : vector<8x32xf32>
    %356 = vector.broadcast %259 : vector<1x32xf32> to vector<8x32xf32>
    %357 = arith.addf %355, %356 : vector<8x32xf32>
    %358 = arith.addf %129, %357 : vector<8x32xf32>
    %359 = vector.extract_strided_slice %260 {offsets = [0, 0], sizes = [1, 32], strides = [1, 1]} : vector<2x32xf32> to vector<1x32xf32>
    %360 = vector.extract_strided_slice %260 {offsets = [1, 0], sizes = [1, 32], strides = [1, 1]} : vector<2x32xf32> to vector<1x32xf32>
    %cst_155 = arith.constant dense<0.000000e+00> : vector<8xf32>
    %361 = vector.multi_reduction <add>, %358, %cst_155 [1] : vector<8x32xf32> to vector<8xf32>
    %362 = vector.shape_cast %361 : vector<8xf32> to vector<8x1xf32>
    %cst_156 = arith.constant 3.200000e+01 : f32
    %363 = vector.broadcast %cst_156 : f32 to vector<8x1xf32>
    %364 = arith.divf %362, %363 : vector<8x1xf32>
    %365 = vector.broadcast %364 : vector<8x1xf32> to vector<8x32xf32>
    %366 = arith.subf %358, %365 : vector<8x32xf32>
    %367 = arith.mulf %366, %366 : vector<8x32xf32>
    %cst_157 = arith.constant dense<0.000000e+00> : vector<8xf32>
    %368 = vector.multi_reduction <add>, %367, %cst_157 [1] : vector<8x32xf32> to vector<8xf32>
    %369 = vector.shape_cast %368 : vector<8xf32> to vector<8x1xf32>
    %cst_158 = arith.constant 3.200000e+01 : f32
    %370 = vector.broadcast %cst_158 : f32 to vector<8x1xf32>
    %371 = arith.divf %369, %370 : vector<8x1xf32>
    %372 = vector.broadcast %364 : vector<8x1xf32> to vector<8x32xf32>
    %373 = arith.subf %358, %372 : vector<8x32xf32>
    %cst_159 = arith.constant 9.99999974E-6 : f32
    %374 = vector.broadcast %cst_159 : f32 to vector<8x1xf32>
    %375 = arith.addf %371, %374 : vector<8x1xf32>
    %376 = math.rsqrt %375 : vector<8x1xf32>
    %377 = vector.broadcast %376 : vector<8x1xf32> to vector<8x32xf32>
    %378 = arith.mulf %373, %377 : vector<8x32xf32>
    %379 = vector.broadcast %359 : vector<1x32xf32> to vector<8x32xf32>
    %380 = arith.mulf %378, %379 : vector<8x32xf32>
    %381 = vector.broadcast %360 : vector<1x32xf32> to vector<8x32xf32>
    %382 = arith.addf %380, %381 : vector<8x32xf32>
    %cst_160 = arith.constant dense<0.000000e+00> : vector<8x64xf32>
    %383 = tpu.matmul %382, %261, %cst_160 {dimension_numbers = #tpu.dot_dimension_numbers<[1], [0], [0], [1], [0, 0, 1, 1], [], []>} : vector<8x32xf32>, vector<32x64xf32>, vector<8x64xf32> -> vector<8x64xf32>
    %384 = vector.broadcast %262 : vector<1x64xf32> to vector<8x64xf32>
    %385 = arith.addf %383, %384 : vector<8x64xf32>
    %cst_161 = arith.constant 0.000000e+00 : f32
    %386 = vector.broadcast %cst_161 : f32 to vector<8x64xf32>
    %387 = arith.maximumf %385, %386 : vector<8x64xf32>
    %cst_162 = arith.constant dense<0.000000e+00> : vector<8x32xf32>
    %388 = tpu.matmul %387, %263, %cst_162 {dimension_numbers = #tpu.dot_dimension_numbers<[1], [0], [0], [1], [0, 0, 1, 1], [], []>} : vector<8x64xf32>, vector<64x32xf32>, vector<8x32xf32> -> vector<8x32xf32>
    %389 = vector.broadcast %264 : vector<1x32xf32> to vector<8x32xf32>
    %390 = arith.addf %388, %389 : vector<8x32xf32>
    %391 = arith.addf %382, %390 : vector<8x32xf32>
    %392 = vector.extract_strided_slice %265 {offsets = [0, 0], sizes = [1, 32], strides = [1, 1]} : vector<2x32xf32> to vector<1x32xf32>
    %393 = vector.extract_strided_slice %265 {offsets = [1, 0], sizes = [1, 32], strides = [1, 1]} : vector<2x32xf32> to vector<1x32xf32>
    %cst_163 = arith.constant dense<0.000000e+00> : vector<8xf32>
    %394 = vector.multi_reduction <add>, %391, %cst_163 [1] : vector<8x32xf32> to vector<8xf32>
    %395 = vector.shape_cast %394 : vector<8xf32> to vector<8x1xf32>
    %cst_164 = arith.constant 3.200000e+01 : f32
    %396 = vector.broadcast %cst_164 : f32 to vector<8x1xf32>
    %397 = arith.divf %395, %396 : vector<8x1xf32>
    %398 = vector.broadcast %397 : vector<8x1xf32> to vector<8x32xf32>
    %399 = arith.subf %391, %398 : vector<8x32xf32>
    %400 = arith.mulf %399, %399 : vector<8x32xf32>
    %cst_165 = arith.constant dense<0.000000e+00> : vector<8xf32>
    %401 = vector.multi_reduction <add>, %400, %cst_165 [1] : vector<8x32xf32> to vector<8xf32>
    %402 = vector.shape_cast %401 : vector<8xf32> to vector<8x1xf32>
    %cst_166 = arith.constant 3.200000e+01 : f32
    %403 = vector.broadcast %cst_166 : f32 to vector<8x1xf32>
    %404 = arith.divf %402, %403 : vector<8x1xf32>
    %405 = vector.broadcast %397 : vector<8x1xf32> to vector<8x32xf32>
    %406 = arith.subf %391, %405 : vector<8x32xf32>
    %cst_167 = arith.constant 9.99999974E-6 : f32
    %407 = vector.broadcast %cst_167 : f32 to vector<8x1xf32>
    %408 = arith.addf %404, %407 : vector<8x1xf32>
    %409 = math.rsqrt %408 : vector<8x1xf32>
    %410 = vector.broadcast %409 : vector<8x1xf32> to vector<8x32xf32>
    %411 = arith.mulf %406, %410 : vector<8x32xf32>
    %412 = vector.broadcast %392 : vector<1x32xf32> to vector<8x32xf32>
    %413 = arith.mulf %411, %412 : vector<8x32xf32>
    %414 = vector.broadcast %393 : vector<1x32xf32> to vector<8x32xf32>
    %415 = arith.addf %413, %414 : vector<8x32xf32>
    %c0_168 = arith.constant 0 : index
    %c0_169 = arith.constant 0 : index
    %416 = vector.load %arg33[%c0_168, %c0_169] : memref<32x32xf32, #tpu.memory_space<vmem>>, vector<32x32xf32>
    %c0_170 = arith.constant 0 : index
    %c0_171 = arith.constant 0 : index
    %417 = vector.load %arg34[%c0_170, %c0_171] : memref<1x32xf32, #tpu.memory_space<vmem>>, vector<1x32xf32>
    %c0_172 = arith.constant 0 : index
    %c0_173 = arith.constant 0 : index
    %418 = vector.load %arg35[%c0_172, %c0_173] : memref<32x32xf32, #tpu.memory_space<vmem>>, vector<32x32xf32>
    %c0_174 = arith.constant 0 : index
    %c0_175 = arith.constant 0 : index
    %419 = vector.load %arg36[%c0_174, %c0_175] : memref<1x32xf32, #tpu.memory_space<vmem>>, vector<1x32xf32>
    %c0_176 = arith.constant 0 : index
    %c0_177 = arith.constant 0 : index
    %420 = vector.load %arg37[%c0_176, %c0_177] : memref<32x32xf32, #tpu.memory_space<vmem>>, vector<32x32xf32>
    %c0_178 = arith.constant 0 : index
    %c0_179 = arith.constant 0 : index
    %421 = vector.load %arg38[%c0_178, %c0_179] : memref<1x32xf32, #tpu.memory_space<vmem>>, vector<1x32xf32>
    %c0_180 = arith.constant 0 : index
    %c0_181 = arith.constant 0 : index
    %422 = vector.load %arg39[%c0_180, %c0_181] : memref<32x32xf32, #tpu.memory_space<vmem>>, vector<32x32xf32>
    %c0_182 = arith.constant 0 : index
    %c0_183 = arith.constant 0 : index
    %423 = vector.load %arg40[%c0_182, %c0_183] : memref<1x32xf32, #tpu.memory_space<vmem>>, vector<1x32xf32>
    %c0_184 = arith.constant 0 : index
    %c0_185 = arith.constant 0 : index
    %424 = vector.load %arg41[%c0_184, %c0_185] : memref<2x32xf32, #tpu.memory_space<vmem>>, vector<2x32xf32>
    %c0_186 = arith.constant 0 : index
    %c0_187 = arith.constant 0 : index
    %425 = vector.load %arg42[%c0_186, %c0_187] : memref<32x64xf32, #tpu.memory_space<vmem>>, vector<32x64xf32>
    %c0_188 = arith.constant 0 : index
    %c0_189 = arith.constant 0 : index
    %426 = vector.load %arg43[%c0_188, %c0_189] : memref<1x64xf32, #tpu.memory_space<vmem>>, vector<1x64xf32>
    %c0_190 = arith.constant 0 : index
    %c0_191 = arith.constant 0 : index
    %427 = vector.load %arg44[%c0_190, %c0_191] : memref<64x32xf32, #tpu.memory_space<vmem>>, vector<64x32xf32>
    %c0_192 = arith.constant 0 : index
    %c0_193 = arith.constant 0 : index
    %428 = vector.load %arg45[%c0_192, %c0_193] : memref<1x32xf32, #tpu.memory_space<vmem>>, vector<1x32xf32>
    %c0_194 = arith.constant 0 : index
    %c0_195 = arith.constant 0 : index
    %429 = vector.load %arg46[%c0_194, %c0_195] : memref<2x32xf32, #tpu.memory_space<vmem>>, vector<2x32xf32>
    %430 = arith.addf %251, %7 : vector<8x32xf32>
    %cst_196 = arith.constant dense<0.000000e+00> : vector<8x32xf32>
    %431 = tpu.matmul %430, %416, %cst_196 {dimension_numbers = #tpu.dot_dimension_numbers<[1], [0], [0], [1], [0, 0, 1, 1], [], []>} : vector<8x32xf32>, vector<32x32xf32>, vector<8x32xf32> -> vector<8x32xf32>
    %432 = vector.broadcast %417 : vector<1x32xf32> to vector<8x32xf32>
    %433 = arith.addf %431, %432 : vector<8x32xf32>
    %434 = arith.addf %129, %3 : vector<8x32xf32>
    %cst_197 = arith.constant dense<0.000000e+00> : vector<8x32xf32>
    %435 = tpu.matmul %434, %418, %cst_197 {dimension_numbers = #tpu.dot_dimension_numbers<[1], [0], [0], [1], [0, 0, 1, 1], [], []>} : vector<8x32xf32>, vector<32x32xf32>, vector<8x32xf32> -> vector<8x32xf32>
    %436 = vector.broadcast %419 : vector<1x32xf32> to vector<8x32xf32>
    %437 = arith.addf %435, %436 : vector<8x32xf32>
    %cst_198 = arith.constant dense<0.000000e+00> : vector<8x32xf32>
    %438 = tpu.matmul %129, %420, %cst_198 {dimension_numbers = #tpu.dot_dimension_numbers<[1], [0], [0], [1], [0, 0, 1, 1], [], []>} : vector<8x32xf32>, vector<32x32xf32>, vector<8x32xf32> -> vector<8x32xf32>
    %439 = vector.broadcast %421 : vector<1x32xf32> to vector<8x32xf32>
    %440 = arith.addf %438, %439 : vector<8x32xf32>
    %441 = vector.extract_strided_slice %433 {offsets = [0, 0], sizes = [8, 8], strides = [1, 1]} : vector<8x32xf32> to vector<8x8xf32>
    %cst_199 = arith.constant 0.353553385 : f32
    %442 = vector.broadcast %cst_199 : f32 to vector<8x8xf32>
    %443 = arith.mulf %441, %442 : vector<8x8xf32>
    %444 = vector.extract_strided_slice %437 {offsets = [0, 0], sizes = [8, 8], strides = [1, 1]} : vector<8x32xf32> to vector<8x8xf32>
    %445 = vector.extract_strided_slice %440 {offsets = [0, 0], sizes = [8, 8], strides = [1, 1]} : vector<8x32xf32> to vector<8x8xf32>
    %cst_200 = arith.constant dense<0.000000e+00> : vector<8x8xf32>
    %446 = tpu.matmul %443, %444, %cst_200 {dimension_numbers = #tpu.dot_dimension_numbers<[1], [1], [0], [0], [0, 0, 1, 0], [], []>} : vector<8x8xf32>, vector<8x8xf32>, vector<8x8xf32> -> vector<8x8xf32>
    %cst_201 = arith.constant dense<0xFF800000> : vector<8xf32>
    %447 = vector.multi_reduction <maximumf>, %446, %cst_201 [1] : vector<8x8xf32> to vector<8xf32>
    %448 = vector.shape_cast %447 : vector<8xf32> to vector<8x1xf32>
    %449 = vector.broadcast %448 : vector<8x1xf32> to vector<8x8xf32>
    %450 = arith.subf %446, %449 : vector<8x8xf32>
    %451 = math.exp %450 : vector<8x8xf32>
    %cst_202 = arith.constant dense<0.000000e+00> : vector<8xf32>
    %452 = vector.multi_reduction <add>, %451, %cst_202 [1] : vector<8x8xf32> to vector<8xf32>
    %453 = vector.shape_cast %452 : vector<8xf32> to vector<8x1xf32>
    %454 = tpu.reciprocal %453 {approx = true} : vector<8x1xf32> -> vector<8x1xf32>
    %455 = vector.broadcast %454 : vector<8x1xf32> to vector<8x8xf32>
    %456 = arith.mulf %451, %455 : vector<8x8xf32>
    %cst_203 = arith.constant dense<0.000000e+00> : vector<8x8xf32>
    %457 = tpu.matmul %456, %445, %cst_203 {dimension_numbers = #tpu.dot_dimension_numbers<[1], [0], [0], [1], [0, 0, 1, 1], [], []>} : vector<8x8xf32>, vector<8x8xf32>, vector<8x8xf32> -> vector<8x8xf32>
    %458 = vector.extract_strided_slice %422 {offsets = [0, 0], sizes = [8, 32], strides = [1, 1]} : vector<32x32xf32> to vector<8x32xf32>
    %cst_204 = arith.constant dense<0.000000e+00> : vector<8x32xf32>
    %459 = tpu.matmul %457, %458, %cst_204 {dimension_numbers = #tpu.dot_dimension_numbers<[1], [0], [0], [1], [0, 0, 1, 1], [], []>} : vector<8x8xf32>, vector<8x32xf32>, vector<8x32xf32> -> vector<8x32xf32>
    %460 = vector.extract_strided_slice %433 {offsets = [0, 8], sizes = [8, 8], strides = [1, 1]} : vector<8x32xf32> to vector<8x8xf32>
    %cst_205 = arith.constant 0.353553385 : f32
    %461 = vector.broadcast %cst_205 : f32 to vector<8x8xf32>
    %462 = arith.mulf %460, %461 : vector<8x8xf32>
    %463 = vector.extract_strided_slice %437 {offsets = [0, 8], sizes = [8, 8], strides = [1, 1]} : vector<8x32xf32> to vector<8x8xf32>
    %464 = vector.extract_strided_slice %440 {offsets = [0, 8], sizes = [8, 8], strides = [1, 1]} : vector<8x32xf32> to vector<8x8xf32>
    %cst_206 = arith.constant dense<0.000000e+00> : vector<8x8xf32>
    %465 = tpu.matmul %462, %463, %cst_206 {dimension_numbers = #tpu.dot_dimension_numbers<[1], [1], [0], [0], [0, 0, 1, 0], [], []>} : vector<8x8xf32>, vector<8x8xf32>, vector<8x8xf32> -> vector<8x8xf32>
    %cst_207 = arith.constant dense<0xFF800000> : vector<8xf32>
    %466 = vector.multi_reduction <maximumf>, %465, %cst_207 [1] : vector<8x8xf32> to vector<8xf32>
    %467 = vector.shape_cast %466 : vector<8xf32> to vector<8x1xf32>
    %468 = vector.broadcast %467 : vector<8x1xf32> to vector<8x8xf32>
    %469 = arith.subf %465, %468 : vector<8x8xf32>
    %470 = math.exp %469 : vector<8x8xf32>
    %cst_208 = arith.constant dense<0.000000e+00> : vector<8xf32>
    %471 = vector.multi_reduction <add>, %470, %cst_208 [1] : vector<8x8xf32> to vector<8xf32>
    %472 = vector.shape_cast %471 : vector<8xf32> to vector<8x1xf32>
    %473 = tpu.reciprocal %472 {approx = true} : vector<8x1xf32> -> vector<8x1xf32>
    %474 = vector.broadcast %473 : vector<8x1xf32> to vector<8x8xf32>
    %475 = arith.mulf %470, %474 : vector<8x8xf32>
    %cst_209 = arith.constant dense<0.000000e+00> : vector<8x8xf32>
    %476 = tpu.matmul %475, %464, %cst_209 {dimension_numbers = #tpu.dot_dimension_numbers<[1], [0], [0], [1], [0, 0, 1, 1], [], []>} : vector<8x8xf32>, vector<8x8xf32>, vector<8x8xf32> -> vector<8x8xf32>
    %477 = vector.extract_strided_slice %422 {offsets = [8, 0], sizes = [8, 32], strides = [1, 1]} : vector<32x32xf32> to vector<8x32xf32>
    %cst_210 = arith.constant dense<0.000000e+00> : vector<8x32xf32>
    %478 = tpu.matmul %476, %477, %cst_210 {dimension_numbers = #tpu.dot_dimension_numbers<[1], [0], [0], [1], [0, 0, 1, 1], [], []>} : vector<8x8xf32>, vector<8x32xf32>, vector<8x32xf32> -> vector<8x32xf32>
    %479 = arith.addf %459, %478 : vector<8x32xf32>
    %480 = vector.extract_strided_slice %433 {offsets = [0, 16], sizes = [8, 8], strides = [1, 1]} : vector<8x32xf32> to vector<8x8xf32>
    %cst_211 = arith.constant 0.353553385 : f32
    %481 = vector.broadcast %cst_211 : f32 to vector<8x8xf32>
    %482 = arith.mulf %480, %481 : vector<8x8xf32>
    %483 = vector.extract_strided_slice %437 {offsets = [0, 16], sizes = [8, 8], strides = [1, 1]} : vector<8x32xf32> to vector<8x8xf32>
    %484 = vector.extract_strided_slice %440 {offsets = [0, 16], sizes = [8, 8], strides = [1, 1]} : vector<8x32xf32> to vector<8x8xf32>
    %cst_212 = arith.constant dense<0.000000e+00> : vector<8x8xf32>
    %485 = tpu.matmul %482, %483, %cst_212 {dimension_numbers = #tpu.dot_dimension_numbers<[1], [1], [0], [0], [0, 0, 1, 0], [], []>} : vector<8x8xf32>, vector<8x8xf32>, vector<8x8xf32> -> vector<8x8xf32>
    %cst_213 = arith.constant dense<0xFF800000> : vector<8xf32>
    %486 = vector.multi_reduction <maximumf>, %485, %cst_213 [1] : vector<8x8xf32> to vector<8xf32>
    %487 = vector.shape_cast %486 : vector<8xf32> to vector<8x1xf32>
    %488 = vector.broadcast %487 : vector<8x1xf32> to vector<8x8xf32>
    %489 = arith.subf %485, %488 : vector<8x8xf32>
    %490 = math.exp %489 : vector<8x8xf32>
    %cst_214 = arith.constant dense<0.000000e+00> : vector<8xf32>
    %491 = vector.multi_reduction <add>, %490, %cst_214 [1] : vector<8x8xf32> to vector<8xf32>
    %492 = vector.shape_cast %491 : vector<8xf32> to vector<8x1xf32>
    %493 = tpu.reciprocal %492 {approx = true} : vector<8x1xf32> -> vector<8x1xf32>
    %494 = vector.broadcast %493 : vector<8x1xf32> to vector<8x8xf32>
    %495 = arith.mulf %490, %494 : vector<8x8xf32>
    %cst_215 = arith.constant dense<0.000000e+00> : vector<8x8xf32>
    %496 = tpu.matmul %495, %484, %cst_215 {dimension_numbers = #tpu.dot_dimension_numbers<[1], [0], [0], [1], [0, 0, 1, 1], [], []>} : vector<8x8xf32>, vector<8x8xf32>, vector<8x8xf32> -> vector<8x8xf32>
    %497 = vector.extract_strided_slice %422 {offsets = [16, 0], sizes = [8, 32], strides = [1, 1]} : vector<32x32xf32> to vector<8x32xf32>
    %cst_216 = arith.constant dense<0.000000e+00> : vector<8x32xf32>
    %498 = tpu.matmul %496, %497, %cst_216 {dimension_numbers = #tpu.dot_dimension_numbers<[1], [0], [0], [1], [0, 0, 1, 1], [], []>} : vector<8x8xf32>, vector<8x32xf32>, vector<8x32xf32> -> vector<8x32xf32>
    %499 = arith.addf %479, %498 : vector<8x32xf32>
    %500 = vector.extract_strided_slice %433 {offsets = [0, 24], sizes = [8, 8], strides = [1, 1]} : vector<8x32xf32> to vector<8x8xf32>
    %cst_217 = arith.constant 0.353553385 : f32
    %501 = vector.broadcast %cst_217 : f32 to vector<8x8xf32>
    %502 = arith.mulf %500, %501 : vector<8x8xf32>
    %503 = vector.extract_strided_slice %437 {offsets = [0, 24], sizes = [8, 8], strides = [1, 1]} : vector<8x32xf32> to vector<8x8xf32>
    %504 = vector.extract_strided_slice %440 {offsets = [0, 24], sizes = [8, 8], strides = [1, 1]} : vector<8x32xf32> to vector<8x8xf32>
    %cst_218 = arith.constant dense<0.000000e+00> : vector<8x8xf32>
    %505 = tpu.matmul %502, %503, %cst_218 {dimension_numbers = #tpu.dot_dimension_numbers<[1], [1], [0], [0], [0, 0, 1, 0], [], []>} : vector<8x8xf32>, vector<8x8xf32>, vector<8x8xf32> -> vector<8x8xf32>
    %cst_219 = arith.constant dense<0xFF800000> : vector<8xf32>
    %506 = vector.multi_reduction <maximumf>, %505, %cst_219 [1] : vector<8x8xf32> to vector<8xf32>
    %507 = vector.shape_cast %506 : vector<8xf32> to vector<8x1xf32>
    %508 = vector.broadcast %507 : vector<8x1xf32> to vector<8x8xf32>
    %509 = arith.subf %505, %508 : vector<8x8xf32>
    %510 = math.exp %509 : vector<8x8xf32>
    %cst_220 = arith.constant dense<0.000000e+00> : vector<8xf32>
    %511 = vector.multi_reduction <add>, %510, %cst_220 [1] : vector<8x8xf32> to vector<8xf32>
    %512 = vector.shape_cast %511 : vector<8xf32> to vector<8x1xf32>
    %513 = tpu.reciprocal %512 {approx = true} : vector<8x1xf32> -> vector<8x1xf32>
    %514 = vector.broadcast %513 : vector<8x1xf32> to vector<8x8xf32>
    %515 = arith.mulf %510, %514 : vector<8x8xf32>
    %cst_221 = arith.constant dense<0.000000e+00> : vector<8x8xf32>
    %516 = tpu.matmul %515, %504, %cst_221 {dimension_numbers = #tpu.dot_dimension_numbers<[1], [0], [0], [1], [0, 0, 1, 1], [], []>} : vector<8x8xf32>, vector<8x8xf32>, vector<8x8xf32> -> vector<8x8xf32>
    %517 = vector.extract_strided_slice %422 {offsets = [24, 0], sizes = [8, 32], strides = [1, 1]} : vector<32x32xf32> to vector<8x32xf32>
    %cst_222 = arith.constant dense<0.000000e+00> : vector<8x32xf32>
    %518 = tpu.matmul %516, %517, %cst_222 {dimension_numbers = #tpu.dot_dimension_numbers<[1], [0], [0], [1], [0, 0, 1, 1], [], []>} : vector<8x8xf32>, vector<8x32xf32>, vector<8x32xf32> -> vector<8x32xf32>
    %519 = arith.addf %499, %518 : vector<8x32xf32>
    %520 = vector.broadcast %423 : vector<1x32xf32> to vector<8x32xf32>
    %521 = arith.addf %519, %520 : vector<8x32xf32>
    %522 = arith.addf %251, %521 : vector<8x32xf32>
    %523 = vector.extract_strided_slice %424 {offsets = [0, 0], sizes = [1, 32], strides = [1, 1]} : vector<2x32xf32> to vector<1x32xf32>
    %524 = vector.extract_strided_slice %424 {offsets = [1, 0], sizes = [1, 32], strides = [1, 1]} : vector<2x32xf32> to vector<1x32xf32>
    %cst_223 = arith.constant dense<0.000000e+00> : vector<8xf32>
    %525 = vector.multi_reduction <add>, %522, %cst_223 [1] : vector<8x32xf32> to vector<8xf32>
    %526 = vector.shape_cast %525 : vector<8xf32> to vector<8x1xf32>
    %cst_224 = arith.constant 3.200000e+01 : f32
    %527 = vector.broadcast %cst_224 : f32 to vector<8x1xf32>
    %528 = arith.divf %526, %527 : vector<8x1xf32>
    %529 = vector.broadcast %528 : vector<8x1xf32> to vector<8x32xf32>
    %530 = arith.subf %522, %529 : vector<8x32xf32>
    %531 = arith.mulf %530, %530 : vector<8x32xf32>
    %cst_225 = arith.constant dense<0.000000e+00> : vector<8xf32>
    %532 = vector.multi_reduction <add>, %531, %cst_225 [1] : vector<8x32xf32> to vector<8xf32>
    %533 = vector.shape_cast %532 : vector<8xf32> to vector<8x1xf32>
    %cst_226 = arith.constant 3.200000e+01 : f32
    %534 = vector.broadcast %cst_226 : f32 to vector<8x1xf32>
    %535 = arith.divf %533, %534 : vector<8x1xf32>
    %536 = vector.broadcast %528 : vector<8x1xf32> to vector<8x32xf32>
    %537 = arith.subf %522, %536 : vector<8x32xf32>
    %cst_227 = arith.constant 9.99999974E-6 : f32
    %538 = vector.broadcast %cst_227 : f32 to vector<8x1xf32>
    %539 = arith.addf %535, %538 : vector<8x1xf32>
    %540 = math.rsqrt %539 : vector<8x1xf32>
    %541 = vector.broadcast %540 : vector<8x1xf32> to vector<8x32xf32>
    %542 = arith.mulf %537, %541 : vector<8x32xf32>
    %543 = vector.broadcast %523 : vector<1x32xf32> to vector<8x32xf32>
    %544 = arith.mulf %542, %543 : vector<8x32xf32>
    %545 = vector.broadcast %524 : vector<1x32xf32> to vector<8x32xf32>
    %546 = arith.addf %544, %545 : vector<8x32xf32>
    %cst_228 = arith.constant dense<0.000000e+00> : vector<8x64xf32>
    %547 = tpu.matmul %546, %425, %cst_228 {dimension_numbers = #tpu.dot_dimension_numbers<[1], [0], [0], [1], [0, 0, 1, 1], [], []>} : vector<8x32xf32>, vector<32x64xf32>, vector<8x64xf32> -> vector<8x64xf32>
    %548 = vector.broadcast %426 : vector<1x64xf32> to vector<8x64xf32>
    %549 = arith.addf %547, %548 : vector<8x64xf32>
    %cst_229 = arith.constant 0.000000e+00 : f32
    %550 = vector.broadcast %cst_229 : f32 to vector<8x64xf32>
    %551 = arith.maximumf %549, %550 : vector<8x64xf32>
    %cst_230 = arith.constant dense<0.000000e+00> : vector<8x32xf32>
    %552 = tpu.matmul %551, %427, %cst_230 {dimension_numbers = #tpu.dot_dimension_numbers<[1], [0], [0], [1], [0, 0, 1, 1], [], []>} : vector<8x64xf32>, vector<64x32xf32>, vector<8x32xf32> -> vector<8x32xf32>
    %553 = vector.broadcast %428 : vector<1x32xf32> to vector<8x32xf32>
    %554 = arith.addf %552, %553 : vector<8x32xf32>
    %555 = arith.addf %546, %554 : vector<8x32xf32>
    %556 = vector.extract_strided_slice %429 {offsets = [0, 0], sizes = [1, 32], strides = [1, 1]} : vector<2x32xf32> to vector<1x32xf32>
    %557 = vector.extract_strided_slice %429 {offsets = [1, 0], sizes = [1, 32], strides = [1, 1]} : vector<2x32xf32> to vector<1x32xf32>
    %cst_231 = arith.constant dense<0.000000e+00> : vector<8xf32>
    %558 = vector.multi_reduction <add>, %555, %cst_231 [1] : vector<8x32xf32> to vector<8xf32>
    %559 = vector.shape_cast %558 : vector<8xf32> to vector<8x1xf32>
    %cst_232 = arith.constant 3.200000e+01 : f32
    %560 = vector.broadcast %cst_232 : f32 to vector<8x1xf32>
    %561 = arith.divf %559, %560 : vector<8x1xf32>
    %562 = vector.broadcast %561 : vector<8x1xf32> to vector<8x32xf32>
    %563 = arith.subf %555, %562 : vector<8x32xf32>
    %564 = arith.mulf %563, %563 : vector<8x32xf32>
    %cst_233 = arith.constant dense<0.000000e+00> : vector<8xf32>
    %565 = vector.multi_reduction <add>, %564, %cst_233 [1] : vector<8x32xf32> to vector<8xf32>
    %566 = vector.shape_cast %565 : vector<8xf32> to vector<8x1xf32>
    %cst_234 = arith.constant 3.200000e+01 : f32
    %567 = vector.broadcast %cst_234 : f32 to vector<8x1xf32>
    %568 = arith.divf %566, %567 : vector<8x1xf32>
    %569 = vector.broadcast %561 : vector<8x1xf32> to vector<8x32xf32>
    %570 = arith.subf %555, %569 : vector<8x32xf32>
    %cst_235 = arith.constant 9.99999974E-6 : f32
    %571 = vector.broadcast %cst_235 : f32 to vector<8x1xf32>
    %572 = arith.addf %568, %571 : vector<8x1xf32>
    %573 = math.rsqrt %572 : vector<8x1xf32>
    %574 = vector.broadcast %573 : vector<8x1xf32> to vector<8x32xf32>
    %575 = arith.mulf %570, %574 : vector<8x32xf32>
    %576 = vector.broadcast %556 : vector<1x32xf32> to vector<8x32xf32>
    %577 = arith.mulf %575, %576 : vector<8x32xf32>
    %578 = vector.broadcast %557 : vector<1x32xf32> to vector<8x32xf32>
    %579 = arith.addf %577, %578 : vector<8x32xf32>
    %c0_236 = arith.constant 0 : index
    %c0_237 = arith.constant 0 : index
    %c0_238 = arith.constant 0 : index
    %580 = vector.load %arg47[%c0_236, %c0_237, %c0_238] : memref<1x8x32xf32, #tpu.memory_space<vmem>>, vector<1x8x32xf32>
    %581 = vector.shape_cast %580 : vector<1x8x32xf32> to vector<8x32xf32>
    %582 = vector.shape_cast %415 : vector<8x32xf32> to vector<1x8x32xf32>
    tpu.vector_store %arg47[%c0_236, %c0_237, %c0_238], %582 {strides = array<i32>} : memref<1x8x32xf32, #tpu.memory_space<vmem>>, vector<1x8x32xf32>,
    %c0_239 = arith.constant 0 : index
    %c0_240 = arith.constant 0 : index
    %c0_241 = arith.constant 0 : index
    %583 = vector.load %arg48[%c0_239, %c0_240, %c0_241] : memref<1x8x32xf32, #tpu.memory_space<vmem>>, vector<1x8x32xf32>
    %584 = vector.shape_cast %583 : vector<1x8x32xf32> to vector<8x32xf32>
    %585 = vector.shape_cast %579 : vector<8x32xf32> to vector<1x8x32xf32>
    tpu.vector_store %arg48[%c0_239, %c0_240, %c0_241], %585 {strides = array<i32>} : memref<1x8x32xf32, #tpu.memory_space<vmem>>, vector<1x8x32xf32>,
    return
  }
  func.func @transform_0(%arg0: i32) -> (i32, i32, i32) {
    %c0_i32 = arith.constant 0 : i32
    %c0_i32_0 = arith.constant 0 : i32
    %c0_i32_1 = arith.constant 0 : i32
    return %arg0, %c0_i32, %c0_i32_0 : i32, i32, i32
  }
  func.func @transform_1(%arg0: i32) -> (i32, i32, i32) {
    %c0_i32 = arith.constant 0 : i32
    %c0_i32_0 = arith.constant 0 : i32
    %c0_i32_1 = arith.constant 0 : i32
    return %arg0, %c0_i32, %c0_i32_0 : i32, i32, i32
  }
  func.func @transform_2(%arg0: i32) -> (i32, i32, i32) {
    %c0_i32 = arith.constant 0 : i32
    %c0_i32_0 = arith.constant 0 : i32
    %c0_i32_1 = arith.constant 0 : i32
    return %arg0, %c0_i32, %c0_i32_0 : i32, i32, i32
  }
  func.func @transform_3(%arg0: i32) -> (i32, i32, i32) {
    %c0_i32 = arith.constant 0 : i32
    %c0_i32_0 = arith.constant 0 : i32
    %c0_i32_1 = arith.constant 0 : i32
    return %arg0, %c0_i32, %c0_i32_0 : i32, i32, i32
  }
  func.func @transform_4(%arg0: i32) -> (i32, i32) {
    %c0_i32 = arith.constant 0 : i32
    %c0_i32_0 = arith.constant 0 : i32
    %c0_i32_1 = arith.constant 0 : i32
    return %c0_i32, %c0_i32_0 : i32, i32
  }
  func.func @transform_5(%arg0: i32) -> (i32, i32) {
    %c0_i32 = arith.constant 0 : i32
    %c0_i32_0 = arith.constant 0 : i32
    %c0_i32_1 = arith.constant 0 : i32
    return %c0_i32, %c0_i32_0 : i32, i32
  }
  func.func @transform_6(%arg0: i32) -> (i32, i32) {
    %c0_i32 = arith.constant 0 : i32
    %c0_i32_0 = arith.constant 0 : i32
    %c0_i32_1 = arith.constant 0 : i32
    return %c0_i32, %c0_i32_0 : i32, i32
  }
  func.func @transform_7(%arg0: i32) -> (i32, i32) {
    %c0_i32 = arith.constant 0 : i32
    %c0_i32_0 = arith.constant 0 : i32
    %c0_i32_1 = arith.constant 0 : i32
    return %c0_i32, %c0_i32_0 : i32, i32
  }
  func.func @transform_8(%arg0: i32) -> (i32, i32) {
    %c0_i32 = arith.constant 0 : i32
    %c0_i32_0 = arith.constant 0 : i32
    %c0_i32_1 = arith.constant 0 : i32
    return %c0_i32, %c0_i32_0 : i32, i32
  }
  func.func @transform_9(%arg0: i32) -> (i32, i32) {
    %c0_i32 = arith.constant 0 : i32
    %c0_i32_0 = arith.constant 0 : i32
    %c0_i32_1 = arith.constant 0 : i32
    return %c0_i32, %c0_i32_0 : i32, i32
  }
  func.func @transform_10(%arg0: i32) -> (i32, i32) {
    %c0_i32 = arith.constant 0 : i32
    %c0_i32_0 = arith.constant 0 : i32
    %c0_i32_1 = arith.constant 0 : i32
    return %c0_i32, %c0_i32_0 : i32, i32
  }
  func.func @transform_11(%arg0: i32) -> (i32, i32) {
    %c0_i32 = arith.constant 0 : i32
    %c0_i32_0 = arith.constant 0 : i32
    %c0_i32_1 = arith.constant 0 : i32
    return %c0_i32, %c0_i32_0 : i32, i32
  }
  func.func @transform_12(%arg0: i32) -> (i32, i32) {
    %c0_i32 = arith.constant 0 : i32
    %c0_i32_0 = arith.constant 0 : i32
    %c0_i32_1 = arith.constant 0 : i32
    return %c0_i32, %c0_i32_0 : i32, i32
  }
  func.func @transform_13(%arg0: i32) -> (i32, i32) {
    %c0_i32 = arith.constant 0 : i32
    %c0_i32_0 = arith.constant 0 : i32
    %c0_i32_1 = arith.constant 0 : i32
    return %c0_i32, %c0_i32_0 : i32, i32
  }
  func.func @transform_14(%arg0: i32) -> (i32, i32) {
    %c0_i32 = arith.constant 0 : i32
    %c0_i32_0 = arith.constant 0 : i32
    %c0_i32_1 = arith.constant 0 : i32
    return %c0_i32, %c0_i32_0 : i32, i32
  }
  func.func @transform_15(%arg0: i32) -> (i32, i32) {
    %c0_i32 = arith.constant 0 : i32
    %c0_i32_0 = arith.constant 0 : i32
    %c0_i32_1 = arith.constant 0 : i32
    return %c0_i32, %c0_i32_0 : i32, i32
  }
  func.func @transform_16(%arg0: i32) -> (i32, i32) {
    %c0_i32 = arith.constant 0 : i32
    %c0_i32_0 = arith.constant 0 : i32
    %c0_i32_1 = arith.constant 0 : i32
    return %c0_i32, %c0_i32_0 : i32, i32
  }
  func.func @transform_17(%arg0: i32) -> (i32, i32) {
    %c0_i32 = arith.constant 0 : i32
    %c0_i32_0 = arith.constant 0 : i32
    %c0_i32_1 = arith.constant 0 : i32
    return %c0_i32, %c0_i32_0 : i32, i32
  }
  func.func @transform_18(%arg0: i32) -> (i32, i32) {
    %c0_i32 = arith.constant 0 : i32
    %c0_i32_0 = arith.constant 0 : i32
    %c0_i32_1 = arith.constant 0 : i32
    return %c0_i32, %c0_i32_0 : i32, i32
  }
  func.func @transform_19(%arg0: i32) -> (i32, i32) {
    %c0_i32 = arith.constant 0 : i32
    %c0_i32_0 = arith.constant 0 : i32
    %c0_i32_1 = arith.constant 0 : i32
    return %c0_i32, %c0_i32_0 : i32, i32
  }
  func.func @transform_20(%arg0: i32) -> (i32, i32) {
    %c0_i32 = arith.constant 0 : i32
    %c0_i32_0 = arith.constant 0 : i32
    %c0_i32_1 = arith.constant 0 : i32
    return %c0_i32, %c0_i32_0 : i32, i32
  }
  func.func @transform_21(%arg0: i32) -> (i32, i32) {
    %c0_i32 = arith.constant 0 : i32
    %c0_i32_0 = arith.constant 0 : i32
    %c0_i32_1 = arith.constant 0 : i32
    return %c0_i32, %c0_i32_0 : i32, i32
  }
  func.func @transform_22(%arg0: i32) -> (i32, i32) {
    %c0_i32 = arith.constant 0 : i32
    %c0_i32_0 = arith.constant 0 : i32
    %c0_i32_1 = arith.constant 0 : i32
    return %c0_i32, %c0_i32_0 : i32, i32
  }
  func.func @transform_23(%arg0: i32) -> (i32, i32) {
    %c0_i32 = arith.constant 0 : i32
    %c0_i32_0 = arith.constant 0 : i32
    %c0_i32_1 = arith.constant 0 : i32
    return %c0_i32, %c0_i32_0 : i32, i32
  }
  func.func @transform_24(%arg0: i32) -> (i32, i32) {
    %c0_i32 = arith.constant 0 : i32
    %c0_i32_0 = arith.constant 0 : i32
    %c0_i32_1 = arith.constant 0 : i32
    return %c0_i32, %c0_i32_0 : i32, i32
  }
  func.func @transform_25(%arg0: i32) -> (i32, i32) {
    %c0_i32 = arith.constant 0 : i32
    %c0_i32_0 = arith.constant 0 : i32
    %c0_i32_1 = arith.constant 0 : i32
    return %c0_i32, %c0_i32_0 : i32, i32
  }
  func.func @transform_26(%arg0: i32) -> (i32, i32) {
    %c0_i32 = arith.constant 0 : i32
    %c0_i32_0 = arith.constant 0 : i32
    %c0_i32_1 = arith.constant 0 : i32
    return %c0_i32, %c0_i32_0 : i32, i32
  }
  func.func @transform_27(%arg0: i32) -> (i32, i32) {
    %c0_i32 = arith.constant 0 : i32
    %c0_i32_0 = arith.constant 0 : i32
    %c0_i32_1 = arith.constant 0 : i32
    return %c0_i32, %c0_i32_0 : i32, i32
  }
  func.func @transform_28(%arg0: i32) -> (i32, i32) {
    %c0_i32 = arith.constant 0 : i32
    %c0_i32_0 = arith.constant 0 : i32
    %c0_i32_1 = arith.constant 0 : i32
    return %c0_i32, %c0_i32_0 : i32, i32
  }
  func.func @transform_29(%arg0: i32) -> (i32, i32) {
    %c0_i32 = arith.constant 0 : i32
    %c0_i32_0 = arith.constant 0 : i32
    %c0_i32_1 = arith.constant 0 : i32
    return %c0_i32, %c0_i32_0 : i32, i32
  }
  func.func @transform_30(%arg0: i32) -> (i32, i32) {
    %c0_i32 = arith.constant 0 : i32
    %c0_i32_0 = arith.constant 0 : i32
    %c0_i32_1 = arith.constant 0 : i32
    return %c0_i32, %c0_i32_0 : i32, i32
  }
  func.func @transform_31(%arg0: i32) -> (i32, i32) {
    %c0_i32 = arith.constant 0 : i32
    %c0_i32_0 = arith.constant 0 : i32
    %c0_i32_1 = arith.constant 0 : i32
    return %c0_i32, %c0_i32_0 : i32, i32
  }
  func.func @transform_32(%arg0: i32) -> (i32, i32) {
    %c0_i32 = arith.constant 0 : i32
    %c0_i32_0 = arith.constant 0 : i32
    %c0_i32_1 = arith.constant 0 : i32
    return %c0_i32, %c0_i32_0 : i32, i32
  }
  func.func @transform_33(%arg0: i32) -> (i32, i32) {
    %c0_i32 = arith.constant 0 : i32
    %c0_i32_0 = arith.constant 0 : i32
    %c0_i32_1 = arith.constant 0 : i32
    return %c0_i32, %c0_i32_0 : i32, i32
  }
  func.func @transform_34(%arg0: i32) -> (i32, i32) {
    %c0_i32 = arith.constant 0 : i32
    %c0_i32_0 = arith.constant 0 : i32
    %c0_i32_1 = arith.constant 0 : i32
    return %c0_i32, %c0_i32_0 : i32, i32
  }
  func.func @transform_35(%arg0: i32) -> (i32, i32) {
    %c0_i32 = arith.constant 0 : i32
    %c0_i32_0 = arith.constant 0 : i32
    %c0_i32_1 = arith.constant 0 : i32
    return %c0_i32, %c0_i32_0 : i32, i32
  }
  func.func @transform_36(%arg0: i32) -> (i32, i32) {
    %c0_i32 = arith.constant 0 : i32
    %c0_i32_0 = arith.constant 0 : i32
    %c0_i32_1 = arith.constant 0 : i32
    return %c0_i32, %c0_i32_0 : i32, i32
  }
  func.func @transform_37(%arg0: i32) -> (i32, i32) {
    %c0_i32 = arith.constant 0 : i32
    %c0_i32_0 = arith.constant 0 : i32
    %c0_i32_1 = arith.constant 0 : i32
    return %c0_i32, %c0_i32_0 : i32, i32
  }
  func.func @transform_38(%arg0: i32) -> (i32, i32) {
    %c0_i32 = arith.constant 0 : i32
    %c0_i32_0 = arith.constant 0 : i32
    %c0_i32_1 = arith.constant 0 : i32
    return %c0_i32, %c0_i32_0 : i32, i32
  }
  func.func @transform_39(%arg0: i32) -> (i32, i32) {
    %c0_i32 = arith.constant 0 : i32
    %c0_i32_0 = arith.constant 0 : i32
    %c0_i32_1 = arith.constant 0 : i32
    return %c0_i32, %c0_i32_0 : i32, i32
  }
  func.func @transform_40(%arg0: i32) -> (i32, i32) {
    %c0_i32 = arith.constant 0 : i32
    %c0_i32_0 = arith.constant 0 : i32
    %c0_i32_1 = arith.constant 0 : i32
    return %c0_i32, %c0_i32_0 : i32, i32
  }
  func.func @transform_41(%arg0: i32) -> (i32, i32) {
    %c0_i32 = arith.constant 0 : i32
    %c0_i32_0 = arith.constant 0 : i32
    %c0_i32_1 = arith.constant 0 : i32
    return %c0_i32, %c0_i32_0 : i32, i32
  }
  func.func @transform_42(%arg0: i32) -> (i32, i32) {
    %c0_i32 = arith.constant 0 : i32
    %c0_i32_0 = arith.constant 0 : i32
    %c0_i32_1 = arith.constant 0 : i32
    return %c0_i32, %c0_i32_0 : i32, i32
  }
  func.func @transform_43(%arg0: i32) -> (i32, i32) {
    %c0_i32 = arith.constant 0 : i32
    %c0_i32_0 = arith.constant 0 : i32
    %c0_i32_1 = arith.constant 0 : i32
    return %c0_i32, %c0_i32_0 : i32, i32
  }
  func.func @transform_44(%arg0: i32) -> (i32, i32) {
    %c0_i32 = arith.constant 0 : i32
    %c0_i32_0 = arith.constant 0 : i32
    %c0_i32_1 = arith.constant 0 : i32
    return %c0_i32, %c0_i32_0 : i32, i32
  }
  func.func @transform_45(%arg0: i32) -> (i32, i32) {
    %c0_i32 = arith.constant 0 : i32
    %c0_i32_0 = arith.constant 0 : i32
    %c0_i32_1 = arith.constant 0 : i32
    return %c0_i32, %c0_i32_0 : i32, i32
  }
  func.func @transform_46(%arg0: i32) -> (i32, i32, i32) {
    %c0_i32 = arith.constant 0 : i32
    %c0_i32_0 = arith.constant 0 : i32
    %c0_i32_1 = arith.constant 0 : i32
    return %arg0, %c0_i32, %c0_i32_0 : i32, i32, i32
  }
  func.func @transform_47(%arg0: i32) -> (i32, i32, i32) {
    %c0_i32 = arith.constant 0 : i32
    %c0_i32_0 = arith.constant 0 : i32
    %c0_i32_1 = arith.constant 0 : i32
    return %arg0, %c0_i32, %c0_i32_0 : i32, i32, i32
  }
}

</mosaic_0001>

<llo_original>
// kernel: tpu_custom_call.1
$region0: #{tpu_custom_call.1}
  #allocation0 [shape = 'u32[]', space=smem, size = 0x4, offset = 0x4, fixed_abs, tag = 'smem constant byte address 0x4 - core index']
  #allocation1 [shape = 'u32[144,128]{1,0:T(1,128)}', space=vmem, size = 0x12000, scoped, tag = 'internal scratch']
  %s0 = inlined_call_operand.smem [shape: u32[48], index: -1, kind: input, shape index: {}]
  %s1 = sld [smem:[%s0]]
  %s2 = scalar_lea.smem %s0, 1
  %s3 = sld [smem:[%s2]]
  %s4 = scalar_lea.smem %s0, 2
  %s5 = sld [smem:[%s4]]
  %s6 = scalar_lea.smem %s0, 3
  %s7 = sld [smem:[%s6]]
  %s8 = scalar_lea.smem %s0, 4
  %s9 = sld [smem:[%s8]]
  %s10 = scalar_lea.smem %s0, 5
  %s11 = sld [smem:[%s10]]
  %s12 = scalar_lea.smem %s0, 6
  %s13 = sld [smem:[%s12]]
  %s14 = scalar_lea.smem %s0, 7
  %s15 = sld [smem:[%s14]]
  %s16 = scalar_lea.smem %s0, 8
  %s17 = sld [smem:[%s16]]
  %s18 = scalar_lea.smem %s0, 9
  %s19 = sld [smem:[%s18]]
  %s20 = scalar_lea.smem %s0, 10
  %s21 = sld [smem:[%s20]]
  %s22 = scalar_lea.smem %s0, 11
  %s23 = sld [smem:[%s22]]
  %s24 = scalar_lea.smem %s0, 12
  %s25 = sld [smem:[%s24]]
  %s26 = scalar_lea.smem %s0, 13
  %s27 = sld [smem:[%s26]]
  %s28 = scalar_lea.smem %s0, 14
  %s29 = sld [smem:[%s28]]
  %s30 = scalar_lea.smem %s0, 15
  %s31 = sld [smem:[%s30]]
  %s32 = scalar_lea.smem %s0, 16
  %s33 = sld [smem:[%s32]]
  %s34 = scalar_lea.smem %s0, 17
  %s35 = sld [smem:[%s34]]
  %s36 = scalar_lea.smem %s0, 18
  %s37 = sld [smem:[%s36]]
  %s38 = scalar_lea.smem %s0, 19
  %s39 = sld [smem:[%s38]]
  %s40 = scalar_lea.smem %s0, 20
  %s41 = sld [smem:[%s40]]
  %s42 = scalar_lea.smem %s0, 21
  %s43 = sld [smem:[%s42]]
  %s44 = scalar_lea.smem %s0, 22
  %s45 = sld [smem:[%s44]]
  %s46 = scalar_lea.smem %s0, 23
  %s47 = sld [smem:[%s46]]
  %s48 = scalar_lea.smem %s0, 24
  %s49 = sld [smem:[%s48]]
  %s50 = scalar_lea.smem %s0, 25
  %s51 = sld [smem:[%s50]]
  %s52 = scalar_lea.smem %s0, 26
  %s53 = sld [smem:[%s52]]
  %s54 = scalar_lea.smem %s0, 27
  %s55 = sld [smem:[%s54]]
  %s56 = scalar_lea.smem %s0, 28
  %s57 = sld [smem:[%s56]]
  %s58 = scalar_lea.smem %s0, 29
  %s59 = sld [smem:[%s58]]
  %s60 = scalar_lea.smem %s0, 30
  %s61 = sld [smem:[%s60]]
  %s62 = scalar_lea.smem %s0, 31
  %s63 = sld [smem:[%s62]]
  %s64 = scalar_lea.smem %s0, 32
  %s65 = sld [smem:[%s64]]
  %s66 = scalar_lea.smem %s0, 33
  %s67 = sld [smem:[%s66]]
  %s68 = scalar_lea.smem %s0, 34
  %s69 = sld [smem:[%s68]]
  %s70 = scalar_lea.smem %s0, 35
  %s71 = sld [smem:[%s70]]
  %s72 = scalar_lea.smem %s0, 36
  %s73 = sld [smem:[%s72]]
  %s74 = scalar_lea.smem %s0, 37
  %s75 = sld [smem:[%s74]]
  %s76 = scalar_lea.smem %s0, 38
  %s77 = sld [smem:[%s76]]
  %s78 = scalar_lea.smem %s0, 39
  %s79 = sld [smem:[%s78]]
  %s80 = scalar_lea.smem %s0, 40
  %s81 = sld [smem:[%s80]]
  %s82 = scalar_lea.smem %s0, 41
  %s83 = sld [smem:[%s82]]
  %s84 = scalar_lea.smem %s0, 42
  %s85 = sld [smem:[%s84]]
  %s86 = scalar_lea.smem %s0, 43
  %s87 = sld [smem:[%s86]]
  %s88 = scalar_lea.smem %s0, 44
  %s89 = sld [smem:[%s88]]
  %s90 = scalar_lea.smem %s0, 45
  %s91 = sld [smem:[%s90]]
  %s92 = scalar_lea.smem %s0, 46
  %s93 = sld [smem:[%s92]]
  %s94 = scalar_lea.smem %s0, 47
  %s95 = sld [smem:[%s94]]
  %96 = xla_tuple %s93, %s95
  %s97 = sld [smem:[#allocation0]]
  $region357: #{tpu_custom_call.1} parent=0
    _
  %s99 = ssub.s32 1, %s97
  %s100 = scalar_select 0, %s99, %s97
  $region1: #{tpu_custom_call.1} parent=0
    #allocation2 [shape = 'u8[8192]{0}', space=vmem, size = 0x2000, scoped, tag = 'input window, operand 0']
    #allocation3 [shape = 's32[2]{0}', space=sflag, size = 0x8, scoped, tag = 'scoped memory for tpu_custom_call.1']
    #allocation4 [shape = 's32[2]{0}', space=sflag, size = 0x8, scoped, tag = 'scoped memory for tpu_custom_call.1']
    #allocation5 [shape = 'u8[8192]{0}', space=vmem, size = 0x2000, scoped, tag = 'input window, operand 1']
    #allocation6 [shape = 's32[2]{0}', space=sflag, size = 0x8, scoped, tag = 'scoped memory for tpu_custom_call.1']
    #allocation7 [shape = 'u8[8192]{0}', space=vmem, size = 0x2000, scoped, tag = 'input window, operand 2']
    #allocation8 [shape = 'u8[8192]{0}', space=vmem, size = 0x2000, scoped, tag = 'input window, operand 3']
    #allocation9 [shape = 's32[2]{0}', space=sflag, size = 0x8, scoped, tag = 'scoped memory for tpu_custom_call.1']
    #allocation10 [shape = 'u8[512]{0}', space=vmem, size = 0x400, scoped, tag = 'input window, operand 7, single buffered']
    #allocation11 [shape = 'u8[512]{0}', space=vmem, size = 0x400, scoped, tag = 'input window, operand 9, single buffered']
    #allocation12 [shape = 's32[1]{0}', space=sflag, size = 0x4, scoped, tag = 'scoped memory for tpu_custom_call.1']
    #allocation13 [shape = 'u8[1024]{0}', space=vmem, size = 0x400, scoped, tag = 'input window, operand 10, single buffered']
    #allocation14 [shape = 'u8[512]{0}', space=vmem, size = 0x400, scoped, tag = 'input window, operand 12, single buffered']
    #allocation15 [shape = 's32[1]{0}', space=sflag, size = 0x4, scoped, tag = 'scoped memory for tpu_custom_call.1']
    #allocation16 [shape = 'u8[512]{0}', space=vmem, size = 0x400, scoped, tag = 'input window, operand 14, single buffered']
    #allocation17 [shape = 'u8[16384]{0}', space=vmem, size = 0x4000, scoped, tag = 'input window, operand 15, single buffered']
    #allocation18 [shape = 's32[1]{0}', space=sflag, size = 0x4, scoped, tag = 'scoped memory for tpu_custom_call.1']
    #allocation19 [shape = 'u8[512]{0}', space=vmem, size = 0x400, scoped, tag = 'input window, operand 16, single buffered']
    #allocation20 [shape = 'u8[1024]{0}', space=vmem, size = 0x400, scoped, tag = 'input window, operand 17, single buffered']
    #allocation21 [shape = 's32[1]{0}', space=sflag, size = 0x4, scoped, tag = 'scoped memory for tpu_custom_call.1']
    #allocation22 [shape = 'u8[16384]{0}', space=vmem, size = 0x4000, scoped, tag = 'input window, operand 18, single buffered']
    #allocation23 [shape = 'u8[512]{0}', space=vmem, size = 0x400, scoped, tag = 'input window, operand 19, single buffered']
    #allocation24 [shape = 's32[1]{0}', space=sflag, size = 0x4, scoped, tag = 'scoped memory for tpu_custom_call.1']
    #allocation25 [shape = 'u8[16384]{0}', space=vmem, size = 0x4000, scoped, tag = 'input window, operand 20, single buffered']
    #allocation26 [shape = 'u8[512]{0}', space=vmem, size = 0x400, scoped, tag = 'input window, operand 21, single buffered']
    #allocation27 [shape = 's32[1]{0}', space=sflag, size = 0x4, scoped, tag = 'scoped memory for tpu_custom_call.1']
    #allocation28 [shape = 'u8[16384]{0}', space=vmem, size = 0x4000, scoped, tag = 'input window, operand 22, single buffered']
    #allocation29 [shape = 'u8[512]{0}', space=vmem, size = 0x400, scoped, tag = 'input window, operand 23, single buffered']
    #allocation30 [shape = 's32[1]{0}', space=sflag, size = 0x4, scoped, tag = 'scoped memory for tpu_custom_call.1']
    #allocation31 [shape = 'u8[16384]{0}', space=vmem, size = 0x4000, scoped, tag = 'input window, operand 24, single buffered']
    #allocation32 [shape = 'u8[512]{0}', space=vmem, size = 0x400, scoped, tag = 'input window, operand 25, single buffered']
    #allocation33 [shape = 's32[1]{0}', space=sflag, size = 0x4, scoped, tag = 'scoped memory for tpu_custom_call.1']
    #allocation34 [shape = 'u8[1024]{0}', space=vmem, size = 0x400, scoped, tag = 'input window, operand 26, single buffered']
    #allocation35 [shape = 'u8[16384]{0}', space=vmem, size = 0x4000, scoped, tag = 'input window, operand 27, single buffered']
    #allocation36 [shape = 's32[1]{0}', space=sflag, size = 0x4, scoped, tag = 'scoped memory for tpu_custom_call.1']
    #allocation37 [shape = 'u8[512]{0}', space=vmem, size = 0x400, scoped, tag = 'input window, operand 28, single buffered']
    #allocation38 [shape = 'u8[512]{0}', space=vmem, size = 0x400, scoped, tag = 'input window, operand 30, single buffered']
    #allocation39 [shape = 's32[1]{0}', space=sflag, size = 0x4, scoped, tag = 'scoped memory for tpu_custom_call.1']
    #allocation40 [shape = 'u8[1024]{0}', space=vmem, size = 0x400, scoped, tag = 'input window, operand 31, single buffered']
    #allocation41 [shape = 'u8[16384]{0}', space=vmem, size = 0x4000, scoped, tag = 'input window, operand 32, single buffered']
    #allocation42 [shape = 's32[1]{0}', space=sflag, size = 0x4, scoped, tag = 'scoped memory for tpu_custom_call.1']
    #allocation43 [shape = 'u8[512]{0}', space=vmem, size = 0x400, scoped, tag = 'input window, operand 33, single buffered']
    #allocation44 [shape = 'u8[16384]{0}', space=vmem, size = 0x4000, scoped, tag = 'input window, operand 34, single buffered']
    #allocation45 [shape = 's32[1]{0}', space=sflag, size = 0x4, scoped, tag = 'scoped memory for tpu_custom_call.1']
    #allocation46 [shape = 'u8[512]{0}', space=vmem, size = 0x400, scoped, tag = 'input window, operand 35, single buffered']
    #allocation47 [shape = 'u8[512]{0}', space=vmem, size = 0x400, scoped, tag = 'input window, operand 37, single buffered']
    #allocation48 [shape = 's32[1]{0}', space=sflag, size = 0x4, scoped, tag = 'scoped memory for tpu_custom_call.1']
    #allocation49 [shape = 'u8[16384]{0}', space=vmem, size = 0x4000, scoped, tag = 'input window, operand 38, single buffered']
    #allocation50 [shape = 'u8[512]{0}', space=vmem, size = 0x400, scoped, tag = 'input window, operand 39, single buffered']
    #allocation51 [shape = 's32[1]{0}', space=sflag, size = 0x4, scoped, tag = 'scoped memory for tpu_custom_call.1']
    #allocation52 [shape = 'u8[16384]{0}', space=vmem, size = 0x4000, scoped, tag = 'input window, operand 41, single buffered']
    #allocation53 [shape = 'u8[8192]{0}', space=vmem, size = 0x2000, scoped, tag = 'output window, operand 0']
    #allocation54 [shape = 'u8[8192]{0}', space=vmem, size = 0x2000, scoped, tag = 'output window, operand 1']
    #allocation55 [shape = 's32[2]{0}', space=sflag, size = 0x8, scoped, tag = 'scoped memory for tpu_custom_call.1']
    %101 = vsyncpa [#allocation3], 0
    %s102 = scalar_lea.sflag [#allocation3], 1
    %103 = vsyncpa %s102, 0
    %104 = vsyncpa [#allocation6], 0
    %s105 = scalar_lea.sflag [#allocation6], 1
    %106 = vsyncpa %s105, 0
    %107 = vsyncpa [#allocation9], 0
    %s108 = scalar_lea.sflag [#allocation9], 1
    %109 = vsyncpa %s108, 0
    %110 = vsyncpa [#allocation12], 0
    %111 = vsyncpa [#allocation15], 0
    %112 = vsyncpa [#allocation18], 0
    %113 = vsyncpa [#allocation21], 0
    %114 = vsyncpa [#allocation24], 0
    %115 = vsyncpa [#allocation27], 0
    %116 = vsyncpa [#allocation30], 0
    %117 = vsyncpa [#allocation33], 0
    %118 = vsyncpa [#allocation36], 0
    %119 = vsyncpa [#allocation39], 0
    %120 = vsyncpa [#allocation42], 0
    %121 = vsyncpa [#allocation45], 0
    %122 = vsyncpa [#allocation48], 0
    %123 = vsyncpa [#allocation51], 0
    %124 = vsyncpa [#allocation4], 0
    %s125 = scalar_lea.sflag [#allocation4], 1
    %126 = vsyncpa %s125, 0
    %127 = vsyncpa [#allocation55], 0
    %s128 = scalar_lea.sflag [#allocation55], 1
    %129 = vsyncpa %s128, 0
    loop: start=0, step=1, limit=4
    $region2: #{tpu_custom_call.1} parent=1 // loop_pre_header
      _
    $region3: #{tpu_custom_call.1} parent=1 // loop_header
      %s131 = sphi 0, %s135
      %p132 = scmp.ge.s32.totalorder %s131, 4
      %s141 = sphi 0, %s143
      %s144 = sphi 0, %s141
      %s145 = sphi 0, %s144
      %s161 = sphi 0, %s145
      %s167 = sphi 0, %s169
      %s170 = sphi 0, %s167
      %s171 = sphi 0, %s170
      %s187 = sphi 0, %s171
      %s193 = sphi 0, %s195
      %s196 = sphi 0, %s193
      %s197 = sphi 0, %s196
      %s213 = sphi 0, %s197
      %s219 = sphi 0, %s221
      %s222 = sphi 0, %s219
      %s223 = sphi 0, %s222
      %s239 = sphi 0, %s223
      %s243 = sphi 0, %s243
      %s245 = sphi 0, %s243
      %s246 = sphi 0, %s245
      %s260 = sphi 0, %s246
      %s264 = sphi 0, %s264
      %s266 = sphi 0, %s264
      %s267 = sphi 0, %s266
      %s281 = sphi 0, %s267
      %s285 = sphi 0, %s285
      %s287 = sphi 0, %s285
      %s288 = sphi 0, %s287
      %s302 = sphi 0, %s288
      %s306 = sphi 0, %s306
      %s308 = sphi 0, %s306
      %s309 = sphi 0, %s308
      %s323 = sphi 0, %s309
      %s327 = sphi 0, %s327
      %s329 = sphi 0, %s327
      %s330 = sphi 0, %s329
      %s344 = sphi 0, %s330
      %s348 = sphi 0, %s348
      %s350 = sphi 0, %s348
      %s351 = sphi 0, %s350
      %s365 = sphi 0, %s351
      %s369 = sphi 0, %s369
      %s371 = sphi 0, %s369
      %s372 = sphi 0, %s371
      %s386 = sphi 0, %s372
      %s390 = sphi 0, %s390
      %s392 = sphi 0, %s390
      %s393 = sphi 0, %s392
      %s407 = sphi 0, %s393
      %s411 = sphi 0, %s411
      %s413 = sphi 0, %s411
      %s414 = sphi 0, %s413
      %s428 = sphi 0, %s414
      %s432 = sphi 0, %s432
      %s434 = sphi 0, %s432
      %s435 = sphi 0, %s434
      %s449 = sphi 0, %s435
      %s453 = sphi 0, %s453
      %s455 = sphi 0, %s453
      %s456 = sphi 0, %s455
      %s470 = sphi 0, %s456
      %s474 = sphi 0, %s474
      %s476 = sphi 0, %s474
      %s477 = sphi 0, %s476
      %s491 = sphi 0, %s477
      %s495 = sphi 0, %s495
      %s497 = sphi 0, %s495
      %s498 = sphi 0, %s497
      %s512 = sphi 0, %s498
      %s516 = sphi 0, %s516
      %s518 = sphi 0, %s516
      %s519 = sphi 0, %s518
      %s533 = sphi 0, %s519
      %s537 = sphi 0, %s537
      %s539 = sphi 0, %s537
      %s540 = sphi 0, %s539
      %s554 = sphi 0, %s540
      %s558 = sphi 0, %s558
      %s560 = sphi 0, %s558
      %s561 = sphi 0, %s560
      %s575 = sphi 0, %s561
      %s579 = sphi 0, %s579
      %s581 = sphi 0, %s579
      %s582 = sphi 0, %s581
      %s596 = sphi 0, %s582
      %s600 = sphi 0, %s600
      %s602 = sphi 0, %s600
      %s603 = sphi 0, %s602
      %s617 = sphi 0, %s603
      %s621 = sphi 0, %s621
      %s623 = sphi 0, %s621
      %s624 = sphi 0, %s623
      %s638 = sphi 0, %s624
      %s642 = sphi 0, %s642
      %s644 = sphi 0, %s642
      %s645 = sphi 0, %s644
      %s659 = sphi 0, %s645
      %s663 = sphi 0, %s663
      %s665 = sphi 0, %s663
      %s666 = sphi 0, %s665
      %s680 = sphi 0, %s666
      %s684 = sphi 0, %s684
      %s686 = sphi 0, %s684
      %s687 = sphi 0, %s686
      %s701 = sphi 0, %s687
      %s705 = sphi 0, %s705
      %s707 = sphi 0, %s705
      %s708 = sphi 0, %s707
      %s722 = sphi 0, %s708
      %s726 = sphi 0, %s726
      %s728 = sphi 0, %s726
      %s729 = sphi 0, %s728
      %s743 = sphi 0, %s729
      %s747 = sphi 0, %s747
      %s749 = sphi 0, %s747
      %s750 = sphi 0, %s749
      %s764 = sphi 0, %s750
      %s768 = sphi 0, %s768
      %s770 = sphi 0, %s768
      %s771 = sphi 0, %s770
      %s785 = sphi 0, %s771
      %s789 = sphi 0, %s789
      %s791 = sphi 0, %s789
      %s792 = sphi 0, %s791
      %s806 = sphi 0, %s792
      %s810 = sphi 0, %s810
      %s812 = sphi 0, %s810
      %s813 = sphi 0, %s812
      %s827 = sphi 0, %s813
      %s831 = sphi 0, %s831
      %s833 = sphi 0, %s831
      %s834 = sphi 0, %s833
      %s848 = sphi 0, %s834
      %s852 = sphi 0, %s852
      %s854 = sphi 0, %s852
      %s855 = sphi 0, %s854
      %s869 = sphi 0, %s855
      %s873 = sphi 0, %s873
      %s875 = sphi 0, %s873
      %s876 = sphi 0, %s875
      %s890 = sphi 0, %s876
      %s894 = sphi 0, %s894
      %s896 = sphi 0, %s894
      %s897 = sphi 0, %s896
      %s911 = sphi 0, %s897
      %s915 = sphi 0, %s915
      %s917 = sphi 0, %s915
      %s918 = sphi 0, %s917
      %s932 = sphi 0, %s918
      %s936 = sphi 0, %s936
      %s938 = sphi 0, %s936
      %s939 = sphi 0, %s938
      %s953 = sphi 0, %s939
      %s957 = sphi 0, %s957
      %s959 = sphi 0, %s957
      %s960 = sphi 0, %s959
      %s974 = sphi 0, %s960
      %s978 = sphi 0, %s978
      %s980 = sphi 0, %s978
      %s981 = sphi 0, %s980
      %s995 = sphi 0, %s981
      %s999 = sphi 0, %s999
      %s1001 = sphi 0, %s999
      %s1002 = sphi 0, %s1001
      %s1016 = sphi 0, %s1002
      %s1020 = sphi 0, %s1020
      %s1022 = sphi 0, %s1020
      %s1023 = sphi 0, %s1022
      %s1037 = sphi 0, %s1023
      %s1041 = sphi 0, %s1041
      %s1043 = sphi 0, %s1041
      %s1044 = sphi 0, %s1043
      %s1058 = sphi 0, %s1044
      %s1062 = sphi 0, %s1062
      %s1064 = sphi 0, %s1062
      %s1065 = sphi 0, %s1064
      %s1079 = sphi 0, %s1065
      %s1083 = sphi 0, %s1083
      %s1085 = sphi 0, %s1083
      %s1086 = sphi 0, %s1085
      %s1100 = sphi 0, %s1086
      %s1104 = sphi 0, %s1104
      %s1106 = sphi 0, %s1104
      %s1107 = sphi 0, %s1106
      %s1121 = sphi 0, %s1107
      %s1127 = sphi 0, %s1129
      %s1130 = sphi 0, %s1127
      %s1131 = sphi 0, %s1130
      %s1147 = sphi 0, %s1131
      %s1153 = sphi 0, %s1155
      %s1156 = sphi 0, %s1153
      %s1157 = sphi 0, %s1156
      %s1173 = sphi 0, %s1157
    $region4: #{tpu_custom_call.1} parent=1 // loop_header_branch
      %134 = sbr.rel (%p132) target = $region8
    $region5: #{tpu_custom_call.1} parent=1 // loop_body
      %s136 = ssub.s32 %s131, 1
      %s137 = ssub.s32 %s131, 2
      %s138 = sadd.s32 %s131, 1
      %s139 = ssub.s32 %s131, %s138
      %p140 = scmp.eq.s32.totalorder %s139, 0
      %s142 = sadd.s32 %s141, 1
      %s143 = scalar_select %p140, %s141, %s142
      %p146 = pneg %p140
      %p147 = scmp.eq.s32.totalorder %s131, 1
      %p148 = por %p146, %p147
      %p149 = scmp.ne.s32.totalorder %s141, %s144
      %p150 = scmp.eq.s32.totalorder %s131, 0
      %p151 = por %p149, %p150
      %p152 = scmp.ne.s32.totalorder %s141, %s144
      %p153 = scmp.eq.s32.totalorder %s136, 1
      %p154 = por %p152, %p153
      %p155 = scmp.ne.s32.totalorder %s144, %s145
      %p156 = scmp.eq.s32.totalorder %s136, 0
      %p157 = por %p155, %p156
      %p158 = scmp.ne.s32.totalorder %s144, %s145
      %p159 = scmp.eq.s32.totalorder %s137, 1
      %p160 = por %p158, %p159
      %p162 = scmp.ne.s32.totalorder %s145, %s161
      %p163 = scmp.eq.s32.totalorder %s137, 0
      %p164 = por %p162, %p163
      %s165 = ssub.s32 %s131, %s138
      %p166 = scmp.eq.s32.totalorder %s165, 0
      %s168 = sadd.s32 %s167, 1
      %s169 = scalar_select %p166, %s167, %s168
      %p172 = pneg %p166
      %p173 = scmp.eq.s32.totalorder %s131, 1
      %p174 = por %p172, %p173
      %p175 = scmp.ne.s32.totalorder %s167, %s170
      %p176 = scmp.eq.s32.totalorder %s131, 0
      %p177 = por %p175, %p176
      %p178 = scmp.ne.s32.totalorder %s167, %s170
      %p179 = scmp.eq.s32.totalorder %s136, 1
      %p180 = por %p178, %p179
      %p181 = scmp.ne.s32.totalorder %s170, %s171
      %p182 = scmp.eq.s32.totalorder %s136, 0
      %p183 = por %p181, %p182
      %p184 = scmp.ne.s32.totalorder %s170, %s171
      %p185 = scmp.eq.s32.totalorder %s137, 1
      %p186 = por %p184, %p185
      %p188 = scmp.ne.s32.totalorder %s171, %s187
      %p189 = scmp.eq.s32.totalorder %s137, 0
      %p190 = por %p188, %p189
      %s191 = ssub.s32 %s131, %s138
      %p192 = scmp.eq.s32.totalorder %s191, 0
      %s194 = sadd.s32 %s193, 1
      %s195 = scalar_select %p192, %s193, %s194
      %p198 = pneg %p192
      %p199 = scmp.eq.s32.totalorder %s131, 1
      %p200 = por %p198, %p199
      %p201 = scmp.ne.s32.totalorder %s193, %s196
      %p202 = scmp.eq.s32.totalorder %s131, 0
      %p203 = por %p201, %p202
      %p204 = scmp.ne.s32.totalorder %s193, %s196
      %p205 = scmp.eq.s32.totalorder %s136, 1
      %p206 = por %p204, %p205
      %p207 = scmp.ne.s32.totalorder %s196, %s197
      %p208 = scmp.eq.s32.totalorder %s136, 0
      %p209 = por %p207, %p208
      %p210 = scmp.ne.s32.totalorder %s196, %s197
      %p211 = scmp.eq.s32.totalorder %s137, 1
      %p212 = por %p210, %p211
      %p214 = scmp.ne.s32.totalorder %s197, %s213
      %p215 = scmp.eq.s32.totalorder %s137, 0
      %p216 = por %p214, %p215
      %s217 = ssub.s32 %s131, %s138
      %p218 = scmp.eq.s32.totalorder %s217, 0
      %s220 = sadd.s32 %s219, 1
      %s221 = scalar_select %p218, %s219, %s220
      %p224 = pneg %p218
      %p225 = scmp.eq.s32.totalorder %s131, 1
      %p226 = por %p224, %p225
      %p227 = scmp.ne.s32.totalorder %s219, %s222
      %p228 = scmp.eq.s32.totalorder %s131, 0
      %p229 = por %p227, %p228
      %p230 = scmp.ne.s32.totalorder %s219, %s222
      %p231 = scmp.eq.s32.totalorder %s136, 1
      %p232 = por %p230, %p231
      %p233 = scmp.ne.s32.totalorder %s222, %s223
      %p234 = scmp.eq.s32.totalorder %s136, 0
      %p235 = por %p233, %p234
      %p236 = scmp.ne.s32.totalorder %s222, %s223
      %p237 = scmp.eq.s32.totalorder %s137, 1
      %p238 = por %p236, %p237
      %p240 = scmp.ne.s32.totalorder %s223, %s239
      %p241 = scmp.eq.s32.totalorder %s137, 0
      %p242 = por %p240, %p241
      %s244 = sadd.s32 %s243, 1
      %p247 = scmp.eq.s32.totalorder %s131, 1
      %p248 = scmp.ne.s32.totalorder %s243, %s245
      %p249 = scmp.eq.s32.totalorder %s131, 0
      %p250 = por %p248, %p249
      %p251 = scmp.ne.s32.totalorder %s243, %s245
      %p252 = scmp.eq.s32.totalorder %s136, 1
      %p253 = por %p251, %p252
      %p254 = scmp.ne.s32.totalorder %s245, %s246
      %p255 = scmp.eq.s32.totalorder %s136, 0
      %p256 = por %p254, %p255
      %p257 = scmp.ne.s32.totalorder %s245, %s246
      %p258 = scmp.eq.s32.totalorder %s137, 1
      %p259 = por %p257, %p258
      %p261 = scmp.ne.s32.totalorder %s246, %s260
      %p262 = scmp.eq.s32.totalorder %s137, 0
      %p263 = por %p261, %p262
      %s265 = sadd.s32 %s264, 1
      %p268 = scmp.eq.s32.totalorder %s131, 1
      %p269 = scmp.ne.s32.totalorder %s264, %s266
      %p270 = scmp.eq.s32.totalorder %s131, 0
      %p271 = por %p269, %p270
      %p272 = scmp.ne.s32.totalorder %s264, %s266
      %p273 = scmp.eq.s32.totalorder %s136, 1
      %p274 = por %p272, %p273
      %p275 = scmp.ne.s32.totalorder %s266, %s267
      %p276 = scmp.eq.s32.totalorder %s136, 0
      %p277 = por %p275, %p276
      %p278 = scmp.ne.s32.totalorder %s266, %s267
      %p279 = scmp.eq.s32.totalorder %s137, 1
      %p280 = por %p278, %p279
      %p282 = scmp.ne.s32.totalorder %s267, %s281
      %p283 = scmp.eq.s32.totalorder %s137, 0
      %p284 = por %p282, %p283
      %s286 = sadd.s32 %s285, 1
      %p289 = scmp.eq.s32.totalorder %s131, 1
      %p290 = scmp.ne.s32.totalorder %s285, %s287
      %p291 = scmp.eq.s32.totalorder %s131, 0
      %p292 = por %p290, %p291
      %p293 = scmp.ne.s32.totalorder %s285, %s287
      %p294 = scmp.eq.s32.totalorder %s136, 1
      %p295 = por %p293, %p294
      %p296 = scmp.ne.s32.totalorder %s287, %s288
      %p297 = scmp.eq.s32.totalorder %s136, 0
      %p298 = por %p296, %p297
      %p299 = scmp.ne.s32.totalorder %s287, %s288
      %p300 = scmp.eq.s32.totalorder %s137, 1
      %p301 = por %p299, %p300
      %p303 = scmp.ne.s32.totalorder %s288, %s302
      %p304 = scmp.eq.s32.totalorder %s137, 0
      %p305 = por %p303, %p304
      %s307 = sadd.s32 %s306, 1
      %p310 = scmp.eq.s32.totalorder %s131, 1
      %p311 = scmp.ne.s32.totalorder %s306, %s308
      %p312 = scmp.eq.s32.totalorder %s131, 0
      %p313 = por %p311, %p312
      %p314 = scmp.ne.s32.totalorder %s306, %s308
      %p315 = scmp.eq.s32.totalorder %s136, 1
      %p316 = por %p314, %p315
      %p317 = scmp.ne.s32.totalorder %s308, %s309
      %p318 = scmp.eq.s32.totalorder %s136, 0
      %p319 = por %p317, %p318
      %p320 = scmp.ne.s32.totalorder %s308, %s309
      %p321 = scmp.eq.s32.totalorder %s137, 1
      %p322 = por %p320, %p321
      %p324 = scmp.ne.s32.totalorder %s309, %s323
      %p325 = scmp.eq.s32.totalorder %s137, 0
      %p326 = por %p324, %p325
      %s328 = sadd.s32 %s327, 1
      %p331 = scmp.eq.s32.totalorder %s131, 1
      %p332 = scmp.ne.s32.totalorder %s327, %s329
      %p333 = scmp.eq.s32.totalorder %s131, 0
      %p334 = por %p332, %p333
      %p335 = scmp.ne.s32.totalorder %s327, %s329
      %p336 = scmp.eq.s32.totalorder %s136, 1
      %p337 = por %p335, %p336
      %p338 = scmp.ne.s32.totalorder %s329, %s330
      %p339 = scmp.eq.s32.totalorder %s136, 0
      %p340 = por %p338, %p339
      %p341 = scmp.ne.s32.totalorder %s329, %s330
      %p342 = scmp.eq.s32.totalorder %s137, 1
      %p343 = por %p341, %p342
      %p345 = scmp.ne.s32.totalorder %s330, %s344
      %p346 = scmp.eq.s32.totalorder %s137, 0
      %p347 = por %p345, %p346
      %s349 = sadd.s32 %s348, 1
      %p352 = scmp.eq.s32.totalorder %s131, 1
      %p353 = scmp.ne.s32.totalorder %s348, %s350
      %p354 = scmp.eq.s32.totalorder %s131, 0
      %p355 = por %p353, %p354
      %p356 = scmp.ne.s32.totalorder %s348, %s350
      %p357 = scmp.eq.s32.totalorder %s136, 1
      %p358 = por %p356, %p357
      %p359 = scmp.ne.s32.totalorder %s350, %s351
      %p360 = scmp.eq.s32.totalorder %s136, 0
      %p361 = por %p359, %p360
      %p362 = scmp.ne.s32.totalorder %s350, %s351
      %p363 = scmp.eq.s32.totalorder %s137, 1
      %p364 = por %p362, %p363
      %p366 = scmp.ne.s32.totalorder %s351, %s365
      %p367 = scmp.eq.s32.totalorder %s137, 0
      %p368 = por %p366, %p367
      %s370 = sadd.s32 %s369, 1
      %p373 = scmp.eq.s32.totalorder %s131, 1
      %p374 = scmp.ne.s32.totalorder %s369, %s371
      %p375 = scmp.eq.s32.totalorder %s131, 0
      %p376 = por %p374, %p375
      %p377 = scmp.ne.s32.totalorder %s369, %s371
      %p378 = scmp.eq.s32.totalorder %s136, 1
      %p379 = por %p377, %p378
      %p380 = scmp.ne.s32.totalorder %s371, %s372
      %p381 = scmp.eq.s32.totalorder %s136, 0
      %p382 = por %p380, %p381
      %p383 = scmp.ne.s32.totalorder %s371, %s372
      %p384 = scmp.eq.s32.totalorder %s137, 1
      %p385 = por %p383, %p384
      %p387 = scmp.ne.s32.totalorder %s372, %s386
      %p388 = scmp.eq.s32.totalorder %s137, 0
      %p389 = por %p387, %p388
      %s391 = sadd.s32 %s390, 1
      %p394 = scmp.eq.s32.totalorder %s131, 1
      %p395 = scmp.ne.s32.totalorder %s390, %s392
      %p396 = scmp.eq.s32.totalorder %s131, 0
      %p397 = por %p395, %p396
      %p398 = scmp.ne.s32.totalorder %s390, %s392
      %p399 = scmp.eq.s32.totalorder %s136, 1
      %p400 = por %p398, %p399
      %p401 = scmp.ne.s32.totalorder %s392, %s393
      %p402 = scmp.eq.s32.totalorder %s136, 0
      %p403 = por %p401, %p402
      %p404 = scmp.ne.s32.totalorder %s392, %s393
      %p405 = scmp.eq.s32.totalorder %s137, 1
      %p406 = por %p404, %p405
      %p408 = scmp.ne.s32.totalorder %s393, %s407
      %p409 = scmp.eq.s32.totalorder %s137, 0
      %p410 = por %p408, %p409
      %s412 = sadd.s32 %s411, 1
      %p415 = scmp.eq.s32.totalorder %s131, 1
      %p416 = scmp.ne.s32.totalorder %s411, %s413
      %p417 = scmp.eq.s32.totalorder %s131, 0
      %p418 = por %p416, %p417
      %p419 = scmp.ne.s32.totalorder %s411, %s413
      %p420 = scmp.eq.s32.totalorder %s136, 1
      %p421 = por %p419, %p420
      %p422 = scmp.ne.s32.totalorder %s413, %s414
      %p423 = scmp.eq.s32.totalorder %s136, 0
      %p424 = por %p422, %p423
      %p425 = scmp.ne.s32.totalorder %s413, %s414
      %p426 = scmp.eq.s32.totalorder %s137, 1
      %p427 = por %p425, %p426
      %p429 = scmp.ne.s32.totalorder %s414, %s428
      %p430 = scmp.eq.s32.totalorder %s137, 0
      %p431 = por %p429, %p430
      %s433 = sadd.s32 %s432, 1
      %p436 = scmp.eq.s32.totalorder %s131, 1
      %p437 = scmp.ne.s32.totalorder %s432, %s434
      %p438 = scmp.eq.s32.totalorder %s131, 0
      %p439 = por %p437, %p438
      %p440 = scmp.ne.s32.totalorder %s432, %s434
      %p441 = scmp.eq.s32.totalorder %s136, 1
      %p442 = por %p440, %p441
      %p443 = scmp.ne.s32.totalorder %s434, %s435
      %p444 = scmp.eq.s32.totalorder %s136, 0
      %p445 = por %p443, %p444
      %p446 = scmp.ne.s32.totalorder %s434, %s435
      %p447 = scmp.eq.s32.totalorder %s137, 1
      %p448 = por %p446, %p447
      %p450 = scmp.ne.s32.totalorder %s435, %s449
      %p451 = scmp.eq.s32.totalorder %s137, 0
      %p452 = por %p450, %p451
      %s454 = sadd.s32 %s453, 1
      %p457 = scmp.eq.s32.totalorder %s131, 1
      %p458 = scmp.ne.s32.totalorder %s453, %s455
      %p459 = scmp.eq.s32.totalorder %s131, 0
      %p460 = por %p458, %p459
      %p461 = scmp.ne.s32.totalorder %s453, %s455
      %p462 = scmp.eq.s32.totalorder %s136, 1
      %p463 = por %p461, %p462
      %p464 = scmp.ne.s32.totalorder %s455, %s456
      %p465 = scmp.eq.s32.totalorder %s136, 0
      %p466 = por %p464, %p465
      %p467 = scmp.ne.s32.totalorder %s455, %s456
      %p468 = scmp.eq.s32.totalorder %s137, 1
      %p469 = por %p467, %p468
      %p471 = scmp.ne.s32.totalorder %s456, %s470
      %p472 = scmp.eq.s32.totalorder %s137, 0
      %p473 = por %p471, %p472
      %s475 = sadd.s32 %s474, 1
      %p478 = scmp.eq.s32.totalorder %s131, 1
      %p479 = scmp.ne.s32.totalorder %s474, %s476
      %p480 = scmp.eq.s32.totalorder %s131, 0
      %p481 = por %p479, %p480
      %p482 = scmp.ne.s32.totalorder %s474, %s476
      %p483 = scmp.eq.s32.totalorder %s136, 1
      %p484 = por %p482, %p483
      %p485 = scmp.ne.s32.totalorder %s476, %s477
      %p486 = scmp.eq.s32.totalorder %s136, 0
      %p487 = por %p485, %p486
      %p488 = scmp.ne.s32.totalorder %s476, %s477
      %p489 = scmp.eq.s32.totalorder %s137, 1
      %p490 = por %p488, %p489
      %p492 = scmp.ne.s32.totalorder %s477, %s491
      %p493 = scmp.eq.s32.totalorder %s137, 0
      %p494 = por %p492, %p493
      %s496 = sadd.s32 %s495, 1
      %p499 = scmp.eq.s32.totalorder %s131, 1
      %p500 = scmp.ne.s32.totalorder %s495, %s497
      %p501 = scmp.eq.s32.totalorder %s131, 0
      %p502 = por %p500, %p501
      %p503 = scmp.ne.s32.totalorder %s495, %s497
      %p504 = scmp.eq.s32.totalorder %s136, 1
      %p505 = por %p503, %p504
      %p506 = scmp.ne.s32.totalorder %s497, %s498
      %p507 = scmp.eq.s32.totalorder %s136, 0
      %p508 = por %p506, %p507
      %p509 = scmp.ne.s32.totalorder %s497, %s498
      %p510 = scmp.eq.s32.totalorder %s137, 1
      %p511 = por %p509, %p510
      %p513 = scmp.ne.s32.totalorder %s498, %s512
      %p514 = scmp.eq.s32.totalorder %s137, 0
      %p515 = por %p513, %p514
      %s517 = sadd.s32 %s516, 1
      %p520 = scmp.eq.s32.totalorder %s131, 1
      %p521 = scmp.ne.s32.totalorder %s516, %s518
      %p522 = scmp.eq.s32.totalorder %s131, 0
      %p523 = por %p521, %p522
      %p524 = scmp.ne.s32.totalorder %s516, %s518
      %p525 = scmp.eq.s32.totalorder %s136, 1
      %p526 = por %p524, %p525
      %p527 = scmp.ne.s32.totalorder %s518, %s519
      %p528 = scmp.eq.s32.totalorder %s136, 0
      %p529 = por %p527, %p528
      %p530 = scmp.ne.s32.totalorder %s518, %s519
      %p531 = scmp.eq.s32.totalorder %s137, 1
      %p532 = por %p530, %p531
      %p534 = scmp.ne.s32.totalorder %s519, %s533
      %p535 = scmp.eq.s32.totalorder %s137, 0
      %p536 = por %p534, %p535
      %s538 = sadd.s32 %s537, 1
      %p541 = scmp.eq.s32.totalorder %s131, 1
      %p542 = scmp.ne.s32.totalorder %s537, %s539
      %p543 = scmp.eq.s32.totalorder %s131, 0
      %p544 = por %p542, %p543
      %p545 = scmp.ne.s32.totalorder %s537, %s539
      %p546 = scmp.eq.s32.totalorder %s136, 1
      %p547 = por %p545, %p546
      %p548 = scmp.ne.s32.totalorder %s539, %s540
      %p549 = scmp.eq.s32.totalorder %s136, 0
      %p550 = por %p548, %p549
      %p551 = scmp.ne.s32.totalorder %s539, %s540
      %p552 = scmp.eq.s32.totalorder %s137, 1
      %p553 = por %p551, %p552
      %p555 = scmp.ne.s32.totalorder %s540, %s554
      %p556 = scmp.eq.s32.totalorder %s137, 0
      %p557 = por %p555, %p556
      %s559 = sadd.s32 %s558, 1
      %p562 = scmp.eq.s32.totalorder %s131, 1
      %p563 = scmp.ne.s32.totalorder %s558, %s560
      %p564 = scmp.eq.s32.totalorder %s131, 0
      %p565 = por %p563, %p564
      %p566 = scmp.ne.s32.totalorder %s558, %s560
      %p567 = scmp.eq.s32.totalorder %s136, 1
      %p568 = por %p566, %p567
      %p569 = scmp.ne.s32.totalorder %s560, %s561
      %p570 = scmp.eq.s32.totalorder %s136, 0
      %p571 = por %p569, %p570
      %p572 = scmp.ne.s32.totalorder %s560, %s561
      %p573 = scmp.eq.s32.totalorder %s137, 1
      %p574 = por %p572, %p573
      %p576 = scmp.ne.s32.totalorder %s561, %s575
      %p577 = scmp.eq.s32.totalorder %s137, 0
      %p578 = por %p576, %p577
      %s580 = sadd.s32 %s579, 1
      %p583 = scmp.eq.s32.totalorder %s131, 1
      %p584 = scmp.ne.s32.totalorder %s579, %s581
      %p585 = scmp.eq.s32.totalorder %s131, 0
      %p586 = por %p584, %p585
      %p587 = scmp.ne.s32.totalorder %s579, %s581
      %p588 = scmp.eq.s32.totalorder %s136, 1
      %p589 = por %p587, %p588
      %p590 = scmp.ne.s32.totalorder %s581, %s582
      %p591 = scmp.eq.s32.totalorder %s136, 0
      %p592 = por %p590, %p591
      %p593 = scmp.ne.s32.totalorder %s581, %s582
      %p594 = scmp.eq.s32.totalorder %s137, 1
      %p595 = por %p593, %p594
      %p597 = scmp.ne.s32.totalorder %s582, %s596
      %p598 = scmp.eq.s32.totalorder %s137, 0
      %p599 = por %p597, %p598
      %s601 = sadd.s32 %s600, 1
      %p604 = scmp.eq.s32.totalorder %s131, 1
      %p605 = scmp.ne.s32.totalorder %s600, %s602
      %p606 = scmp.eq.s32.totalorder %s131, 0
      %p607 = por %p605, %p606
      %p608 = scmp.ne.s32.totalorder %s600, %s602
      %p609 = scmp.eq.s32.totalorder %s136, 1
      %p610 = por %p608, %p609
      %p611 = scmp.ne.s32.totalorder %s602, %s603
      %p612 = scmp.eq.s32.totalorder %s136, 0
      %p613 = por %p611, %p612
      %p614 = scmp.ne.s32.totalorder %s602, %s603
      %p615 = scmp.eq.s32.totalorder %s137, 1
      %p616 = por %p614, %p615
      %p618 = scmp.ne.s32.totalorder %s603, %s617
      %p619 = scmp.eq.s32.totalorder %s137, 0
      %p620 = por %p618, %p619
      %s622 = sadd.s32 %s621, 1
      %p625 = scmp.eq.s32.totalorder %s131, 1
      %p626 = scmp.ne.s32.totalorder %s621, %s623
      %p627 = scmp.eq.s32.totalorder %s131, 0
      %p628 = por %p626, %p627
      %p629 = scmp.ne.s32.totalorder %s621, %s623
      %p630 = scmp.eq.s32.totalorder %s136, 1
      %p631 = por %p629, %p630
      %p632 = scmp.ne.s32.totalorder %s623, %s624
      %p633 = scmp.eq.s32.totalorder %s136, 0
      %p634 = por %p632, %p633
      %p635 = scmp.ne.s32.totalorder %s623, %s624
      %p636 = scmp.eq.s32.totalorder %s137, 1
      %p637 = por %p635, %p636
      %p639 = scmp.ne.s32.totalorder %s624, %s638
      %p640 = scmp.eq.s32.totalorder %s137, 0
      %p641 = por %p639, %p640
      %s643 = sadd.s32 %s642, 1
      %p646 = scmp.eq.s32.totalorder %s131, 1
      %p647 = scmp.ne.s32.totalorder %s642, %s644
      %p648 = scmp.eq.s32.totalorder %s131, 0
      %p649 = por %p647, %p648
      %p650 = scmp.ne.s32.totalorder %s642, %s644
      %p651 = scmp.eq.s32.totalorder %s136, 1
      %p652 = por %p650, %p651
      %p653 = scmp.ne.s32.totalorder %s644, %s645
      %p654 = scmp.eq.s32.totalorder %s136, 0
      %p655 = por %p653, %p654
      %p656 = scmp.ne.s32.totalorder %s644, %s645
      %p657 = scmp.eq.s32.totalorder %s137, 1
      %p658 = por %p656, %p657
      %p660 = scmp.ne.s32.totalorder %s645, %s659
      %p661 = scmp.eq.s32.totalorder %s137, 0
      %p662 = por %p660, %p661
      %s664 = sadd.s32 %s663, 1
      %p667 = scmp.eq.s32.totalorder %s131, 1
      %p668 = scmp.ne.s32.totalorder %s663, %s665
      %p669 = scmp.eq.s32.totalorder %s131, 0
      %p670 = por %p668, %p669
      %p671 = scmp.ne.s32.totalorder %s663, %s665
      %p672 = scmp.eq.s32.totalorder %s136, 1
      %p673 = por %p671, %p672
      %p674 = scmp.ne.s32.totalorder %s665, %s666
      %p675 = scmp.eq.s32.totalorder %s136, 0
      %p676 = por %p674, %p675
      %p677 = scmp.ne.s32.totalorder %s665, %s666
      %p678 = scmp.eq.s32.totalorder %s137, 1
      %p679 = por %p677, %p678
      %p681 = scmp.ne.s32.totalorder %s666, %s680
      %p682 = scmp.eq.s32.totalorder %s137, 0
      %p683 = por %p681, %p682
      %s685 = sadd.s32 %s684, 1
      %p688 = scmp.eq.s32.totalorder %s131, 1
      %p689 = scmp.ne.s32.totalorder %s684, %s686
      %p690 = scmp.eq.s32.totalorder %s131, 0
      %p691 = por %p689, %p690
      %p692 = scmp.ne.s32.totalorder %s684, %s686
      %p693 = scmp.eq.s32.totalorder %s136, 1
      %p694 = por %p692, %p693
      %p695 = scmp.ne.s32.totalorder %s686, %s687
      %p696 = scmp.eq.s32.totalorder %s136, 0
      %p697 = por %p695, %p696
      %p698 = scmp.ne.s32.totalorder %s686, %s687
      %p699 = scmp.eq.s32.totalorder %s137, 1
      %p700 = por %p698, %p699
      %p702 = scmp.ne.s32.totalorder %s687, %s701
      %p703 = scmp.eq.s32.totalorder %s137, 0
      %p704 = por %p702, %p703
      %s706 = sadd.s32 %s705, 1
      %p709 = scmp.eq.s32.totalorder %s131, 1
      %p710 = scmp.ne.s32.totalorder %s705, %s707
      %p711 = scmp.eq.s32.totalorder %s131, 0
      %p712 = por %p710, %p711
      %p713 = scmp.ne.s32.totalorder %s705, %s707
      %p714 = scmp.eq.s32.totalorder %s136, 1
      %p715 = por %p713, %p714
      %p716 = scmp.ne.s32.totalorder %s707, %s708
      %p717 = scmp.eq.s32.totalorder %s136, 0
      %p718 = por %p716, %p717
      %p719 = scmp.ne.s32.totalorder %s707, %s708
      %p720 = scmp.eq.s32.totalorder %s137, 1
      %p721 = por %p719, %p720
      %p723 = scmp.ne.s32.totalorder %s708, %s722
      %p724 = scmp.eq.s32.totalorder %s137, 0
      %p725 = por %p723, %p724
      %s727 = sadd.s32 %s726, 1
      %p730 = scmp.eq.s32.totalorder %s131, 1
      %p731 = scmp.ne.s32.totalorder %s726, %s728
      %p732 = scmp.eq.s32.totalorder %s131, 0
      %p733 = por %p731, %p732
      %p734 = scmp.ne.s32.totalorder %s726, %s728
      %p735 = scmp.eq.s32.totalorder %s136, 1
      %p736 = por %p734, %p735
      %p737 = scmp.ne.s32.totalorder %s728, %s729
      %p738 = scmp.eq.s32.totalorder %s136, 0
      %p739 = por %p737, %p738
      %p740 = scmp.ne.s32.totalorder %s728, %s729
      %p741 = scmp.eq.s32.totalorder %s137, 1
      %p742 = por %p740, %p741
      %p744 = scmp.ne.s32.totalorder %s729, %s743
      %p745 = scmp.eq.s32.totalorder %s137, 0
      %p746 = por %p744, %p745
      %s748 = sadd.s32 %s747, 1
      %p751 = scmp.eq.s32.totalorder %s131, 1
      %p752 = scmp.ne.s32.totalorder %s747, %s749
      %p753 = scmp.eq.s32.totalorder %s131, 0
      %p754 = por %p752, %p753
      %p755 = scmp.ne.s32.totalorder %s747, %s749
      %p756 = scmp.eq.s32.totalorder %s136, 1
      %p757 = por %p755, %p756
      %p758 = scmp.ne.s32.totalorder %s749, %s750
      %p759 = scmp.eq.s32.totalorder %s136, 0
      %p760 = por %p758, %p759
      %p761 = scmp.ne.s32.totalorder %s749, %s750
      %p762 = scmp.eq.s32.totalorder %s137, 1
      %p763 = por %p761, %p762
      %p765 = scmp.ne.s32.totalorder %s750, %s764
      %p766 = scmp.eq.s32.totalorder %s137, 0
      %p767 = por %p765, %p766
      %s769 = sadd.s32 %s768, 1
      %p772 = scmp.eq.s32.totalorder %s131, 1
      %p773 = scmp.ne.s32.totalorder %s768, %s770
      %p774 = scmp.eq.s32.totalorder %s131, 0
      %p775 = por %p773, %p774
      %p776 = scmp.ne.s32.totalorder %s768, %s770
      %p777 = scmp.eq.s32.totalorder %s136, 1
      %p778 = por %p776, %p777
      %p779 = scmp.ne.s32.totalorder %s770, %s771
      %p780 = scmp.eq.s32.totalorder %s136, 0
      %p781 = por %p779, %p780
      %p782 = scmp.ne.s32.totalorder %s770, %s771
      %p783 = scmp.eq.s32.totalorder %s137, 1
      %p784 = por %p782, %p783
      %p786 = scmp.ne.s32.totalorder %s771, %s785
      %p787 = scmp.eq.s32.totalorder %s137, 0
      %p788 = por %p786, %p787
      %s790 = sadd.s32 %s789, 1
      %p793 = scmp.eq.s32.totalorder %s131, 1
      %p794 = scmp.ne.s32.totalorder %s789, %s791
      %p795 = scmp.eq.s32.totalorder %s131, 0
      %p796 = por %p794, %p795
      %p797 = scmp.ne.s32.totalorder %s789, %s791
      %p798 = scmp.eq.s32.totalorder %s136, 1
      %p799 = por %p797, %p798
      %p800 = scmp.ne.s32.totalorder %s791, %s792
      %p801 = scmp.eq.s32.totalorder %s136, 0
      %p802 = por %p800, %p801
      %p803 = scmp.ne.s32.totalorder %s791, %s792
      %p804 = scmp.eq.s32.totalorder %s137, 1
      %p805 = por %p803, %p804
      %p807 = scmp.ne.s32.totalorder %s792, %s806
      %p808 = scmp.eq.s32.totalorder %s137, 0
      %p809 = por %p807, %p808
      %s811 = sadd.s32 %s810, 1
      %p814 = scmp.eq.s32.totalorder %s131, 1
      %p815 = scmp.ne.s32.totalorder %s810, %s812
      %p816 = scmp.eq.s32.totalorder %s131, 0
      %p817 = por %p815, %p816
      %p818 = scmp.ne.s32.totalorder %s810, %s812
      %p819 = scmp.eq.s32.totalorder %s136, 1
      %p820 = por %p818, %p819
      %p821 = scmp.ne.s32.totalorder %s812, %s813
      %p822 = scmp.eq.s32.totalorder %s136, 0
      %p823 = por %p821, %p822
      %p824 = scmp.ne.s32.totalorder %s812, %s813
      %p825 = scmp.eq.s32.totalorder %s137, 1
      %p826 = por %p824, %p825
      %p828 = scmp.ne.s32.totalorder %s813, %s827
      %p829 = scmp.eq.s32.totalorder %s137, 0
      %p830 = por %p828, %p829
      %s832 = sadd.s32 %s831, 1
      %p835 = scmp.eq.s32.totalorder %s131, 1
      %p836 = scmp.ne.s32.totalorder %s831, %s833
      %p837 = scmp.eq.s32.totalorder %s131, 0
      %p838 = por %p836, %p837
      %p839 = scmp.ne.s32.totalorder %s831, %s833
      %p840 = scmp.eq.s32.totalorder %s136, 1
      %p841 = por %p839, %p840
      %p842 = scmp.ne.s32.totalorder %s833, %s834
      %p843 = scmp.eq.s32.totalorder %s136, 0
      %p844 = por %p842, %p843
      %p845 = scmp.ne.s32.totalorder %s833, %s834
      %p846 = scmp.eq.s32.totalorder %s137, 1
      %p847 = por %p845, %p846
      %p849 = scmp.ne.s32.totalorder %s834, %s848
      %p850 = scmp.eq.s32.totalorder %s137, 0
      %p851 = por %p849, %p850
      %s853 = sadd.s32 %s852, 1
      %p856 = scmp.eq.s32.totalorder %s131, 1
      %p857 = scmp.ne.s32.totalorder %s852, %s854
      %p858 = scmp.eq.s32.totalorder %s131, 0
      %p859 = por %p857, %p858
      %p860 = scmp.ne.s32.totalorder %s852, %s854
      %p861 = scmp.eq.s32.totalorder %s136, 1
      %p862 = por %p860, %p861
      %p863 = scmp.ne.s32.totalorder %s854, %s855
      %p864 = scmp.eq.s32.totalorder %s136, 0
      %p865 = por %p863, %p864
      %p866 = scmp.ne.s32.totalorder %s854, %s855
      %p867 = scmp.eq.s32.totalorder %s137, 1
      %p868 = por %p866, %p867
      %p870 = scmp.ne.s32.totalorder %s855, %s869
      %p871 = scmp.eq.s32.totalorder %s137, 0
      %p872 = por %p870, %p871
      %s874 = sadd.s32 %s873, 1
      %p877 = scmp.eq.s32.totalorder %s131, 1
      %p878 = scmp.ne.s32.totalorder %s873, %s875
      %p879 = scmp.eq.s32.totalorder %s131, 0
      %p880 = por %p878, %p879
      %p881 = scmp.ne.s32.totalorder %s873, %s875
      %p882 = scmp.eq.s32.totalorder %s136, 1
      %p883 = por %p881, %p882
      %p884 = scmp.ne.s32.totalorder %s875, %s876
      %p885 = scmp.eq.s32.totalorder %s136, 0
      %p886 = por %p884, %p885
      %p887 = scmp.ne.s32.totalorder %s875, %s876
      %p888 = scmp.eq.s32.totalorder %s137, 1
      %p889 = por %p887, %p888
      %p891 = scmp.ne.s32.totalorder %s876, %s890
      %p892 = scmp.eq.s32.totalorder %s137, 0
      %p893 = por %p891, %p892
      %s895 = sadd.s32 %s894, 1
      %p898 = scmp.eq.s32.totalorder %s131, 1
      %p899 = scmp.ne.s32.totalorder %s894, %s896
      %p900 = scmp.eq.s32.totalorder %s131, 0
      %p901 = por %p899, %p900
      %p902 = scmp.ne.s32.totalorder %s894, %s896
      %p903 = scmp.eq.s32.totalorder %s136, 1
      %p904 = por %p902, %p903
      %p905 = scmp.ne.s32.totalorder %s896, %s897
      %p906 = scmp.eq.s32.totalorder %s136, 0
      %p907 = por %p905, %p906
      %p908 = scmp.ne.s32.totalorder %s896, %s897
      %p909 = scmp.eq.s32.totalorder %s137, 1
      %p910 = por %p908, %p909
      %p912 = scmp.ne.s32.totalorder %s897, %s911
      %p913 = scmp.eq.s32.totalorder %s137, 0
      %p914 = por %p912, %p913
      %s916 = sadd.s32 %s915, 1
      %p919 = scmp.eq.s32.totalorder %s131, 1
      %p920 = scmp.ne.s32.totalorder %s915, %s917
      %p921 = scmp.eq.s32.totalorder %s131, 0
      %p922 = por %p920, %p921
      %p923 = scmp.ne.s32.totalorder %s915, %s917
      %p924 = scmp.eq.s32.totalorder %s136, 1
      %p925 = por %p923, %p924
      %p926 = scmp.ne.s32.totalorder %s917, %s918
      %p927 = scmp.eq.s32.totalorder %s136, 0
      %p928 = por %p926, %p927
      %p929 = scmp.ne.s32.totalorder %s917, %s918
      %p930 = scmp.eq.s32.totalorder %s137, 1
      %p931 = por %p929, %p930
      %p933 = scmp.ne.s32.totalorder %s918, %s932
      %p934 = scmp.eq.s32.totalorder %s137, 0
      %p935 = por %p933, %p934
      %s937 = sadd.s32 %s936, 1
      %p940 = scmp.eq.s32.totalorder %s131, 1
      %p941 = scmp.ne.s32.totalorder %s936, %s938
      %p942 = scmp.eq.s32.totalorder %s131, 0
      %p943 = por %p941, %p942
      %p944 = scmp.ne.s32.totalorder %s936, %s938
      %p945 = scmp.eq.s32.totalorder %s136, 1
      %p946 = por %p944, %p945
      %p947 = scmp.ne.s32.totalorder %s938, %s939
      %p948 = scmp.eq.s32.totalorder %s136, 0
      %p949 = por %p947, %p948
      %p950 = scmp.ne.s32.totalorder %s938, %s939
      %p951 = scmp.eq.s32.totalorder %s137, 1
      %p952 = por %p950, %p951
      %p954 = scmp.ne.s32.totalorder %s939, %s953
      %p955 = scmp.eq.s32.totalorder %s137, 0
      %p956 = por %p954, %p955
      %s958 = sadd.s32 %s957, 1
      %p961 = scmp.eq.s32.totalorder %s131, 1
      %p962 = scmp.ne.s32.totalorder %s957, %s959
      %p963 = scmp.eq.s32.totalorder %s131, 0
      %p964 = por %p962, %p963
      %p965 = scmp.ne.s32.totalorder %s957, %s959
      %p966 = scmp.eq.s32.totalorder %s136, 1
      %p967 = por %p965, %p966
      %p968 = scmp.ne.s32.totalorder %s959, %s960
      %p969 = scmp.eq.s32.totalorder %s136, 0
      %p970 = por %p968, %p969
      %p971 = scmp.ne.s32.totalorder %s959, %s960
      %p972 = scmp.eq.s32.totalorder %s137, 1
      %p973 = por %p971, %p972
      %p975 = scmp.ne.s32.totalorder %s960, %s974
      %p976 = scmp.eq.s32.totalorder %s137, 0
      %p977 = por %p975, %p976
      %s979 = sadd.s32 %s978, 1
      %p982 = scmp.eq.s32.totalorder %s131, 1
      %p983 = scmp.ne.s32.totalorder %s978, %s980
      %p984 = scmp.eq.s32.totalorder %s131, 0
      %p985 = por %p983, %p984
      %p986 = scmp.ne.s32.totalorder %s978, %s980
      %p987 = scmp.eq.s32.totalorder %s136, 1
      %p988 = por %p986, %p987
      %p989 = scmp.ne.s32.totalorder %s980, %s981
      %p990 = scmp.eq.s32.totalorder %s136, 0
      %p991 = por %p989, %p990
      %p992 = scmp.ne.s32.totalorder %s980, %s981
      %p993 = scmp.eq.s32.totalorder %s137, 1
      %p994 = por %p992, %p993
      %p996 = scmp.ne.s32.totalorder %s981, %s995
      %p997 = scmp.eq.s32.totalorder %s137, 0
      %p998 = por %p996, %p997
      %s1000 = sadd.s32 %s999, 1
      %p1003 = scmp.eq.s32.totalorder %s131, 1
      %p1004 = scmp.ne.s32.totalorder %s999, %s1001
      %p1005 = scmp.eq.s32.totalorder %s131, 0
      %p1006 = por %p1004, %p1005
      %p1007 = scmp.ne.s32.totalorder %s999, %s1001
      %p1008 = scmp.eq.s32.totalorder %s136, 1
      %p1009 = por %p1007, %p1008
      %p1010 = scmp.ne.s32.totalorder %s1001, %s1002
      %p1011 = scmp.eq.s32.totalorder %s136, 0
      %p1012 = por %p1010, %p1011
      %p1013 = scmp.ne.s32.totalorder %s1001, %s1002
      %p1014 = scmp.eq.s32.totalorder %s137, 1
      %p1015 = por %p1013, %p1014
      %p1017 = scmp.ne.s32.totalorder %s1002, %s1016
      %p1018 = scmp.eq.s32.totalorder %s137, 0
      %p1019 = por %p1017, %p1018
      %s1021 = sadd.s32 %s1020, 1
      %p1024 = scmp.eq.s32.totalorder %s131, 1
      %p1025 = scmp.ne.s32.totalorder %s1020, %s1022
      %p1026 = scmp.eq.s32.totalorder %s131, 0
      %p1027 = por %p1025, %p1026
      %p1028 = scmp.ne.s32.totalorder %s1020, %s1022
      %p1029 = scmp.eq.s32.totalorder %s136, 1
      %p1030 = por %p1028, %p1029
      %p1031 = scmp.ne.s32.totalorder %s1022, %s1023
      %p1032 = scmp.eq.s32.totalorder %s136, 0
      %p1033 = por %p1031, %p1032
      %p1034 = scmp.ne.s32.totalorder %s1022, %s1023
      %p1035 = scmp.eq.s32.totalorder %s137, 1
      %p1036 = por %p1034, %p1035
      %p1038 = scmp.ne.s32.totalorder %s1023, %s1037
      %p1039 = scmp.eq.s32.totalorder %s137, 0
      %p1040 = por %p1038, %p1039
      %s1042 = sadd.s32 %s1041, 1
      %p1045 = scmp.eq.s32.totalorder %s131, 1
      %p1046 = scmp.ne.s32.totalorder %s1041, %s1043
      %p1047 = scmp.eq.s32.totalorder %s131, 0
      %p1048 = por %p1046, %p1047
      %p1049 = scmp.ne.s32.totalorder %s1041, %s1043
      %p1050 = scmp.eq.s32.totalorder %s136, 1
      %p1051 = por %p1049, %p1050
      %p1052 = scmp.ne.s32.totalorder %s1043, %s1044
      %p1053 = scmp.eq.s32.totalorder %s136, 0
      %p1054 = por %p1052, %p1053
      %p1055 = scmp.ne.s32.totalorder %s1043, %s1044
      %p1056 = scmp.eq.s32.totalorder %s137, 1
      %p1057 = por %p1055, %p1056
      %p1059 = scmp.ne.s32.totalorder %s1044, %s1058
      %p1060 = scmp.eq.s32.totalorder %s137, 0
      %p1061 = por %p1059, %p1060
      %s1063 = sadd.s32 %s1062, 1
      %p1066 = scmp.eq.s32.totalorder %s131, 1
      %p1067 = scmp.ne.s32.totalorder %s1062, %s1064
      %p1068 = scmp.eq.s32.totalorder %s131, 0
      %p1069 = por %p1067, %p1068
      %p1070 = scmp.ne.s32.totalorder %s1062, %s1064
      %p1071 = scmp.eq.s32.totalorder %s136, 1
      %p1072 = por %p1070, %p1071
      %p1073 = scmp.ne.s32.totalorder %s1064, %s1065
      %p1074 = scmp.eq.s32.totalorder %s136, 0
      %p1075 = por %p1073, %p1074
      %p1076 = scmp.ne.s32.totalorder %s1064, %s1065
      %p1077 = scmp.eq.s32.totalorder %s137, 1
      %p1078 = por %p1076, %p1077
      %p1080 = scmp.ne.s32.totalorder %s1065, %s1079
      %p1081 = scmp.eq.s32.totalorder %s137, 0
      %p1082 = por %p1080, %p1081
      %s1084 = sadd.s32 %s1083, 1
      %p1087 = scmp.eq.s32.totalorder %s131, 1
      %p1088 = scmp.ne.s32.totalorder %s1083, %s1085
      %p1089 = scmp.eq.s32.totalorder %s131, 0
      %p1090 = por %p1088, %p1089
      %p1091 = scmp.ne.s32.totalorder %s1083, %s1085
      %p1092 = scmp.eq.s32.totalorder %s136, 1
      %p1093 = por %p1091, %p1092
      %p1094 = scmp.ne.s32.totalorder %s1085, %s1086
      %p1095 = scmp.eq.s32.totalorder %s136, 0
      %p1096 = por %p1094, %p1095
      %p1097 = scmp.ne.s32.totalorder %s1085, %s1086
      %p1098 = scmp.eq.s32.totalorder %s137, 1
      %p1099 = por %p1097, %p1098
      %p1101 = scmp.ne.s32.totalorder %s1086, %s1100
      %p1102 = scmp.eq.s32.totalorder %s137, 0
      %p1103 = por %p1101, %p1102
      %s1105 = sadd.s32 %s1104, 1
      %p1108 = scmp.eq.s32.totalorder %s131, 1
      %p1109 = scmp.ne.s32.totalorder %s1104, %s1106
      %p1110 = scmp.eq.s32.totalorder %s131, 0
      %p1111 = por %p1109, %p1110
      %p1112 = scmp.ne.s32.totalorder %s1104, %s1106
      %p1113 = scmp.eq.s32.totalorder %s136, 1
      %p1114 = por %p1112, %p1113
      %p1115 = scmp.ne.s32.totalorder %s1106, %s1107
      %p1116 = scmp.eq.s32.totalorder %s136, 0
      %p1117 = por %p1115, %p1116
      %p1118 = scmp.ne.s32.totalorder %s1106, %s1107
      %p1119 = scmp.eq.s32.totalorder %s137, 1
      %p1120 = por %p1118, %p1119
      %p1122 = scmp.ne.s32.totalorder %s1107, %s1121
      %p1123 = scmp.eq.s32.totalorder %s137, 0
      %p1124 = por %p1122, %p1123
      %s1125 = ssub.s32 %s131, %s138
      %p1126 = scmp.eq.s32.totalorder %s1125, 0
      %s1128 = sadd.s32 %s1127, 1
      %s1129 = scalar_select %p1126, %s1127, %s1128
      %p1132 = pneg %p1126
      %p1133 = scmp.eq.s32.totalorder %s131, 1
      %p1134 = por %p1132, %p1133
      %p1135 = scmp.ne.s32.totalorder %s1127, %s1130
      %p1136 = scmp.eq.s32.totalorder %s131, 0
      %p1137 = por %p1135, %p1136
      %p1138 = scmp.ne.s32.totalorder %s1127, %s1130
      %p1139 = scmp.eq.s32.totalorder %s136, 1
      %p1140 = por %p1138, %p1139
      %p1141 = scmp.ne.s32.totalorder %s1130, %s1131
      %p1142 = scmp.eq.s32.totalorder %s136, 0
      %p1143 = por %p1141, %p1142
      %p1144 = scmp.ne.s32.totalorder %s1130, %s1131
      %p1145 = scmp.eq.s32.totalorder %s137, 1
      %p1146 = por %p1144, %p1145
      %p1148 = scmp.ne.s32.totalorder %s1131, %s1147
      %p1149 = scmp.eq.s32.totalorder %s137, 0
      %p1150 = por %p1148, %p1149
      %s1151 = ssub.s32 %s131, %s138
      %p1152 = scmp.eq.s32.totalorder %s1151, 0
      %s1154 = sadd.s32 %s1153, 1
      %s1155 = scalar_select %p1152, %s1153, %s1154
      %p1158 = pneg %p1152
      %p1159 = scmp.eq.s32.totalorder %s131, 1
      %p1160 = por %p1158, %p1159
      %p1161 = scmp.ne.s32.totalorder %s1153, %s1156
      %p1162 = scmp.eq.s32.totalorder %s131, 0
      %p1163 = por %p1161, %p1162
      %p1164 = scmp.ne.s32.totalorder %s1153, %s1156
      %p1165 = scmp.eq.s32.totalorder %s136, 1
      %p1166 = por %p1164, %p1165
      %p1167 = scmp.ne.s32.totalorder %s1156, %s1157
      %p1168 = scmp.eq.s32.totalorder %s136, 0
      %p1169 = por %p1167, %p1168
      %p1170 = scmp.ne.s32.totalorder %s1156, %s1157
      %p1171 = scmp.eq.s32.totalorder %s137, 1
      %p1172 = por %p1170, %p1171
      %p1174 = scmp.ne.s32.totalorder %s1157, %s1173
      %p1175 = scmp.eq.s32.totalorder %s137, 0
      %p1176 = por %p1174, %p1175
      %p1177 = scmp.le.s32.totalorder 1, %s131
      %p1178 = scmp.lt.s32.totalorder %s131, 3
      %p1179 = pnand %p1177, %p1178
      %p1180 = pneg %p1179
      // Predicated region
      $region9: #{tpu_custom_call.1} parent=5 // pred_check
        _
      $region10: #{tpu_custom_call.1} parent=5 // pred_check_branch
        %1182 = sbr.rel (%p1179) target = $region12
      $region11: #{tpu_custom_call.1} parent=5 // pred_region
        %s1183 = ssub.s32 %s131, 1
        // Predicated region
        $region13: #{tpu_custom_call.1} parent=11 // pred_check
          %p1184 = pneg %p256
        $region14: #{tpu_custom_call.1} parent=11 // pred_check_branch
          %1186 = sbr.rel (%p1184) target = $region16
        $region15: #{tpu_custom_call.1} parent=11 // pred_region
          _
        $region16: #{tpu_custom_call.1} parent=11 // pred_fallthru
          _
        // Predicated region
        $region17: #{tpu_custom_call.1} parent=11 // pred_check
          %p1187 = pneg %p277
        $region18: #{tpu_custom_call.1} parent=11 // pred_check_branch
          %1189 = sbr.rel (%p1187) target = $region20
        $region19: #{tpu_custom_call.1} parent=11 // pred_region
          _
        $region20: #{tpu_custom_call.1} parent=11 // pred_fallthru
          _
        // Predicated region
        $region21: #{tpu_custom_call.1} parent=11 // pred_check
          %p1190 = pneg %p298
        $region22: #{tpu_custom_call.1} parent=11 // pred_check_branch
          %1192 = sbr.rel (%p1190) target = $region24
        $region23: #{tpu_custom_call.1} parent=11 // pred_region
          _
        $region24: #{tpu_custom_call.1} parent=11 // pred_fallthru
          _
        // Predicated region
        $region25: #{tpu_custom_call.1} parent=11 // pred_check
          %p1193 = pneg %p319
        $region26: #{tpu_custom_call.1} parent=11 // pred_check_branch
          %1195 = sbr.rel (%p1193) target = $region28
        $region27: #{tpu_custom_call.1} parent=11 // pred_region
          %s1197 = ssub.s32 16, 16
          %1198 = vsyncadd [#allocation9], %s1197
          %s1200 = sshll.u32 [#allocation10], 4
          %s1201 = int_to_ptr.vmem [resolvable:$true] %s1200
          %1203 = dma.hbm_to_vmem [thread:$0]  %s15, 16, %s1201, [#allocation9]
        $region28: #{tpu_custom_call.1} parent=11 // pred_fallthru
          _
        // Predicated region
        $region29: #{tpu_custom_call.1} parent=11 // pred_check
          %p1204 = pneg %p340
        $region30: #{tpu_custom_call.1} parent=11 // pred_check_branch
          %1206 = sbr.rel (%p1204) target = $region32
        $region31: #{tpu_custom_call.1} parent=11 // pred_region
          _
        $region32: #{tpu_custom_call.1} parent=11 // pred_fallthru
          _
        // Predicated region
        $region33: #{tpu_custom_call.1} parent=11 // pred_check
          %p1207 = pneg %p361
        $region34: #{tpu_custom_call.1} parent=11 // pred_check_branch
          %1209 = sbr.rel (%p1207) target = $region36
        $region35: #{tpu_custom_call.1} parent=11 // pred_region
          %s1211 = ssub.s32 16, 16
          %1212 = vsyncadd [#allocation12], %s1211
          %s1214 = sshll.u32 [#allocation11], 4
          %s1215 = int_to_ptr.vmem [resolvable:$true] %s1214
          %1217 = dma.hbm_to_vmem [thread:$0]  %s19, 16, %s1215, [#allocation12]
        $region36: #{tpu_custom_call.1} parent=11 // pred_fallthru
          _
        // Predicated region
        $region37: #{tpu_custom_call.1} parent=11 // pred_check
          %p1218 = pneg %p382
        $region38: #{tpu_custom_call.1} parent=11 // pred_check_branch
          %1220 = sbr.rel (%p1218) target = $region40
        $region39: #{tpu_custom_call.1} parent=11 // pred_region
          %s1222 = ssub.s32 32, 32
          %1223 = vsyncadd [#allocation12], %s1222
          %s1225 = sshll.u32 [#allocation13], 4
          %s1226 = int_to_ptr.vmem [resolvable:$true] %s1225
          %1228 = dma.hbm_to_vmem [thread:$0]  %s21, 32, %s1226, [#allocation12]
        $region40: #{tpu_custom_call.1} parent=11 // pred_fallthru
          _
        // Predicated region
        $region41: #{tpu_custom_call.1} parent=11 // pred_check
          %p1229 = pneg %p403
        $region42: #{tpu_custom_call.1} parent=11 // pred_check_branch
          %1231 = sbr.rel (%p1229) target = $region44
        $region43: #{tpu_custom_call.1} parent=11 // pred_region
          _
        $region44: #{tpu_custom_call.1} parent=11 // pred_fallthru
          _
        // Predicated region
        $region45: #{tpu_custom_call.1} parent=11 // pred_check
          %p1232 = pneg %p424
        $region46: #{tpu_custom_call.1} parent=11 // pred_check_branch
          %1234 = sbr.rel (%p1232) target = $region48
        $region47: #{tpu_custom_call.1} parent=11 // pred_region
          %s1236 = ssub.s32 16, 16
          %1237 = vsyncadd [#allocation15], %s1236
          %s1239 = sshll.u32 [#allocation14], 4
          %s1240 = int_to_ptr.vmem [resolvable:$true] %s1239
          %1242 = dma.hbm_to_vmem [thread:$0]  %s25, 16, %s1240, [#allocation15]
        $region48: #{tpu_custom_call.1} parent=11 // pred_fallthru
          _
        // Predicated region
        $region49: #{tpu_custom_call.1} parent=11 // pred_check
          %p1243 = pneg %p445
        $region50: #{tpu_custom_call.1} parent=11 // pred_check_branch
          %1245 = sbr.rel (%p1243) target = $region52
        $region51: #{tpu_custom_call.1} parent=11 // pred_region
          _
        $region52: #{tpu_custom_call.1} parent=11 // pred_fallthru
          _
        // Predicated region
        $region53: #{tpu_custom_call.1} parent=11 // pred_check
          %p1246 = pneg %p466
        $region54: #{tpu_custom_call.1} parent=11 // pred_check_branch
          %1248 = sbr.rel (%p1246) target = $region56
        $region55: #{tpu_custom_call.1} parent=11 // pred_region
          %s1250 = ssub.s32 16, 16
          %1251 = vsyncadd [#allocation15], %s1250
          %s1253 = sshll.u32 [#allocation16], 4
          %s1254 = int_to_ptr.vmem [resolvable:$true] %s1253
          %1256 = dma.hbm_to_vmem [thread:$0]  %s29, 16, %s1254, [#allocation15]
        $region56: #{tpu_custom_call.1} parent=11 // pred_fallthru
          _
        // Predicated region
        $region57: #{tpu_custom_call.1} parent=11 // pred_check
          %p1257 = pneg %p487
        $region58: #{tpu_custom_call.1} parent=11 // pred_check_branch
          %1259 = sbr.rel (%p1257) target = $region60
        $region59: #{tpu_custom_call.1} parent=11 // pred_region
          %s1261 = ssub.s32 512, 512
          %1262 = vsyncadd [#allocation18], %s1261
          %s1263 = sshll.u32 [#allocation17], 4
          %s1264 = int_to_ptr.vmem [resolvable:$true] %s1263
          %1269 = dma.hbm_to_vmem [thread:$0]  %s31, 512, %s1264, [#allocation18], 128, 128, 8
        $region60: #{tpu_custom_call.1} parent=11 // pred_fallthru
          _
        // Predicated region
        $region61: #{tpu_custom_call.1} parent=11 // pred_check
          %p1270 = pneg %p508
        $region62: #{tpu_custom_call.1} parent=11 // pred_check_branch
          %1272 = sbr.rel (%p1270) target = $region64
        $region63: #{tpu_custom_call.1} parent=11 // pred_region
          %s1274 = ssub.s32 16, 16
          %1275 = vsyncadd [#allocation18], %s1274
          %s1277 = sshll.u32 [#allocation19], 4
          %s1278 = int_to_ptr.vmem [resolvable:$true] %s1277
          %1280 = dma.hbm_to_vmem [thread:$0]  %s33, 16, %s1278, [#allocation18]
        $region64: #{tpu_custom_call.1} parent=11 // pred_fallthru
          _
        // Predicated region
        $region65: #{tpu_custom_call.1} parent=11 // pred_check
          %p1281 = pneg %p529
        $region66: #{tpu_custom_call.1} parent=11 // pred_check_branch
          %1283 = sbr.rel (%p1281) target = $region68
        $region67: #{tpu_custom_call.1} parent=11 // pred_region
          %s1285 = ssub.s32 32, 32
          %1286 = vsyncadd [#allocation21], %s1285
          %s1288 = sshll.u32 [#allocation20], 4
          %s1289 = int_to_ptr.vmem [resolvable:$true] %s1288
          %1291 = dma.hbm_to_vmem [thread:$0]  %s35, 32, %s1289, [#allocation21]
        $region68: #{tpu_custom_call.1} parent=11 // pred_fallthru
          _
        // Predicated region
        $region69: #{tpu_custom_call.1} parent=11 // pred_check
          %p1292 = pneg %p550
        $region70: #{tpu_custom_call.1} parent=11 // pred_check_branch
          %1294 = sbr.rel (%p1292) target = $region72
        $region71: #{tpu_custom_call.1} parent=11 // pred_region
          %s1296 = ssub.s32 512, 512
          %1297 = vsyncadd [#allocation21], %s1296
          %s1298 = sshll.u32 [#allocation22], 4
          %s1299 = int_to_ptr.vmem [resolvable:$true] %s1298
          %1304 = dma.hbm_to_vmem [thread:$0]  %s37, 512, %s1299, [#allocation21], 128, 128, 8
        $region72: #{tpu_custom_call.1} parent=11 // pred_fallthru
          _
        // Predicated region
        $region73: #{tpu_custom_call.1} parent=11 // pred_check
          %p1305 = pneg %p571
        $region74: #{tpu_custom_call.1} parent=11 // pred_check_branch
          %1307 = sbr.rel (%p1305) target = $region76
        $region75: #{tpu_custom_call.1} parent=11 // pred_region
          %s1309 = ssub.s32 16, 16
          %1310 = vsyncadd [#allocation24], %s1309
          %s1312 = sshll.u32 [#allocation23], 4
          %s1313 = int_to_ptr.vmem [resolvable:$true] %s1312
          %1315 = dma.hbm_to_vmem [thread:$0]  %s39, 16, %s1313, [#allocation24]
        $region76: #{tpu_custom_call.1} parent=11 // pred_fallthru
          _
        // Predicated region
        $region77: #{tpu_custom_call.1} parent=11 // pred_check
          %p1316 = pneg %p592
        $region78: #{tpu_custom_call.1} parent=11 // pred_check_branch
          %1318 = sbr.rel (%p1316) target = $region80
        $region79: #{tpu_custom_call.1} parent=11 // pred_region
          %s1320 = ssub.s32 512, 512
          %1321 = vsyncadd [#allocation24], %s1320
          %s1322 = sshll.u32 [#allocation25], 4
          %s1323 = int_to_ptr.vmem [resolvable:$true] %s1322
          %1328 = dma.hbm_to_vmem [thread:$0]  %s41, 512, %s1323, [#allocation24], 128, 128, 8
        $region80: #{tpu_custom_call.1} parent=11 // pred_fallthru
          _
        // Predicated region
        $region81: #{tpu_custom_call.1} parent=11 // pred_check
          %p1329 = pneg %p613
        $region82: #{tpu_custom_call.1} parent=11 // pred_check_branch
          %1331 = sbr.rel (%p1329) target = $region84
        $region83: #{tpu_custom_call.1} parent=11 // pred_region
          %s1333 = ssub.s32 16, 16
          %1334 = vsyncadd [#allocation27], %s1333
          %s1336 = sshll.u32 [#allocation26], 4
          %s1337 = int_to_ptr.vmem [resolvable:$true] %s1336
          %1339 = dma.hbm_to_vmem [thread:$0]  %s43, 16, %s1337, [#allocation27]
        $region84: #{tpu_custom_call.1} parent=11 // pred_fallthru
          _
        // Predicated region
        $region85: #{tpu_custom_call.1} parent=11 // pred_check
          %p1340 = pneg %p634
        $region86: #{tpu_custom_call.1} parent=11 // pred_check_branch
          %1342 = sbr.rel (%p1340) target = $region88
        $region87: #{tpu_custom_call.1} parent=11 // pred_region
          %s1344 = ssub.s32 512, 512
          %1345 = vsyncadd [#allocation27], %s1344
          %s1346 = sshll.u32 [#allocation28], 4
          %s1347 = int_to_ptr.vmem [resolvable:$true] %s1346
          %1352 = dma.hbm_to_vmem [thread:$0]  %s45, 512, %s1347, [#allocation27], 128, 128, 8
        $region88: #{tpu_custom_call.1} parent=11 // pred_fallthru
          _
        // Predicated region
        $region89: #{tpu_custom_call.1} parent=11 // pred_check
          %p1353 = pneg %p655
        $region90: #{tpu_custom_call.1} parent=11 // pred_check_branch
          %1355 = sbr.rel (%p1353) target = $region92
        $region91: #{tpu_custom_call.1} parent=11 // pred_region
          %s1357 = ssub.s32 16, 16
          %1358 = vsyncadd [#allocation30], %s1357
          %s1360 = sshll.u32 [#allocation29], 4
          %s1361 = int_to_ptr.vmem [resolvable:$true] %s1360
          %1363 = dma.hbm_to_vmem [thread:$0]  %s47, 16, %s1361, [#allocation30]
        $region92: #{tpu_custom_call.1} parent=11 // pred_fallthru
          _
        // Predicated region
        $region93: #{tpu_custom_call.1} parent=11 // pred_check
          %p1364 = pneg %p676
        $region94: #{tpu_custom_call.1} parent=11 // pred_check_branch
          %1366 = sbr.rel (%p1364) target = $region96
        $region95: #{tpu_custom_call.1} parent=11 // pred_region
          %s1368 = ssub.s32 512, 512
          %1369 = vsyncadd [#allocation30], %s1368
          %s1370 = sshll.u32 [#allocation31], 4
          %s1371 = int_to_ptr.vmem [resolvable:$true] %s1370
          %1376 = dma.hbm_to_vmem [thread:$0]  %s49, 512, %s1371, [#allocation30], 128, 128, 8
        $region96: #{tpu_custom_call.1} parent=11 // pred_fallthru
          _
        // Predicated region
        $region97: #{tpu_custom_call.1} parent=11 // pred_check
          %p1377 = pneg %p697
        $region98: #{tpu_custom_call.1} parent=11 // pred_check_branch
          %1379 = sbr.rel (%p1377) target = $region100
        $region99: #{tpu_custom_call.1} parent=11 // pred_region
          %s1381 = ssub.s32 16, 16
          %1382 = vsyncadd [#allocation33], %s1381
          %s1384 = sshll.u32 [#allocation32], 4
          %s1385 = int_to_ptr.vmem [resolvable:$true] %s1384
          %1387 = dma.hbm_to_vmem [thread:$0]  %s51, 16, %s1385, [#allocation33]
        $region100: #{tpu_custom_call.1} parent=11 // pred_fallthru
          _
        // Predicated region
        $region101: #{tpu_custom_call.1} parent=11 // pred_check
          %p1388 = pneg %p718
        $region102: #{tpu_custom_call.1} parent=11 // pred_check_branch
          %1390 = sbr.rel (%p1388) target = $region104
        $region103: #{tpu_custom_call.1} parent=11 // pred_region
          %s1392 = ssub.s32 32, 32
          %1393 = vsyncadd [#allocation33], %s1392
          %s1395 = sshll.u32 [#allocation34], 4
          %s1396 = int_to_ptr.vmem [resolvable:$true] %s1395
          %1398 = dma.hbm_to_vmem [thread:$0]  %s53, 32, %s1396, [#allocation33]
        $region104: #{tpu_custom_call.1} parent=11 // pred_fallthru
          _
        // Predicated region
        $region105: #{tpu_custom_call.1} parent=11 // pred_check
          %p1399 = pneg %p739
        $region106: #{tpu_custom_call.1} parent=11 // pred_check_branch
          %1401 = sbr.rel (%p1399) target = $region108
        $region107: #{tpu_custom_call.1} parent=11 // pred_region
          %s1403 = ssub.s32 512, 512
          %1404 = vsyncadd [#allocation36], %s1403
          %s1405 = sshll.u32 [#allocation35], 4
          %s1406 = int_to_ptr.vmem [resolvable:$true] %s1405
          %1411 = dma.hbm_to_vmem [thread:$0]  %s55, 512, %s1406, [#allocation36], 128, 128, 8
        $region108: #{tpu_custom_call.1} parent=11 // pred_fallthru
          _
        // Predicated region
        $region109: #{tpu_custom_call.1} parent=11 // pred_check
          %p1412 = pneg %p760
        $region110: #{tpu_custom_call.1} parent=11 // pred_check_branch
          %1414 = sbr.rel (%p1412) target = $region112
        $region111: #{tpu_custom_call.1} parent=11 // pred_region
          %s1416 = ssub.s32 16, 16
          %1417 = vsyncadd [#allocation36], %s1416
          %s1419 = sshll.u32 [#allocation37], 4
          %s1420 = int_to_ptr.vmem [resolvable:$true] %s1419
          %1422 = dma.hbm_to_vmem [thread:$0]  %s57, 16, %s1420, [#allocation36]
        $region112: #{tpu_custom_call.1} parent=11 // pred_fallthru
          _
        // Predicated region
        $region113: #{tpu_custom_call.1} parent=11 // pred_check
          %p1423 = pneg %p781
        $region114: #{tpu_custom_call.1} parent=11 // pred_check_branch
          %1425 = sbr.rel (%p1423) target = $region116
        $region115: #{tpu_custom_call.1} parent=11 // pred_region
          _
        $region116: #{tpu_custom_call.1} parent=11 // pred_fallthru
          _
        // Predicated region
        $region117: #{tpu_custom_call.1} parent=11 // pred_check
          %p1426 = pneg %p802
        $region118: #{tpu_custom_call.1} parent=11 // pred_check_branch
          %1428 = sbr.rel (%p1426) target = $region120
        $region119: #{tpu_custom_call.1} parent=11 // pred_region
          %s1430 = ssub.s32 16, 16
          %1431 = vsyncadd [#allocation39], %s1430
          %s1433 = sshll.u32 [#allocation38], 4
          %s1434 = int_to_ptr.vmem [resolvable:$true] %s1433
          %1436 = dma.hbm_to_vmem [thread:$0]  %s61, 16, %s1434, [#allocation39]
        $region120: #{tpu_custom_call.1} parent=11 // pred_fallthru
          _
        // Predicated region
        $region121: #{tpu_custom_call.1} parent=11 // pred_check
          %p1437 = pneg %p823
        $region122: #{tpu_custom_call.1} parent=11 // pred_check_branch
          %1439 = sbr.rel (%p1437) target = $region124
        $region123: #{tpu_custom_call.1} parent=11 // pred_region
          %s1441 = ssub.s32 32, 32
          %1442 = vsyncadd [#allocation39], %s1441
          %s1444 = sshll.u32 [#allocation40], 4
          %s1445 = int_to_ptr.vmem [resolvable:$true] %s1444
          %1447 = dma.hbm_to_vmem [thread:$0]  %s63, 32, %s1445, [#allocation39]
        $region124: #{tpu_custom_call.1} parent=11 // pred_fallthru
          _
        // Predicated region
        $region125: #{tpu_custom_call.1} parent=11 // pred_check
          %p1448 = pneg %p844
        $region126: #{tpu_custom_call.1} parent=11 // pred_check_branch
          %1450 = sbr.rel (%p1448) target = $region128
        $region127: #{tpu_custom_call.1} parent=11 // pred_region
          %s1452 = ssub.s32 512, 512
          %1453 = vsyncadd [#allocation42], %s1452
          %s1454 = sshll.u32 [#allocation41], 4
          %s1455 = int_to_ptr.vmem [resolvable:$true] %s1454
          %1460 = dma.hbm_to_vmem [thread:$0]  %s65, 512, %s1455, [#allocation42], 128, 128, 8
        $region128: #{tpu_custom_call.1} parent=11 // pred_fallthru
          _
        // Predicated region
        $region129: #{tpu_custom_call.1} parent=11 // pred_check
          %p1461 = pneg %p865
        $region130: #{tpu_custom_call.1} parent=11 // pred_check_branch
          %1463 = sbr.rel (%p1461) target = $region132
        $region131: #{tpu_custom_call.1} parent=11 // pred_region
          %s1465 = ssub.s32 16, 16
          %1466 = vsyncadd [#allocation42], %s1465
          %s1468 = sshll.u32 [#allocation43], 4
          %s1469 = int_to_ptr.vmem [resolvable:$true] %s1468
          %1471 = dma.hbm_to_vmem [thread:$0]  %s67, 16, %s1469, [#allocation42]
        $region132: #{tpu_custom_call.1} parent=11 // pred_fallthru
          _
        // Predicated region
        $region133: #{tpu_custom_call.1} parent=11 // pred_check
          %p1472 = pneg %p886
        $region134: #{tpu_custom_call.1} parent=11 // pred_check_branch
          %1474 = sbr.rel (%p1472) target = $region136
        $region135: #{tpu_custom_call.1} parent=11 // pred_region
          %s1476 = ssub.s32 512, 512
          %1477 = vsyncadd [#allocation45], %s1476
          %s1478 = sshll.u32 [#allocation44], 4
          %s1479 = int_to_ptr.vmem [resolvable:$true] %s1478
          %1484 = dma.hbm_to_vmem [thread:$0]  %s69, 512, %s1479, [#allocation45], 128, 128, 8
        $region136: #{tpu_custom_call.1} parent=11 // pred_fallthru
          _
        // Predicated region
        $region137: #{tpu_custom_call.1} parent=11 // pred_check
          %p1485 = pneg %p907
        $region138: #{tpu_custom_call.1} parent=11 // pred_check_branch
          %1487 = sbr.rel (%p1485) target = $region140
        $region139: #{tpu_custom_call.1} parent=11 // pred_region
          %s1489 = ssub.s32 16, 16
          %1490 = vsyncadd [#allocation45], %s1489
          %s1492 = sshll.u32 [#allocation46], 4
          %s1493 = int_to_ptr.vmem [resolvable:$true] %s1492
          %1495 = dma.hbm_to_vmem [thread:$0]  %s71, 16, %s1493, [#allocation45]
        $region140: #{tpu_custom_call.1} parent=11 // pred_fallthru
          _
        // Predicated region
        $region141: #{tpu_custom_call.1} parent=11 // pred_check
          %p1496 = pneg %p928
        $region142: #{tpu_custom_call.1} parent=11 // pred_check_branch
          %1498 = sbr.rel (%p1496) target = $region144
        $region143: #{tpu_custom_call.1} parent=11 // pred_region
          _
        $region144: #{tpu_custom_call.1} parent=11 // pred_fallthru
          _
        // Predicated region
        $region145: #{tpu_custom_call.1} parent=11 // pred_check
          %p1499 = pneg %p949
        $region146: #{tpu_custom_call.1} parent=11 // pred_check_branch
          %1501 = sbr.rel (%p1499) target = $region148
        $region147: #{tpu_custom_call.1} parent=11 // pred_region
          %s1503 = ssub.s32 16, 16
          %1504 = vsyncadd [#allocation48], %s1503
          %s1506 = sshll.u32 [#allocation47], 4
          %s1507 = int_to_ptr.vmem [resolvable:$true] %s1506
          %1509 = dma.hbm_to_vmem [thread:$0]  %s75, 16, %s1507, [#allocation48]
        $region148: #{tpu_custom_call.1} parent=11 // pred_fallthru
          _
        // Predicated region
        $region149: #{tpu_custom_call.1} parent=11 // pred_check
          %p1510 = pneg %p970
        $region150: #{tpu_custom_call.1} parent=11 // pred_check_branch
          %1512 = sbr.rel (%p1510) target = $region152
        $region151: #{tpu_custom_call.1} parent=11 // pred_region
          %s1514 = ssub.s32 512, 512
          %1515 = vsyncadd [#allocation48], %s1514
          %s1516 = sshll.u32 [#allocation49], 4
          %s1517 = int_to_ptr.vmem [resolvable:$true] %s1516
          %1522 = dma.hbm_to_vmem [thread:$0]  %s77, 512, %s1517, [#allocation48], 128, 128, 8
        $region152: #{tpu_custom_call.1} parent=11 // pred_fallthru
          _
        // Predicated region
        $region153: #{tpu_custom_call.1} parent=11 // pred_check
          %p1523 = pneg %p991
        $region154: #{tpu_custom_call.1} parent=11 // pred_check_branch
          %1525 = sbr.rel (%p1523) target = $region156
        $region155: #{tpu_custom_call.1} parent=11 // pred_region
          %s1527 = ssub.s32 16, 16
          %1528 = vsyncadd [#allocation51], %s1527
          %s1530 = sshll.u32 [#allocation50], 4
          %s1531 = int_to_ptr.vmem [resolvable:$true] %s1530
          %1533 = dma.hbm_to_vmem [thread:$0]  %s79, 16, %s1531, [#allocation51]
        $region156: #{tpu_custom_call.1} parent=11 // pred_fallthru
          _
        // Predicated region
        $region157: #{tpu_custom_call.1} parent=11 // pred_check
          %p1534 = pneg %p1012
        $region158: #{tpu_custom_call.1} parent=11 // pred_check_branch
          %1536 = sbr.rel (%p1534) target = $region160
        $region159: #{tpu_custom_call.1} parent=11 // pred_region
          _
        $region160: #{tpu_custom_call.1} parent=11 // pred_fallthru
          _
        // Predicated region
        $region161: #{tpu_custom_call.1} parent=11 // pred_check
          %p1537 = pneg %p1033
        $region162: #{tpu_custom_call.1} parent=11 // pred_check_branch
          %1539 = sbr.rel (%p1537) target = $region164
        $region163: #{tpu_custom_call.1} parent=11 // pred_region
          %s1541 = ssub.s32 512, 512
          %1542 = vsyncadd [#allocation51], %s1541
          %s1543 = sshll.u32 [#allocation52], 4
          %s1544 = int_to_ptr.vmem [resolvable:$true] %s1543
          %1549 = dma.hbm_to_vmem [thread:$0]  %s83, 512, %s1544, [#allocation51], 128, 128, 8
        $region164: #{tpu_custom_call.1} parent=11 // pred_fallthru
          _
        // Predicated region
        $region165: #{tpu_custom_call.1} parent=11 // pred_check
          %p1550 = pneg %p1054
        $region166: #{tpu_custom_call.1} parent=11 // pred_check_branch
          %1552 = sbr.rel (%p1550) target = $region168
        $region167: #{tpu_custom_call.1} parent=11 // pred_region
          _
        $region168: #{tpu_custom_call.1} parent=11 // pred_fallthru
          _
        // Predicated region
        $region169: #{tpu_custom_call.1} parent=11 // pred_check
          %p1553 = pneg %p1075
        $region170: #{tpu_custom_call.1} parent=11 // pred_check_branch
          %1555 = sbr.rel (%p1553) target = $region172
        $region171: #{tpu_custom_call.1} parent=11 // pred_region
          _
        $region172: #{tpu_custom_call.1} parent=11 // pred_fallthru
          _
        // Predicated region
        $region173: #{tpu_custom_call.1} parent=11 // pred_check
          %p1556 = pneg %p1096
        $region174: #{tpu_custom_call.1} parent=11 // pred_check_branch
          %1558 = sbr.rel (%p1556) target = $region176
        $region175: #{tpu_custom_call.1} parent=11 // pred_region
          _
        $region176: #{tpu_custom_call.1} parent=11 // pred_fallthru
          _
        // Predicated region
        $region177: #{tpu_custom_call.1} parent=11 // pred_check
          %p1559 = pneg %p1117
        $region178: #{tpu_custom_call.1} parent=11 // pred_check_branch
          %1561 = sbr.rel (%p1559) target = $region180
        $region179: #{tpu_custom_call.1} parent=11 // pred_region
          _
        $region180: #{tpu_custom_call.1} parent=11 // pred_fallthru
          _
      $region12: #{tpu_custom_call.1} parent=5 // pred_fallthru
        _
      %p1562 = scmp.lt.s32.totalorder %s131, 2
      // Predicated region
      $region181: #{tpu_custom_call.1} parent=5 // pred_check
        %p1563 = pneg %p1562
      $region182: #{tpu_custom_call.1} parent=5 // pred_check_branch
        %1565 = sbr.rel (%p1563) target = $region184
      $region183: #{tpu_custom_call.1} parent=5 // pred_region
        // Predicated region
        $region185: #{tpu_custom_call.1} parent=183 // pred_check
          %p1566 = pneg %p151
        $region186: #{tpu_custom_call.1} parent=183 // pred_check_branch
          %1568 = sbr.rel (%p1566) target = $region188
        $region187: #{tpu_custom_call.1} parent=183 // pred_region
          %s1569 = sand.u32 %s141, 1
          %s1570 = scalar_lea.sflag [#allocation3], %s1569
          %s1571 = sand.u32 %s141, 1
          %s1572 = smul.addr %s1571, 8
          %s1573 = scalar_lea.vmem [#allocation2], %s1572
          %s1575 = ssub.s32 128, 128
          %1576 = vsyncadd %s1570, %s1575
          %s1577 = smul.addr %s131, 128
          %s1578 = scalar_lea.hbm %s1, %s1577
          %s1580 = sshll.u32 %s1573, 4
          %s1581 = int_to_ptr.vmem [resolvable:$true] %s1580
          %1583 = dma.hbm_to_vmem [thread:$0]  %s1578, 128, %s1581, %s1570
        $region188: #{tpu_custom_call.1} parent=183 // pred_fallthru
          _
        // Predicated region
        $region189: #{tpu_custom_call.1} parent=183 // pred_check
          %p1584 = pneg %p177
        $region190: #{tpu_custom_call.1} parent=183 // pred_check_branch
          %1586 = sbr.rel (%p1584) target = $region192
        $region191: #{tpu_custom_call.1} parent=183 // pred_region
          %s1587 = sand.u32 %s131, 1
          %s1588 = scalar_lea.sflag [#allocation6], %s1587
          %s1589 = sand.u32 %s167, 1
          %s1590 = smul.addr %s1589, 8
          %s1591 = scalar_lea.vmem [#allocation5], %s1590
          %s1593 = ssub.s32 128, 128
          %1594 = vsyncadd %s1588, %s1593
          %s1595 = smul.addr %s131, 128
          %s1596 = scalar_lea.hbm %s3, %s1595
          %s1598 = sshll.u32 %s1591, 4
          %s1599 = int_to_ptr.vmem [resolvable:$true] %s1598
          %1601 = dma.hbm_to_vmem [thread:$0]  %s1596, 128, %s1599, %s1588
        $region192: #{tpu_custom_call.1} parent=183 // pred_fallthru
          _
        // Predicated region
        $region193: #{tpu_custom_call.1} parent=183 // pred_check
          %p1602 = pneg %p203
        $region194: #{tpu_custom_call.1} parent=183 // pred_check_branch
          %1604 = sbr.rel (%p1602) target = $region196
        $region195: #{tpu_custom_call.1} parent=183 // pred_region
          %s1605 = sand.u32 %s131, 1
          %s1606 = scalar_lea.sflag [#allocation6], %s1605
          %s1607 = sand.u32 %s193, 1
          %s1608 = smul.addr %s1607, 8
          %s1609 = scalar_lea.vmem [#allocation7], %s1608
          %s1611 = ssub.s32 128, 128
          %1612 = vsyncadd %s1606, %s1611
          %s1613 = smul.addr %s131, 128
          %s1614 = scalar_lea.hbm %s5, %s1613
          %s1616 = sshll.u32 %s1609, 4
          %s1617 = int_to_ptr.vmem [resolvable:$true] %s1616
          %1619 = dma.hbm_to_vmem [thread:$0]  %s1614, 128, %s1617, %s1606
        $region196: #{tpu_custom_call.1} parent=183 // pred_fallthru
          _
        // Predicated region
        $region197: #{tpu_custom_call.1} parent=183 // pred_check
          %p1620 = pneg %p229
        $region198: #{tpu_custom_call.1} parent=183 // pred_check_branch
          %1622 = sbr.rel (%p1620) target = $region200
        $region199: #{tpu_custom_call.1} parent=183 // pred_region
          %s1623 = sand.u32 %s131, 1
          %s1624 = scalar_lea.sflag [#allocation9], %s1623
          %s1625 = sand.u32 %s219, 1
          %s1626 = smul.addr %s1625, 8
          %s1627 = scalar_lea.vmem [#allocation8], %s1626
          %s1629 = ssub.s32 128, 128
          %1630 = vsyncadd %s1624, %s1629
          %s1631 = smul.addr %s131, 128
          %s1632 = scalar_lea.hbm %s7, %s1631
          %s1634 = sshll.u32 %s1627, 4
          %s1635 = int_to_ptr.vmem [resolvable:$true] %s1634
          %1637 = dma.hbm_to_vmem [thread:$0]  %s1632, 128, %s1635, %s1624
        $region200: #{tpu_custom_call.1} parent=183 // pred_fallthru
          _
      $region184: #{tpu_custom_call.1} parent=5 // pred_fallthru
        _
      %p1638 = scmp.le.s32.totalorder 1, %s131
      %p1639 = scmp.lt.s32.totalorder %s131, 3
      %p1640 = pnand %p1638, %p1639
      %p1641 = pneg %p1640
      // Predicated region
      $region201: #{tpu_custom_call.1} parent=5 // pred_check
        _
      $region202: #{tpu_custom_call.1} parent=5 // pred_check_branch
        %1643 = sbr.rel (%p1640) target = $region204
      $region203: #{tpu_custom_call.1} parent=5 // pred_region
        %s1644 = ssub.s32 %s131, 1
        %s1645 = sand.u32 %s144, 1
        %s1646 = scalar_lea.sflag [#allocation3], %s1645
        %s1647 = sand.u32 %s144, 1
        %s1648 = smul.addr %s1647, 8
        %s1649 = scalar_lea.vmem [#allocation2], %s1648
        // Predicated region
        $region205: #{tpu_custom_call.1} parent=203 // pred_check
          %p1650 = pneg %p157
        $region206: #{tpu_custom_call.1} parent=203 // pred_check_branch
          %1652 = sbr.rel (%p1650) target = $region208
        $region207: #{tpu_custom_call.1} parent=203 // pred_region
          %1653 = dma.done %s1646, 128
        $region208: #{tpu_custom_call.1} parent=203 // pred_fallthru
          _
        %s1654 = sand.u32 %s136, 1
        %s1655 = scalar_lea.sflag [#allocation6], %s1654
        %s1656 = sand.u32 %s170, 1
        %s1657 = smul.addr %s1656, 8
        %s1658 = scalar_lea.vmem [#allocation5], %s1657
        // Predicated region
        $region209: #{tpu_custom_call.1} parent=203 // pred_check
          %p1659 = pneg %p183
        $region210: #{tpu_custom_call.1} parent=203 // pred_check_branch
          %1661 = sbr.rel (%p1659) target = $region212
        $region211: #{tpu_custom_call.1} parent=203 // pred_region
          %1662 = dma.done %s1655, 128
        $region212: #{tpu_custom_call.1} parent=203 // pred_fallthru
          _
        %s1663 = sand.u32 %s136, 1
        %s1664 = scalar_lea.sflag [#allocation6], %s1663
        %s1665 = sand.u32 %s196, 1
        %s1666 = smul.addr %s1665, 8
        %s1667 = scalar_lea.vmem [#allocation7], %s1666
        // Predicated region
        $region213: #{tpu_custom_call.1} parent=203 // pred_check
          %p1668 = pneg %p209
        $region214: #{tpu_custom_call.1} parent=203 // pred_check_branch
          %1670 = sbr.rel (%p1668) target = $region216
        $region215: #{tpu_custom_call.1} parent=203 // pred_region
          %1671 = dma.done %s1664, 128
        $region216: #{tpu_custom_call.1} parent=203 // pred_fallthru
          _
        %s1672 = sand.u32 %s136, 1
        %s1673 = scalar_lea.sflag [#allocation9], %s1672
        %s1674 = sand.u32 %s222, 1
        %s1675 = smul.addr %s1674, 8
        %s1676 = scalar_lea.vmem [#allocation8], %s1675
        // Predicated region
        $region217: #{tpu_custom_call.1} parent=203 // pred_check
          %p1677 = pneg %p235
        $region218: #{tpu_custom_call.1} parent=203 // pred_check_branch
          %1679 = sbr.rel (%p1677) target = $region220
        $region219: #{tpu_custom_call.1} parent=203 // pred_region
          %1680 = dma.done %s1673, 128
        $region220: #{tpu_custom_call.1} parent=203 // pred_fallthru
          _
        // Predicated region
        $region221: #{tpu_custom_call.1} parent=203 // pred_check
          %p1681 = pneg %p319
        $region222: #{tpu_custom_call.1} parent=203 // pred_check_branch
          %1683 = sbr.rel (%p1681) target = $region224
        $region223: #{tpu_custom_call.1} parent=203 // pred_region
          %1684 = dma.done [#allocation9], 16
        $region224: #{tpu_custom_call.1} parent=203 // pred_fallthru
          _
        // Predicated region
        $region225: #{tpu_custom_call.1} parent=203 // pred_check
          %p1685 = pneg %p361
        $region226: #{tpu_custom_call.1} parent=203 // pred_check_branch
          %1687 = sbr.rel (%p1685) target = $region228
        $region227: #{tpu_custom_call.1} parent=203 // pred_region
          %1688 = dma.done [#allocation12], 16
        $region228: #{tpu_custom_call.1} parent=203 // pred_fallthru
          _
        // Predicated region
        $region229: #{tpu_custom_call.1} parent=203 // pred_check
          %p1689 = pneg %p382
        $region230: #{tpu_custom_call.1} parent=203 // pred_check_branch
          %1691 = sbr.rel (%p1689) target = $region232
        $region231: #{tpu_custom_call.1} parent=203 // pred_region
          %1692 = dma.done [#allocation12], 32
        $region232: #{tpu_custom_call.1} parent=203 // pred_fallthru
          _
        // Predicated region
        $region233: #{tpu_custom_call.1} parent=203 // pred_check
          %p1693 = pneg %p424
        $region234: #{tpu_custom_call.1} parent=203 // pred_check_branch
          %1695 = sbr.rel (%p1693) target = $region236
        $region235: #{tpu_custom_call.1} parent=203 // pred_region
          %1696 = dma.done [#allocation15], 16
        $region236: #{tpu_custom_call.1} parent=203 // pred_fallthru
          _
        // Predicated region
        $region237: #{tpu_custom_call.1} parent=203 // pred_check
          %p1697 = pneg %p466
        $region238: #{tpu_custom_call.1} parent=203 // pred_check_branch
          %1699 = sbr.rel (%p1697) target = $region240
        $region239: #{tpu_custom_call.1} parent=203 // pred_region
          %1700 = dma.done [#allocation15], 16
        $region240: #{tpu_custom_call.1} parent=203 // pred_fallthru
          _
        // Predicated region
        $region241: #{tpu_custom_call.1} parent=203 // pred_check
          %p1701 = pneg %p487
        $region242: #{tpu_custom_call.1} parent=203 // pred_check_branch
          %1703 = sbr.rel (%p1701) target = $region244
        $region243: #{tpu_custom_call.1} parent=203 // pred_region
          %1704 = dma.done [#allocation18], 512
        $region244: #{tpu_custom_call.1} parent=203 // pred_fallthru
          _
        // Predicated region
        $region245: #{tpu_custom_call.1} parent=203 // pred_check
          %p1705 = pneg %p508
        $region246: #{tpu_custom_call.1} parent=203 // pred_check_branch
          %1707 = sbr.rel (%p1705) target = $region248
        $region247: #{tpu_custom_call.1} parent=203 // pred_region
          %1708 = dma.done [#allocation18], 16
        $region248: #{tpu_custom_call.1} parent=203 // pred_fallthru
          _
        // Predicated region
        $region249: #{tpu_custom_call.1} parent=203 // pred_check
          %p1709 = pneg %p529
        $region250: #{tpu_custom_call.1} parent=203 // pred_check_branch
          %1711 = sbr.rel (%p1709) target = $region252
        $region251: #{tpu_custom_call.1} parent=203 // pred_region
          %1712 = dma.done [#allocation21], 32
        $region252: #{tpu_custom_call.1} parent=203 // pred_fallthru
          _
        // Predicated region
        $region253: #{tpu_custom_call.1} parent=203 // pred_check
          %p1713 = pneg %p550
        $region254: #{tpu_custom_call.1} parent=203 // pred_check_branch
          %1715 = sbr.rel (%p1713) target = $region256
        $region255: #{tpu_custom_call.1} parent=203 // pred_region
          %1716 = dma.done [#allocation21], 512
        $region256: #{tpu_custom_call.1} parent=203 // pred_fallthru
          _
        // Predicated region
        $region257: #{tpu_custom_call.1} parent=203 // pred_check
          %p1717 = pneg %p571
        $region258: #{tpu_custom_call.1} parent=203 // pred_check_branch
          %1719 = sbr.rel (%p1717) target = $region260
        $region259: #{tpu_custom_call.1} parent=203 // pred_region
          %1720 = dma.done [#allocation24], 16
        $region260: #{tpu_custom_call.1} parent=203 // pred_fallthru
          _
        // Predicated region
        $region261: #{tpu_custom_call.1} parent=203 // pred_check
          %p1721 = pneg %p592
        $region262: #{tpu_custom_call.1} parent=203 // pred_check_branch
          %1723 = sbr.rel (%p1721) target = $region264
        $region263: #{tpu_custom_call.1} parent=203 // pred_region
          %1724 = dma.done [#allocation24], 512
        $region264: #{tpu_custom_call.1} parent=203 // pred_fallthru
          _
        // Predicated region
        $region265: #{tpu_custom_call.1} parent=203 // pred_check
          %p1725 = pneg %p613
        $region266: #{tpu_custom_call.1} parent=203 // pred_check_branch
          %1727 = sbr.rel (%p1725) target = $region268
        $region267: #{tpu_custom_call.1} parent=203 // pred_region
          %1728 = dma.done [#allocation27], 16
        $region268: #{tpu_custom_call.1} parent=203 // pred_fallthru
          _
        // Predicated region
        $region269: #{tpu_custom_call.1} parent=203 // pred_check
          %p1729 = pneg %p634
        $region270: #{tpu_custom_call.1} parent=203 // pred_check_branch
          %1731 = sbr.rel (%p1729) target = $region272
        $region271: #{tpu_custom_call.1} parent=203 // pred_region
          %1732 = dma.done [#allocation27], 512
        $region272: #{tpu_custom_call.1} parent=203 // pred_fallthru
          _
        // Predicated region
        $region273: #{tpu_custom_call.1} parent=203 // pred_check
          %p1733 = pneg %p655
        $region274: #{tpu_custom_call.1} parent=203 // pred_check_branch
          %1735 = sbr.rel (%p1733) target = $region276
        $region275: #{tpu_custom_call.1} parent=203 // pred_region
          %1736 = dma.done [#allocation30], 16
        $region276: #{tpu_custom_call.1} parent=203 // pred_fallthru
          _
        // Predicated region
        $region277: #{tpu_custom_call.1} parent=203 // pred_check
          %p1737 = pneg %p676
        $region278: #{tpu_custom_call.1} parent=203 // pred_check_branch
          %1739 = sbr.rel (%p1737) target = $region280
        $region279: #{tpu_custom_call.1} parent=203 // pred_region
          %1740 = dma.done [#allocation30], 512
        $region280: #{tpu_custom_call.1} parent=203 // pred_fallthru
          _
        // Predicated region
        $region281: #{tpu_custom_call.1} parent=203 // pred_check
          %p1741 = pneg %p697
        $region282: #{tpu_custom_call.1} parent=203 // pred_check_branch
          %1743 = sbr.rel (%p1741) target = $region284
        $region283: #{tpu_custom_call.1} parent=203 // pred_region
          %1744 = dma.done [#allocation33], 16
        $region284: #{tpu_custom_call.1} parent=203 // pred_fallthru
          _
        // Predicated region
        $region285: #{tpu_custom_call.1} parent=203 // pred_check
          %p1745 = pneg %p718
        $region286: #{tpu_custom_call.1} parent=203 // pred_check_branch
          %1747 = sbr.rel (%p1745) target = $region288
        $region287: #{tpu_custom_call.1} parent=203 // pred_region
          %1748 = dma.done [#allocation33], 32
        $region288: #{tpu_custom_call.1} parent=203 // pred_fallthru
          _
        // Predicated region
        $region289: #{tpu_custom_call.1} parent=203 // pred_check
          %p1749 = pneg %p739
        $region290: #{tpu_custom_call.1} parent=203 // pred_check_branch
          %1751 = sbr.rel (%p1749) target = $region292
        $region291: #{tpu_custom_call.1} parent=203 // pred_region
          %1752 = dma.done [#allocation36], 512
        $region292: #{tpu_custom_call.1} parent=203 // pred_fallthru
          _
        // Predicated region
        $region293: #{tpu_custom_call.1} parent=203 // pred_check
          %p1753 = pneg %p760
        $region294: #{tpu_custom_call.1} parent=203 // pred_check_branch
          %1755 = sbr.rel (%p1753) target = $region296
        $region295: #{tpu_custom_call.1} parent=203 // pred_region
          %1756 = dma.done [#allocation36], 16
        $region296: #{tpu_custom_call.1} parent=203 // pred_fallthru
          _
        // Predicated region
        $region297: #{tpu_custom_call.1} parent=203 // pred_check
          %p1757 = pneg %p802
        $region298: #{tpu_custom_call.1} parent=203 // pred_check_branch
          %1759 = sbr.rel (%p1757) target = $region300
        $region299: #{tpu_custom_call.1} parent=203 // pred_region
          %1760 = dma.done [#allocation39], 16
        $region300: #{tpu_custom_call.1} parent=203 // pred_fallthru
          _
        // Predicated region
        $region301: #{tpu_custom_call.1} parent=203 // pred_check
          %p1761 = pneg %p823
        $region302: #{tpu_custom_call.1} parent=203 // pred_check_branch
          %1763 = sbr.rel (%p1761) target = $region304
        $region303: #{tpu_custom_call.1} parent=203 // pred_region
          %1764 = dma.done [#allocation39], 32
        $region304: #{tpu_custom_call.1} parent=203 // pred_fallthru
          _
        // Predicated region
        $region305: #{tpu_custom_call.1} parent=203 // pred_check
          %p1765 = pneg %p844
        $region306: #{tpu_custom_call.1} parent=203 // pred_check_branch
          %1767 = sbr.rel (%p1765) target = $region308
        $region307: #{tpu_custom_call.1} parent=203 // pred_region
          %1768 = dma.done [#allocation42], 512
        $region308: #{tpu_custom_call.1} parent=203 // pred_fallthru
          _
        // Predicated region
        $region309: #{tpu_custom_call.1} parent=203 // pred_check
          %p1769 = pneg %p865
        $region310: #{tpu_custom_call.1} parent=203 // pred_check_branch
          %1771 = sbr.rel (%p1769) target = $region312
        $region311: #{tpu_custom_call.1} parent=203 // pred_region
          %1772 = dma.done [#allocation42], 16
        $region312: #{tpu_custom_call.1} parent=203 // pred_fallthru
          _
        // Predicated region
        $region313: #{tpu_custom_call.1} parent=203 // pred_check
          %p1773 = pneg %p886
        $region314: #{tpu_custom_call.1} parent=203 // pred_check_branch
          %1775 = sbr.rel (%p1773) target = $region316
        $region315: #{tpu_custom_call.1} parent=203 // pred_region
          %1776 = dma.done [#allocation45], 512
        $region316: #{tpu_custom_call.1} parent=203 // pred_fallthru
          _
        // Predicated region
        $region317: #{tpu_custom_call.1} parent=203 // pred_check
          %p1777 = pneg %p907
        $region318: #{tpu_custom_call.1} parent=203 // pred_check_branch
          %1779 = sbr.rel (%p1777) target = $region320
        $region319: #{tpu_custom_call.1} parent=203 // pred_region
          %1780 = dma.done [#allocation45], 16
        $region320: #{tpu_custom_call.1} parent=203 // pred_fallthru
          _
        // Predicated region
        $region321: #{tpu_custom_call.1} parent=203 // pred_check
          %p1781 = pneg %p949
        $region322: #{tpu_custom_call.1} parent=203 // pred_check_branch
          %1783 = sbr.rel (%p1781) target = $region324
        $region323: #{tpu_custom_call.1} parent=203 // pred_region
          %1784 = dma.done [#allocation48], 16
        $region324: #{tpu_custom_call.1} parent=203 // pred_fallthru
          _
        // Predicated region
        $region325: #{tpu_custom_call.1} parent=203 // pred_check
          %p1785 = pneg %p970
        $region326: #{tpu_custom_call.1} parent=203 // pred_check_branch
          %1787 = sbr.rel (%p1785) target = $region328
        $region327: #{tpu_custom_call.1} parent=203 // pred_region
          %1788 = dma.done [#allocation48], 512
        $region328: #{tpu_custom_call.1} parent=203 // pred_fallthru
          _
        // Predicated region
        $region329: #{tpu_custom_call.1} parent=203 // pred_check
          %p1789 = pneg %p991
        $region330: #{tpu_custom_call.1} parent=203 // pred_check_branch
          %1791 = sbr.rel (%p1789) target = $region332
        $region331: #{tpu_custom_call.1} parent=203 // pred_region
          %1792 = dma.done [#allocation51], 16
        $region332: #{tpu_custom_call.1} parent=203 // pred_fallthru
          _
        // Predicated region
        $region333: #{tpu_custom_call.1} parent=203 // pred_check
          %p1793 = pneg %p1033
        $region334: #{tpu_custom_call.1} parent=203 // pred_check_branch
          %1795 = sbr.rel (%p1793) target = $region336
        $region335: #{tpu_custom_call.1} parent=203 // pred_region
          %1796 = dma.done [#allocation51], 512
        $region336: #{tpu_custom_call.1} parent=203 // pred_fallthru
          _
        %s1797 = sand.u32 %s144, 1
        %s1798 = scalar_lea.sflag [#allocation3], %s1797
        %s1799 = sand.u32 %s144, 1
        %s1800 = smul.addr %s1799, 8
        %s1801 = scalar_lea.vmem [#allocation2], %s1800
        %p1802 = pneg %p157
        %p1803 = pneg %p154
        %s1804 = sand.u32 %s136, 1
        %s1805 = scalar_lea.sflag [#allocation6], %s1804
        %s1806 = sand.u32 %s170, 1
        %s1807 = smul.addr %s1806, 8
        %s1808 = scalar_lea.vmem [#allocation5], %s1807
        %p1809 = pneg %p183
        %p1810 = pneg %p180
        %s1811 = sand.u32 %s136, 1
        %s1812 = scalar_lea.sflag [#allocation6], %s1811
        %s1813 = sand.u32 %s196, 1
        %s1814 = smul.addr %s1813, 8
        %s1815 = scalar_lea.vmem [#allocation7], %s1814
        %p1816 = pneg %p209
        %p1817 = pneg %p206
        %s1818 = sand.u32 %s136, 1
        %s1819 = scalar_lea.sflag [#allocation9], %s1818
        %s1820 = sand.u32 %s222, 1
        %s1821 = smul.addr %s1820, 8
        %s1822 = scalar_lea.vmem [#allocation8], %s1821
        %p1823 = pneg %p235
        %p1824 = pneg %p232
        %p1825 = pneg %p256
        %p1826 = pneg %p253
        %p1827 = pneg %p277
        %p1828 = pneg %p274
        %p1829 = pneg %p298
        %p1830 = pneg %p295
        %p1831 = pneg %p319
        %p1832 = pneg %p316
        %p1833 = pneg %p340
        %p1834 = pneg %p337
        %p1835 = pneg %p361
        %p1836 = pneg %p358
        %p1837 = pneg %p382
        %p1838 = pneg %p379
        %p1839 = pneg %p403
        %p1840 = pneg %p400
        %p1841 = pneg %p424
        %p1842 = pneg %p421
        %p1843 = pneg %p445
        %p1844 = pneg %p442
        %p1845 = pneg %p466
        %p1846 = pneg %p463
        %p1847 = pneg %p487
        %p1848 = pneg %p484
        %p1849 = pneg %p508
        %p1850 = pneg %p505
        %p1851 = pneg %p529
        %p1852 = pneg %p526
        %p1853 = pneg %p550
        %p1854 = pneg %p547
        %p1855 = pneg %p571
        %p1856 = pneg %p568
        %p1857 = pneg %p592
        %p1858 = pneg %p589
        %p1859 = pneg %p613
        %p1860 = pneg %p610
        %p1861 = pneg %p634
        %p1862 = pneg %p631
        %p1863 = pneg %p655
        %p1864 = pneg %p652
        %p1865 = pneg %p676
        %p1866 = pneg %p673
        %p1867 = pneg %p697
        %p1868 = pneg %p694
        %p1869 = pneg %p718
        %p1870 = pneg %p715
        %p1871 = pneg %p739
        %p1872 = pneg %p736
        %p1873 = pneg %p760
        %p1874 = pneg %p757
        %p1875 = pneg %p781
        %p1876 = pneg %p778
        %p1877 = pneg %p802
        %p1878 = pneg %p799
        %p1879 = pneg %p823
        %p1880 = pneg %p820
        %p1881 = pneg %p844
        %p1882 = pneg %p841
        %p1883 = pneg %p865
        %p1884 = pneg %p862
        %p1885 = pneg %p886
        %p1886 = pneg %p883
        %p1887 = pneg %p907
        %p1888 = pneg %p904
        %p1889 = pneg %p928
        %p1890 = pneg %p925
        %p1891 = pneg %p949
        %p1892 = pneg %p946
        %p1893 = pneg %p970
        %p1894 = pneg %p967
        %p1895 = pneg %p991
        %p1896 = pneg %p988
        %p1897 = pneg %p1012
        %p1898 = pneg %p1009
        %p1899 = pneg %p1033
        %p1900 = pneg %p1030
        %p1901 = pneg %p1054
        %p1902 = pneg %p1051
        %p1903 = pneg %p1075
        %p1904 = pneg %p1072
        %p1905 = pneg %p1096
        %p1906 = pneg %p1093
        %p1907 = pneg %p1117
        %p1908 = pneg %p1114
        %p1909 = pneg %p1143
        %p1910 = pneg %p1140
        %s1911 = sand.u32 %s1130, 1
        %s1912 = scalar_lea.sflag [#allocation4], %s1911
        %s1913 = sand.u32 %s1130, 1
        %s1914 = smul.addr %s1913, 8
        %s1915 = scalar_lea.vmem [#allocation53], %s1914
        %p1916 = pneg %p1169
        %p1917 = pneg %p1166
        %s1918 = sand.u32 %s1156, 1
        %s1919 = scalar_lea.sflag [#allocation55], %s1918
        %s1920 = sand.u32 %s1156, 1
        %s1921 = smul.addr %s1920, 8
        %s1922 = scalar_lea.vmem [#allocation54], %s1921
        %v1923 = vld [vmem:[%s1649] sm:$0xff]
        %v1924 = vld [vmem:[%s1658] sm:$0xff]
        %v1925 = vld [vmem:[%s1667] sm:$0xff]
        %v1926 = vld [vmem:[%s1676] sm:$0xff]
        %v1927 = vld [vmem:[%s9] sm:$0xff]
        %v1928 = vld [vmem:[%s9 + $0x8] sm:$0xff]
        %v1929 = vld [vmem:[%s9 + $0x10] sm:$0xff]
        %v1930 = vld [vmem:[%s9 + $0x18] sm:$0xff]
        %v1931 = vld [vmem:[%s11] sm:$0x1]
        %v1932 = vld [vmem:[%s13] sm:$0xff]
        %v1933 = vld [vmem:[%s13 + $0x8] sm:$0xff]
        %v1934 = vld [vmem:[%s13 + $0x10] sm:$0xff]
        %v1935 = vld [vmem:[%s13 + $0x18] sm:$0xff]
        %v1936 = vld [vmem:[#allocation10] sm:$0x1]
        %v1937 = vld [vmem:[%s17] sm:$0xff]
        %v1938 = vld [vmem:[%s17 + $0x8] sm:$0xff]
        %v1939 = vld [vmem:[%s17 + $0x10] sm:$0xff]
        %v1940 = vld [vmem:[%s17 + $0x18] sm:$0xff]
        %v1941 = vld [vmem:[#allocation11] sm:$0x1]
        %v1942 = vld [vmem:[#allocation13] sm:$0x3]
        %v1943 = vadd.f32 %v1923, %v1924
        %v1945 = vlaneseq
        %v1946 = vshrl.u32 %v1945, 7
        %v1947 = vsub.s32 0, %v1946
        %v1948 = vrot.slane %v1931, %v1947
        %vm1950 = vcmask 261120
        %v1952 = vsel %vm1950, %v1943, 0
        %1954 = vmatprep.subr.mxu0 0.0
        %1955 = vmatpush1.msra.mxu0 0.0
        %1956 = vmatprep.subr.mxu0 0.0
        %1957 = vmatpush1.msra.mxu0 0.0
        %1958 = vmatprep.subr.mxu0 0.0
        %1959 = vmatpush1.msra.mxu0 0.0
        %1960 = vmatprep.subr.mxu0 0.0
        %1961 = vmatpush1.msra.mxu0 0.0
        %1962 = vmatprep.subr.mxu0 0.0
        %1963 = vmatpush1.msra.mxu0 0.0
        %1964 = vmatprep.subr.mxu0 0.0
        %1965 = vmatpush1.msra.mxu0 0.0
        %1966 = vmatprep.subr.mxu0 0.0
        %1967 = vmatpush1.msra.mxu0 0.0
        %1968 = vmatprep.subr.mxu0 0.0
        %1969 = vmatpush1.msra.mxu0 0.0
        %1970 = vmatprep.subr.mxu0 0.0
        %1971 = vmatpush1.msra.mxu0 0.0
        %1972 = vmatprep.subr.mxu0 0.0
        %1973 = vmatpush1.msra.mxu0 0.0
        %1974 = vmatprep.subr.mxu0 0.0
        %1975 = vmatpush1.msra.mxu0 0.0
        %1976 = vmatprep.subr.mxu0 0.0
        %1977 = vmatpush1.msra.mxu0 0.0
        %1978 = vmatprep.subr.mxu0 0.0
        %1979 = vmatpush1.msra.mxu0 %v1930
        %1980 = vmatprep.subr.mxu0 0.0
        %1981 = vmatpush1.msra.mxu0 %v1929
        %1982 = vmatprep.subr.mxu0 0.0
        %1983 = vmatpush1.msra.mxu0 %v1928
        %1984 = vmatprep.subr.mxu0 0.0
        %1985 = vmatpush1.msra.mxu0 %v1927
        %1986 = vmatprep.subr.mxu0 0.0
        %1987 = vmatpush2.msra.mxu0 0.0
        %1988 = vmatprep.subr.mxu0 0.0
        %1989 = vmatpush2.msra.mxu0 0.0
        %1990 = vmatprep.subr.mxu0 0.0
        %1991 = vmatpush2.msra.mxu0 0.0
        %1992 = vmatprep.subr.mxu0 0.0
        %1993 = vmatpush2.msra.mxu0 0.0
        %1994 = vmatprep.subr.mxu0 0.0
        %1995 = vmatpush2.msra.mxu0 0.0
        %1996 = vmatprep.subr.mxu0 0.0
        %1997 = vmatpush2.msra.mxu0 0.0
        %1998 = vmatprep.subr.mxu0 0.0
        %1999 = vmatpush2.msra.mxu0 0.0
        %2000 = vmatprep.subr.mxu0 0.0
        %2001 = vmatpush2.msra.mxu0 0.0
        %2002 = vmatprep.subr.mxu0 0.0
        %2003 = vmatpush2.msra.mxu0 0.0
        %2004 = vmatprep.subr.mxu0 0.0
        %2005 = vmatpush2.msra.mxu0 0.0
        %2006 = vmatprep.subr.mxu0 0.0
        %2007 = vmatpush2.msra.mxu0 0.0
        %2008 = vmatprep.subr.mxu0 0.0
        %2009 = vmatpush2.msra.mxu0 0.0
        %2010 = vmatprep.subr.mxu0 0.0
        %2011 = vmatpush2.msra.mxu0 0.0
        %2012 = vmatprep.subr.mxu0 0.0
        %2013 = vmatpush2.msra.mxu0 0.0
        %2014 = vmatprep.subr.mxu0 0.0
        %2015 = vmatpush2.msra.mxu0 0.0
        %2016 = vmatprep.subr.mxu0 0.0
        %2017 = vmatpush2.msra.mxu0 0.0
        %2018 = vmatprep.mubr.f32.mxu0 0.0
        %2019 = vmatmul.mubr.f32.gmra.mxu0 %v1952
        %v2020 = vpop.f32.mrf.mxu0
        %v2021 = vadd.f32 %v1948, %v2020
        %v2022 = vpop.f32.mrf.mxu0
        %2023 = vdwg.mxu0
        %v2025 = vlaneseq
        %v2026 = vshrl.u32 %v2025, 7
        %v2027 = vsub.s32 0, %v2026
        %v2028 = vrot.slane %v1936, %v2027
        %v2031 = vsel %vm1950, %v1923, 0
        %2033 = vmatprep.subr.mxu0 0.0
        %2034 = vmatpush1.msra.mxu0 0.0
        %2035 = vmatprep.subr.mxu0 0.0
        %2036 = vmatpush1.msra.mxu0 0.0
        %2037 = vmatprep.subr.mxu0 0.0
        %2038 = vmatpush1.msra.mxu0 0.0
        %2039 = vmatprep.subr.mxu0 0.0
        %2040 = vmatpush1.msra.mxu0 0.0
        %2041 = vmatprep.subr.mxu0 0.0
        %2042 = vmatpush1.msra.mxu0 0.0
        %2043 = vmatprep.subr.mxu0 0.0
        %2044 = vmatpush1.msra.mxu0 0.0
        %2045 = vmatprep.subr.mxu0 0.0
        %2046 = vmatpush1.msra.mxu0 0.0
        %2047 = vmatprep.subr.mxu0 0.0
        %2048 = vmatpush1.msra.mxu0 0.0
        %2049 = vmatprep.subr.mxu0 0.0
        %2050 = vmatpush1.msra.mxu0 0.0
        %2051 = vmatprep.subr.mxu0 0.0
        %2052 = vmatpush1.msra.mxu0 0.0
        %2053 = vmatprep.subr.mxu0 0.0
        %2054 = vmatpush1.msra.mxu0 0.0
        %2055 = vmatprep.subr.mxu0 0.0
        %2056 = vmatpush1.msra.mxu0 0.0
        %2057 = vmatprep.subr.mxu0 0.0
        %2058 = vmatpush1.msra.mxu0 %v1935
        %2059 = vmatprep.subr.mxu0 0.0
        %2060 = vmatpush1.msra.mxu0 %v1934
        %2061 = vmatprep.subr.mxu0 0.0
        %2062 = vmatpush1.msra.mxu0 %v1933
        %2063 = vmatprep.subr.mxu0 0.0
        %2064 = vmatpush1.msra.mxu0 %v1932
        %2065 = vmatprep.subr.mxu0 0.0
        %2066 = vmatpush2.msra.mxu0 0.0
        %2067 = vmatprep.subr.mxu0 0.0
        %2068 = vmatpush2.msra.mxu0 0.0
        %2069 = vmatprep.subr.mxu0 0.0
        %2070 = vmatpush2.msra.mxu0 0.0
        %2071 = vmatprep.subr.mxu0 0.0
        %2072 = vmatpush2.msra.mxu0 0.0
        %2073 = vmatprep.subr.mxu0 0.0
        %2074 = vmatpush2.msra.mxu0 0.0
        %2075 = vmatprep.subr.mxu0 0.0
        %2076 = vmatpush2.msra.mxu0 0.0
        %2077 = vmatprep.subr.mxu0 0.0
        %2078 = vmatpush2.msra.mxu0 0.0
        %2079 = vmatprep.subr.mxu0 0.0
        %2080 = vmatpush2.msra.mxu0 0.0
        %2081 = vmatprep.subr.mxu0 0.0
        %2082 = vmatpush2.msra.mxu0 0.0
        %2083 = vmatprep.subr.mxu0 0.0
        %2084 = vmatpush2.msra.mxu0 0.0
        %2085 = vmatprep.subr.mxu0 0.0
        %2086 = vmatpush2.msra.mxu0 0.0
        %2087 = vmatprep.subr.mxu0 0.0
        %2088 = vmatpush2.msra.mxu0 0.0
        %2089 = vmatprep.subr.mxu0 0.0
        %2090 = vmatpush2.msra.mxu0 0.0
        %2091 = vmatprep.subr.mxu0 0.0
        %2092 = vmatpush2.msra.mxu0 0.0
        %2093 = vmatprep.subr.mxu0 0.0
        %2094 = vmatpush2.msra.mxu0 0.0
        %2095 = vmatprep.subr.mxu0 0.0
        %2096 = vmatpush2.msra.mxu0 0.0
        %2097 = vmatprep.mubr.f32.mxu0 0.0
        %2098 = vmatmul.mubr.f32.gmra.mxu0 %v2031
        %v2099 = vpop.f32.mrf.mxu0
        %v2100 = vadd.f32 %v2028, %v2099
        %v2101 = vpop.f32.mrf.mxu0
        %2102 = vdwg.mxu0
        %v2103 = vmul.f32 %v2021, 0.35355338
        %2105 = vrot.lane.b32.xlu0 %v2021, 96
        %v2106 = vpop.permute.xlu0 %2105
        %vm2107 = vcmask 64512
        %v2109 = vsel %vm2107, %v2103, 0
        %v2111 = vsel %vm2107, %v2106, 0
        %2113 = vmatprep.subr.mxu0 0.0
        %2114 = vmatpush1.xpose.msra.mxu0 0.0
        %2115 = vmatprep.subr.mxu0 0.0
        %2116 = vmatpush1.xpose.msra.mxu0 0.0
        %2117 = vmatprep.subr.mxu0 0.0
        %2118 = vmatpush1.xpose.msra.mxu0 0.0
        %2119 = vmatprep.subr.mxu0 0.0
        %2120 = vmatpush1.xpose.msra.mxu0 0.0
        %2121 = vmatprep.subr.mxu0 0.0
        %2122 = vmatpush1.xpose.msra.mxu0 0.0
        %2123 = vmatprep.subr.mxu0 0.0
        %2124 = vmatpush1.xpose.msra.mxu0 0.0
        %2125 = vmatprep.subr.mxu0 0.0
        %2126 = vmatpush1.xpose.msra.mxu0 0.0
        %2127 = vmatprep.subr.mxu0 0.0
        %2128 = vmatpush1.xpose.msra.mxu0 0.0
        %2129 = vmatprep.subr.mxu0 0.0
        %2130 = vmatpush1.xpose.msra.mxu0 0.0
        %2131 = vmatprep.subr.mxu0 0.0
        %2132 = vmatpush1.xpose.msra.mxu0 0.0
        %2133 = vmatprep.subr.mxu0 0.0
        %2134 = vmatpush1.xpose.msra.mxu0 0.0
        %2135 = vmatprep.subr.mxu0 0.0
        %2136 = vmatpush1.xpose.msra.mxu0 0.0
        %2137 = vmatprep.subr.mxu0 0.0
        %2138 = vmatpush1.xpose.msra.mxu0 0.0
        %2139 = vmatprep.subr.mxu0 0.0
        %2140 = vmatpush1.xpose.msra.mxu0 0.0
        %2141 = vmatprep.subr.mxu0 0.0
        %2142 = vmatpush1.xpose.msra.mxu0 0.0
        %2143 = vmatprep.subr.mxu0 0.0
        %2144 = vmatpush1.xpose.msra.mxu0 %v2111
        %2145 = vmatprep.subr.mxu0 0.0
        %2146 = vmatpush2.xpose.msra.mxu0 0.0
        %2147 = vmatprep.subr.mxu0 0.0
        %2148 = vmatpush2.xpose.msra.mxu0 0.0
        %2149 = vmatprep.subr.mxu0 0.0
        %2150 = vmatpush2.xpose.msra.mxu0 0.0
        %2151 = vmatprep.subr.mxu0 0.0
        %2152 = vmatpush2.xpose.msra.mxu0 0.0
        %2153 = vmatprep.subr.mxu0 0.0
        %2154 = vmatpush2.xpose.msra.mxu0 0.0
        %2155 = vmatprep.subr.mxu0 0.0
        %2156 = vmatpush2.xpose.msra.mxu0 0.0
        %2157 = vmatprep.subr.mxu0 0.0
        %2158 = vmatpush2.xpose.msra.mxu0 0.0
        %2159 = vmatprep.subr.mxu0 0.0
        %2160 = vmatpush2.xpose.msra.mxu0 0.0
        %2161 = vmatprep.subr.mxu0 0.0
        %2162 = vmatpush2.xpose.msra.mxu0 0.0
        %2163 = vmatprep.subr.mxu0 0.0
        %2164 = vmatpush2.xpose.msra.mxu0 0.0
        %2165 = vmatprep.subr.mxu0 0.0
        %2166 = vmatpush2.xpose.msra.mxu0 0.0
        %2167 = vmatprep.subr.mxu0 0.0
        %2168 = vmatpush2.xpose.msra.mxu0 0.0
        %2169 = vmatprep.subr.mxu0 0.0
        %2170 = vmatpush2.xpose.msra.mxu0 0.0
        %2171 = vmatprep.subr.mxu0 0.0
        %2172 = vmatpush2.xpose.msra.mxu0 0.0
        %2173 = vmatprep.subr.mxu0 0.0
        %2174 = vmatpush2.xpose.msra.mxu0 0.0
        %2175 = vmatprep.subr.mxu0 0.0
        %2176 = vmatpush2.xpose.msra.mxu0 0.0
        %2177 = vmatprep.mubr.f32.mxu0 0.0
        %2178 = vmatmul.mubr.f32.gmra.mxu0 %v2109
        %v2179 = vpop.f32.mrf.mxu0
        %v2180 = vadd.f32 0.0, %v2179
        %v2181 = vpop.f32.mrf.mxu0
        %2182 = vdwg.mxu0
        %v2183 = vsel %vm2107, %v2180, -inf
        %2184 = vmax.xlane.f32.xlu0 %v2183
        %v2185 = vpop.xlane.xlu0 %2184
        %v2186 = vsub.f32 %v2180, %v2185
        %v2187 = vmul.f32 %v2186, 1.442695
        %v2188 = vpow.pop %v2187
        %v2189 = vsel %vm2107, %v2188, 0.0
        %2190 = vadd.xlane.f32.xlu0 %v2189
        %v2191 = vpop.xlane.xlu0 %2190
        %v2192 = vrcp.pop %v2191
        %v2193 = vmul.f32 %v2188, %v2192
        %v2195 = vsel %vm2107, %v2193, 0
        %2197 = vmatprep.subr.mxu0 0.0
        %2198 = vmatpush1.msra.mxu0 0.0
        %2199 = vmatprep.subr.mxu0 0.0
        %2200 = vmatpush1.msra.mxu0 0.0
        %2201 = vmatprep.subr.mxu0 0.0
        %2202 = vmatpush1.msra.mxu0 0.0
        %2203 = vmatprep.subr.mxu0 0.0
        %2204 = vmatpush1.msra.mxu0 0.0
        %2205 = vmatprep.subr.mxu0 0.0
        %2206 = vmatpush1.msra.mxu0 0.0
        %2207 = vmatprep.subr.mxu0 0.0
        %2208 = vmatpush1.msra.mxu0 0.0
        %2209 = vmatprep.subr.mxu0 0.0
        %2210 = vmatpush1.msra.mxu0 0.0
        %2211 = vmatprep.subr.mxu0 0.0
        %2212 = vmatpush1.msra.mxu0 0.0
        %2213 = vmatprep.subr.mxu0 0.0
        %2214 = vmatpush1.msra.mxu0 0.0
        %2215 = vmatprep.subr.mxu0 0.0
        %2216 = vmatpush1.msra.mxu0 0.0
        %2217 = vmatprep.subr.mxu0 0.0
        %2218 = vmatpush1.msra.mxu0 0.0
        %2219 = vmatprep.subr.mxu0 0.0
        %2220 = vmatpush1.msra.mxu0 0.0
        %2221 = vmatprep.subr.mxu0 0.0
        %2222 = vmatpush1.msra.mxu0 0.0
        %2223 = vmatprep.subr.mxu0 0.0
        %2224 = vmatpush1.msra.mxu0 0.0
        %2225 = vmatprep.subr.mxu0 0.0
        %2226 = vmatpush1.msra.mxu0 0.0
        %2227 = vmatprep.subr.mxu0 0.0
        %2228 = vmatpush1.msra.mxu0 %v2100
        %2229 = vmatprep.subr.mxu0 0.0
        %2230 = vmatpush2.msra.mxu0 0.0
        %2231 = vmatprep.subr.mxu0 0.0
        %2232 = vmatpush2.msra.mxu0 0.0
        %2233 = vmatprep.subr.mxu0 0.0
        %2234 = vmatpush2.msra.mxu0 0.0
        %2235 = vmatprep.subr.mxu0 0.0
        %2236 = vmatpush2.msra.mxu0 0.0
        %2237 = vmatprep.subr.mxu0 0.0
        %2238 = vmatpush2.msra.mxu0 0.0
        %2239 = vmatprep.subr.mxu0 0.0
        %2240 = vmatpush2.msra.mxu0 0.0
        %2241 = vmatprep.subr.mxu0 0.0
        %2242 = vmatpush2.msra.mxu0 0.0
        %2243 = vmatprep.subr.mxu0 0.0
        %2244 = vmatpush2.msra.mxu0 0.0
        %2245 = vmatprep.subr.mxu0 0.0
        %2246 = vmatpush2.msra.mxu0 0.0
        %2247 = vmatprep.subr.mxu0 0.0
        %2248 = vmatpush2.msra.mxu0 0.0
        %2249 = vmatprep.subr.mxu0 0.0
        %2250 = vmatpush2.msra.mxu0 0.0
        %2251 = vmatprep.subr.mxu0 0.0
        %2252 = vmatpush2.msra.mxu0 0.0
        %2253 = vmatprep.subr.mxu0 0.0
        %2254 = vmatpush2.msra.mxu0 0.0
        %2255 = vmatprep.subr.mxu0 0.0
        %2256 = vmatpush2.msra.mxu0 0.0
        %2257 = vmatprep.subr.mxu0 0.0
        %2258 = vmatpush2.msra.mxu0 0.0
        %2259 = vmatprep.subr.mxu0 0.0
        %2260 = vmatpush2.msra.mxu0 0.0
        %2261 = vmatprep.mubr.f32.mxu0 0.0
        %2262 = vmatmul.mubr.f32.gmra.mxu0 %v2195
        %v2263 = vpop.f32.mrf.mxu0
        %v2264 = vadd.f32 0.0, %v2263
        %v2265 = vpop.f32.mrf.mxu0
        %2266 = vdwg.mxu0
        %2267 = vrot.lane.b32.xlu0 %v2103, 120
        %v2268 = vpop.permute.xlu0 %2267
        %2269 = vrot.lane.b32.xlu0 %v2021, 88
        %v2270 = vpop.permute.xlu0 %2269
        %v2271 = vsel %vm2107, %v2268, 0
        %v2273 = vsel %vm2107, %v2270, 0
        %2275 = vmatprep.subr.mxu0 0.0
        %2276 = vmatpush1.xpose.msra.mxu0 0.0
        %2277 = vmatprep.subr.mxu0 0.0
        %2278 = vmatpush1.xpose.msra.mxu0 0.0
        %2279 = vmatprep.subr.mxu0 0.0
        %2280 = vmatpush1.xpose.msra.mxu0 0.0
        %2281 = vmatprep.subr.mxu0 0.0
        %2282 = vmatpush1.xpose.msra.mxu0 0.0
        %2283 = vmatprep.subr.mxu0 0.0
        %2284 = vmatpush1.xpose.msra.mxu0 0.0
        %2285 = vmatprep.subr.mxu0 0.0
        %2286 = vmatpush1.xpose.msra.mxu0 0.0
        %2287 = vmatprep.subr.mxu0 0.0
        %2288 = vmatpush1.xpose.msra.mxu0 0.0
        %2289 = vmatprep.subr.mxu0 0.0
        %2290 = vmatpush1.xpose.msra.mxu0 0.0
        %2291 = vmatprep.subr.mxu0 0.0
        %2292 = vmatpush1.xpose.msra.mxu0 0.0
        %2293 = vmatprep.subr.mxu0 0.0
        %2294 = vmatpush1.xpose.msra.mxu0 0.0
        %2295 = vmatprep.subr.mxu0 0.0
        %2296 = vmatpush1.xpose.msra.mxu0 0.0
        %2297 = vmatprep.subr.mxu0 0.0
        %2298 = vmatpush1.xpose.msra.mxu0 0.0
        %2299 = vmatprep.subr.mxu0 0.0
        %2300 = vmatpush1.xpose.msra.mxu0 0.0
        %2301 = vmatprep.subr.mxu0 0.0
        %2302 = vmatpush1.xpose.msra.mxu0 0.0
        %2303 = vmatprep.subr.mxu0 0.0
        %2304 = vmatpush1.xpose.msra.mxu0 0.0
        %2305 = vmatprep.subr.mxu0 0.0
        %2306 = vmatpush1.xpose.msra.mxu0 %v2273
        %2307 = vmatprep.subr.mxu0 0.0
        %2308 = vmatpush2.xpose.msra.mxu0 0.0
        %2309 = vmatprep.subr.mxu0 0.0
        %2310 = vmatpush2.xpose.msra.mxu0 0.0
        %2311 = vmatprep.subr.mxu0 0.0
        %2312 = vmatpush2.xpose.msra.mxu0 0.0
        %2313 = vmatprep.subr.mxu0 0.0
        %2314 = vmatpush2.xpose.msra.mxu0 0.0
        %2315 = vmatprep.subr.mxu0 0.0
        %2316 = vmatpush2.xpose.msra.mxu0 0.0
        %2317 = vmatprep.subr.mxu0 0.0
        %2318 = vmatpush2.xpose.msra.mxu0 0.0
        %2319 = vmatprep.subr.mxu0 0.0
        %2320 = vmatpush2.xpose.msra.mxu0 0.0
        %2321 = vmatprep.subr.mxu0 0.0
        %2322 = vmatpush2.xpose.msra.mxu0 0.0
        %2323 = vmatprep.subr.mxu0 0.0
        %2324 = vmatpush2.xpose.msra.mxu0 0.0
        %2325 = vmatprep.subr.mxu0 0.0
        %2326 = vmatpush2.xpose.msra.mxu0 0.0
        %2327 = vmatprep.subr.mxu0 0.0
        %2328 = vmatpush2.xpose.msra.mxu0 0.0
        %2329 = vmatprep.subr.mxu0 0.0
        %2330 = vmatpush2.xpose.msra.mxu0 0.0
        %2331 = vmatprep.subr.mxu0 0.0
        %2332 = vmatpush2.xpose.msra.mxu0 0.0
        %2333 = vmatprep.subr.mxu0 0.0
        %2334 = vmatpush2.xpose.msra.mxu0 0.0
        %2335 = vmatprep.subr.mxu0 0.0
        %2336 = vmatpush2.xpose.msra.mxu0 0.0
        %2337 = vmatprep.subr.mxu0 0.0
        %2338 = vmatpush2.xpose.msra.mxu0 0.0
        %2339 = vmatprep.mubr.f32.mxu0 0.0
        %2340 = vmatmul.mubr.f32.gmra.mxu0 %v2271
        %v2341 = vpop.f32.mrf.mxu0
        %v2342 = vadd.f32 0.0, %v2341
        %v2343 = vpop.f32.mrf.mxu0
        %2344 = vdwg.mxu0
        %v2345 = vsel %vm2107, %v2342, -inf
        %2346 = vmax.xlane.f32.xlu0 %v2345
        %v2347 = vpop.xlane.xlu0 %2346
        %v2348 = vsub.f32 %v2342, %v2347
        %v2349 = vmul.f32 %v2348, 1.442695
        %v2350 = vpow.pop %v2349
        %v2351 = vsel %vm2107, %v2350, 0.0
        %2352 = vadd.xlane.f32.xlu0 %v2351
        %v2353 = vpop.xlane.xlu0 %2352
        %v2354 = vrcp.pop %v2353
        %v2355 = vmul.f32 %v2350, %v2354
        %2357 = vrot.lane.b32.xlu0 %v2100, 120
        %v2358 = vpop.permute.xlu0 %2357
        %v2361 = vsel %vm2107, %v2355, 0
        %2363 = vmatprep.subr.mxu0 0.0
        %2364 = vmatpush1.msra.mxu0 0.0
        %2365 = vmatprep.subr.mxu0 0.0
        %2366 = vmatpush1.msra.mxu0 0.0
        %2367 = vmatprep.subr.mxu0 0.0
        %2368 = vmatpush1.msra.mxu0 0.0
        %2369 = vmatprep.subr.mxu0 0.0
        %2370 = vmatpush1.msra.mxu0 0.0
        %2371 = vmatprep.subr.mxu0 0.0
        %2372 = vmatpush1.msra.mxu0 0.0
        %2373 = vmatprep.subr.mxu0 0.0
        %2374 = vmatpush1.msra.mxu0 0.0
        %2375 = vmatprep.subr.mxu0 0.0
        %2376 = vmatpush1.msra.mxu0 0.0
        %2377 = vmatprep.subr.mxu0 0.0
        %2378 = vmatpush1.msra.mxu0 0.0
        %2379 = vmatprep.subr.mxu0 0.0
        %2380 = vmatpush1.msra.mxu0 0.0
        %2381 = vmatprep.subr.mxu0 0.0
        %2382 = vmatpush1.msra.mxu0 0.0
        %2383 = vmatprep.subr.mxu0 0.0
        %2384 = vmatpush1.msra.mxu0 0.0
        %2385 = vmatprep.subr.mxu0 0.0
        %2386 = vmatpush1.msra.mxu0 0.0
        %2387 = vmatprep.subr.mxu0 0.0
        %2388 = vmatpush1.msra.mxu0 0.0
        %2389 = vmatprep.subr.mxu0 0.0
        %2390 = vmatpush1.msra.mxu0 0.0
        %2391 = vmatprep.subr.mxu0 0.0
        %2392 = vmatpush1.msra.mxu0 0.0
        %2393 = vmatprep.subr.mxu0 0.0
        %2394 = vmatpush1.msra.mxu0 %v2358
        %2395 = vmatprep.subr.mxu0 0.0
        %2396 = vmatpush2.msra.mxu0 0.0
        %2397 = vmatprep.subr.mxu0 0.0
        %2398 = vmatpush2.msra.mxu0 0.0
        %2399 = vmatprep.subr.mxu0 0.0
        %2400 = vmatpush2.msra.mxu0 0.0
        %2401 = vmatprep.subr.mxu0 0.0
        %2402 = vmatpush2.msra.mxu0 0.0
        %2403 = vmatprep.subr.mxu0 0.0
        %2404 = vmatpush2.msra.mxu0 0.0
        %2405 = vmatprep.subr.mxu0 0.0
        %2406 = vmatpush2.msra.mxu0 0.0
        %2407 = vmatprep.subr.mxu0 0.0
        %2408 = vmatpush2.msra.mxu0 0.0
        %2409 = vmatprep.subr.mxu0 0.0
        %2410 = vmatpush2.msra.mxu0 0.0
        %2411 = vmatprep.subr.mxu0 0.0
        %2412 = vmatpush2.msra.mxu0 0.0
        %2413 = vmatprep.subr.mxu0 0.0
        %2414 = vmatpush2.msra.mxu0 0.0
        %2415 = vmatprep.subr.mxu0 0.0
        %2416 = vmatpush2.msra.mxu0 0.0
        %2417 = vmatprep.subr.mxu0 0.0
        %2418 = vmatpush2.msra.mxu0 0.0
        %2419 = vmatprep.subr.mxu0 0.0
        %2420 = vmatpush2.msra.mxu0 0.0
        %2421 = vmatprep.subr.mxu0 0.0
        %2422 = vmatpush2.msra.mxu0 0.0
        %2423 = vmatprep.subr.mxu0 0.0
        %2424 = vmatpush2.msra.mxu0 0.0
        %2425 = vmatprep.subr.mxu0 0.0
        %2426 = vmatpush2.msra.mxu0 0.0
        %2427 = vmatprep.mubr.f32.mxu0 0.0
        %2428 = vmatmul.mubr.f32.gmra.mxu0 %v2361
        %v2429 = vpop.f32.mrf.mxu0
        %v2430 = vadd.f32 0.0, %v2429
        %v2431 = vpop.f32.mrf.mxu0
        %2432 = vdwg.mxu0
        %v2434 = vsel %vm2107, %v2430, 0
        %2436 = vmatprep.subr.mxu0 0.0
        %2437 = vmatpush1.msra.mxu0 0.0
        %2438 = vmatprep.subr.mxu0 0.0
        %2439 = vmatpush1.msra.mxu0 0.0
        %2440 = vmatprep.subr.mxu0 0.0
        %2441 = vmatpush1.msra.mxu0 0.0
        %2442 = vmatprep.subr.mxu0 0.0
        %2443 = vmatpush1.msra.mxu0 0.0
        %2444 = vmatprep.subr.mxu0 0.0
        %2445 = vmatpush1.msra.mxu0 0.0
        %2446 = vmatprep.subr.mxu0 0.0
        %2447 = vmatpush1.msra.mxu0 0.0
        %2448 = vmatprep.subr.mxu0 0.0
        %2449 = vmatpush1.msra.mxu0 0.0
        %2450 = vmatprep.subr.mxu0 0.0
        %2451 = vmatpush1.msra.mxu0 0.0
        %2452 = vmatprep.subr.mxu0 0.0
        %2453 = vmatpush1.msra.mxu0 0.0
        %2454 = vmatprep.subr.mxu0 0.0
        %2455 = vmatpush1.msra.mxu0 0.0
        %2456 = vmatprep.subr.mxu0 0.0
        %2457 = vmatpush1.msra.mxu0 0.0
        %2458 = vmatprep.subr.mxu0 0.0
        %2459 = vmatpush1.msra.mxu0 0.0
        %2460 = vmatprep.subr.mxu0 0.0
        %2461 = vmatpush1.msra.mxu0 0.0
        %2462 = vmatprep.subr.mxu0 0.0
        %2463 = vmatpush1.msra.mxu0 0.0
        %2464 = vmatprep.subr.mxu0 0.0
        %2465 = vmatpush1.msra.mxu0 0.0
        %2466 = vmatprep.subr.mxu0 0.0
        %2467 = vmatpush1.msra.mxu0 %v1938
        %2468 = vmatprep.subr.mxu0 0.0
        %2469 = vmatpush2.msra.mxu0 0.0
        %2470 = vmatprep.subr.mxu0 0.0
        %2471 = vmatpush2.msra.mxu0 0.0
        %2472 = vmatprep.subr.mxu0 0.0
        %2473 = vmatpush2.msra.mxu0 0.0
        %2474 = vmatprep.subr.mxu0 0.0
        %2475 = vmatpush2.msra.mxu0 0.0
        %2476 = vmatprep.subr.mxu0 0.0
        %2477 = vmatpush2.msra.mxu0 0.0
        %2478 = vmatprep.subr.mxu0 0.0
        %2479 = vmatpush2.msra.mxu0 0.0
        %2480 = vmatprep.subr.mxu0 0.0
        %2481 = vmatpush2.msra.mxu0 0.0
        %2482 = vmatprep.subr.mxu0 0.0
        %2483 = vmatpush2.msra.mxu0 0.0
        %2484 = vmatprep.subr.mxu0 0.0
        %2485 = vmatpush2.msra.mxu0 0.0
        %2486 = vmatprep.subr.mxu0 0.0
        %2487 = vmatpush2.msra.mxu0 0.0
        %2488 = vmatprep.subr.mxu0 0.0
        %2489 = vmatpush2.msra.mxu0 0.0
        %2490 = vmatprep.subr.mxu0 0.0
        %2491 = vmatpush2.msra.mxu0 0.0
        %2492 = vmatprep.subr.mxu0 0.0
        %2493 = vmatpush2.msra.mxu0 0.0
        %2494 = vmatprep.subr.mxu0 0.0
        %2495 = vmatpush2.msra.mxu0 0.0
        %2496 = vmatprep.subr.mxu0 0.0
        %2497 = vmatpush2.msra.mxu0 0.0
        %2498 = vmatprep.subr.mxu0 0.0
        %2499 = vmatpush2.msra.mxu0 0.0
        %2500 = vmatprep.mubr.f32.mxu0 0.0
        %2501 = vmatmul.mubr.f32.gmra.mxu0 %v2434
        %v2502 = vpop.f32.mrf.mxu0
        %v2503 = vadd.f32 0.0, %v2502
        %v2504 = vpop.f32.mrf.mxu0
        %2505 = vdwg.mxu0
        %v2507 = vsel %vm2107, %v2264, 0
        %2509 = vmatprep.subr.mxu0 0.0
        %2510 = vmatpush1.msra.mxu0 0.0
        %2511 = vmatprep.subr.mxu0 0.0
        %2512 = vmatpush1.msra.mxu0 0.0
        %2513 = vmatprep.subr.mxu0 0.0
        %2514 = vmatpush1.msra.mxu0 0.0
        %2515 = vmatprep.subr.mxu0 0.0
        %2516 = vmatpush1.msra.mxu0 0.0
        %2517 = vmatprep.subr.mxu0 0.0
        %2518 = vmatpush1.msra.mxu0 0.0
        %2519 = vmatprep.subr.mxu0 0.0
        %2520 = vmatpush1.msra.mxu0 0.0
        %2521 = vmatprep.subr.mxu0 0.0
        %2522 = vmatpush1.msra.mxu0 0.0
        %2523 = vmatprep.subr.mxu0 0.0
        %2524 = vmatpush1.msra.mxu0 0.0
        %2525 = vmatprep.subr.mxu0 0.0
        %2526 = vmatpush1.msra.mxu0 0.0
        %2527 = vmatprep.subr.mxu0 0.0
        %2528 = vmatpush1.msra.mxu0 0.0
        %2529 = vmatprep.subr.mxu0 0.0
        %2530 = vmatpush1.msra.mxu0 0.0
        %2531 = vmatprep.subr.mxu0 0.0
        %2532 = vmatpush1.msra.mxu0 0.0
        %2533 = vmatprep.subr.mxu0 0.0
        %2534 = vmatpush1.msra.mxu0 0.0
        %2535 = vmatprep.subr.mxu0 0.0
        %2536 = vmatpush1.msra.mxu0 0.0
        %2537 = vmatprep.subr.mxu0 0.0
        %2538 = vmatpush1.msra.mxu0 0.0
        %2539 = vmatprep.subr.mxu0 0.0
        %2540 = vmatpush1.msra.mxu0 %v1937
        %2541 = vmatprep.subr.mxu0 0.0
        %2542 = vmatpush2.msra.mxu0 0.0
        %2543 = vmatprep.subr.mxu0 0.0
        %2544 = vmatpush2.msra.mxu0 0.0
        %2545 = vmatprep.subr.mxu0 0.0
        %2546 = vmatpush2.msra.mxu0 0.0
        %2547 = vmatprep.subr.mxu0 0.0
        %2548 = vmatpush2.msra.mxu0 0.0
        %2549 = vmatprep.subr.mxu0 0.0
        %2550 = vmatpush2.msra.mxu0 0.0
        %2551 = vmatprep.subr.mxu0 0.0
        %2552 = vmatpush2.msra.mxu0 0.0
        %2553 = vmatprep.subr.mxu0 0.0
        %2554 = vmatpush2.msra.mxu0 0.0
        %2555 = vmatprep.subr.mxu0 0.0
        %2556 = vmatpush2.msra.mxu0 0.0
        %2557 = vmatprep.subr.mxu0 0.0
        %2558 = vmatpush2.msra.mxu0 0.0
        %2559 = vmatprep.subr.mxu0 0.0
        %2560 = vmatpush2.msra.mxu0 0.0
        %2561 = vmatprep.subr.mxu0 0.0
        %2562 = vmatpush2.msra.mxu0 0.0
        %2563 = vmatprep.subr.mxu0 0.0
        %2564 = vmatpush2.msra.mxu0 0.0
        %2565 = vmatprep.subr.mxu0 0.0
        %2566 = vmatpush2.msra.mxu0 0.0
        %2567 = vmatprep.subr.mxu0 0.0
        %2568 = vmatpush2.msra.mxu0 0.0
        %2569 = vmatprep.subr.mxu0 0.0
        %2570 = vmatpush2.msra.mxu0 0.0
        %2571 = vmatprep.subr.mxu0 0.0
        %2572 = vmatpush2.msra.mxu0 0.0
        %2573 = vmatprep.mubr.f32.mxu0 0.0
        %2574 = vmatmul.mubr.f32.gmra.mxu0 %v2507
        %v2575 = vpop.f32.mrf.mxu0
        %v2576 = vadd.f32 %v2503, %v2575
        %v2577 = vpop.f32.mrf.mxu0
        %2578 = vdwg.mxu0
        %2579 = vrot.lane.b32.xlu0 %v2103, 112
        %v2580 = vpop.permute.xlu0 %2579
        %2581 = vrot.lane.b32.xlu0 %v2021, 80
        %v2582 = vpop.permute.xlu0 %2581
        %v2583 = vsel %vm2107, %v2580, 0
        %v2585 = vsel %vm2107, %v2582, 0
        %2587 = vmatprep.subr.mxu0 0.0
        %2588 = vmatpush1.xpose.msra.mxu0 0.0
        %2589 = vmatprep.subr.mxu0 0.0
        %2590 = vmatpush1.xpose.msra.mxu0 0.0
        %2591 = vmatprep.subr.mxu0 0.0
        %2592 = vmatpush1.xpose.msra.mxu0 0.0
        %2593 = vmatprep.subr.mxu0 0.0
        %2594 = vmatpush1.xpose.msra.mxu0 0.0
        %2595 = vmatprep.subr.mxu0 0.0
        %2596 = vmatpush1.xpose.msra.mxu0 0.0
        %2597 = vmatprep.subr.mxu0 0.0
        %2598 = vmatpush1.xpose.msra.mxu0 0.0
        %2599 = vmatprep.subr.mxu0 0.0
        %2600 = vmatpush1.xpose.msra.mxu0 0.0
        %2601 = vmatprep.subr.mxu0 0.0
        %2602 = vmatpush1.xpose.msra.mxu0 0.0
        %2603 = vmatprep.subr.mxu0 0.0
        %2604 = vmatpush1.xpose.msra.mxu0 0.0
        %2605 = vmatprep.subr.mxu0 0.0
        %2606 = vmatpush1.xpose.msra.mxu0 0.0
        %2607 = vmatprep.subr.mxu0 0.0
        %2608 = vmatpush1.xpose.msra.mxu0 0.0
        %2609 = vmatprep.subr.mxu0 0.0
        %2610 = vmatpush1.xpose.msra.mxu0 0.0
        %2611 = vmatprep.subr.mxu0 0.0
        %2612 = vmatpush1.xpose.msra.mxu0 0.0
        %2613 = vmatprep.subr.mxu0 0.0
        %2614 = vmatpush1.xpose.msra.mxu0 0.0
        %2615 = vmatprep.subr.mxu0 0.0
        %2616 = vmatpush1.xpose.msra.mxu0 0.0
        %2617 = vmatprep.subr.mxu0 0.0
        %2618 = vmatpush1.xpose.msra.mxu0 %v2585
        %2619 = vmatprep.subr.mxu0 0.0
        %2620 = vmatpush2.xpose.msra.mxu0 0.0
        %2621 = vmatprep.subr.mxu0 0.0
        %2622 = vmatpush2.xpose.msra.mxu0 0.0
        %2623 = vmatprep.subr.mxu0 0.0
        %2624 = vmatpush2.xpose.msra.mxu0 0.0
        %2625 = vmatprep.subr.mxu0 0.0
        %2626 = vmatpush2.xpose.msra.mxu0 0.0
        %2627 = vmatprep.subr.mxu0 0.0
        %2628 = vmatpush2.xpose.msra.mxu0 0.0
        %2629 = vmatprep.subr.mxu0 0.0
        %2630 = vmatpush2.xpose.msra.mxu0 0.0
        %2631 = vmatprep.subr.mxu0 0.0
        %2632 = vmatpush2.xpose.msra.mxu0 0.0
        %2633 = vmatprep.subr.mxu0 0.0
        %2634 = vmatpush2.xpose.msra.mxu0 0.0
        %2635 = vmatprep.subr.mxu0 0.0
        %2636 = vmatpush2.xpose.msra.mxu0 0.0
        %2637 = vmatprep.subr.mxu0 0.0
        %2638 = vmatpush2.xpose.msra.mxu0 0.0
        %2639 = vmatprep.subr.mxu0 0.0
        %2640 = vmatpush2.xpose.msra.mxu0 0.0
        %2641 = vmatprep.subr.mxu0 0.0
        %2642 = vmatpush2.xpose.msra.mxu0 0.0
        %2643 = vmatprep.subr.mxu0 0.0
        %2644 = vmatpush2.xpose.msra.mxu0 0.0
        %2645 = vmatprep.subr.mxu0 0.0
        %2646 = vmatpush2.xpose.msra.mxu0 0.0
        %2647 = vmatprep.subr.mxu0 0.0
        %2648 = vmatpush2.xpose.msra.mxu0 0.0
        %2649 = vmatprep.subr.mxu0 0.0
        %2650 = vmatpush2.xpose.msra.mxu0 0.0
        %2651 = vmatprep.mubr.f32.mxu0 0.0
        %2652 = vmatmul.mubr.f32.gmra.mxu0 %v2583
        %v2653 = vpop.f32.mrf.mxu0
        %v2654 = vadd.f32 0.0, %v2653
        %v2655 = vpop.f32.mrf.mxu0
        %2656 = vdwg.mxu0
        %v2657 = vsel %vm2107, %v2654, -inf
        %2658 = vmax.xlane.f32.xlu0 %v2657
        %v2659 = vpop.xlane.xlu0 %2658
        %v2660 = vsub.f32 %v2654, %v2659
        %v2661 = vmul.f32 %v2660, 1.442695
        %v2662 = vpow.pop %v2661
        %v2663 = vsel %vm2107, %v2662, 0.0
        %2664 = vadd.xlane.f32.xlu0 %v2663
        %v2665 = vpop.xlane.xlu0 %2664
        %v2666 = vrcp.pop %v2665
        %v2667 = vmul.f32 %v2662, %v2666
        %2668 = vrot.lane.b32.xlu0 %v2100, 112
        %v2669 = vpop.permute.xlu0 %2668
        %v2672 = vsel %vm2107, %v2667, 0
        %2674 = vmatprep.subr.mxu0 0.0
        %2675 = vmatpush1.msra.mxu0 0.0
        %2676 = vmatprep.subr.mxu0 0.0
        %2677 = vmatpush1.msra.mxu0 0.0
        %2678 = vmatprep.subr.mxu0 0.0
        %2679 = vmatpush1.msra.mxu0 0.0
        %2680 = vmatprep.subr.mxu0 0.0
        %2681 = vmatpush1.msra.mxu0 0.0
        %2682 = vmatprep.subr.mxu0 0.0
        %2683 = vmatpush1.msra.mxu0 0.0
        %2684 = vmatprep.subr.mxu0 0.0
        %2685 = vmatpush1.msra.mxu0 0.0
        %2686 = vmatprep.subr.mxu0 0.0
        %2687 = vmatpush1.msra.mxu0 0.0
        %2688 = vmatprep.subr.mxu0 0.0
        %2689 = vmatpush1.msra.mxu0 0.0
        %2690 = vmatprep.subr.mxu0 0.0
        %2691 = vmatpush1.msra.mxu0 0.0
        %2692 = vmatprep.subr.mxu0 0.0
        %2693 = vmatpush1.msra.mxu0 0.0
        %2694 = vmatprep.subr.mxu0 0.0
        %2695 = vmatpush1.msra.mxu0 0.0
        %2696 = vmatprep.subr.mxu0 0.0
        %2697 = vmatpush1.msra.mxu0 0.0
        %2698 = vmatprep.subr.mxu0 0.0
        %2699 = vmatpush1.msra.mxu0 0.0
        %2700 = vmatprep.subr.mxu0 0.0
        %2701 = vmatpush1.msra.mxu0 0.0
        %2702 = vmatprep.subr.mxu0 0.0
        %2703 = vmatpush1.msra.mxu0 0.0
        %2704 = vmatprep.subr.mxu0 0.0
        %2705 = vmatpush1.msra.mxu0 %v2669
        %2706 = vmatprep.subr.mxu0 0.0
        %2707 = vmatpush2.msra.mxu0 0.0
        %2708 = vmatprep.subr.mxu0 0.0
        %2709 = vmatpush2.msra.mxu0 0.0
        %2710 = vmatprep.subr.mxu0 0.0
        %2711 = vmatpush2.msra.mxu0 0.0
        %2712 = vmatprep.subr.mxu0 0.0
        %2713 = vmatpush2.msra.mxu0 0.0
        %2714 = vmatprep.subr.mxu0 0.0
        %2715 = vmatpush2.msra.mxu0 0.0
        %2716 = vmatprep.subr.mxu0 0.0
        %2717 = vmatpush2.msra.mxu0 0.0
        %2718 = vmatprep.subr.mxu0 0.0
        %2719 = vmatpush2.msra.mxu0 0.0
        %2720 = vmatprep.subr.mxu0 0.0
        %2721 = vmatpush2.msra.mxu0 0.0
        %2722 = vmatprep.subr.mxu0 0.0
        %2723 = vmatpush2.msra.mxu0 0.0
        %2724 = vmatprep.subr.mxu0 0.0
        %2725 = vmatpush2.msra.mxu0 0.0
        %2726 = vmatprep.subr.mxu0 0.0
        %2727 = vmatpush2.msra.mxu0 0.0
        %2728 = vmatprep.subr.mxu0 0.0
        %2729 = vmatpush2.msra.mxu0 0.0
        %2730 = vmatprep.subr.mxu0 0.0
        %2731 = vmatpush2.msra.mxu0 0.0
        %2732 = vmatprep.subr.mxu0 0.0
        %2733 = vmatpush2.msra.mxu0 0.0
        %2734 = vmatprep.subr.mxu0 0.0
        %2735 = vmatpush2.msra.mxu0 0.0
        %2736 = vmatprep.subr.mxu0 0.0
        %2737 = vmatpush2.msra.mxu0 0.0
        %2738 = vmatprep.mubr.f32.mxu0 0.0
        %2739 = vmatmul.mubr.f32.gmra.mxu0 %v2672
        %v2740 = vpop.f32.mrf.mxu0
        %v2741 = vadd.f32 0.0, %v2740
        %v2742 = vpop.f32.mrf.mxu0
        %2743 = vdwg.mxu0
        %v2745 = vsel %vm2107, %v2741, 0
        %2747 = vmatprep.subr.mxu0 0.0
        %2748 = vmatpush1.msra.mxu0 0.0
        %2749 = vmatprep.subr.mxu0 0.0
        %2750 = vmatpush1.msra.mxu0 0.0
        %2751 = vmatprep.subr.mxu0 0.0
        %2752 = vmatpush1.msra.mxu0 0.0
        %2753 = vmatprep.subr.mxu0 0.0
        %2754 = vmatpush1.msra.mxu0 0.0
        %2755 = vmatprep.subr.mxu0 0.0
        %2756 = vmatpush1.msra.mxu0 0.0
        %2757 = vmatprep.subr.mxu0 0.0
        %2758 = vmatpush1.msra.mxu0 0.0
        %2759 = vmatprep.subr.mxu0 0.0
        %2760 = vmatpush1.msra.mxu0 0.0
        %2761 = vmatprep.subr.mxu0 0.0
        %2762 = vmatpush1.msra.mxu0 0.0
        %2763 = vmatprep.subr.mxu0 0.0
        %2764 = vmatpush1.msra.mxu0 0.0
        %2765 = vmatprep.subr.mxu0 0.0
        %2766 = vmatpush1.msra.mxu0 0.0
        %2767 = vmatprep.subr.mxu0 0.0
        %2768 = vmatpush1.msra.mxu0 0.0
        %2769 = vmatprep.subr.mxu0 0.0
        %2770 = vmatpush1.msra.mxu0 0.0
        %2771 = vmatprep.subr.mxu0 0.0
        %2772 = vmatpush1.msra.mxu0 0.0
        %2773 = vmatprep.subr.mxu0 0.0
        %2774 = vmatpush1.msra.mxu0 0.0
        %2775 = vmatprep.subr.mxu0 0.0
        %2776 = vmatpush1.msra.mxu0 0.0
        %2777 = vmatprep.subr.mxu0 0.0
        %2778 = vmatpush1.msra.mxu0 %v1939
        %2779 = vmatprep.subr.mxu0 0.0
        %2780 = vmatpush2.msra.mxu0 0.0
        %2781 = vmatprep.subr.mxu0 0.0
        %2782 = vmatpush2.msra.mxu0 0.0
        %2783 = vmatprep.subr.mxu0 0.0
        %2784 = vmatpush2.msra.mxu0 0.0
        %2785 = vmatprep.subr.mxu0 0.0
        %2786 = vmatpush2.msra.mxu0 0.0
        %2787 = vmatprep.subr.mxu0 0.0
        %2788 = vmatpush2.msra.mxu0 0.0
        %2789 = vmatprep.subr.mxu0 0.0
        %2790 = vmatpush2.msra.mxu0 0.0
        %2791 = vmatprep.subr.mxu0 0.0
        %2792 = vmatpush2.msra.mxu0 0.0
        %2793 = vmatprep.subr.mxu0 0.0
        %2794 = vmatpush2.msra.mxu0 0.0
        %2795 = vmatprep.subr.mxu0 0.0
        %2796 = vmatpush2.msra.mxu0 0.0
        %2797 = vmatprep.subr.mxu0 0.0
        %2798 = vmatpush2.msra.mxu0 0.0
        %2799 = vmatprep.subr.mxu0 0.0
        %2800 = vmatpush2.msra.mxu0 0.0
        %2801 = vmatprep.subr.mxu0 0.0
        %2802 = vmatpush2.msra.mxu0 0.0
        %2803 = vmatprep.subr.mxu0 0.0
        %2804 = vmatpush2.msra.mxu0 0.0
        %2805 = vmatprep.subr.mxu0 0.0
        %2806 = vmatpush2.msra.mxu0 0.0
        %2807 = vmatprep.subr.mxu0 0.0
        %2808 = vmatpush2.msra.mxu0 0.0
        %2809 = vmatprep.subr.mxu0 0.0
        %2810 = vmatpush2.msra.mxu0 0.0
        %2811 = vmatprep.mubr.f32.mxu0 0.0
        %2812 = vmatmul.mubr.f32.gmra.mxu0 %v2745
        %v2813 = vpop.f32.mrf.mxu0
        %v2814 = vadd.f32 0.0, %v2813
        %v2815 = vpop.f32.mrf.mxu0
        %2816 = vdwg.mxu0
        %v2817 = vadd.f32 %v2576, %v2814
        %2818 = vrot.lane.b32.xlu0 %v2103, 104
        %v2819 = vpop.permute.xlu0 %2818
        %2820 = vrot.lane.b32.xlu0 %v2021, 72
        %v2821 = vpop.permute.xlu0 %2820
        %v2822 = vsel %vm2107, %v2819, 0
        %v2824 = vsel %vm2107, %v2821, 0
        %2826 = vmatprep.subr.mxu0 0.0
        %2827 = vmatpush1.xpose.msra.mxu0 0.0
        %2828 = vmatprep.subr.mxu0 0.0
        %2829 = vmatpush1.xpose.msra.mxu0 0.0
        %2830 = vmatprep.subr.mxu0 0.0
        %2831 = vmatpush1.xpose.msra.mxu0 0.0
        %2832 = vmatprep.subr.mxu0 0.0
        %2833 = vmatpush1.xpose.msra.mxu0 0.0
        %2834 = vmatprep.subr.mxu0 0.0
        %2835 = vmatpush1.xpose.msra.mxu0 0.0
        %2836 = vmatprep.subr.mxu0 0.0
        %2837 = vmatpush1.xpose.msra.mxu0 0.0
        %2838 = vmatprep.subr.mxu0 0.0
        %2839 = vmatpush1.xpose.msra.mxu0 0.0
        %2840 = vmatprep.subr.mxu0 0.0
        %2841 = vmatpush1.xpose.msra.mxu0 0.0
        %2842 = vmatprep.subr.mxu0 0.0
        %2843 = vmatpush1.xpose.msra.mxu0 0.0
        %2844 = vmatprep.subr.mxu0 0.0
        %2845 = vmatpush1.xpose.msra.mxu0 0.0
        %2846 = vmatprep.subr.mxu0 0.0
        %2847 = vmatpush1.xpose.msra.mxu0 0.0
        %2848 = vmatprep.subr.mxu0 0.0
        %2849 = vmatpush1.xpose.msra.mxu0 0.0
        %2850 = vmatprep.subr.mxu0 0.0
        %2851 = vmatpush1.xpose.msra.mxu0 0.0
        %2852 = vmatprep.subr.mxu0 0.0
        %2853 = vmatpush1.xpose.msra.mxu0 0.0
        %2854 = vmatprep.subr.mxu0 0.0
        %2855 = vmatpush1.xpose.msra.mxu0 0.0
        %2856 = vmatprep.subr.mxu0 0.0
        %2857 = vmatpush1.xpose.msra.mxu0 %v2824
        %2858 = vmatprep.subr.mxu0 0.0
        %2859 = vmatpush2.xpose.msra.mxu0 0.0
        %2860 = vmatprep.subr.mxu0 0.0
        %2861 = vmatpush2.xpose.msra.mxu0 0.0
        %2862 = vmatprep.subr.mxu0 0.0
        %2863 = vmatpush2.xpose.msra.mxu0 0.0
        %2864 = vmatprep.subr.mxu0 0.0
        %2865 = vmatpush2.xpose.msra.mxu0 0.0
        %2866 = vmatprep.subr.mxu0 0.0
        %2867 = vmatpush2.xpose.msra.mxu0 0.0
        %2868 = vmatprep.subr.mxu0 0.0
        %2869 = vmatpush2.xpose.msra.mxu0 0.0
        %2870 = vmatprep.subr.mxu0 0.0
        %2871 = vmatpush2.xpose.msra.mxu0 0.0
        %2872 = vmatprep.subr.mxu0 0.0
        %2873 = vmatpush2.xpose.msra.mxu0 0.0
        %2874 = vmatprep.subr.mxu0 0.0
        %2875 = vmatpush2.xpose.msra.mxu0 0.0
        %2876 = vmatprep.subr.mxu0 0.0
        %2877 = vmatpush2.xpose.msra.mxu0 0.0
        %2878 = vmatprep.subr.mxu0 0.0
        %2879 = vmatpush2.xpose.msra.mxu0 0.0
        %2880 = vmatprep.subr.mxu0 0.0
        %2881 = vmatpush2.xpose.msra.mxu0 0.0
        %2882 = vmatprep.subr.mxu0 0.0
        %2883 = vmatpush2.xpose.msra.mxu0 0.0
        %2884 = vmatprep.subr.mxu0 0.0
        %2885 = vmatpush2.xpose.msra.mxu0 0.0
        %2886 = vmatprep.subr.mxu0 0.0
        %2887 = vmatpush2.xpose.msra.mxu0 0.0
        %2888 = vmatprep.subr.mxu0 0.0
        %2889 = vmatpush2.xpose.msra.mxu0 0.0
        %2890 = vmatprep.mubr.f32.mxu0 0.0
        %2891 = vmatmul.mubr.f32.gmra.mxu0 %v2822
        %v2892 = vpop.f32.mrf.mxu0
        %v2893 = vadd.f32 0.0, %v2892
        %v2894 = vpop.f32.mrf.mxu0
        %2895 = vdwg.mxu0
        %v2896 = vsel %vm2107, %v2893, -inf
        %2897 = vmax.xlane.f32.xlu0 %v2896
        %v2898 = vpop.xlane.xlu0 %2897
        %v2899 = vsub.f32 %v2893, %v2898
        %v2900 = vmul.f32 %v2899, 1.442695
        %v2901 = vpow.pop %v2900
        %v2902 = vsel %vm2107, %v2901, 0.0
        %2903 = vadd.xlane.f32.xlu0 %v2902
        %v2904 = vpop.xlane.xlu0 %2903
        %v2905 = vrcp.pop %v2904
        %v2906 = vmul.f32 %v2901, %v2905
        %2907 = vrot.lane.b32.xlu0 %v2100, 104
        %v2908 = vpop.permute.xlu0 %2907
        %v2911 = vsel %vm2107, %v2906, 0
        %2913 = vmatprep.subr.mxu0 0.0
        %2914 = vmatpush1.msra.mxu0 0.0
        %2915 = vmatprep.subr.mxu0 0.0
        %2916 = vmatpush1.msra.mxu0 0.0
        %2917 = vmatprep.subr.mxu0 0.0
        %2918 = vmatpush1.msra.mxu0 0.0
        %2919 = vmatprep.subr.mxu0 0.0
        %2920 = vmatpush1.msra.mxu0 0.0
        %2921 = vmatprep.subr.mxu0 0.0
        %2922 = vmatpush1.msra.mxu0 0.0
        %2923 = vmatprep.subr.mxu0 0.0
        %2924 = vmatpush1.msra.mxu0 0.0
        %2925 = vmatprep.subr.mxu0 0.0
        %2926 = vmatpush1.msra.mxu0 0.0
        %2927 = vmatprep.subr.mxu0 0.0
        %2928 = vmatpush1.msra.mxu0 0.0
        %2929 = vmatprep.subr.mxu0 0.0
        %2930 = vmatpush1.msra.mxu0 0.0
        %2931 = vmatprep.subr.mxu0 0.0
        %2932 = vmatpush1.msra.mxu0 0.0
        %2933 = vmatprep.subr.mxu0 0.0
        %2934 = vmatpush1.msra.mxu0 0.0
        %2935 = vmatprep.subr.mxu0 0.0
        %2936 = vmatpush1.msra.mxu0 0.0
        %2937 = vmatprep.subr.mxu0 0.0
        %2938 = vmatpush1.msra.mxu0 0.0
        %2939 = vmatprep.subr.mxu0 0.0
        %2940 = vmatpush1.msra.mxu0 0.0
        %2941 = vmatprep.subr.mxu0 0.0
        %2942 = vmatpush1.msra.mxu0 0.0
        %2943 = vmatprep.subr.mxu0 0.0
        %2944 = vmatpush1.msra.mxu0 %v2908
        %2945 = vmatprep.subr.mxu0 0.0
        %2946 = vmatpush2.msra.mxu0 0.0
        %2947 = vmatprep.subr.mxu0 0.0
        %2948 = vmatpush2.msra.mxu0 0.0
        %2949 = vmatprep.subr.mxu0 0.0
        %2950 = vmatpush2.msra.mxu0 0.0
        %2951 = vmatprep.subr.mxu0 0.0
        %2952 = vmatpush2.msra.mxu0 0.0
        %2953 = vmatprep.subr.mxu0 0.0
        %2954 = vmatpush2.msra.mxu0 0.0
        %2955 = vmatprep.subr.mxu0 0.0
        %2956 = vmatpush2.msra.mxu0 0.0
        %2957 = vmatprep.subr.mxu0 0.0
        %2958 = vmatpush2.msra.mxu0 0.0
        %2959 = vmatprep.subr.mxu0 0.0
        %2960 = vmatpush2.msra.mxu0 0.0
        %2961 = vmatprep.subr.mxu0 0.0
        %2962 = vmatpush2.msra.mxu0 0.0
        %2963 = vmatprep.subr.mxu0 0.0
        %2964 = vmatpush2.msra.mxu0 0.0
        %2965 = vmatprep.subr.mxu0 0.0
        %2966 = vmatpush2.msra.mxu0 0.0
        %2967 = vmatprep.subr.mxu0 0.0
        %2968 = vmatpush2.msra.mxu0 0.0
        %2969 = vmatprep.subr.mxu0 0.0
        %2970 = vmatpush2.msra.mxu0 0.0
        %2971 = vmatprep.subr.mxu0 0.0
        %2972 = vmatpush2.msra.mxu0 0.0
        %2973 = vmatprep.subr.mxu0 0.0
        %2974 = vmatpush2.msra.mxu0 0.0
        %2975 = vmatprep.subr.mxu0 0.0
        %2976 = vmatpush2.msra.mxu0 0.0
        %2977 = vmatprep.mubr.f32.mxu0 0.0
        %2978 = vmatmul.mubr.f32.gmra.mxu0 %v2911
        %v2979 = vpop.f32.mrf.mxu0
        %v2980 = vadd.f32 0.0, %v2979
        %v2981 = vpop.f32.mrf.mxu0
        %2982 = vdwg.mxu0
        %v2984 = vsel %vm2107, %v2980, 0
        %2986 = vmatprep.subr.mxu0 0.0
        %2987 = vmatpush1.msra.mxu0 0.0
        %2988 = vmatprep.subr.mxu0 0.0
        %2989 = vmatpush1.msra.mxu0 0.0
        %2990 = vmatprep.subr.mxu0 0.0
        %2991 = vmatpush1.msra.mxu0 0.0
        %2992 = vmatprep.subr.mxu0 0.0
        %2993 = vmatpush1.msra.mxu0 0.0
        %2994 = vmatprep.subr.mxu0 0.0
        %2995 = vmatpush1.msra.mxu0 0.0
        %2996 = vmatprep.subr.mxu0 0.0
        %2997 = vmatpush1.msra.mxu0 0.0
        %2998 = vmatprep.subr.mxu0 0.0
        %2999 = vmatpush1.msra.mxu0 0.0
        %3000 = vmatprep.subr.mxu0 0.0
        %3001 = vmatpush1.msra.mxu0 0.0
        %3002 = vmatprep.subr.mxu0 0.0
        %3003 = vmatpush1.msra.mxu0 0.0
        %3004 = vmatprep.subr.mxu0 0.0
        %3005 = vmatpush1.msra.mxu0 0.0
        %3006 = vmatprep.subr.mxu0 0.0
        %3007 = vmatpush1.msra.mxu0 0.0
        %3008 = vmatprep.subr.mxu0 0.0
        %3009 = vmatpush1.msra.mxu0 0.0
        %3010 = vmatprep.subr.mxu0 0.0
        %3011 = vmatpush1.msra.mxu0 0.0
        %3012 = vmatprep.subr.mxu0 0.0
        %3013 = vmatpush1.msra.mxu0 0.0
        %3014 = vmatprep.subr.mxu0 0.0
        %3015 = vmatpush1.msra.mxu0 0.0
        %3016 = vmatprep.subr.mxu0 0.0
        %3017 = vmatpush1.msra.mxu0 %v1940
        %3018 = vmatprep.subr.mxu0 0.0
        %3019 = vmatpush2.msra.mxu0 0.0
        %3020 = vmatprep.subr.mxu0 0.0
        %3021 = vmatpush2.msra.mxu0 0.0
        %3022 = vmatprep.subr.mxu0 0.0
        %3023 = vmatpush2.msra.mxu0 0.0
        %3024 = vmatprep.subr.mxu0 0.0
        %3025 = vmatpush2.msra.mxu0 0.0
        %3026 = vmatprep.subr.mxu0 0.0
        %3027 = vmatpush2.msra.mxu0 0.0
        %3028 = vmatprep.subr.mxu0 0.0
        %3029 = vmatpush2.msra.mxu0 0.0
        %3030 = vmatprep.subr.mxu0 0.0
        %3031 = vmatpush2.msra.mxu0 0.0
        %3032 = vmatprep.subr.mxu0 0.0
        %3033 = vmatpush2.msra.mxu0 0.0
        %3034 = vmatprep.subr.mxu0 0.0
        %3035 = vmatpush2.msra.mxu0 0.0
        %3036 = vmatprep.subr.mxu0 0.0
        %3037 = vmatpush2.msra.mxu0 0.0
        %3038 = vmatprep.subr.mxu0 0.0
        %3039 = vmatpush2.msra.mxu0 0.0
        %3040 = vmatprep.subr.mxu0 0.0
        %3041 = vmatpush2.msra.mxu0 0.0
        %3042 = vmatprep.subr.mxu0 0.0
        %3043 = vmatpush2.msra.mxu0 0.0
        %3044 = vmatprep.subr.mxu0 0.0
        %3045 = vmatpush2.msra.mxu0 0.0
        %3046 = vmatprep.subr.mxu0 0.0
        %3047 = vmatpush2.msra.mxu0 0.0
        %3048 = vmatprep.subr.mxu0 0.0
        %3049 = vmatpush2.msra.mxu0 0.0
        %3050 = vmatprep.mubr.f32.mxu0 0.0
        %3051 = vmatmul.mubr.f32.gmra.mxu0 %v2984
        %v3052 = vpop.f32.mrf.mxu0
        %v3053 = vadd.f32 0.0, %v3052
        %v3054 = vpop.f32.mrf.mxu0
        %3055 = vdwg.mxu0
        %v3056 = vadd.f32 %v2817, %v3053
        %v3058 = vlaneseq
        %v3059 = vshrl.u32 %v3058, 7
        %v3060 = vsub.s32 0, %v3059
        %v3061 = vrot.slane %v1941, %v3060
        %v3063 = vadd.f32 %v3056, %v3061
        %v3064 = vadd.f32 %v1923, %v3063
        %v3065 = vsel %vm1950, %v3064, 0.0
        %3066 = vadd.xlane.f32.xlu0 %v3065
        %v3067 = vpop.xlane.xlu0 %3066
        %v3068 = vrcp.pop 32.0
        %v3069 = vmul.f32 %v3067, %v3068
        %v3070 = vsub.f32 %v3064, %v3069
        %v3071 = vmul.f32 %v3070, %v3070
        %v3072 = vsel %vm1950, %v3071, 0.0
        %3073 = vadd.xlane.f32.xlu0 %v3072
        %v3074 = vpop.xlane.xlu0 %3073
        %v3075 = vmul.f32 %v3074, %v3068
        %v3076 = vadd.f32 %v3075, 1e-05
        %v3077 = vrsqrt.pop %v3076
        %v3078 = vmul.f32 %v3070, %v3077
        %v3079 = vlaneseq
        %v3080 = vshrl.u32 %v3079, 7
        %v3081 = vsub.s32 0, %v3080
        %v3082 = vrot.slane %v1942, %v3081
        %v3083 = vmul.f32 %v3078, %v3082
        %v3084 = vlaneseq
        %v3085 = vshrl.u32 %v3084, 7
        %v3086 = vsub.s32 1, %v3085
        %v3087 = vrot.slane %v1942, %v3086
        %v3088 = vadd.f32 %v3083, %v3087
        %v3089 = vld [vmem:[%s23] sm:$0xff]
        %v3090 = vld [vmem:[%s23 + $0x8] sm:$0xff]
        %v3091 = vld [vmem:[%s23 + $0x10] sm:$0xff]
        %v3092 = vld [vmem:[%s23 + $0x18] sm:$0xff]
        %v3093 = vld [vmem:[#allocation14] sm:$0x1]
        %v3094 = vld [vmem:[%s27] sm:$0xff]
        %v3095 = vld [vmem:[%s27 + $0x8] sm:$0xff]
        %v3096 = vld [vmem:[%s27 + $0x10] sm:$0xff]
        %v3097 = vld [vmem:[%s27 + $0x18] sm:$0xff]
        %v3098 = vld [vmem:[#allocation16] sm:$0x1]
        %v3099 = vld [vmem:[#allocation17] sm:$0xff]
        %v3100 = vld [vmem:[#allocation17 + $0x8] sm:$0xff]
        %v3101 = vld [vmem:[#allocation17 + $0x10] sm:$0xff]
        %v3102 = vld [vmem:[#allocation17 + $0x18] sm:$0xff]
        %v3103 = vld [vmem:[#allocation19] sm:$0x1]
        %v3104 = vld [vmem:[#allocation20] sm:$0x3]
        %v3105 = vadd.f32 %v1925, %v1926
        %v3107 = vlaneseq
        %v3108 = vshrl.u32 %v3107, 7
        %v3109 = vsub.s32 0, %v3108
        %v3110 = vrot.slane %v3093, %v3109
        %v3113 = vsel %vm1950, %v3105, 0
        %3115 = vmatprep.subr.mxu0 0.0
        %3116 = vmatpush1.msra.mxu0 0.0
        %3117 = vmatprep.subr.mxu0 0.0
        %3118 = vmatpush1.msra.mxu0 0.0
        %3119 = vmatprep.subr.mxu0 0.0
        %3120 = vmatpush1.msra.mxu0 0.0
        %3121 = vmatprep.subr.mxu0 0.0
        %3122 = vmatpush1.msra.mxu0 0.0
        %3123 = vmatprep.subr.mxu0 0.0
        %3124 = vmatpush1.msra.mxu0 0.0
        %3125 = vmatprep.subr.mxu0 0.0
        %3126 = vmatpush1.msra.mxu0 0.0
        %3127 = vmatprep.subr.mxu0 0.0
        %3128 = vmatpush1.msra.mxu0 0.0
        %3129 = vmatprep.subr.mxu0 0.0
        %3130 = vmatpush1.msra.mxu0 0.0
        %3131 = vmatprep.subr.mxu0 0.0
        %3132 = vmatpush1.msra.mxu0 0.0
        %3133 = vmatprep.subr.mxu0 0.0
        %3134 = vmatpush1.msra.mxu0 0.0
        %3135 = vmatprep.subr.mxu0 0.0
        %3136 = vmatpush1.msra.mxu0 0.0
        %3137 = vmatprep.subr.mxu0 0.0
        %3138 = vmatpush1.msra.mxu0 0.0
        %3139 = vmatprep.subr.mxu0 0.0
        %3140 = vmatpush1.msra.mxu0 %v3092
        %3141 = vmatprep.subr.mxu0 0.0
        %3142 = vmatpush1.msra.mxu0 %v3091
        %3143 = vmatprep.subr.mxu0 0.0
        %3144 = vmatpush1.msra.mxu0 %v3090
        %3145 = vmatprep.subr.mxu0 0.0
        %3146 = vmatpush1.msra.mxu0 %v3089
        %3147 = vmatprep.subr.mxu0 0.0
        %3148 = vmatpush2.msra.mxu0 0.0
        %3149 = vmatprep.subr.mxu0 0.0
        %3150 = vmatpush2.msra.mxu0 0.0
        %3151 = vmatprep.subr.mxu0 0.0
        %3152 = vmatpush2.msra.mxu0 0.0
        %3153 = vmatprep.subr.mxu0 0.0
        %3154 = vmatpush2.msra.mxu0 0.0
        %3155 = vmatprep.subr.mxu0 0.0
        %3156 = vmatpush2.msra.mxu0 0.0
        %3157 = vmatprep.subr.mxu0 0.0
        %3158 = vmatpush2.msra.mxu0 0.0
        %3159 = vmatprep.subr.mxu0 0.0
        %3160 = vmatpush2.msra.mxu0 0.0
        %3161 = vmatprep.subr.mxu0 0.0
        %3162 = vmatpush2.msra.mxu0 0.0
        %3163 = vmatprep.subr.mxu0 0.0
        %3164 = vmatpush2.msra.mxu0 0.0
        %3165 = vmatprep.subr.mxu0 0.0
        %3166 = vmatpush2.msra.mxu0 0.0
        %3167 = vmatprep.subr.mxu0 0.0
        %3168 = vmatpush2.msra.mxu0 0.0
        %3169 = vmatprep.subr.mxu0 0.0
        %3170 = vmatpush2.msra.mxu0 0.0
        %3171 = vmatprep.subr.mxu0 0.0
        %3172 = vmatpush2.msra.mxu0 0.0
        %3173 = vmatprep.subr.mxu0 0.0
        %3174 = vmatpush2.msra.mxu0 0.0
        %3175 = vmatprep.subr.mxu0 0.0
        %3176 = vmatpush2.msra.mxu0 0.0
        %3177 = vmatprep.subr.mxu0 0.0
        %3178 = vmatpush2.msra.mxu0 0.0
        %3179 = vmatprep.mubr.f32.mxu0 0.0
        %3180 = vmatmul.mubr.f32.gmra.mxu0 %v3113
        %v3181 = vpop.f32.mrf.mxu0
        %v3182 = vadd.f32 %v3110, %v3181
        %v3183 = vpop.f32.mrf.mxu0
        %3184 = vdwg.mxu0
        %v3186 = vlaneseq
        %v3187 = vshrl.u32 %v3186, 7
        %v3188 = vsub.s32 0, %v3187
        %v3189 = vrot.slane %v3098, %v3188
        %v3192 = vsel %vm1950, %v1925, 0
        %3194 = vmatprep.subr.mxu0 0.0
        %3195 = vmatpush1.msra.mxu0 0.0
        %3196 = vmatprep.subr.mxu0 0.0
        %3197 = vmatpush1.msra.mxu0 0.0
        %3198 = vmatprep.subr.mxu0 0.0
        %3199 = vmatpush1.msra.mxu0 0.0
        %3200 = vmatprep.subr.mxu0 0.0
        %3201 = vmatpush1.msra.mxu0 0.0
        %3202 = vmatprep.subr.mxu0 0.0
        %3203 = vmatpush1.msra.mxu0 0.0
        %3204 = vmatprep.subr.mxu0 0.0
        %3205 = vmatpush1.msra.mxu0 0.0
        %3206 = vmatprep.subr.mxu0 0.0
        %3207 = vmatpush1.msra.mxu0 0.0
        %3208 = vmatprep.subr.mxu0 0.0
        %3209 = vmatpush1.msra.mxu0 0.0
        %3210 = vmatprep.subr.mxu0 0.0
        %3211 = vmatpush1.msra.mxu0 0.0
        %3212 = vmatprep.subr.mxu0 0.0
        %3213 = vmatpush1.msra.mxu0 0.0
        %3214 = vmatprep.subr.mxu0 0.0
        %3215 = vmatpush1.msra.mxu0 0.0
        %3216 = vmatprep.subr.mxu0 0.0
        %3217 = vmatpush1.msra.mxu0 0.0
        %3218 = vmatprep.subr.mxu0 0.0
        %3219 = vmatpush1.msra.mxu0 %v3097
        %3220 = vmatprep.subr.mxu0 0.0
        %3221 = vmatpush1.msra.mxu0 %v3096
        %3222 = vmatprep.subr.mxu0 0.0
        %3223 = vmatpush1.msra.mxu0 %v3095
        %3224 = vmatprep.subr.mxu0 0.0
        %3225 = vmatpush1.msra.mxu0 %v3094
        %3226 = vmatprep.subr.mxu0 0.0
        %3227 = vmatpush2.msra.mxu0 0.0
        %3228 = vmatprep.subr.mxu0 0.0
        %3229 = vmatpush2.msra.mxu0 0.0
        %3230 = vmatprep.subr.mxu0 0.0
        %3231 = vmatpush2.msra.mxu0 0.0
        %3232 = vmatprep.subr.mxu0 0.0
        %3233 = vmatpush2.msra.mxu0 0.0
        %3234 = vmatprep.subr.mxu0 0.0
        %3235 = vmatpush2.msra.mxu0 0.0
        %3236 = vmatprep.subr.mxu0 0.0
        %3237 = vmatpush2.msra.mxu0 0.0
        %3238 = vmatprep.subr.mxu0 0.0
        %3239 = vmatpush2.msra.mxu0 0.0
        %3240 = vmatprep.subr.mxu0 0.0
        %3241 = vmatpush2.msra.mxu0 0.0
        %3242 = vmatprep.subr.mxu0 0.0
        %3243 = vmatpush2.msra.mxu0 0.0
        %3244 = vmatprep.subr.mxu0 0.0
        %3245 = vmatpush2.msra.mxu0 0.0
        %3246 = vmatprep.subr.mxu0 0.0
        %3247 = vmatpush2.msra.mxu0 0.0
        %3248 = vmatprep.subr.mxu0 0.0
        %3249 = vmatpush2.msra.mxu0 0.0
        %3250 = vmatprep.subr.mxu0 0.0
        %3251 = vmatpush2.msra.mxu0 0.0
        %3252 = vmatprep.subr.mxu0 0.0
        %3253 = vmatpush2.msra.mxu0 0.0
        %3254 = vmatprep.subr.mxu0 0.0
        %3255 = vmatpush2.msra.mxu0 0.0
        %3256 = vmatprep.subr.mxu0 0.0
        %3257 = vmatpush2.msra.mxu0 0.0
        %3258 = vmatprep.mubr.f32.mxu0 0.0
        %3259 = vmatmul.mubr.f32.gmra.mxu0 %v3192
        %v3260 = vpop.f32.mrf.mxu0
        %v3261 = vadd.f32 %v3189, %v3260
        %v3262 = vpop.f32.mrf.mxu0
        %3263 = vdwg.mxu0
        %v3264 = vmul.f32 %v3182, 0.35355338
        %3266 = vrot.lane.b32.xlu0 %v3182, 96
        %v3267 = vpop.permute.xlu0 %3266
        %v3269 = vsel %vm2107, %v3264, 0
        %v3271 = vsel %vm2107, %v3267, 0
        %3273 = vmatprep.subr.mxu0 0.0
        %3274 = vmatpush1.xpose.msra.mxu0 0.0
        %3275 = vmatprep.subr.mxu0 0.0
        %3276 = vmatpush1.xpose.msra.mxu0 0.0
        %3277 = vmatprep.subr.mxu0 0.0
        %3278 = vmatpush1.xpose.msra.mxu0 0.0
        %3279 = vmatprep.subr.mxu0 0.0
        %3280 = vmatpush1.xpose.msra.mxu0 0.0
        %3281 = vmatprep.subr.mxu0 0.0
        %3282 = vmatpush1.xpose.msra.mxu0 0.0
        %3283 = vmatprep.subr.mxu0 0.0
        %3284 = vmatpush1.xpose.msra.mxu0 0.0
        %3285 = vmatprep.subr.mxu0 0.0
        %3286 = vmatpush1.xpose.msra.mxu0 0.0
        %3287 = vmatprep.subr.mxu0 0.0
        %3288 = vmatpush1.xpose.msra.mxu0 0.0
        %3289 = vmatprep.subr.mxu0 0.0
        %3290 = vmatpush1.xpose.msra.mxu0 0.0
        %3291 = vmatprep.subr.mxu0 0.0
        %3292 = vmatpush1.xpose.msra.mxu0 0.0
        %3293 = vmatprep.subr.mxu0 0.0
        %3294 = vmatpush1.xpose.msra.mxu0 0.0
        %3295 = vmatprep.subr.mxu0 0.0
        %3296 = vmatpush1.xpose.msra.mxu0 0.0
        %3297 = vmatprep.subr.mxu0 0.0
        %3298 = vmatpush1.xpose.msra.mxu0 0.0
        %3299 = vmatprep.subr.mxu0 0.0
        %3300 = vmatpush1.xpose.msra.mxu0 0.0
        %3301 = vmatprep.subr.mxu0 0.0
        %3302 = vmatpush1.xpose.msra.mxu0 0.0
        %3303 = vmatprep.subr.mxu0 0.0
        %3304 = vmatpush1.xpose.msra.mxu0 %v3271
        %3305 = vmatprep.subr.mxu0 0.0
        %3306 = vmatpush2.xpose.msra.mxu0 0.0
        %3307 = vmatprep.subr.mxu0 0.0
        %3308 = vmatpush2.xpose.msra.mxu0 0.0
        %3309 = vmatprep.subr.mxu0 0.0
        %3310 = vmatpush2.xpose.msra.mxu0 0.0
        %3311 = vmatprep.subr.mxu0 0.0
        %3312 = vmatpush2.xpose.msra.mxu0 0.0
        %3313 = vmatprep.subr.mxu0 0.0
        %3314 = vmatpush2.xpose.msra.mxu0 0.0
        %3315 = vmatprep.subr.mxu0 0.0
        %3316 = vmatpush2.xpose.msra.mxu0 0.0
        %3317 = vmatprep.subr.mxu0 0.0
        %3318 = vmatpush2.xpose.msra.mxu0 0.0
        %3319 = vmatprep.subr.mxu0 0.0
        %3320 = vmatpush2.xpose.msra.mxu0 0.0
        %3321 = vmatprep.subr.mxu0 0.0
        %3322 = vmatpush2.xpose.msra.mxu0 0.0
        %3323 = vmatprep.subr.mxu0 0.0
        %3324 = vmatpush2.xpose.msra.mxu0 0.0
        %3325 = vmatprep.subr.mxu0 0.0
        %3326 = vmatpush2.xpose.msra.mxu0 0.0
        %3327 = vmatprep.subr.mxu0 0.0
        %3328 = vmatpush2.xpose.msra.mxu0 0.0
        %3329 = vmatprep.subr.mxu0 0.0
        %3330 = vmatpush2.xpose.msra.mxu0 0.0
        %3331 = vmatprep.subr.mxu0 0.0
        %3332 = vmatpush2.xpose.msra.mxu0 0.0
        %3333 = vmatprep.subr.mxu0 0.0
        %3334 = vmatpush2.xpose.msra.mxu0 0.0
        %3335 = vmatprep.subr.mxu0 0.0
        %3336 = vmatpush2.xpose.msra.mxu0 0.0
        %3337 = vmatprep.mubr.f32.mxu0 0.0
        %3338 = vmatmul.mubr.f32.gmra.mxu0 %v3269
        %v3339 = vpop.f32.mrf.mxu0
        %v3340 = vadd.f32 0.0, %v3339
        %v3341 = vpop.f32.mrf.mxu0
        %3342 = vdwg.mxu0
        %v3343 = vsel %vm2107, %v3340, -inf
        %3344 = vmax.xlane.f32.xlu0 %v3343
        %v3345 = vpop.xlane.xlu0 %3344
        %v3346 = vsub.f32 %v3340, %v3345
        %v3347 = vmul.f32 %v3346, 1.442695
        %v3348 = vpow.pop %v3347
        %v3349 = vsel %vm2107, %v3348, 0.0
        %3350 = vadd.xlane.f32.xlu0 %v3349
        %v3351 = vpop.xlane.xlu0 %3350
        %v3352 = vrcp.pop %v3351
        %v3353 = vmul.f32 %v3348, %v3352
        %v3355 = vsel %vm2107, %v3353, 0
        %3357 = vmatprep.subr.mxu0 0.0
        %3358 = vmatpush1.msra.mxu0 0.0
        %3359 = vmatprep.subr.mxu0 0.0
        %3360 = vmatpush1.msra.mxu0 0.0
        %3361 = vmatprep.subr.mxu0 0.0
        %3362 = vmatpush1.msra.mxu0 0.0
        %3363 = vmatprep.subr.mxu0 0.0
        %3364 = vmatpush1.msra.mxu0 0.0
        %3365 = vmatprep.subr.mxu0 0.0
        %3366 = vmatpush1.msra.mxu0 0.0
        %3367 = vmatprep.subr.mxu0 0.0
        %3368 = vmatpush1.msra.mxu0 0.0
        %3369 = vmatprep.subr.mxu0 0.0
        %3370 = vmatpush1.msra.mxu0 0.0
        %3371 = vmatprep.subr.mxu0 0.0
        %3372 = vmatpush1.msra.mxu0 0.0
        %3373 = vmatprep.subr.mxu0 0.0
        %3374 = vmatpush1.msra.mxu0 0.0
        %3375 = vmatprep.subr.mxu0 0.0
        %3376 = vmatpush1.msra.mxu0 0.0
        %3377 = vmatprep.subr.mxu0 0.0
        %3378 = vmatpush1.msra.mxu0 0.0
        %3379 = vmatprep.subr.mxu0 0.0
        %3380 = vmatpush1.msra.mxu0 0.0
        %3381 = vmatprep.subr.mxu0 0.0
        %3382 = vmatpush1.msra.mxu0 0.0
        %3383 = vmatprep.subr.mxu0 0.0
        %3384 = vmatpush1.msra.mxu0 0.0
        %3385 = vmatprep.subr.mxu0 0.0
        %3386 = vmatpush1.msra.mxu0 0.0
        %3387 = vmatprep.subr.mxu0 0.0
        %3388 = vmatpush1.msra.mxu0 %v3261
        %3389 = vmatprep.subr.mxu0 0.0
        %3390 = vmatpush2.msra.mxu0 0.0
        %3391 = vmatprep.subr.mxu0 0.0
        %3392 = vmatpush2.msra.mxu0 0.0
        %3393 = vmatprep.subr.mxu0 0.0
        %3394 = vmatpush2.msra.mxu0 0.0
        %3395 = vmatprep.subr.mxu0 0.0
        %3396 = vmatpush2.msra.mxu0 0.0
        %3397 = vmatprep.subr.mxu0 0.0
        %3398 = vmatpush2.msra.mxu0 0.0
        %3399 = vmatprep.subr.mxu0 0.0
        %3400 = vmatpush2.msra.mxu0 0.0
        %3401 = vmatprep.subr.mxu0 0.0
        %3402 = vmatpush2.msra.mxu0 0.0
        %3403 = vmatprep.subr.mxu0 0.0
        %3404 = vmatpush2.msra.mxu0 0.0
        %3405 = vmatprep.subr.mxu0 0.0
        %3406 = vmatpush2.msra.mxu0 0.0
        %3407 = vmatprep.subr.mxu0 0.0
        %3408 = vmatpush2.msra.mxu0 0.0
        %3409 = vmatprep.subr.mxu0 0.0
        %3410 = vmatpush2.msra.mxu0 0.0
        %3411 = vmatprep.subr.mxu0 0.0
        %3412 = vmatpush2.msra.mxu0 0.0
        %3413 = vmatprep.subr.mxu0 0.0
        %3414 = vmatpush2.msra.mxu0 0.0
        %3415 = vmatprep.subr.mxu0 0.0
        %3416 = vmatpush2.msra.mxu0 0.0
        %3417 = vmatprep.subr.mxu0 0.0
        %3418 = vmatpush2.msra.mxu0 0.0
        %3419 = vmatprep.subr.mxu0 0.0
        %3420 = vmatpush2.msra.mxu0 0.0
        %3421 = vmatprep.mubr.f32.mxu0 0.0
        %3422 = vmatmul.mubr.f32.gmra.mxu0 %v3355
        %v3423 = vpop.f32.mrf.mxu0
        %v3424 = vadd.f32 0.0, %v3423
        %v3425 = vpop.f32.mrf.mxu0
        %3426 = vdwg.mxu0
        %3427 = vrot.lane.b32.xlu0 %v3264, 120
        %v3428 = vpop.permute.xlu0 %3427
        %3429 = vrot.lane.b32.xlu0 %v3182, 88
        %v3430 = vpop.permute.xlu0 %3429
        %v3431 = vsel %vm2107, %v3428, 0
        %v3433 = vsel %vm2107, %v3430, 0
        %3435 = vmatprep.subr.mxu0 0.0
        %3436 = vmatpush1.xpose.msra.mxu0 0.0
        %3437 = vmatprep.subr.mxu0 0.0
        %3438 = vmatpush1.xpose.msra.mxu0 0.0
        %3439 = vmatprep.subr.mxu0 0.0
        %3440 = vmatpush1.xpose.msra.mxu0 0.0
        %3441 = vmatprep.subr.mxu0 0.0
        %3442 = vmatpush1.xpose.msra.mxu0 0.0
        %3443 = vmatprep.subr.mxu0 0.0
        %3444 = vmatpush1.xpose.msra.mxu0 0.0
        %3445 = vmatprep.subr.mxu0 0.0
        %3446 = vmatpush1.xpose.msra.mxu0 0.0
        %3447 = vmatprep.subr.mxu0 0.0
        %3448 = vmatpush1.xpose.msra.mxu0 0.0
        %3449 = vmatprep.subr.mxu0 0.0
        %3450 = vmatpush1.xpose.msra.mxu0 0.0
        %3451 = vmatprep.subr.mxu0 0.0
        %3452 = vmatpush1.xpose.msra.mxu0 0.0
        %3453 = vmatprep.subr.mxu0 0.0
        %3454 = vmatpush1.xpose.msra.mxu0 0.0
        %3455 = vmatprep.subr.mxu0 0.0
        %3456 = vmatpush1.xpose.msra.mxu0 0.0
        %3457 = vmatprep.subr.mxu0 0.0
        %3458 = vmatpush1.xpose.msra.mxu0 0.0
        %3459 = vmatprep.subr.mxu0 0.0
        %3460 = vmatpush1.xpose.msra.mxu0 0.0
        %3461 = vmatprep.subr.mxu0 0.0
        %3462 = vmatpush1.xpose.msra.mxu0 0.0
        %3463 = vmatprep.subr.mxu0 0.0
        %3464 = vmatpush1.xpose.msra.mxu0 0.0
        %3465 = vmatprep.subr.mxu0 0.0
        %3466 = vmatpush1.xpose.msra.mxu0 %v3433
        %3467 = vmatprep.subr.mxu0 0.0
        %3468 = vmatpush2.xpose.msra.mxu0 0.0
        %3469 = vmatprep.subr.mxu0 0.0
        %3470 = vmatpush2.xpose.msra.mxu0 0.0
        %3471 = vmatprep.subr.mxu0 0.0
        %3472 = vmatpush2.xpose.msra.mxu0 0.0
        %3473 = vmatprep.subr.mxu0 0.0
        %3474 = vmatpush2.xpose.msra.mxu0 0.0
        %3475 = vmatprep.subr.mxu0 0.0
        %3476 = vmatpush2.xpose.msra.mxu0 0.0
        %3477 = vmatprep.subr.mxu0 0.0
        %3478 = vmatpush2.xpose.msra.mxu0 0.0
        %3479 = vmatprep.subr.mxu0 0.0
        %3480 = vmatpush2.xpose.msra.mxu0 0.0
        %3481 = vmatprep.subr.mxu0 0.0
        %3482 = vmatpush2.xpose.msra.mxu0 0.0
        %3483 = vmatprep.subr.mxu0 0.0
        %3484 = vmatpush2.xpose.msra.mxu0 0.0
        %3485 = vmatprep.subr.mxu0 0.0
        %3486 = vmatpush2.xpose.msra.mxu0 0.0
        %3487 = vmatprep.subr.mxu0 0.0
        %3488 = vmatpush2.xpose.msra.mxu0 0.0
        %3489 = vmatprep.subr.mxu0 0.0
        %3490 = vmatpush2.xpose.msra.mxu0 0.0
        %3491 = vmatprep.subr.mxu0 0.0
        %3492 = vmatpush2.xpose.msra.mxu0 0.0
        %3493 = vmatprep.subr.mxu0 0.0
        %3494 = vmatpush2.xpose.msra.mxu0 0.0
        %3495 = vmatprep.subr.mxu0 0.0
        %3496 = vmatpush2.xpose.msra.mxu0 0.0
        %3497 = vmatprep.subr.mxu0 0.0
        %3498 = vmatpush2.xpose.msra.mxu0 0.0
        %3499 = vmatprep.mubr.f32.mxu0 0.0
        %3500 = vmatmul.mubr.f32.gmra.mxu0 %v3431
        %v3501 = vpop.f32.mrf.mxu0
        %v3502 = vadd.f32 0.0, %v3501
        %v3503 = vpop.f32.mrf.mxu0
        %3504 = vdwg.mxu0
        %v3505 = vsel %vm2107, %v3502, -inf
        %3506 = vmax.xlane.f32.xlu0 %v3505
        %v3507 = vpop.xlane.xlu0 %3506
        %v3508 = vsub.f32 %v3502, %v3507
        %v3509 = vmul.f32 %v3508, 1.442695
        %v3510 = vpow.pop %v3509
        %v3511 = vsel %vm2107, %v3510, 0.0
        %3512 = vadd.xlane.f32.xlu0 %v3511
        %v3513 = vpop.xlane.xlu0 %3512
        %v3514 = vrcp.pop %v3513
        %v3515 = vmul.f32 %v3510, %v3514
        %3517 = vrot.lane.b32.xlu0 %v3261, 120
        %v3518 = vpop.permute.xlu0 %3517
        %v3521 = vsel %vm2107, %v3515, 0
        %3523 = vmatprep.subr.mxu0 0.0
        %3524 = vmatpush1.msra.mxu0 0.0
        %3525 = vmatprep.subr.mxu0 0.0
        %3526 = vmatpush1.msra.mxu0 0.0
        %3527 = vmatprep.subr.mxu0 0.0
        %3528 = vmatpush1.msra.mxu0 0.0
        %3529 = vmatprep.subr.mxu0 0.0
        %3530 = vmatpush1.msra.mxu0 0.0
        %3531 = vmatprep.subr.mxu0 0.0
        %3532 = vmatpush1.msra.mxu0 0.0
        %3533 = vmatprep.subr.mxu0 0.0
        %3534 = vmatpush1.msra.mxu0 0.0
        %3535 = vmatprep.subr.mxu0 0.0
        %3536 = vmatpush1.msra.mxu0 0.0
        %3537 = vmatprep.subr.mxu0 0.0
        %3538 = vmatpush1.msra.mxu0 0.0
        %3539 = vmatprep.subr.mxu0 0.0
        %3540 = vmatpush1.msra.mxu0 0.0
        %3541 = vmatprep.subr.mxu0 0.0
        %3542 = vmatpush1.msra.mxu0 0.0
        %3543 = vmatprep.subr.mxu0 0.0
        %3544 = vmatpush1.msra.mxu0 0.0
        %3545 = vmatprep.subr.mxu0 0.0
        %3546 = vmatpush1.msra.mxu0 0.0
        %3547 = vmatprep.subr.mxu0 0.0
        %3548 = vmatpush1.msra.mxu0 0.0
        %3549 = vmatprep.subr.mxu0 0.0
        %3550 = vmatpush1.msra.mxu0 0.0
        %3551 = vmatprep.subr.mxu0 0.0
        %3552 = vmatpush1.msra.mxu0 0.0
        %3553 = vmatprep.subr.mxu0 0.0
        %3554 = vmatpush1.msra.mxu0 %v3518
        %3555 = vmatprep.subr.mxu0 0.0
        %3556 = vmatpush2.msra.mxu0 0.0
        %3557 = vmatprep.subr.mxu0 0.0
        %3558 = vmatpush2.msra.mxu0 0.0
        %3559 = vmatprep.subr.mxu0 0.0
        %3560 = vmatpush2.msra.mxu0 0.0
        %3561 = vmatprep.subr.mxu0 0.0
        %3562 = vmatpush2.msra.mxu0 0.0
        %3563 = vmatprep.subr.mxu0 0.0
        %3564 = vmatpush2.msra.mxu0 0.0
        %3565 = vmatprep.subr.mxu0 0.0
        %3566 = vmatpush2.msra.mxu0 0.0
        %3567 = vmatprep.subr.mxu0 0.0
        %3568 = vmatpush2.msra.mxu0 0.0
        %3569 = vmatprep.subr.mxu0 0.0
        %3570 = vmatpush2.msra.mxu0 0.0
        %3571 = vmatprep.subr.mxu0 0.0
        %3572 = vmatpush2.msra.mxu0 0.0
        %3573 = vmatprep.subr.mxu0 0.0
        %3574 = vmatpush2.msra.mxu0 0.0
        %3575 = vmatprep.subr.mxu0 0.0
        %3576 = vmatpush2.msra.mxu0 0.0
        %3577 = vmatprep.subr.mxu0 0.0
        %3578 = vmatpush2.msra.mxu0 0.0
        %3579 = vmatprep.subr.mxu0 0.0
        %3580 = vmatpush2.msra.mxu0 0.0
        %3581 = vmatprep.subr.mxu0 0.0
        %3582 = vmatpush2.msra.mxu0 0.0
        %3583 = vmatprep.subr.mxu0 0.0
        %3584 = vmatpush2.msra.mxu0 0.0
        %3585 = vmatprep.subr.mxu0 0.0
        %3586 = vmatpush2.msra.mxu0 0.0
        %3587 = vmatprep.mubr.f32.mxu0 0.0
        %3588 = vmatmul.mubr.f32.gmra.mxu0 %v3521
        %v3589 = vpop.f32.mrf.mxu0
        %v3590 = vadd.f32 0.0, %v3589
        %v3591 = vpop.f32.mrf.mxu0
        %3592 = vdwg.mxu0
        %v3594 = vsel %vm2107, %v3590, 0
        %3596 = vmatprep.subr.mxu0 0.0
        %3597 = vmatpush1.msra.mxu0 0.0
        %3598 = vmatprep.subr.mxu0 0.0
        %3599 = vmatpush1.msra.mxu0 0.0
        %3600 = vmatprep.subr.mxu0 0.0
        %3601 = vmatpush1.msra.mxu0 0.0
        %3602 = vmatprep.subr.mxu0 0.0
        %3603 = vmatpush1.msra.mxu0 0.0
        %3604 = vmatprep.subr.mxu0 0.0
        %3605 = vmatpush1.msra.mxu0 0.0
        %3606 = vmatprep.subr.mxu0 0.0
        %3607 = vmatpush1.msra.mxu0 0.0
        %3608 = vmatprep.subr.mxu0 0.0
        %3609 = vmatpush1.msra.mxu0 0.0
        %3610 = vmatprep.subr.mxu0 0.0
        %3611 = vmatpush1.msra.mxu0 0.0
        %3612 = vmatprep.subr.mxu0 0.0
        %3613 = vmatpush1.msra.mxu0 0.0
        %3614 = vmatprep.subr.mxu0 0.0
        %3615 = vmatpush1.msra.mxu0 0.0
        %3616 = vmatprep.subr.mxu0 0.0
        %3617 = vmatpush1.msra.mxu0 0.0
        %3618 = vmatprep.subr.mxu0 0.0
        %3619 = vmatpush1.msra.mxu0 0.0
        %3620 = vmatprep.subr.mxu0 0.0
        %3621 = vmatpush1.msra.mxu0 0.0
        %3622 = vmatprep.subr.mxu0 0.0
        %3623 = vmatpush1.msra.mxu0 0.0
        %3624 = vmatprep.subr.mxu0 0.0
        %3625 = vmatpush1.msra.mxu0 0.0
        %3626 = vmatprep.subr.mxu0 0.0
        %3627 = vmatpush1.msra.mxu0 %v3100
        %3628 = vmatprep.subr.mxu0 0.0
        %3629 = vmatpush2.msra.mxu0 0.0
        %3630 = vmatprep.subr.mxu0 0.0
        %3631 = vmatpush2.msra.mxu0 0.0
        %3632 = vmatprep.subr.mxu0 0.0
        %3633 = vmatpush2.msra.mxu0 0.0
        %3634 = vmatprep.subr.mxu0 0.0
        %3635 = vmatpush2.msra.mxu0 0.0
        %3636 = vmatprep.subr.mxu0 0.0
        %3637 = vmatpush2.msra.mxu0 0.0
        %3638 = vmatprep.subr.mxu0 0.0
        %3639 = vmatpush2.msra.mxu0 0.0
        %3640 = vmatprep.subr.mxu0 0.0
        %3641 = vmatpush2.msra.mxu0 0.0
        %3642 = vmatprep.subr.mxu0 0.0
        %3643 = vmatpush2.msra.mxu0 0.0
        %3644 = vmatprep.subr.mxu0 0.0
        %3645 = vmatpush2.msra.mxu0 0.0
        %3646 = vmatprep.subr.mxu0 0.0
        %3647 = vmatpush2.msra.mxu0 0.0
        %3648 = vmatprep.subr.mxu0 0.0
        %3649 = vmatpush2.msra.mxu0 0.0
        %3650 = vmatprep.subr.mxu0 0.0
        %3651 = vmatpush2.msra.mxu0 0.0
        %3652 = vmatprep.subr.mxu0 0.0
        %3653 = vmatpush2.msra.mxu0 0.0
        %3654 = vmatprep.subr.mxu0 0.0
        %3655 = vmatpush2.msra.mxu0 0.0
        %3656 = vmatprep.subr.mxu0 0.0
        %3657 = vmatpush2.msra.mxu0 0.0
        %3658 = vmatprep.subr.mxu0 0.0
        %3659 = vmatpush2.msra.mxu0 0.0
        %3660 = vmatprep.mubr.f32.mxu0 0.0
        %3661 = vmatmul.mubr.f32.gmra.mxu0 %v3594
        %v3662 = vpop.f32.mrf.mxu0
        %v3663 = vadd.f32 0.0, %v3662
        %v3664 = vpop.f32.mrf.mxu0
        %3665 = vdwg.mxu0
        %v3667 = vsel %vm2107, %v3424, 0
        %3669 = vmatprep.subr.mxu0 0.0
        %3670 = vmatpush1.msra.mxu0 0.0
        %3671 = vmatprep.subr.mxu0 0.0
        %3672 = vmatpush1.msra.mxu0 0.0
        %3673 = vmatprep.subr.mxu0 0.0
        %3674 = vmatpush1.msra.mxu0 0.0
        %3675 = vmatprep.subr.mxu0 0.0
        %3676 = vmatpush1.msra.mxu0 0.0
        %3677 = vmatprep.subr.mxu0 0.0
        %3678 = vmatpush1.msra.mxu0 0.0
        %3679 = vmatprep.subr.mxu0 0.0
        %3680 = vmatpush1.msra.mxu0 0.0
        %3681 = vmatprep.subr.mxu0 0.0
        %3682 = vmatpush1.msra.mxu0 0.0
        %3683 = vmatprep.subr.mxu0 0.0
        %3684 = vmatpush1.msra.mxu0 0.0
        %3685 = vmatprep.subr.mxu0 0.0
        %3686 = vmatpush1.msra.mxu0 0.0
        %3687 = vmatprep.subr.mxu0 0.0
        %3688 = vmatpush1.msra.mxu0 0.0
        %3689 = vmatprep.subr.mxu0 0.0
        %3690 = vmatpush1.msra.mxu0 0.0
        %3691 = vmatprep.subr.mxu0 0.0
        %3692 = vmatpush1.msra.mxu0 0.0
        %3693 = vmatprep.subr.mxu0 0.0
        %3694 = vmatpush1.msra.mxu0 0.0
        %3695 = vmatprep.subr.mxu0 0.0
        %3696 = vmatpush1.msra.mxu0 0.0
        %3697 = vmatprep.subr.mxu0 0.0
        %3698 = vmatpush1.msra.mxu0 0.0
        %3699 = vmatprep.subr.mxu0 0.0
        %3700 = vmatpush1.msra.mxu0 %v3099
        %3701 = vmatprep.subr.mxu0 0.0
        %3702 = vmatpush2.msra.mxu0 0.0
        %3703 = vmatprep.subr.mxu0 0.0
        %3704 = vmatpush2.msra.mxu0 0.0
        %3705 = vmatprep.subr.mxu0 0.0
        %3706 = vmatpush2.msra.mxu0 0.0
        %3707 = vmatprep.subr.mxu0 0.0
        %3708 = vmatpush2.msra.mxu0 0.0
        %3709 = vmatprep.subr.mxu0 0.0
        %3710 = vmatpush2.msra.mxu0 0.0
        %3711 = vmatprep.subr.mxu0 0.0
        %3712 = vmatpush2.msra.mxu0 0.0
        %3713 = vmatprep.subr.mxu0 0.0
        %3714 = vmatpush2.msra.mxu0 0.0
        %3715 = vmatprep.subr.mxu0 0.0
        %3716 = vmatpush2.msra.mxu0 0.0
        %3717 = vmatprep.subr.mxu0 0.0
        %3718 = vmatpush2.msra.mxu0 0.0
        %3719 = vmatprep.subr.mxu0 0.0
        %3720 = vmatpush2.msra.mxu0 0.0
        %3721 = vmatprep.subr.mxu0 0.0
        %3722 = vmatpush2.msra.mxu0 0.0
        %3723 = vmatprep.subr.mxu0 0.0
        %3724 = vmatpush2.msra.mxu0 0.0
        %3725 = vmatprep.subr.mxu0 0.0
        %3726 = vmatpush2.msra.mxu0 0.0
        %3727 = vmatprep.subr.mxu0 0.0
        %3728 = vmatpush2.msra.mxu0 0.0
        %3729 = vmatprep.subr.mxu0 0.0
        %3730 = vmatpush2.msra.mxu0 0.0
        %3731 = vmatprep.subr.mxu0 0.0
        %3732 = vmatpush2.msra.mxu0 0.0
        %3733 = vmatprep.mubr.f32.mxu0 0.0
        %3734 = vmatmul.mubr.f32.gmra.mxu0 %v3667
        %v3735 = vpop.f32.mrf.mxu0
        %v3736 = vadd.f32 %v3663, %v3735
        %v3737 = vpop.f32.mrf.mxu0
        %3738 = vdwg.mxu0
        %3739 = vrot.lane.b32.xlu0 %v3264, 112
        %v3740 = vpop.permute.xlu0 %3739
        %3741 = vrot.lane.b32.xlu0 %v3182, 80
        %v3742 = vpop.permute.xlu0 %3741
        %v3743 = vsel %vm2107, %v3740, 0
        %v3745 = vsel %vm2107, %v3742, 0
        %3747 = vmatprep.subr.mxu0 0.0
        %3748 = vmatpush1.xpose.msra.mxu0 0.0
        %3749 = vmatprep.subr.mxu0 0.0
        %3750 = vmatpush1.xpose.msra.mxu0 0.0
        %3751 = vmatprep.subr.mxu0 0.0
        %3752 = vmatpush1.xpose.msra.mxu0 0.0
        %3753 = vmatprep.subr.mxu0 0.0
        %3754 = vmatpush1.xpose.msra.mxu0 0.0
        %3755 = vmatprep.subr.mxu0 0.0
        %3756 = vmatpush1.xpose.msra.mxu0 0.0
        %3757 = vmatprep.subr.mxu0 0.0
        %3758 = vmatpush1.xpose.msra.mxu0 0.0
        %3759 = vmatprep.subr.mxu0 0.0
        %3760 = vmatpush1.xpose.msra.mxu0 0.0
        %3761 = vmatprep.subr.mxu0 0.0
        %3762 = vmatpush1.xpose.msra.mxu0 0.0
        %3763 = vmatprep.subr.mxu0 0.0
        %3764 = vmatpush1.xpose.msra.mxu0 0.0
        %3765 = vmatprep.subr.mxu0 0.0
        %3766 = vmatpush1.xpose.msra.mxu0 0.0
        %3767 = vmatprep.subr.mxu0 0.0
        %3768 = vmatpush1.xpose.msra.mxu0 0.0
        %3769 = vmatprep.subr.mxu0 0.0
        %3770 = vmatpush1.xpose.msra.mxu0 0.0
        %3771 = vmatprep.subr.mxu0 0.0
        %3772 = vmatpush1.xpose.msra.mxu0 0.0
        %3773 = vmatprep.subr.mxu0 0.0
        %3774 = vmatpush1.xpose.msra.mxu0 0.0
        %3775 = vmatprep.subr.mxu0 0.0
        %3776 = vmatpush1.xpose.msra.mxu0 0.0
        %3777 = vmatprep.subr.mxu0 0.0
        %3778 = vmatpush1.xpose.msra.mxu0 %v3745
        %3779 = vmatprep.subr.mxu0 0.0
        %3780 = vmatpush2.xpose.msra.mxu0 0.0
        %3781 = vmatprep.subr.mxu0 0.0
        %3782 = vmatpush2.xpose.msra.mxu0 0.0
        %3783 = vmatprep.subr.mxu0 0.0
        %3784 = vmatpush2.xpose.msra.mxu0 0.0
        %3785 = vmatprep.subr.mxu0 0.0
        %3786 = vmatpush2.xpose.msra.mxu0 0.0
        %3787 = vmatprep.subr.mxu0 0.0
        %3788 = vmatpush2.xpose.msra.mxu0 0.0
        %3789 = vmatprep.subr.mxu0 0.0
        %3790 = vmatpush2.xpose.msra.mxu0 0.0
        %3791 = vmatprep.subr.mxu0 0.0
        %3792 = vmatpush2.xpose.msra.mxu0 0.0
        %3793 = vmatprep.subr.mxu0 0.0
        %3794 = vmatpush2.xpose.msra.mxu0 0.0
        %3795 = vmatprep.subr.mxu0 0.0
        %3796 = vmatpush2.xpose.msra.mxu0 0.0
        %3797 = vmatprep.subr.mxu0 0.0
        %3798 = vmatpush2.xpose.msra.mxu0 0.0
        %3799 = vmatprep.subr.mxu0 0.0
        %3800 = vmatpush2.xpose.msra.mxu0 0.0
        %3801 = vmatprep.subr.mxu0 0.0
        %3802 = vmatpush2.xpose.msra.mxu0 0.0
        %3803 = vmatprep.subr.mxu0 0.0
        %3804 = vmatpush2.xpose.msra.mxu0 0.0
        %3805 = vmatprep.subr.mxu0 0.0
        %3806 = vmatpush2.xpose.msra.mxu0 0.0
        %3807 = vmatprep.subr.mxu0 0.0
        %3808 = vmatpush2.xpose.msra.mxu0 0.0
        %3809 = vmatprep.subr.mxu0 0.0
        %3810 = vmatpush2.xpose.msra.mxu0 0.0
        %3811 = vmatprep.mubr.f32.mxu0 0.0
        %3812 = vmatmul.mubr.f32.gmra.mxu0 %v3743
        %v3813 = vpop.f32.mrf.mxu0
        %v3814 = vadd.f32 0.0, %v3813
        %v3815 = vpop.f32.mrf.mxu0
        %3816 = vdwg.mxu0
        %v3817 = vsel %vm2107, %v3814, -inf
        %3818 = vmax.xlane.f32.xlu0 %v3817
        %v3819 = vpop.xlane.xlu0 %3818
        %v3820 = vsub.f32 %v3814, %v3819
        %v3821 = vmul.f32 %v3820, 1.442695
        %v3822 = vpow.pop %v3821
        %v3823 = vsel %vm2107, %v3822, 0.0
        %3824 = vadd.xlane.f32.xlu0 %v3823
        %v3825 = vpop.xlane.xlu0 %3824
        %v3826 = vrcp.pop %v3825
        %v3827 = vmul.f32 %v3822, %v3826
        %3828 = vrot.lane.b32.xlu0 %v3261, 112
        %v3829 = vpop.permute.xlu0 %3828
        %v3832 = vsel %vm2107, %v3827, 0
        %3834 = vmatprep.subr.mxu0 0.0
        %3835 = vmatpush1.msra.mxu0 0.0
        %3836 = vmatprep.subr.mxu0 0.0
        %3837 = vmatpush1.msra.mxu0 0.0
        %3838 = vmatprep.subr.mxu0 0.0
        %3839 = vmatpush1.msra.mxu0 0.0
        %3840 = vmatprep.subr.mxu0 0.0
        %3841 = vmatpush1.msra.mxu0 0.0
        %3842 = vmatprep.subr.mxu0 0.0
        %3843 = vmatpush1.msra.mxu0 0.0
        %3844 = vmatprep.subr.mxu0 0.0
        %3845 = vmatpush1.msra.mxu0 0.0
        %3846 = vmatprep.subr.mxu0 0.0
        %3847 = vmatpush1.msra.mxu0 0.0
        %3848 = vmatprep.subr.mxu0 0.0
        %3849 = vmatpush1.msra.mxu0 0.0
        %3850 = vmatprep.subr.mxu0 0.0
        %3851 = vmatpush1.msra.mxu0 0.0
        %3852 = vmatprep.subr.mxu0 0.0
        %3853 = vmatpush1.msra.mxu0 0.0
        %3854 = vmatprep.subr.mxu0 0.0
        %3855 = vmatpush1.msra.mxu0 0.0
        %3856 = vmatprep.subr.mxu0 0.0
        %3857 = vmatpush1.msra.mxu0 0.0
        %3858 = vmatprep.subr.mxu0 0.0
        %3859 = vmatpush1.msra.mxu0 0.0
        %3860 = vmatprep.subr.mxu0 0.0
        %3861 = vmatpush1.msra.mxu0 0.0
        %3862 = vmatprep.subr.mxu0 0.0
        %3863 = vmatpush1.msra.mxu0 0.0
        %3864 = vmatprep.subr.mxu0 0.0
        %3865 = vmatpush1.msra.mxu0 %v3829
        %3866 = vmatprep.subr.mxu0 0.0
        %3867 = vmatpush2.msra.mxu0 0.0
        %3868 = vmatprep.subr.mxu0 0.0
        %3869 = vmatpush2.msra.mxu0 0.0
        %3870 = vmatprep.subr.mxu0 0.0
        %3871 = vmatpush2.msra.mxu0 0.0
        %3872 = vmatprep.subr.mxu0 0.0
        %3873 = vmatpush2.msra.mxu0 0.0
        %3874 = vmatprep.subr.mxu0 0.0
        %3875 = vmatpush2.msra.mxu0 0.0
        %3876 = vmatprep.subr.mxu0 0.0
        %3877 = vmatpush2.msra.mxu0 0.0
        %3878 = vmatprep.subr.mxu0 0.0
        %3879 = vmatpush2.msra.mxu0 0.0
        %3880 = vmatprep.subr.mxu0 0.0
        %3881 = vmatpush2.msra.mxu0 0.0
        %3882 = vmatprep.subr.mxu0 0.0
        %3883 = vmatpush2.msra.mxu0 0.0
        %3884 = vmatprep.subr.mxu0 0.0
        %3885 = vmatpush2.msra.mxu0 0.0
        %3886 = vmatprep.subr.mxu0 0.0
        %3887 = vmatpush2.msra.mxu0 0.0
        %3888 = vmatprep.subr.mxu0 0.0
        %3889 = vmatpush2.msra.mxu0 0.0
        %3890 = vmatprep.subr.mxu0 0.0
        %3891 = vmatpush2.msra.mxu0 0.0
        %3892 = vmatprep.subr.mxu0 0.0
        %3893 = vmatpush2.msra.mxu0 0.0
        %3894 = vmatprep.subr.mxu0 0.0
        %3895 = vmatpush2.msra.mxu0 0.0
        %3896 = vmatprep.subr.mxu0 0.0
        %3897 = vmatpush2.msra.mxu0 0.0
        %3898 = vmatprep.mubr.f32.mxu0 0.0
        %3899 = vmatmul.mubr.f32.gmra.mxu0 %v3832
        %v3900 = vpop.f32.mrf.mxu0
        %v3901 = vadd.f32 0.0, %v3900
        %v3902 = vpop.f32.mrf.mxu0
        %3903 = vdwg.mxu0
        %v3905 = vsel %vm2107, %v3901, 0
        %3907 = vmatprep.subr.mxu0 0.0
        %3908 = vmatpush1.msra.mxu0 0.0
        %3909 = vmatprep.subr.mxu0 0.0
        %3910 = vmatpush1.msra.mxu0 0.0
        %3911 = vmatprep.subr.mxu0 0.0
        %3912 = vmatpush1.msra.mxu0 0.0
        %3913 = vmatprep.subr.mxu0 0.0
        %3914 = vmatpush1.msra.mxu0 0.0
        %3915 = vmatprep.subr.mxu0 0.0
        %3916 = vmatpush1.msra.mxu0 0.0
        %3917 = vmatprep.subr.mxu0 0.0
        %3918 = vmatpush1.msra.mxu0 0.0
        %3919 = vmatprep.subr.mxu0 0.0
        %3920 = vmatpush1.msra.mxu0 0.0
        %3921 = vmatprep.subr.mxu0 0.0
        %3922 = vmatpush1.msra.mxu0 0.0
        %3923 = vmatprep.subr.mxu0 0.0
        %3924 = vmatpush1.msra.mxu0 0.0
        %3925 = vmatprep.subr.mxu0 0.0
        %3926 = vmatpush1.msra.mxu0 0.0
        %3927 = vmatprep.subr.mxu0 0.0
        %3928 = vmatpush1.msra.mxu0 0.0
        %3929 = vmatprep.subr.mxu0 0.0
        %3930 = vmatpush1.msra.mxu0 0.0
        %3931 = vmatprep.subr.mxu0 0.0
        %3932 = vmatpush1.msra.mxu0 0.0
        %3933 = vmatprep.subr.mxu0 0.0
        %3934 = vmatpush1.msra.mxu0 0.0
        %3935 = vmatprep.subr.mxu0 0.0
        %3936 = vmatpush1.msra.mxu0 0.0
        %3937 = vmatprep.subr.mxu0 0.0
        %3938 = vmatpush1.msra.mxu0 %v3101
        %3939 = vmatprep.subr.mxu0 0.0
        %3940 = vmatpush2.msra.mxu0 0.0
        %3941 = vmatprep.subr.mxu0 0.0
        %3942 = vmatpush2.msra.mxu0 0.0
        %3943 = vmatprep.subr.mxu0 0.0
        %3944 = vmatpush2.msra.mxu0 0.0
        %3945 = vmatprep.subr.mxu0 0.0
        %3946 = vmatpush2.msra.mxu0 0.0
        %3947 = vmatprep.subr.mxu0 0.0
        %3948 = vmatpush2.msra.mxu0 0.0
        %3949 = vmatprep.subr.mxu0 0.0
        %3950 = vmatpush2.msra.mxu0 0.0
        %3951 = vmatprep.subr.mxu0 0.0
        %3952 = vmatpush2.msra.mxu0 0.0
        %3953 = vmatprep.subr.mxu0 0.0
        %3954 = vmatpush2.msra.mxu0 0.0
        %3955 = vmatprep.subr.mxu0 0.0
        %3956 = vmatpush2.msra.mxu0 0.0
        %3957 = vmatprep.subr.mxu0 0.0
        %3958 = vmatpush2.msra.mxu0 0.0
        %3959 = vmatprep.subr.mxu0 0.0
        %3960 = vmatpush2.msra.mxu0 0.0
        %3961 = vmatprep.subr.mxu0 0.0
        %3962 = vmatpush2.msra.mxu0 0.0
        %3963 = vmatprep.subr.mxu0 0.0
        %3964 = vmatpush2.msra.mxu0 0.0
        %3965 = vmatprep.subr.mxu0 0.0
        %3966 = vmatpush2.msra.mxu0 0.0
        %3967 = vmatprep.subr.mxu0 0.0
        %3968 = vmatpush2.msra.mxu0 0.0
        %3969 = vmatprep.subr.mxu0 0.0
        %3970 = vmatpush2.msra.mxu0 0.0
        %3971 = vmatprep.mubr.f32.mxu0 0.0
        %3972 = vmatmul.mubr.f32.gmra.mxu0 %v3905
        %v3973 = vpop.f32.mrf.mxu0
        %v3974 = vadd.f32 0.0, %v3973
        %v3975 = vpop.f32.mrf.mxu0
        %3976 = vdwg.mxu0
        %v3977 = vadd.f32 %v3736, %v3974
        %3978 = vrot.lane.b32.xlu0 %v3264, 104
        %v3979 = vpop.permute.xlu0 %3978
        %3980 = vrot.lane.b32.xlu0 %v3182, 72
        %v3981 = vpop.permute.xlu0 %3980
        %v3982 = vsel %vm2107, %v3979, 0
        %v3984 = vsel %vm2107, %v3981, 0
        %3986 = vmatprep.subr.mxu0 0.0
        %3987 = vmatpush1.xpose.msra.mxu0 0.0
        %3988 = vmatprep.subr.mxu0 0.0
        %3989 = vmatpush1.xpose.msra.mxu0 0.0
        %3990 = vmatprep.subr.mxu0 0.0
        %3991 = vmatpush1.xpose.msra.mxu0 0.0
        %3992 = vmatprep.subr.mxu0 0.0
        %3993 = vmatpush1.xpose.msra.mxu0 0.0
        %3994 = vmatprep.subr.mxu0 0.0
        %3995 = vmatpush1.xpose.msra.mxu0 0.0
        %3996 = vmatprep.subr.mxu0 0.0
        %3997 = vmatpush1.xpose.msra.mxu0 0.0
        %3998 = vmatprep.subr.mxu0 0.0
        %3999 = vmatpush1.xpose.msra.mxu0 0.0
        %4000 = vmatprep.subr.mxu0 0.0
        %4001 = vmatpush1.xpose.msra.mxu0 0.0
        %4002 = vmatprep.subr.mxu0 0.0
        %4003 = vmatpush1.xpose.msra.mxu0 0.0
        %4004 = vmatprep.subr.mxu0 0.0
        %4005 = vmatpush1.xpose.msra.mxu0 0.0
        %4006 = vmatprep.subr.mxu0 0.0
        %4007 = vmatpush1.xpose.msra.mxu0 0.0
        %4008 = vmatprep.subr.mxu0 0.0
        %4009 = vmatpush1.xpose.msra.mxu0 0.0
        %4010 = vmatprep.subr.mxu0 0.0
        %4011 = vmatpush1.xpose.msra.mxu0 0.0
        %4012 = vmatprep.subr.mxu0 0.0
        %4013 = vmatpush1.xpose.msra.mxu0 0.0
        %4014 = vmatprep.subr.mxu0 0.0
        %4015 = vmatpush1.xpose.msra.mxu0 0.0
        %4016 = vmatprep.subr.mxu0 0.0
        %4017 = vmatpush1.xpose.msra.mxu0 %v3984
        %4018 = vmatprep.subr.mxu0 0.0
        %4019 = vmatpush2.xpose.msra.mxu0 0.0
        %4020 = vmatprep.subr.mxu0 0.0
        %4021 = vmatpush2.xpose.msra.mxu0 0.0
        %4022 = vmatprep.subr.mxu0 0.0
        %4023 = vmatpush2.xpose.msra.mxu0 0.0
        %4024 = vmatprep.subr.mxu0 0.0
        %4025 = vmatpush2.xpose.msra.mxu0 0.0
        %4026 = vmatprep.subr.mxu0 0.0
        %4027 = vmatpush2.xpose.msra.mxu0 0.0
        %4028 = vmatprep.subr.mxu0 0.0
        %4029 = vmatpush2.xpose.msra.mxu0 0.0
        %4030 = vmatprep.subr.mxu0 0.0
        %4031 = vmatpush2.xpose.msra.mxu0 0.0
        %4032 = vmatprep.subr.mxu0 0.0
        %4033 = vmatpush2.xpose.msra.mxu0 0.0
        %4034 = vmatprep.subr.mxu0 0.0
        %4035 = vmatpush2.xpose.msra.mxu0 0.0
        %4036 = vmatprep.subr.mxu0 0.0
        %4037 = vmatpush2.xpose.msra.mxu0 0.0
        %4038 = vmatprep.subr.mxu0 0.0
        %4039 = vmatpush2.xpose.msra.mxu0 0.0
        %4040 = vmatprep.subr.mxu0 0.0
        %4041 = vmatpush2.xpose.msra.mxu0 0.0
        %4042 = vmatprep.subr.mxu0 0.0
        %4043 = vmatpush2.xpose.msra.mxu0 0.0
        %4044 = vmatprep.subr.mxu0 0.0
        %4045 = vmatpush2.xpose.msra.mxu0 0.0
        %4046 = vmatprep.subr.mxu0 0.0
        %4047 = vmatpush2.xpose.msra.mxu0 0.0
        %4048 = vmatprep.subr.mxu0 0.0
        %4049 = vmatpush2.xpose.msra.mxu0 0.0
        %4050 = vmatprep.mubr.f32.mxu0 0.0
        %4051 = vmatmul.mubr.f32.gmra.mxu0 %v3982
        %v4052 = vpop.f32.mrf.mxu0
        %v4053 = vadd.f32 0.0, %v4052
        %v4054 = vpop.f32.mrf.mxu0
        %4055 = vdwg.mxu0
        %v4056 = vsel %vm2107, %v4053, -inf
        %4057 = vmax.xlane.f32.xlu0 %v4056
        %v4058 = vpop.xlane.xlu0 %4057
        %v4059 = vsub.f32 %v4053, %v4058
        %v4060 = vmul.f32 %v4059, 1.442695
        %v4061 = vpow.pop %v4060
        %v4062 = vsel %vm2107, %v4061, 0.0
        %4063 = vadd.xlane.f32.xlu0 %v4062
        %v4064 = vpop.xlane.xlu0 %4063
        %v4065 = vrcp.pop %v4064
        %v4066 = vmul.f32 %v4061, %v4065
        %4067 = vrot.lane.b32.xlu0 %v3261, 104
        %v4068 = vpop.permute.xlu0 %4067
        %v4071 = vsel %vm2107, %v4066, 0
        %4073 = vmatprep.subr.mxu0 0.0
        %4074 = vmatpush1.msra.mxu0 0.0
        %4075 = vmatprep.subr.mxu0 0.0
        %4076 = vmatpush1.msra.mxu0 0.0
        %4077 = vmatprep.subr.mxu0 0.0
        %4078 = vmatpush1.msra.mxu0 0.0
        %4079 = vmatprep.subr.mxu0 0.0
        %4080 = vmatpush1.msra.mxu0 0.0
        %4081 = vmatprep.subr.mxu0 0.0
        %4082 = vmatpush1.msra.mxu0 0.0
        %4083 = vmatprep.subr.mxu0 0.0
        %4084 = vmatpush1.msra.mxu0 0.0
        %4085 = vmatprep.subr.mxu0 0.0
        %4086 = vmatpush1.msra.mxu0 0.0
        %4087 = vmatprep.subr.mxu0 0.0
        %4088 = vmatpush1.msra.mxu0 0.0
        %4089 = vmatprep.subr.mxu0 0.0
        %4090 = vmatpush1.msra.mxu0 0.0
        %4091 = vmatprep.subr.mxu0 0.0
        %4092 = vmatpush1.msra.mxu0 0.0
        %4093 = vmatprep.subr.mxu0 0.0
        %4094 = vmatpush1.msra.mxu0 0.0
        %4095 = vmatprep.subr.mxu0 0.0
        %4096 = vmatpush1.msra.mxu0 0.0
        %4097 = vmatprep.subr.mxu0 0.0
        %4098 = vmatpush1.msra.mxu0 0.0
        %4099 = vmatprep.subr.mxu0 0.0
        %4100 = vmatpush1.msra.mxu0 0.0
        %4101 = vmatprep.subr.mxu0 0.0
        %4102 = vmatpush1.msra.mxu0 0.0
        %4103 = vmatprep.subr.mxu0 0.0
        %4104 = vmatpush1.msra.mxu0 %v4068
        %4105 = vmatprep.subr.mxu0 0.0
        %4106 = vmatpush2.msra.mxu0 0.0
        %4107 = vmatprep.subr.mxu0 0.0
        %4108 = vmatpush2.msra.mxu0 0.0
        %4109 = vmatprep.subr.mxu0 0.0
        %4110 = vmatpush2.msra.mxu0 0.0
        %4111 = vmatprep.subr.mxu0 0.0
        %4112 = vmatpush2.msra.mxu0 0.0
        %4113 = vmatprep.subr.mxu0 0.0
        %4114 = vmatpush2.msra.mxu0 0.0
        %4115 = vmatprep.subr.mxu0 0.0
        %4116 = vmatpush2.msra.mxu0 0.0
        %4117 = vmatprep.subr.mxu0 0.0
        %4118 = vmatpush2.msra.mxu0 0.0
        %4119 = vmatprep.subr.mxu0 0.0
        %4120 = vmatpush2.msra.mxu0 0.0
        %4121 = vmatprep.subr.mxu0 0.0
        %4122 = vmatpush2.msra.mxu0 0.0
        %4123 = vmatprep.subr.mxu0 0.0
        %4124 = vmatpush2.msra.mxu0 0.0
        %4125 = vmatprep.subr.mxu0 0.0
        %4126 = vmatpush2.msra.mxu0 0.0
        %4127 = vmatprep.subr.mxu0 0.0
        %4128 = vmatpush2.msra.mxu0 0.0
        %4129 = vmatprep.subr.mxu0 0.0
        %4130 = vmatpush2.msra.mxu0 0.0
        %4131 = vmatprep.subr.mxu0 0.0
        %4132 = vmatpush2.msra.mxu0 0.0
        %4133 = vmatprep.subr.mxu0 0.0
        %4134 = vmatpush2.msra.mxu0 0.0
        %4135 = vmatprep.subr.mxu0 0.0
        %4136 = vmatpush2.msra.mxu0 0.0
        %4137 = vmatprep.mubr.f32.mxu0 0.0
        %4138 = vmatmul.mubr.f32.gmra.mxu0 %v4071
        %v4139 = vpop.f32.mrf.mxu0
        %v4140 = vadd.f32 0.0, %v4139
        %v4141 = vpop.f32.mrf.mxu0
        %4142 = vdwg.mxu0
        %v4144 = vsel %vm2107, %v4140, 0
        %4146 = vmatprep.subr.mxu0 0.0
        %4147 = vmatpush1.msra.mxu0 0.0
        %4148 = vmatprep.subr.mxu0 0.0
        %4149 = vmatpush1.msra.mxu0 0.0
        %4150 = vmatprep.subr.mxu0 0.0
        %4151 = vmatpush1.msra.mxu0 0.0
        %4152 = vmatprep.subr.mxu0 0.0
        %4153 = vmatpush1.msra.mxu0 0.0
        %4154 = vmatprep.subr.mxu0 0.0
        %4155 = vmatpush1.msra.mxu0 0.0
        %4156 = vmatprep.subr.mxu0 0.0
        %4157 = vmatpush1.msra.mxu0 0.0
        %4158 = vmatprep.subr.mxu0 0.0
        %4159 = vmatpush1.msra.mxu0 0.0
        %4160 = vmatprep.subr.mxu0 0.0
        %4161 = vmatpush1.msra.mxu0 0.0
        %4162 = vmatprep.subr.mxu0 0.0
        %4163 = vmatpush1.msra.mxu0 0.0
        %4164 = vmatprep.subr.mxu0 0.0
        %4165 = vmatpush1.msra.mxu0 0.0
        %4166 = vmatprep.subr.mxu0 0.0
        %4167 = vmatpush1.msra.mxu0 0.0
        %4168 = vmatprep.subr.mxu0 0.0
        %4169 = vmatpush1.msra.mxu0 0.0
        %4170 = vmatprep.subr.mxu0 0.0
        %4171 = vmatpush1.msra.mxu0 0.0
        %4172 = vmatprep.subr.mxu0 0.0
        %4173 = vmatpush1.msra.mxu0 0.0
        %4174 = vmatprep.subr.mxu0 0.0
        %4175 = vmatpush1.msra.mxu0 0.0
        %4176 = vmatprep.subr.mxu0 0.0
        %4177 = vmatpush1.msra.mxu0 %v3102
        %4178 = vmatprep.subr.mxu0 0.0
        %4179 = vmatpush2.msra.mxu0 0.0
        %4180 = vmatprep.subr.mxu0 0.0
        %4181 = vmatpush2.msra.mxu0 0.0
        %4182 = vmatprep.subr.mxu0 0.0
        %4183 = vmatpush2.msra.mxu0 0.0
        %4184 = vmatprep.subr.mxu0 0.0
        %4185 = vmatpush2.msra.mxu0 0.0
        %4186 = vmatprep.subr.mxu0 0.0
        %4187 = vmatpush2.msra.mxu0 0.0
        %4188 = vmatprep.subr.mxu0 0.0
        %4189 = vmatpush2.msra.mxu0 0.0
        %4190 = vmatprep.subr.mxu0 0.0
        %4191 = vmatpush2.msra.mxu0 0.0
        %4192 = vmatprep.subr.mxu0 0.0
        %4193 = vmatpush2.msra.mxu0 0.0
        %4194 = vmatprep.subr.mxu0 0.0
        %4195 = vmatpush2.msra.mxu0 0.0
        %4196 = vmatprep.subr.mxu0 0.0
        %4197 = vmatpush2.msra.mxu0 0.0
        %4198 = vmatprep.subr.mxu0 0.0
        %4199 = vmatpush2.msra.mxu0 0.0
        %4200 = vmatprep.subr.mxu0 0.0
        %4201 = vmatpush2.msra.mxu0 0.0
        %4202 = vmatprep.subr.mxu0 0.0
        %4203 = vmatpush2.msra.mxu0 0.0
        %4204 = vmatprep.subr.mxu0 0.0
        %4205 = vmatpush2.msra.mxu0 0.0
        %4206 = vmatprep.subr.mxu0 0.0
        %4207 = vmatpush2.msra.mxu0 0.0
        %4208 = vmatprep.subr.mxu0 0.0
        %4209 = vmatpush2.msra.mxu0 0.0
        %4210 = vmatprep.mubr.f32.mxu0 0.0
        %4211 = vmatmul.mubr.f32.gmra.mxu0 %v4144
        %v4212 = vpop.f32.mrf.mxu0
        %v4213 = vadd.f32 0.0, %v4212
        %v4214 = vpop.f32.mrf.mxu0
        %4215 = vdwg.mxu0
        %v4216 = vadd.f32 %v3977, %v4213
        %v4218 = vlaneseq
        %v4219 = vshrl.u32 %v4218, 7
        %v4220 = vsub.s32 0, %v4219
        %v4221 = vrot.slane %v3103, %v4220
        %v4223 = vadd.f32 %v4216, %v4221
        %v4224 = vadd.f32 %v1925, %v4223
        %v4225 = vsel %vm1950, %v4224, 0.0
        %4226 = vadd.xlane.f32.xlu0 %v4225
        %v4227 = vpop.xlane.xlu0 %4226
        %v4228 = vmul.f32 %v4227, %v3068
        %v4229 = vsub.f32 %v4224, %v4228
        %v4230 = vmul.f32 %v4229, %v4229
        %v4231 = vsel %vm1950, %v4230, 0.0
        %4232 = vadd.xlane.f32.xlu0 %v4231
        %v4233 = vpop.xlane.xlu0 %4232
        %v4234 = vmul.f32 %v4233, %v3068
        %v4235 = vadd.f32 %v4234, 1e-05
        %v4236 = vrsqrt.pop %v4235
        %v4237 = vmul.f32 %v4229, %v4236
        %v4238 = vlaneseq
        %v4239 = vshrl.u32 %v4238, 7
        %v4240 = vsub.s32 0, %v4239
        %v4241 = vrot.slane %v3104, %v4240
        %v4242 = vmul.f32 %v4237, %v4241
        %v4243 = vlaneseq
        %v4244 = vshrl.u32 %v4243, 7
        %v4245 = vsub.s32 1, %v4244
        %v4246 = vrot.slane %v3104, %v4245
        %v4247 = vadd.f32 %v4242, %v4246
        %v4248 = vld [vmem:[#allocation22] sm:$0xff]
        %v4249 = vld [vmem:[#allocation22 + $0x8] sm:$0xff]
        %v4250 = vld [vmem:[#allocation22 + $0x10] sm:$0xff]
        %v4251 = vld [vmem:[#allocation22 + $0x18] sm:$0xff]
        %v4252 = vld [vmem:[#allocation23] sm:$0x1]
        %v4253 = vld [vmem:[#allocation25] sm:$0xff]
        %v4254 = vld [vmem:[#allocation25 + $0x8] sm:$0xff]
        %v4255 = vld [vmem:[#allocation25 + $0x10] sm:$0xff]
        %v4256 = vld [vmem:[#allocation25 + $0x18] sm:$0xff]
        %v4257 = vld [vmem:[#allocation26] sm:$0x1]
        %v4258 = vld [vmem:[#allocation28] sm:$0xff]
        %v4259 = vld [vmem:[#allocation28 + $0x8] sm:$0xff]
        %v4260 = vld [vmem:[#allocation28 + $0x10] sm:$0xff]
        %v4261 = vld [vmem:[#allocation28 + $0x18] sm:$0xff]
        %v4262 = vld [vmem:[#allocation29] sm:$0x1]
        %v4263 = vld [vmem:[#allocation31] sm:$0xff]
        %v4264 = vld [vmem:[#allocation31 + $0x8] sm:$0xff]
        %v4265 = vld [vmem:[#allocation31 + $0x10] sm:$0xff]
        %v4266 = vld [vmem:[#allocation31 + $0x18] sm:$0xff]
        %v4267 = vld [vmem:[#allocation32] sm:$0x1]
        %v4268 = vld [vmem:[#allocation34] sm:$0x3]
        %v4269 = vld [vmem:[#allocation35] sm:$0xff]
        %v4270 = vld [vmem:[#allocation35 + $0x8] sm:$0xff]
        %v4271 = vld [vmem:[#allocation35 + $0x10] sm:$0xff]
        %v4272 = vld [vmem:[#allocation35 + $0x18] sm:$0xff]
        %v4273 = vld [vmem:[#allocation37] sm:$0x1]
        %v4274 = vld [vmem:[%s59] sm:$0xff]
        %v4275 = vld [vmem:[%s59 + $0x8] sm:$0xff]
        %v4276 = vld [vmem:[%s59 + $0x10] sm:$0xff]
        %v4277 = vld [vmem:[%s59 + $0x18] sm:$0xff]
        %v4278 = vld [vmem:[%s59 + $0x20] sm:$0xff]
        %v4279 = vld [vmem:[%s59 + $0x28] sm:$0xff]
        %v4280 = vld [vmem:[%s59 + $0x30] sm:$0xff]
        %v4281 = vld [vmem:[%s59 + $0x38] sm:$0xff]
        %v4282 = vld [vmem:[#allocation38] sm:$0x1]
        %v4283 = vld [vmem:[#allocation40] sm:$0x3]
        %v4284 = vadd.f32 %v3088, %v1924
        %v4286 = vlaneseq
        %v4287 = vshrl.u32 %v4286, 7
        %v4288 = vsub.s32 0, %v4287
        %v4289 = vrot.slane %v4252, %v4288
        %v4292 = vsel %vm1950, %v4284, 0
        %4294 = vmatprep.subr.mxu0 0.0
        %4295 = vmatpush1.msra.mxu0 0.0
        %4296 = vmatprep.subr.mxu0 0.0
        %4297 = vmatpush1.msra.mxu0 0.0
        %4298 = vmatprep.subr.mxu0 0.0
        %4299 = vmatpush1.msra.mxu0 0.0
        %4300 = vmatprep.subr.mxu0 0.0
        %4301 = vmatpush1.msra.mxu0 0.0
        %4302 = vmatprep.subr.mxu0 0.0
        %4303 = vmatpush1.msra.mxu0 0.0
        %4304 = vmatprep.subr.mxu0 0.0
        %4305 = vmatpush1.msra.mxu0 0.0
        %4306 = vmatprep.subr.mxu0 0.0
        %4307 = vmatpush1.msra.mxu0 0.0
        %4308 = vmatprep.subr.mxu0 0.0
        %4309 = vmatpush1.msra.mxu0 0.0
        %4310 = vmatprep.subr.mxu0 0.0
        %4311 = vmatpush1.msra.mxu0 0.0
        %4312 = vmatprep.subr.mxu0 0.0
        %4313 = vmatpush1.msra.mxu0 0.0
        %4314 = vmatprep.subr.mxu0 0.0
        %4315 = vmatpush1.msra.mxu0 0.0
        %4316 = vmatprep.subr.mxu0 0.0
        %4317 = vmatpush1.msra.mxu0 0.0
        %4318 = vmatprep.subr.mxu0 0.0
        %4319 = vmatpush1.msra.mxu0 %v4251
        %4320 = vmatprep.subr.mxu0 0.0
        %4321 = vmatpush1.msra.mxu0 %v4250
        %4322 = vmatprep.subr.mxu0 0.0
        %4323 = vmatpush1.msra.mxu0 %v4249
        %4324 = vmatprep.subr.mxu0 0.0
        %4325 = vmatpush1.msra.mxu0 %v4248
        %4326 = vmatprep.subr.mxu0 0.0
        %4327 = vmatpush2.msra.mxu0 0.0
        %4328 = vmatprep.subr.mxu0 0.0
        %4329 = vmatpush2.msra.mxu0 0.0
        %4330 = vmatprep.subr.mxu0 0.0
        %4331 = vmatpush2.msra.mxu0 0.0
        %4332 = vmatprep.subr.mxu0 0.0
        %4333 = vmatpush2.msra.mxu0 0.0
        %4334 = vmatprep.subr.mxu0 0.0
        %4335 = vmatpush2.msra.mxu0 0.0
        %4336 = vmatprep.subr.mxu0 0.0
        %4337 = vmatpush2.msra.mxu0 0.0
        %4338 = vmatprep.subr.mxu0 0.0
        %4339 = vmatpush2.msra.mxu0 0.0
        %4340 = vmatprep.subr.mxu0 0.0
        %4341 = vmatpush2.msra.mxu0 0.0
        %4342 = vmatprep.subr.mxu0 0.0
        %4343 = vmatpush2.msra.mxu0 0.0
        %4344 = vmatprep.subr.mxu0 0.0
        %4345 = vmatpush2.msra.mxu0 0.0
        %4346 = vmatprep.subr.mxu0 0.0
        %4347 = vmatpush2.msra.mxu0 0.0
        %4348 = vmatprep.subr.mxu0 0.0
        %4349 = vmatpush2.msra.mxu0 0.0
        %4350 = vmatprep.subr.mxu0 0.0
        %4351 = vmatpush2.msra.mxu0 0.0
        %4352 = vmatprep.subr.mxu0 0.0
        %4353 = vmatpush2.msra.mxu0 0.0
        %4354 = vmatprep.subr.mxu0 0.0
        %4355 = vmatpush2.msra.mxu0 0.0
        %4356 = vmatprep.subr.mxu0 0.0
        %4357 = vmatpush2.msra.mxu0 0.0
        %4358 = vmatprep.mubr.f32.mxu0 0.0
        %4359 = vmatmul.mubr.f32.gmra.mxu0 %v4292
        %v4360 = vpop.f32.mrf.mxu0
        %v4361 = vadd.f32 %v4289, %v4360
        %v4362 = vpop.f32.mrf.mxu0
        %4363 = vdwg.mxu0
        %v4364 = vadd.f32 %v4247, %v1926
        %v4366 = vlaneseq
        %v4367 = vshrl.u32 %v4366, 7
        %v4368 = vsub.s32 0, %v4367
        %v4369 = vrot.slane %v4257, %v4368
        %v4372 = vsel %vm1950, %v4364, 0
        %4374 = vmatprep.subr.mxu0 0.0
        %4375 = vmatpush1.msra.mxu0 0.0
        %4376 = vmatprep.subr.mxu0 0.0
        %4377 = vmatpush1.msra.mxu0 0.0
        %4378 = vmatprep.subr.mxu0 0.0
        %4379 = vmatpush1.msra.mxu0 0.0
        %4380 = vmatprep.subr.mxu0 0.0
        %4381 = vmatpush1.msra.mxu0 0.0
        %4382 = vmatprep.subr.mxu0 0.0
        %4383 = vmatpush1.msra.mxu0 0.0
        %4384 = vmatprep.subr.mxu0 0.0
        %4385 = vmatpush1.msra.mxu0 0.0
        %4386 = vmatprep.subr.mxu0 0.0
        %4387 = vmatpush1.msra.mxu0 0.0
        %4388 = vmatprep.subr.mxu0 0.0
        %4389 = vmatpush1.msra.mxu0 0.0
        %4390 = vmatprep.subr.mxu0 0.0
        %4391 = vmatpush1.msra.mxu0 0.0
        %4392 = vmatprep.subr.mxu0 0.0
        %4393 = vmatpush1.msra.mxu0 0.0
        %4394 = vmatprep.subr.mxu0 0.0
        %4395 = vmatpush1.msra.mxu0 0.0
        %4396 = vmatprep.subr.mxu0 0.0
        %4397 = vmatpush1.msra.mxu0 0.0
        %4398 = vmatprep.subr.mxu0 0.0
        %4399 = vmatpush1.msra.mxu0 %v4256
        %4400 = vmatprep.subr.mxu0 0.0
        %4401 = vmatpush1.msra.mxu0 %v4255
        %4402 = vmatprep.subr.mxu0 0.0
        %4403 = vmatpush1.msra.mxu0 %v4254
        %4404 = vmatprep.subr.mxu0 0.0
        %4405 = vmatpush1.msra.mxu0 %v4253
        %4406 = vmatprep.subr.mxu0 0.0
        %4407 = vmatpush2.msra.mxu0 0.0
        %4408 = vmatprep.subr.mxu0 0.0
        %4409 = vmatpush2.msra.mxu0 0.0
        %4410 = vmatprep.subr.mxu0 0.0
        %4411 = vmatpush2.msra.mxu0 0.0
        %4412 = vmatprep.subr.mxu0 0.0
        %4413 = vmatpush2.msra.mxu0 0.0
        %4414 = vmatprep.subr.mxu0 0.0
        %4415 = vmatpush2.msra.mxu0 0.0
        %4416 = vmatprep.subr.mxu0 0.0
        %4417 = vmatpush2.msra.mxu0 0.0
        %4418 = vmatprep.subr.mxu0 0.0
        %4419 = vmatpush2.msra.mxu0 0.0
        %4420 = vmatprep.subr.mxu0 0.0
        %4421 = vmatpush2.msra.mxu0 0.0
        %4422 = vmatprep.subr.mxu0 0.0
        %4423 = vmatpush2.msra.mxu0 0.0
        %4424 = vmatprep.subr.mxu0 0.0
        %4425 = vmatpush2.msra.mxu0 0.0
        %4426 = vmatprep.subr.mxu0 0.0
        %4427 = vmatpush2.msra.mxu0 0.0
        %4428 = vmatprep.subr.mxu0 0.0
        %4429 = vmatpush2.msra.mxu0 0.0
        %4430 = vmatprep.subr.mxu0 0.0
        %4431 = vmatpush2.msra.mxu0 0.0
        %4432 = vmatprep.subr.mxu0 0.0
        %4433 = vmatpush2.msra.mxu0 0.0
        %4434 = vmatprep.subr.mxu0 0.0
        %4435 = vmatpush2.msra.mxu0 0.0
        %4436 = vmatprep.subr.mxu0 0.0
        %4437 = vmatpush2.msra.mxu0 0.0
        %4438 = vmatprep.mubr.f32.mxu0 0.0
        %4439 = vmatmul.mubr.f32.gmra.mxu0 %v4372
        %v4440 = vpop.f32.mrf.mxu0
        %v4441 = vadd.f32 %v4369, %v4440
        %v4442 = vpop.f32.mrf.mxu0
        %4443 = vdwg.mxu0
        %v4445 = vlaneseq
        %v4446 = vshrl.u32 %v4445, 7
        %v4447 = vsub.s32 0, %v4446
        %v4448 = vrot.slane %v4262, %v4447
        %v4451 = vsel %vm1950, %v4247, 0
        %4453 = vmatprep.subr.mxu0 0.0
        %4454 = vmatpush1.msra.mxu0 0.0
        %4455 = vmatprep.subr.mxu0 0.0
        %4456 = vmatpush1.msra.mxu0 0.0
        %4457 = vmatprep.subr.mxu0 0.0
        %4458 = vmatpush1.msra.mxu0 0.0
        %4459 = vmatprep.subr.mxu0 0.0
        %4460 = vmatpush1.msra.mxu0 0.0
        %4461 = vmatprep.subr.mxu0 0.0
        %4462 = vmatpush1.msra.mxu0 0.0
        %4463 = vmatprep.subr.mxu0 0.0
        %4464 = vmatpush1.msra.mxu0 0.0
        %4465 = vmatprep.subr.mxu0 0.0
        %4466 = vmatpush1.msra.mxu0 0.0
        %4467 = vmatprep.subr.mxu0 0.0
        %4468 = vmatpush1.msra.mxu0 0.0
        %4469 = vmatprep.subr.mxu0 0.0
        %4470 = vmatpush1.msra.mxu0 0.0
        %4471 = vmatprep.subr.mxu0 0.0
        %4472 = vmatpush1.msra.mxu0 0.0
        %4473 = vmatprep.subr.mxu0 0.0
        %4474 = vmatpush1.msra.mxu0 0.0
        %4475 = vmatprep.subr.mxu0 0.0
        %4476 = vmatpush1.msra.mxu0 0.0
        %4477 = vmatprep.subr.mxu0 0.0
        %4478 = vmatpush1.msra.mxu0 %v4261
        %4479 = vmatprep.subr.mxu0 0.0
        %4480 = vmatpush1.msra.mxu0 %v4260
        %4481 = vmatprep.subr.mxu0 0.0
        %4482 = vmatpush1.msra.mxu0 %v4259
        %4483 = vmatprep.subr.mxu0 0.0
        %4484 = vmatpush1.msra.mxu0 %v4258
        %4485 = vmatprep.subr.mxu0 0.0
        %4486 = vmatpush2.msra.mxu0 0.0
        %4487 = vmatprep.subr.mxu0 0.0
        %4488 = vmatpush2.msra.mxu0 0.0
        %4489 = vmatprep.subr.mxu0 0.0
        %4490 = vmatpush2.msra.mxu0 0.0
        %4491 = vmatprep.subr.mxu0 0.0
        %4492 = vmatpush2.msra.mxu0 0.0
        %4493 = vmatprep.subr.mxu0 0.0
        %4494 = vmatpush2.msra.mxu0 0.0
        %4495 = vmatprep.subr.mxu0 0.0
        %4496 = vmatpush2.msra.mxu0 0.0
        %4497 = vmatprep.subr.mxu0 0.0
        %4498 = vmatpush2.msra.mxu0 0.0
        %4499 = vmatprep.subr.mxu0 0.0
        %4500 = vmatpush2.msra.mxu0 0.0
        %4501 = vmatprep.subr.mxu0 0.0
        %4502 = vmatpush2.msra.mxu0 0.0
        %4503 = vmatprep.subr.mxu0 0.0
        %4504 = vmatpush2.msra.mxu0 0.0
        %4505 = vmatprep.subr.mxu0 0.0
        %4506 = vmatpush2.msra.mxu0 0.0
        %4507 = vmatprep.subr.mxu0 0.0
        %4508 = vmatpush2.msra.mxu0 0.0
        %4509 = vmatprep.subr.mxu0 0.0
        %4510 = vmatpush2.msra.mxu0 0.0
        %4511 = vmatprep.subr.mxu0 0.0
        %4512 = vmatpush2.msra.mxu0 0.0
        %4513 = vmatprep.subr.mxu0 0.0
        %4514 = vmatpush2.msra.mxu0 0.0
        %4515 = vmatprep.subr.mxu0 0.0
        %4516 = vmatpush2.msra.mxu0 0.0
        %4517 = vmatprep.mubr.f32.mxu0 0.0
        %4518 = vmatmul.mubr.f32.gmra.mxu0 %v4451
        %v4519 = vpop.f32.mrf.mxu0
        %v4520 = vadd.f32 %v4448, %v4519
        %v4521 = vpop.f32.mrf.mxu0
        %4522 = vdwg.mxu0
        %v4523 = vmul.f32 %v4361, 0.35355338
        %v4525 = vsel %vm2107, %v4523, 0
        %v4528 = vsel %vm2107, %v4441, 0
        %4530 = vmatprep.subr.mxu0 0.0
        %4531 = vmatpush1.xpose.msra.mxu0 0.0
        %4532 = vmatprep.subr.mxu0 0.0
        %4533 = vmatpush1.xpose.msra.mxu0 0.0
        %4534 = vmatprep.subr.mxu0 0.0
        %4535 = vmatpush1.xpose.msra.mxu0 0.0
        %4536 = vmatprep.subr.mxu0 0.0
        %4537 = vmatpush1.xpose.msra.mxu0 0.0
        %4538 = vmatprep.subr.mxu0 0.0
        %4539 = vmatpush1.xpose.msra.mxu0 0.0
        %4540 = vmatprep.subr.mxu0 0.0
        %4541 = vmatpush1.xpose.msra.mxu0 0.0
        %4542 = vmatprep.subr.mxu0 0.0
        %4543 = vmatpush1.xpose.msra.mxu0 0.0
        %4544 = vmatprep.subr.mxu0 0.0
        %4545 = vmatpush1.xpose.msra.mxu0 0.0
        %4546 = vmatprep.subr.mxu0 0.0
        %4547 = vmatpush1.xpose.msra.mxu0 0.0
        %4548 = vmatprep.subr.mxu0 0.0
        %4549 = vmatpush1.xpose.msra.mxu0 0.0
        %4550 = vmatprep.subr.mxu0 0.0
        %4551 = vmatpush1.xpose.msra.mxu0 0.0
        %4552 = vmatprep.subr.mxu0 0.0
        %4553 = vmatpush1.xpose.msra.mxu0 0.0
        %4554 = vmatprep.subr.mxu0 0.0
        %4555 = vmatpush1.xpose.msra.mxu0 0.0
        %4556 = vmatprep.subr.mxu0 0.0
        %4557 = vmatpush1.xpose.msra.mxu0 0.0
        %4558 = vmatprep.subr.mxu0 0.0
        %4559 = vmatpush1.xpose.msra.mxu0 0.0
        %4560 = vmatprep.subr.mxu0 0.0
        %4561 = vmatpush1.xpose.msra.mxu0 %v4528
        %4562 = vmatprep.subr.mxu0 0.0
        %4563 = vmatpush2.xpose.msra.mxu0 0.0
        %4564 = vmatprep.subr.mxu0 0.0
        %4565 = vmatpush2.xpose.msra.mxu0 0.0
        %4566 = vmatprep.subr.mxu0 0.0
        %4567 = vmatpush2.xpose.msra.mxu0 0.0
        %4568 = vmatprep.subr.mxu0 0.0
        %4569 = vmatpush2.xpose.msra.mxu0 0.0
        %4570 = vmatprep.subr.mxu0 0.0
        %4571 = vmatpush2.xpose.msra.mxu0 0.0
        %4572 = vmatprep.subr.mxu0 0.0
        %4573 = vmatpush2.xpose.msra.mxu0 0.0
        %4574 = vmatprep.subr.mxu0 0.0
        %4575 = vmatpush2.xpose.msra.mxu0 0.0
        %4576 = vmatprep.subr.mxu0 0.0
        %4577 = vmatpush2.xpose.msra.mxu0 0.0
        %4578 = vmatprep.subr.mxu0 0.0
        %4579 = vmatpush2.xpose.msra.mxu0 0.0
        %4580 = vmatprep.subr.mxu0 0.0
        %4581 = vmatpush2.xpose.msra.mxu0 0.0
        %4582 = vmatprep.subr.mxu0 0.0
        %4583 = vmatpush2.xpose.msra.mxu0 0.0
        %4584 = vmatprep.subr.mxu0 0.0
        %4585 = vmatpush2.xpose.msra.mxu0 0.0
        %4586 = vmatprep.subr.mxu0 0.0
        %4587 = vmatpush2.xpose.msra.mxu0 0.0
        %4588 = vmatprep.subr.mxu0 0.0
        %4589 = vmatpush2.xpose.msra.mxu0 0.0
        %4590 = vmatprep.subr.mxu0 0.0
        %4591 = vmatpush2.xpose.msra.mxu0 0.0
        %4592 = vmatprep.subr.mxu0 0.0
        %4593 = vmatpush2.xpose.msra.mxu0 0.0
        %4594 = vmatprep.mubr.f32.mxu0 0.0
        %4595 = vmatmul.mubr.f32.gmra.mxu0 %v4525
        %v4596 = vpop.f32.mrf.mxu0
        %v4597 = vadd.f32 0.0, %v4596
        %v4598 = vpop.f32.mrf.mxu0
        %4599 = vdwg.mxu0
        %v4600 = vsel %vm2107, %v4597, -inf
        %4601 = vmax.xlane.f32.xlu0 %v4600
        %v4602 = vpop.xlane.xlu0 %4601
        %v4603 = vsub.f32 %v4597, %v4602
        %v4604 = vmul.f32 %v4603, 1.442695
        %v4605 = vpow.pop %v4604
        %v4606 = vsel %vm2107, %v4605, 0.0
        %4607 = vadd.xlane.f32.xlu0 %v4606
        %v4608 = vpop.xlane.xlu0 %4607
        %v4609 = vrcp.pop %v4608
        %v4610 = vmul.f32 %v4605, %v4609
        %v4612 = vsel %vm2107, %v4610, 0
        %4614 = vmatprep.subr.mxu0 0.0
        %4615 = vmatpush1.msra.mxu0 0.0
        %4616 = vmatprep.subr.mxu0 0.0
        %4617 = vmatpush1.msra.mxu0 0.0
        %4618 = vmatprep.subr.mxu0 0.0
        %4619 = vmatpush1.msra.mxu0 0.0
        %4620 = vmatprep.subr.mxu0 0.0
        %4621 = vmatpush1.msra.mxu0 0.0
        %4622 = vmatprep.subr.mxu0 0.0
        %4623 = vmatpush1.msra.mxu0 0.0
        %4624 = vmatprep.subr.mxu0 0.0
        %4625 = vmatpush1.msra.mxu0 0.0
        %4626 = vmatprep.subr.mxu0 0.0
        %4627 = vmatpush1.msra.mxu0 0.0
        %4628 = vmatprep.subr.mxu0 0.0
        %4629 = vmatpush1.msra.mxu0 0.0
        %4630 = vmatprep.subr.mxu0 0.0
        %4631 = vmatpush1.msra.mxu0 0.0
        %4632 = vmatprep.subr.mxu0 0.0
        %4633 = vmatpush1.msra.mxu0 0.0
        %4634 = vmatprep.subr.mxu0 0.0
        %4635 = vmatpush1.msra.mxu0 0.0
        %4636 = vmatprep.subr.mxu0 0.0
        %4637 = vmatpush1.msra.mxu0 0.0
        %4638 = vmatprep.subr.mxu0 0.0
        %4639 = vmatpush1.msra.mxu0 0.0
        %4640 = vmatprep.subr.mxu0 0.0
        %4641 = vmatpush1.msra.mxu0 0.0
        %4642 = vmatprep.subr.mxu0 0.0
        %4643 = vmatpush1.msra.mxu0 0.0
        %4644 = vmatprep.subr.mxu0 0.0
        %4645 = vmatpush1.msra.mxu0 %v4520
        %4646 = vmatprep.subr.mxu0 0.0
        %4647 = vmatpush2.msra.mxu0 0.0
        %4648 = vmatprep.subr.mxu0 0.0
        %4649 = vmatpush2.msra.mxu0 0.0
        %4650 = vmatprep.subr.mxu0 0.0
        %4651 = vmatpush2.msra.mxu0 0.0
        %4652 = vmatprep.subr.mxu0 0.0
        %4653 = vmatpush2.msra.mxu0 0.0
        %4654 = vmatprep.subr.mxu0 0.0
        %4655 = vmatpush2.msra.mxu0 0.0
        %4656 = vmatprep.subr.mxu0 0.0
        %4657 = vmatpush2.msra.mxu0 0.0
        %4658 = vmatprep.subr.mxu0 0.0
        %4659 = vmatpush2.msra.mxu0 0.0
        %4660 = vmatprep.subr.mxu0 0.0
        %4661 = vmatpush2.msra.mxu0 0.0
        %4662 = vmatprep.subr.mxu0 0.0
        %4663 = vmatpush2.msra.mxu0 0.0
        %4664 = vmatprep.subr.mxu0 0.0
        %4665 = vmatpush2.msra.mxu0 0.0
        %4666 = vmatprep.subr.mxu0 0.0
        %4667 = vmatpush2.msra.mxu0 0.0
        %4668 = vmatprep.subr.mxu0 0.0
        %4669 = vmatpush2.msra.mxu0 0.0
        %4670 = vmatprep.subr.mxu0 0.0
        %4671 = vmatpush2.msra.mxu0 0.0
        %4672 = vmatprep.subr.mxu0 0.0
        %4673 = vmatpush2.msra.mxu0 0.0
        %4674 = vmatprep.subr.mxu0 0.0
        %4675 = vmatpush2.msra.mxu0 0.0
        %4676 = vmatprep.subr.mxu0 0.0
        %4677 = vmatpush2.msra.mxu0 0.0
        %4678 = vmatprep.mubr.f32.mxu0 0.0
        %4679 = vmatmul.mubr.f32.gmra.mxu0 %v4612
        %v4680 = vpop.f32.mrf.mxu0
        %v4681 = vadd.f32 0.0, %v4680
        %v4682 = vpop.f32.mrf.mxu0
        %4683 = vdwg.mxu0
        %4684 = vrot.lane.b32.xlu0 %v4523, 120
        %v4685 = vpop.permute.xlu0 %4684
        %4686 = vrot.lane.b32.xlu0 %v4441, 120
        %v4687 = vpop.permute.xlu0 %4686
        %v4688 = vsel %vm2107, %v4685, 0
        %v4690 = vsel %vm2107, %v4687, 0
        %4692 = vmatprep.subr.mxu0 0.0
        %4693 = vmatpush1.xpose.msra.mxu0 0.0
        %4694 = vmatprep.subr.mxu0 0.0
        %4695 = vmatpush1.xpose.msra.mxu0 0.0
        %4696 = vmatprep.subr.mxu0 0.0
        %4697 = vmatpush1.xpose.msra.mxu0 0.0
        %4698 = vmatprep.subr.mxu0 0.0
        %4699 = vmatpush1.xpose.msra.mxu0 0.0
        %4700 = vmatprep.subr.mxu0 0.0
        %4701 = vmatpush1.xpose.msra.mxu0 0.0
        %4702 = vmatprep.subr.mxu0 0.0
        %4703 = vmatpush1.xpose.msra.mxu0 0.0
        %4704 = vmatprep.subr.mxu0 0.0
        %4705 = vmatpush1.xpose.msra.mxu0 0.0
        %4706 = vmatprep.subr.mxu0 0.0
        %4707 = vmatpush1.xpose.msra.mxu0 0.0
        %4708 = vmatprep.subr.mxu0 0.0
        %4709 = vmatpush1.xpose.msra.mxu0 0.0
        %4710 = vmatprep.subr.mxu0 0.0
        %4711 = vmatpush1.xpose.msra.mxu0 0.0
        %4712 = vmatprep.subr.mxu0 0.0
        %4713 = vmatpush1.xpose.msra.mxu0 0.0
        %4714 = vmatprep.subr.mxu0 0.0
        %4715 = vmatpush1.xpose.msra.mxu0 0.0
        %4716 = vmatprep.subr.mxu0 0.0
        %4717 = vmatpush1.xpose.msra.mxu0 0.0
        %4718 = vmatprep.subr.mxu0 0.0
        %4719 = vmatpush1.xpose.msra.mxu0 0.0
        %4720 = vmatprep.subr.mxu0 0.0
        %4721 = vmatpush1.xpose.msra.mxu0 0.0
        %4722 = vmatprep.subr.mxu0 0.0
        %4723 = vmatpush1.xpose.msra.mxu0 %v4690
        %4724 = vmatprep.subr.mxu0 0.0
        %4725 = vmatpush2.xpose.msra.mxu0 0.0
        %4726 = vmatprep.subr.mxu0 0.0
        %4727 = vmatpush2.xpose.msra.mxu0 0.0
        %4728 = vmatprep.subr.mxu0 0.0
        %4729 = vmatpush2.xpose.msra.mxu0 0.0
        %4730 = vmatprep.subr.mxu0 0.0
        %4731 = vmatpush2.xpose.msra.mxu0 0.0
        %4732 = vmatprep.subr.mxu0 0.0
        %4733 = vmatpush2.xpose.msra.mxu0 0.0
        %4734 = vmatprep.subr.mxu0 0.0
        %4735 = vmatpush2.xpose.msra.mxu0 0.0
        %4736 = vmatprep.subr.mxu0 0.0
        %4737 = vmatpush2.xpose.msra.mxu0 0.0
        %4738 = vmatprep.subr.mxu0 0.0
        %4739 = vmatpush2.xpose.msra.mxu0 0.0
        %4740 = vmatprep.subr.mxu0 0.0
        %4741 = vmatpush2.xpose.msra.mxu0 0.0
        %4742 = vmatprep.subr.mxu0 0.0
        %4743 = vmatpush2.xpose.msra.mxu0 0.0
        %4744 = vmatprep.subr.mxu0 0.0
        %4745 = vmatpush2.xpose.msra.mxu0 0.0
        %4746 = vmatprep.subr.mxu0 0.0
        %4747 = vmatpush2.xpose.msra.mxu0 0.0
        %4748 = vmatprep.subr.mxu0 0.0
        %4749 = vmatpush2.xpose.msra.mxu0 0.0
        %4750 = vmatprep.subr.mxu0 0.0
        %4751 = vmatpush2.xpose.msra.mxu0 0.0
        %4752 = vmatprep.subr.mxu0 0.0
        %4753 = vmatpush2.xpose.msra.mxu0 0.0
        %4754 = vmatprep.subr.mxu0 0.0
        %4755 = vmatpush2.xpose.msra.mxu0 0.0
        %4756 = vmatprep.mubr.f32.mxu0 0.0
        %4757 = vmatmul.mubr.f32.gmra.mxu0 %v4688
        %v4758 = vpop.f32.mrf.mxu0
        %v4759 = vadd.f32 0.0, %v4758
        %v4760 = vpop.f32.mrf.mxu0
        %4761 = vdwg.mxu0
        %v4762 = vsel %vm2107, %v4759, -inf
        %4763 = vmax.xlane.f32.xlu0 %v4762
        %v4764 = vpop.xlane.xlu0 %4763
        %v4765 = vsub.f32 %v4759, %v4764
        %v4766 = vmul.f32 %v4765, 1.442695
        %v4767 = vpow.pop %v4766
        %v4768 = vsel %vm2107, %v4767, 0.0
        %4769 = vadd.xlane.f32.xlu0 %v4768
        %v4770 = vpop.xlane.xlu0 %4769
        %v4771 = vrcp.pop %v4770
        %v4772 = vmul.f32 %v4767, %v4771
        %4774 = vrot.lane.b32.xlu0 %v4520, 120
        %v4775 = vpop.permute.xlu0 %4774
        %v4778 = vsel %vm2107, %v4772, 0
        %4780 = vmatprep.subr.mxu0 0.0
        %4781 = vmatpush1.msra.mxu0 0.0
        %4782 = vmatprep.subr.mxu0 0.0
        %4783 = vmatpush1.msra.mxu0 0.0
        %4784 = vmatprep.subr.mxu0 0.0
        %4785 = vmatpush1.msra.mxu0 0.0
        %4786 = vmatprep.subr.mxu0 0.0
        %4787 = vmatpush1.msra.mxu0 0.0
        %4788 = vmatprep.subr.mxu0 0.0
        %4789 = vmatpush1.msra.mxu0 0.0
        %4790 = vmatprep.subr.mxu0 0.0
        %4791 = vmatpush1.msra.mxu0 0.0
        %4792 = vmatprep.subr.mxu0 0.0
        %4793 = vmatpush1.msra.mxu0 0.0
        %4794 = vmatprep.subr.mxu0 0.0
        %4795 = vmatpush1.msra.mxu0 0.0
        %4796 = vmatprep.subr.mxu0 0.0
        %4797 = vmatpush1.msra.mxu0 0.0
        %4798 = vmatprep.subr.mxu0 0.0
        %4799 = vmatpush1.msra.mxu0 0.0
        %4800 = vmatprep.subr.mxu0 0.0
        %4801 = vmatpush1.msra.mxu0 0.0
        %4802 = vmatprep.subr.mxu0 0.0
        %4803 = vmatpush1.msra.mxu0 0.0
        %4804 = vmatprep.subr.mxu0 0.0
        %4805 = vmatpush1.msra.mxu0 0.0
        %4806 = vmatprep.subr.mxu0 0.0
        %4807 = vmatpush1.msra.mxu0 0.0
        %4808 = vmatprep.subr.mxu0 0.0
        %4809 = vmatpush1.msra.mxu0 0.0
        %4810 = vmatprep.subr.mxu0 0.0
        %4811 = vmatpush1.msra.mxu0 %v4775
        %4812 = vmatprep.subr.mxu0 0.0
        %4813 = vmatpush2.msra.mxu0 0.0
        %4814 = vmatprep.subr.mxu0 0.0
        %4815 = vmatpush2.msra.mxu0 0.0
        %4816 = vmatprep.subr.mxu0 0.0
        %4817 = vmatpush2.msra.mxu0 0.0
        %4818 = vmatprep.subr.mxu0 0.0
        %4819 = vmatpush2.msra.mxu0 0.0
        %4820 = vmatprep.subr.mxu0 0.0
        %4821 = vmatpush2.msra.mxu0 0.0
        %4822 = vmatprep.subr.mxu0 0.0
        %4823 = vmatpush2.msra.mxu0 0.0
        %4824 = vmatprep.subr.mxu0 0.0
        %4825 = vmatpush2.msra.mxu0 0.0
        %4826 = vmatprep.subr.mxu0 0.0
        %4827 = vmatpush2.msra.mxu0 0.0
        %4828 = vmatprep.subr.mxu0 0.0
        %4829 = vmatpush2.msra.mxu0 0.0
        %4830 = vmatprep.subr.mxu0 0.0
        %4831 = vmatpush2.msra.mxu0 0.0
        %4832 = vmatprep.subr.mxu0 0.0
        %4833 = vmatpush2.msra.mxu0 0.0
        %4834 = vmatprep.subr.mxu0 0.0
        %4835 = vmatpush2.msra.mxu0 0.0
        %4836 = vmatprep.subr.mxu0 0.0
        %4837 = vmatpush2.msra.mxu0 0.0
        %4838 = vmatprep.subr.mxu0 0.0
        %4839 = vmatpush2.msra.mxu0 0.0
        %4840 = vmatprep.subr.mxu0 0.0
        %4841 = vmatpush2.msra.mxu0 0.0
        %4842 = vmatprep.subr.mxu0 0.0
        %4843 = vmatpush2.msra.mxu0 0.0
        %4844 = vmatprep.mubr.f32.mxu0 0.0
        %4845 = vmatmul.mubr.f32.gmra.mxu0 %v4778
        %v4846 = vpop.f32.mrf.mxu0
        %v4847 = vadd.f32 0.0, %v4846
        %v4848 = vpop.f32.mrf.mxu0
        %4849 = vdwg.mxu0
        %v4851 = vsel %vm2107, %v4847, 0
        %4853 = vmatprep.subr.mxu0 0.0
        %4854 = vmatpush1.msra.mxu0 0.0
        %4855 = vmatprep.subr.mxu0 0.0
        %4856 = vmatpush1.msra.mxu0 0.0
        %4857 = vmatprep.subr.mxu0 0.0
        %4858 = vmatpush1.msra.mxu0 0.0
        %4859 = vmatprep.subr.mxu0 0.0
        %4860 = vmatpush1.msra.mxu0 0.0
        %4861 = vmatprep.subr.mxu0 0.0
        %4862 = vmatpush1.msra.mxu0 0.0
        %4863 = vmatprep.subr.mxu0 0.0
        %4864 = vmatpush1.msra.mxu0 0.0
        %4865 = vmatprep.subr.mxu0 0.0
        %4866 = vmatpush1.msra.mxu0 0.0
        %4867 = vmatprep.subr.mxu0 0.0
        %4868 = vmatpush1.msra.mxu0 0.0
        %4869 = vmatprep.subr.mxu0 0.0
        %4870 = vmatpush1.msra.mxu0 0.0
        %4871 = vmatprep.subr.mxu0 0.0
        %4872 = vmatpush1.msra.mxu0 0.0
        %4873 = vmatprep.subr.mxu0 0.0
        %4874 = vmatpush1.msra.mxu0 0.0
        %4875 = vmatprep.subr.mxu0 0.0
        %4876 = vmatpush1.msra.mxu0 0.0
        %4877 = vmatprep.subr.mxu0 0.0
        %4878 = vmatpush1.msra.mxu0 0.0
        %4879 = vmatprep.subr.mxu0 0.0
        %4880 = vmatpush1.msra.mxu0 0.0
        %4881 = vmatprep.subr.mxu0 0.0
        %4882 = vmatpush1.msra.mxu0 0.0
        %4883 = vmatprep.subr.mxu0 0.0
        %4884 = vmatpush1.msra.mxu0 %v4264
        %4885 = vmatprep.subr.mxu0 0.0
        %4886 = vmatpush2.msra.mxu0 0.0
        %4887 = vmatprep.subr.mxu0 0.0
        %4888 = vmatpush2.msra.mxu0 0.0
        %4889 = vmatprep.subr.mxu0 0.0
        %4890 = vmatpush2.msra.mxu0 0.0
        %4891 = vmatprep.subr.mxu0 0.0
        %4892 = vmatpush2.msra.mxu0 0.0
        %4893 = vmatprep.subr.mxu0 0.0
        %4894 = vmatpush2.msra.mxu0 0.0
        %4895 = vmatprep.subr.mxu0 0.0
        %4896 = vmatpush2.msra.mxu0 0.0
        %4897 = vmatprep.subr.mxu0 0.0
        %4898 = vmatpush2.msra.mxu0 0.0
        %4899 = vmatprep.subr.mxu0 0.0
        %4900 = vmatpush2.msra.mxu0 0.0
        %4901 = vmatprep.subr.mxu0 0.0
        %4902 = vmatpush2.msra.mxu0 0.0
        %4903 = vmatprep.subr.mxu0 0.0
        %4904 = vmatpush2.msra.mxu0 0.0
        %4905 = vmatprep.subr.mxu0 0.0
        %4906 = vmatpush2.msra.mxu0 0.0
        %4907 = vmatprep.subr.mxu0 0.0
        %4908 = vmatpush2.msra.mxu0 0.0
        %4909 = vmatprep.subr.mxu0 0.0
        %4910 = vmatpush2.msra.mxu0 0.0
        %4911 = vmatprep.subr.mxu0 0.0
        %4912 = vmatpush2.msra.mxu0 0.0
        %4913 = vmatprep.subr.mxu0 0.0
        %4914 = vmatpush2.msra.mxu0 0.0
        %4915 = vmatprep.subr.mxu0 0.0
        %4916 = vmatpush2.msra.mxu0 0.0
        %4917 = vmatprep.mubr.f32.mxu0 0.0
        %4918 = vmatmul.mubr.f32.gmra.mxu0 %v4851
        %v4919 = vpop.f32.mrf.mxu0
        %v4920 = vadd.f32 0.0, %v4919
        %v4921 = vpop.f32.mrf.mxu0
        %4922 = vdwg.mxu0
        %v4924 = vsel %vm2107, %v4681, 0
        %4926 = vmatprep.subr.mxu0 0.0
        %4927 = vmatpush1.msra.mxu0 0.0
        %4928 = vmatprep.subr.mxu0 0.0
        %4929 = vmatpush1.msra.mxu0 0.0
        %4930 = vmatprep.subr.mxu0 0.0
        %4931 = vmatpush1.msra.mxu0 0.0
        %4932 = vmatprep.subr.mxu0 0.0
        %4933 = vmatpush1.msra.mxu0 0.0
        %4934 = vmatprep.subr.mxu0 0.0
        %4935 = vmatpush1.msra.mxu0 0.0
        %4936 = vmatprep.subr.mxu0 0.0
        %4937 = vmatpush1.msra.mxu0 0.0
        %4938 = vmatprep.subr.mxu0 0.0
        %4939 = vmatpush1.msra.mxu0 0.0
        %4940 = vmatprep.subr.mxu0 0.0
        %4941 = vmatpush1.msra.mxu0 0.0
        %4942 = vmatprep.subr.mxu0 0.0
        %4943 = vmatpush1.msra.mxu0 0.0
        %4944 = vmatprep.subr.mxu0 0.0
        %4945 = vmatpush1.msra.mxu0 0.0
        %4946 = vmatprep.subr.mxu0 0.0
        %4947 = vmatpush1.msra.mxu0 0.0
        %4948 = vmatprep.subr.mxu0 0.0
        %4949 = vmatpush1.msra.mxu0 0.0
        %4950 = vmatprep.subr.mxu0 0.0
        %4951 = vmatpush1.msra.mxu0 0.0
        %4952 = vmatprep.subr.mxu0 0.0
        %4953 = vmatpush1.msra.mxu0 0.0
        %4954 = vmatprep.subr.mxu0 0.0
        %4955 = vmatpush1.msra.mxu0 0.0
        %4956 = vmatprep.subr.mxu0 0.0
        %4957 = vmatpush1.msra.mxu0 %v4263
        %4958 = vmatprep.subr.mxu0 0.0
        %4959 = vmatpush2.msra.mxu0 0.0
        %4960 = vmatprep.subr.mxu0 0.0
        %4961 = vmatpush2.msra.mxu0 0.0
        %4962 = vmatprep.subr.mxu0 0.0
        %4963 = vmatpush2.msra.mxu0 0.0
        %4964 = vmatprep.subr.mxu0 0.0
        %4965 = vmatpush2.msra.mxu0 0.0
        %4966 = vmatprep.subr.mxu0 0.0
        %4967 = vmatpush2.msra.mxu0 0.0
        %4968 = vmatprep.subr.mxu0 0.0
        %4969 = vmatpush2.msra.mxu0 0.0
        %4970 = vmatprep.subr.mxu0 0.0
        %4971 = vmatpush2.msra.mxu0 0.0
        %4972 = vmatprep.subr.mxu0 0.0
        %4973 = vmatpush2.msra.mxu0 0.0
        %4974 = vmatprep.subr.mxu0 0.0
        %4975 = vmatpush2.msra.mxu0 0.0
        %4976 = vmatprep.subr.mxu0 0.0
        %4977 = vmatpush2.msra.mxu0 0.0
        %4978 = vmatprep.subr.mxu0 0.0
        %4979 = vmatpush2.msra.mxu0 0.0
        %4980 = vmatprep.subr.mxu0 0.0
        %4981 = vmatpush2.msra.mxu0 0.0
        %4982 = vmatprep.subr.mxu0 0.0
        %4983 = vmatpush2.msra.mxu0 0.0
        %4984 = vmatprep.subr.mxu0 0.0
        %4985 = vmatpush2.msra.mxu0 0.0
        %4986 = vmatprep.subr.mxu0 0.0
        %4987 = vmatpush2.msra.mxu0 0.0
        %4988 = vmatprep.subr.mxu0 0.0
        %4989 = vmatpush2.msra.mxu0 0.0
        %4990 = vmatprep.mubr.f32.mxu0 0.0
        %4991 = vmatmul.mubr.f32.gmra.mxu0 %v4924
        %v4992 = vpop.f32.mrf.mxu0
        %v4993 = vadd.f32 %v4920, %v4992
        %v4994 = vpop.f32.mrf.mxu0
        %4995 = vdwg.mxu0
        %4996 = vrot.lane.b32.xlu0 %v4523, 112
        %v4997 = vpop.permute.xlu0 %4996
        %4998 = vrot.lane.b32.xlu0 %v4441, 112
        %v4999 = vpop.permute.xlu0 %4998
        %v5000 = vsel %vm2107, %v4997, 0
        %v5002 = vsel %vm2107, %v4999, 0
        %5004 = vmatprep.subr.mxu0 0.0
        %5005 = vmatpush1.xpose.msra.mxu0 0.0
        %5006 = vmatprep.subr.mxu0 0.0
        %5007 = vmatpush1.xpose.msra.mxu0 0.0
        %5008 = vmatprep.subr.mxu0 0.0
        %5009 = vmatpush1.xpose.msra.mxu0 0.0
        %5010 = vmatprep.subr.mxu0 0.0
        %5011 = vmatpush1.xpose.msra.mxu0 0.0
        %5012 = vmatprep.subr.mxu0 0.0
        %5013 = vmatpush1.xpose.msra.mxu0 0.0
        %5014 = vmatprep.subr.mxu0 0.0
        %5015 = vmatpush1.xpose.msra.mxu0 0.0
        %5016 = vmatprep.subr.mxu0 0.0
        %5017 = vmatpush1.xpose.msra.mxu0 0.0
        %5018 = vmatprep.subr.mxu0 0.0
        %5019 = vmatpush1.xpose.msra.mxu0 0.0
        %5020 = vmatprep.subr.mxu0 0.0
        %5021 = vmatpush1.xpose.msra.mxu0 0.0
        %5022 = vmatprep.subr.mxu0 0.0
        %5023 = vmatpush1.xpose.msra.mxu0 0.0
        %5024 = vmatprep.subr.mxu0 0.0
        %5025 = vmatpush1.xpose.msra.mxu0 0.0
        %5026 = vmatprep.subr.mxu0 0.0
        %5027 = vmatpush1.xpose.msra.mxu0 0.0
        %5028 = vmatprep.subr.mxu0 0.0
        %5029 = vmatpush1.xpose.msra.mxu0 0.0
        %5030 = vmatprep.subr.mxu0 0.0
        %5031 = vmatpush1.xpose.msra.mxu0 0.0
        %5032 = vmatprep.subr.mxu0 0.0
        %5033 = vmatpush1.xpose.msra.mxu0 0.0
        %5034 = vmatprep.subr.mxu0 0.0
        %5035 = vmatpush1.xpose.msra.mxu0 %v5002
        %5036 = vmatprep.subr.mxu0 0.0
        %5037 = vmatpush2.xpose.msra.mxu0 0.0
        %5038 = vmatprep.subr.mxu0 0.0
        %5039 = vmatpush2.xpose.msra.mxu0 0.0
        %5040 = vmatprep.subr.mxu0 0.0
        %5041 = vmatpush2.xpose.msra.mxu0 0.0
        %5042 = vmatprep.subr.mxu0 0.0
        %5043 = vmatpush2.xpose.msra.mxu0 0.0
        %5044 = vmatprep.subr.mxu0 0.0
        %5045 = vmatpush2.xpose.msra.mxu0 0.0
        %5046 = vmatprep.subr.mxu0 0.0
        %5047 = vmatpush2.xpose.msra.mxu0 0.0
        %5048 = vmatprep.subr.mxu0 0.0
        %5049 = vmatpush2.xpose.msra.mxu0 0.0
        %5050 = vmatprep.subr.mxu0 0.0
        %5051 = vmatpush2.xpose.msra.mxu0 0.0
        %5052 = vmatprep.subr.mxu0 0.0
        %5053 = vmatpush2.xpose.msra.mxu0 0.0
        %5054 = vmatprep.subr.mxu0 0.0
        %5055 = vmatpush2.xpose.msra.mxu0 0.0
        %5056 = vmatprep.subr.mxu0 0.0
        %5057 = vmatpush2.xpose.msra.mxu0 0.0
        %5058 = vmatprep.subr.mxu0 0.0
        %5059 = vmatpush2.xpose.msra.mxu0 0.0
        %5060 = vmatprep.subr.mxu0 0.0
        %5061 = vmatpush2.xpose.msra.mxu0 0.0
        %5062 = vmatprep.subr.mxu0 0.0
        %5063 = vmatpush2.xpose.msra.mxu0 0.0
        %5064 = vmatprep.subr.mxu0 0.0
        %5065 = vmatpush2.xpose.msra.mxu0 0.0
        %5066 = vmatprep.subr.mxu0 0.0
        %5067 = vmatpush2.xpose.msra.mxu0 0.0
        %5068 = vmatprep.mubr.f32.mxu0 0.0
        %5069 = vmatmul.mubr.f32.gmra.mxu0 %v5000
        %v5070 = vpop.f32.mrf.mxu0
        %v5071 = vadd.f32 0.0, %v5070
        %v5072 = vpop.f32.mrf.mxu0
        %5073 = vdwg.mxu0
        %v5074 = vsel %vm2107, %v5071, -inf
        %5075 = vmax.xlane.f32.xlu0 %v5074
        %v5076 = vpop.xlane.xlu0 %5075
        %v5077 = vsub.f32 %v5071, %v5076
        %v5078 = vmul.f32 %v5077, 1.442695
        %v5079 = vpow.pop %v5078
        %v5080 = vsel %vm2107, %v5079, 0.0
        %5081 = vadd.xlane.f32.xlu0 %v5080
        %v5082 = vpop.xlane.xlu0 %5081
        %v5083 = vrcp.pop %v5082
        %v5084 = vmul.f32 %v5079, %v5083
        %5085 = vrot.lane.b32.xlu0 %v4520, 112
        %v5086 = vpop.permute.xlu0 %5085
        %v5089 = vsel %vm2107, %v5084, 0
        %5091 = vmatprep.subr.mxu0 0.0
        %5092 = vmatpush1.msra.mxu0 0.0
        %5093 = vmatprep.subr.mxu0 0.0
        %5094 = vmatpush1.msra.mxu0 0.0
        %5095 = vmatprep.subr.mxu0 0.0
        %5096 = vmatpush1.msra.mxu0 0.0
        %5097 = vmatprep.subr.mxu0 0.0
        %5098 = vmatpush1.msra.mxu0 0.0
        %5099 = vmatprep.subr.mxu0 0.0
        %5100 = vmatpush1.msra.mxu0 0.0
        %5101 = vmatprep.subr.mxu0 0.0
        %5102 = vmatpush1.msra.mxu0 0.0
        %5103 = vmatprep.subr.mxu0 0.0
        %5104 = vmatpush1.msra.mxu0 0.0
        %5105 = vmatprep.subr.mxu0 0.0
        %5106 = vmatpush1.msra.mxu0 0.0
        %5107 = vmatprep.subr.mxu0 0.0
        %5108 = vmatpush1.msra.mxu0 0.0
        %5109 = vmatprep.subr.mxu0 0.0
        %5110 = vmatpush1.msra.mxu0 0.0
        %5111 = vmatprep.subr.mxu0 0.0
        %5112 = vmatpush1.msra.mxu0 0.0
        %5113 = vmatprep.subr.mxu0 0.0
        %5114 = vmatpush1.msra.mxu0 0.0
        %5115 = vmatprep.subr.mxu0 0.0
        %5116 = vmatpush1.msra.mxu0 0.0
        %5117 = vmatprep.subr.mxu0 0.0
        %5118 = vmatpush1.msra.mxu0 0.0
        %5119 = vmatprep.subr.mxu0 0.0
        %5120 = vmatpush1.msra.mxu0 0.0
        %5121 = vmatprep.subr.mxu0 0.0
        %5122 = vmatpush1.msra.mxu0 %v5086
        %5123 = vmatprep.subr.mxu0 0.0
        %5124 = vmatpush2.msra.mxu0 0.0
        %5125 = vmatprep.subr.mxu0 0.0
        %5126 = vmatpush2.msra.mxu0 0.0
        %5127 = vmatprep.subr.mxu0 0.0
        %5128 = vmatpush2.msra.mxu0 0.0
        %5129 = vmatprep.subr.mxu0 0.0
        %5130 = vmatpush2.msra.mxu0 0.0
        %5131 = vmatprep.subr.mxu0 0.0
        %5132 = vmatpush2.msra.mxu0 0.0
        %5133 = vmatprep.subr.mxu0 0.0
        %5134 = vmatpush2.msra.mxu0 0.0
        %5135 = vmatprep.subr.mxu0 0.0
        %5136 = vmatpush2.msra.mxu0 0.0
        %5137 = vmatprep.subr.mxu0 0.0
        %5138 = vmatpush2.msra.mxu0 0.0
        %5139 = vmatprep.subr.mxu0 0.0
        %5140 = vmatpush2.msra.mxu0 0.0
        %5141 = vmatprep.subr.mxu0 0.0
        %5142 = vmatpush2.msra.mxu0 0.0
        %5143 = vmatprep.subr.mxu0 0.0
        %5144 = vmatpush2.msra.mxu0 0.0
        %5145 = vmatprep.subr.mxu0 0.0
        %5146 = vmatpush2.msra.mxu0 0.0
        %5147 = vmatprep.subr.mxu0 0.0
        %5148 = vmatpush2.msra.mxu0 0.0
        %5149 = vmatprep.subr.mxu0 0.0
        %5150 = vmatpush2.msra.mxu0 0.0
        %5151 = vmatprep.subr.mxu0 0.0
        %5152 = vmatpush2.msra.mxu0 0.0
        %5153 = vmatprep.subr.mxu0 0.0
        %5154 = vmatpush2.msra.mxu0 0.0
        %5155 = vmatprep.mubr.f32.mxu0 0.0
        %5156 = vmatmul.mubr.f32.gmra.mxu0 %v5089
        %v5157 = vpop.f32.mrf.mxu0
        %v5158 = vadd.f32 0.0, %v5157
        %v5159 = vpop.f32.mrf.mxu0
        %5160 = vdwg.mxu0
        %v5162 = vsel %vm2107, %v5158, 0
        %5164 = vmatprep.subr.mxu0 0.0
        %5165 = vmatpush1.msra.mxu0 0.0
        %5166 = vmatprep.subr.mxu0 0.0
        %5167 = vmatpush1.msra.mxu0 0.0
        %5168 = vmatprep.subr.mxu0 0.0
        %5169 = vmatpush1.msra.mxu0 0.0
        %5170 = vmatprep.subr.mxu0 0.0
        %5171 = vmatpush1.msra.mxu0 0.0
        %5172 = vmatprep.subr.mxu0 0.0
        %5173 = vmatpush1.msra.mxu0 0.0
        %5174 = vmatprep.subr.mxu0 0.0
        %5175 = vmatpush1.msra.mxu0 0.0
        %5176 = vmatprep.subr.mxu0 0.0
        %5177 = vmatpush1.msra.mxu0 0.0
        %5178 = vmatprep.subr.mxu0 0.0
        %5179 = vmatpush1.msra.mxu0 0.0
        %5180 = vmatprep.subr.mxu0 0.0
        %5181 = vmatpush1.msra.mxu0 0.0
        %5182 = vmatprep.subr.mxu0 0.0
        %5183 = vmatpush1.msra.mxu0 0.0
        %5184 = vmatprep.subr.mxu0 0.0
        %5185 = vmatpush1.msra.mxu0 0.0
        %5186 = vmatprep.subr.mxu0 0.0
        %5187 = vmatpush1.msra.mxu0 0.0
        %5188 = vmatprep.subr.mxu0 0.0
        %5189 = vmatpush1.msra.mxu0 0.0
        %5190 = vmatprep.subr.mxu0 0.0
        %5191 = vmatpush1.msra.mxu0 0.0
        %5192 = vmatprep.subr.mxu0 0.0
        %5193 = vmatpush1.msra.mxu0 0.0
        %5194 = vmatprep.subr.mxu0 0.0
        %5195 = vmatpush1.msra.mxu0 %v4265
        %5196 = vmatprep.subr.mxu0 0.0
        %5197 = vmatpush2.msra.mxu0 0.0
        %5198 = vmatprep.subr.mxu0 0.0
        %5199 = vmatpush2.msra.mxu0 0.0
        %5200 = vmatprep.subr.mxu0 0.0
        %5201 = vmatpush2.msra.mxu0 0.0
        %5202 = vmatprep.subr.mxu0 0.0
        %5203 = vmatpush2.msra.mxu0 0.0
        %5204 = vmatprep.subr.mxu0 0.0
        %5205 = vmatpush2.msra.mxu0 0.0
        %5206 = vmatprep.subr.mxu0 0.0
        %5207 = vmatpush2.msra.mxu0 0.0
        %5208 = vmatprep.subr.mxu0 0.0
        %5209 = vmatpush2.msra.mxu0 0.0
        %5210 = vmatprep.subr.mxu0 0.0
        %5211 = vmatpush2.msra.mxu0 0.0
        %5212 = vmatprep.subr.mxu0 0.0
        %5213 = vmatpush2.msra.mxu0 0.0
        %5214 = vmatprep.subr.mxu0 0.0
        %5215 = vmatpush2.msra.mxu0 0.0
        %5216 = vmatprep.subr.mxu0 0.0
        %5217 = vmatpush2.msra.mxu0 0.0
        %5218 = vmatprep.subr.mxu0 0.0
        %5219 = vmatpush2.msra.mxu0 0.0
        %5220 = vmatprep.subr.mxu0 0.0
        %5221 = vmatpush2.msra.mxu0 0.0
        %5222 = vmatprep.subr.mxu0 0.0
        %5223 = vmatpush2.msra.mxu0 0.0
        %5224 = vmatprep.subr.mxu0 0.0
        %5225 = vmatpush2.msra.mxu0 0.0
        %5226 = vmatprep.subr.mxu0 0.0
        %5227 = vmatpush2.msra.mxu0 0.0
        %5228 = vmatprep.mubr.f32.mxu0 0.0
        %5229 = vmatmul.mubr.f32.gmra.mxu0 %v5162
        %v5230 = vpop.f32.mrf.mxu0
        %v5231 = vadd.f32 0.0, %v5230
        %v5232 = vpop.f32.mrf.mxu0
        %5233 = vdwg.mxu0
        %v5234 = vadd.f32 %v4993, %v5231
        %5235 = vrot.lane.b32.xlu0 %v4523, 104
        %v5236 = vpop.permute.xlu0 %5235
        %5237 = vrot.lane.b32.xlu0 %v4441, 104
        %v5238 = vpop.permute.xlu0 %5237
        %v5239 = vsel %vm2107, %v5236, 0
        %v5241 = vsel %vm2107, %v5238, 0
        %5243 = vmatprep.subr.mxu0 0.0
        %5244 = vmatpush1.xpose.msra.mxu0 0.0
        %5245 = vmatprep.subr.mxu0 0.0
        %5246 = vmatpush1.xpose.msra.mxu0 0.0
        %5247 = vmatprep.subr.mxu0 0.0
        %5248 = vmatpush1.xpose.msra.mxu0 0.0
        %5249 = vmatprep.subr.mxu0 0.0
        %5250 = vmatpush1.xpose.msra.mxu0 0.0
        %5251 = vmatprep.subr.mxu0 0.0
        %5252 = vmatpush1.xpose.msra.mxu0 0.0
        %5253 = vmatprep.subr.mxu0 0.0
        %5254 = vmatpush1.xpose.msra.mxu0 0.0
        %5255 = vmatprep.subr.mxu0 0.0
        %5256 = vmatpush1.xpose.msra.mxu0 0.0
        %5257 = vmatprep.subr.mxu0 0.0
        %5258 = vmatpush1.xpose.msra.mxu0 0.0
        %5259 = vmatprep.subr.mxu0 0.0
        %5260 = vmatpush1.xpose.msra.mxu0 0.0
        %5261 = vmatprep.subr.mxu0 0.0
        %5262 = vmatpush1.xpose.msra.mxu0 0.0
        %5263 = vmatprep.subr.mxu0 0.0
        %5264 = vmatpush1.xpose.msra.mxu0 0.0
        %5265 = vmatprep.subr.mxu0 0.0
        %5266 = vmatpush1.xpose.msra.mxu0 0.0
        %5267 = vmatprep.subr.mxu0 0.0
        %5268 = vmatpush1.xpose.msra.mxu0 0.0
        %5269 = vmatprep.subr.mxu0 0.0
        %5270 = vmatpush1.xpose.msra.mxu0 0.0
        %5271 = vmatprep.subr.mxu0 0.0
        %5272 = vmatpush1.xpose.msra.mxu0 0.0
        %5273 = vmatprep.subr.mxu0 0.0
        %5274 = vmatpush1.xpose.msra.mxu0 %v5241
        %5275 = vmatprep.subr.mxu0 0.0
        %5276 = vmatpush2.xpose.msra.mxu0 0.0
        %5277 = vmatprep.subr.mxu0 0.0
        %5278 = vmatpush2.xpose.msra.mxu0 0.0
        %5279 = vmatprep.subr.mxu0 0.0
        %5280 = vmatpush2.xpose.msra.mxu0 0.0
        %5281 = vmatprep.subr.mxu0 0.0
        %5282 = vmatpush2.xpose.msra.mxu0 0.0
        %5283 = vmatprep.subr.mxu0 0.0
        %5284 = vmatpush2.xpose.msra.mxu0 0.0
        %5285 = vmatprep.subr.mxu0 0.0
        %5286 = vmatpush2.xpose.msra.mxu0 0.0
        %5287 = vmatprep.subr.mxu0 0.0
        %5288 = vmatpush2.xpose.msra.mxu0 0.0
        %5289 = vmatprep.subr.mxu0 0.0
        %5290 = vmatpush2.xpose.msra.mxu0 0.0
        %5291 = vmatprep.subr.mxu0 0.0
        %5292 = vmatpush2.xpose.msra.mxu0 0.0
        %5293 = vmatprep.subr.mxu0 0.0
        %5294 = vmatpush2.xpose.msra.mxu0 0.0
        %5295 = vmatprep.subr.mxu0 0.0
        %5296 = vmatpush2.xpose.msra.mxu0 0.0
        %5297 = vmatprep.subr.mxu0 0.0
        %5298 = vmatpush2.xpose.msra.mxu0 0.0
        %5299 = vmatprep.subr.mxu0 0.0
        %5300 = vmatpush2.xpose.msra.mxu0 0.0
        %5301 = vmatprep.subr.mxu0 0.0
        %5302 = vmatpush2.xpose.msra.mxu0 0.0
        %5303 = vmatprep.subr.mxu0 0.0
        %5304 = vmatpush2.xpose.msra.mxu0 0.0
        %5305 = vmatprep.subr.mxu0 0.0
        %5306 = vmatpush2.xpose.msra.mxu0 0.0
        %5307 = vmatprep.mubr.f32.mxu0 0.0
        %5308 = vmatmul.mubr.f32.gmra.mxu0 %v5239
        %v5309 = vpop.f32.mrf.mxu0
        %v5310 = vadd.f32 0.0, %v5309
        %v5311 = vpop.f32.mrf.mxu0
        %5312 = vdwg.mxu0
        %v5313 = vsel %vm2107, %v5310, -inf
        %5314 = vmax.xlane.f32.xlu0 %v5313
        %v5315 = vpop.xlane.xlu0 %5314
        %v5316 = vsub.f32 %v5310, %v5315
        %v5317 = vmul.f32 %v5316, 1.442695
        %v5318 = vpow.pop %v5317
        %v5319 = vsel %vm2107, %v5318, 0.0
        %5320 = vadd.xlane.f32.xlu0 %v5319
        %v5321 = vpop.xlane.xlu0 %5320
        %v5322 = vrcp.pop %v5321
        %v5323 = vmul.f32 %v5318, %v5322
        %5324 = vrot.lane.b32.xlu0 %v4520, 104
        %v5325 = vpop.permute.xlu0 %5324
        %v5328 = vsel %vm2107, %v5323, 0
        %5330 = vmatprep.subr.mxu0 0.0
        %5331 = vmatpush1.msra.mxu0 0.0
        %5332 = vmatprep.subr.mxu0 0.0
        %5333 = vmatpush1.msra.mxu0 0.0
        %5334 = vmatprep.subr.mxu0 0.0
        %5335 = vmatpush1.msra.mxu0 0.0
        %5336 = vmatprep.subr.mxu0 0.0
        %5337 = vmatpush1.msra.mxu0 0.0
        %5338 = vmatprep.subr.mxu0 0.0
        %5339 = vmatpush1.msra.mxu0 0.0
        %5340 = vmatprep.subr.mxu0 0.0
        %5341 = vmatpush1.msra.mxu0 0.0
        %5342 = vmatprep.subr.mxu0 0.0
        %5343 = vmatpush1.msra.mxu0 0.0
        %5344 = vmatprep.subr.mxu0 0.0
        %5345 = vmatpush1.msra.mxu0 0.0
        %5346 = vmatprep.subr.mxu0 0.0
        %5347 = vmatpush1.msra.mxu0 0.0
        %5348 = vmatprep.subr.mxu0 0.0
        %5349 = vmatpush1.msra.mxu0 0.0
        %5350 = vmatprep.subr.mxu0 0.0
        %5351 = vmatpush1.msra.mxu0 0.0
        %5352 = vmatprep.subr.mxu0 0.0
        %5353 = vmatpush1.msra.mxu0 0.0
        %5354 = vmatprep.subr.mxu0 0.0
        %5355 = vmatpush1.msra.mxu0 0.0
        %5356 = vmatprep.subr.mxu0 0.0
        %5357 = vmatpush1.msra.mxu0 0.0
        %5358 = vmatprep.subr.mxu0 0.0
        %5359 = vmatpush1.msra.mxu0 0.0
        %5360 = vmatprep.subr.mxu0 0.0
        %5361 = vmatpush1.msra.mxu0 %v5325
        %5362 = vmatprep.subr.mxu0 0.0
        %5363 = vmatpush2.msra.mxu0 0.0
        %5364 = vmatprep.subr.mxu0 0.0
        %5365 = vmatpush2.msra.mxu0 0.0
        %5366 = vmatprep.subr.mxu0 0.0
        %5367 = vmatpush2.msra.mxu0 0.0
        %5368 = vmatprep.subr.mxu0 0.0
        %5369 = vmatpush2.msra.mxu0 0.0
        %5370 = vmatprep.subr.mxu0 0.0
        %5371 = vmatpush2.msra.mxu0 0.0
        %5372 = vmatprep.subr.mxu0 0.0
        %5373 = vmatpush2.msra.mxu0 0.0
        %5374 = vmatprep.subr.mxu0 0.0
        %5375 = vmatpush2.msra.mxu0 0.0
        %5376 = vmatprep.subr.mxu0 0.0
        %5377 = vmatpush2.msra.mxu0 0.0
        %5378 = vmatprep.subr.mxu0 0.0
        %5379 = vmatpush2.msra.mxu0 0.0
        %5380 = vmatprep.subr.mxu0 0.0
        %5381 = vmatpush2.msra.mxu0 0.0
        %5382 = vmatprep.subr.mxu0 0.0
        %5383 = vmatpush2.msra.mxu0 0.0
        %5384 = vmatprep.subr.mxu0 0.0
        %5385 = vmatpush2.msra.mxu0 0.0
        %5386 = vmatprep.subr.mxu0 0.0
        %5387 = vmatpush2.msra.mxu0 0.0
        %5388 = vmatprep.subr.mxu0 0.0
        %5389 = vmatpush2.msra.mxu0 0.0
        %5390 = vmatprep.subr.mxu0 0.0
        %5391 = vmatpush2.msra.mxu0 0.0
        %5392 = vmatprep.subr.mxu0 0.0
        %5393 = vmatpush2.msra.mxu0 0.0
        %5394 = vmatprep.mubr.f32.mxu0 0.0
        %5395 = vmatmul.mubr.f32.gmra.mxu0 %v5328
        %v5396 = vpop.f32.mrf.mxu0
        %v5397 = vadd.f32 0.0, %v5396
        %v5398 = vpop.f32.mrf.mxu0
        %5399 = vdwg.mxu0
        %v5401 = vsel %vm2107, %v5397, 0
        %5403 = vmatprep.subr.mxu0 0.0
        %5404 = vmatpush1.msra.mxu0 0.0
        %5405 = vmatprep.subr.mxu0 0.0
        %5406 = vmatpush1.msra.mxu0 0.0
        %5407 = vmatprep.subr.mxu0 0.0
        %5408 = vmatpush1.msra.mxu0 0.0
        %5409 = vmatprep.subr.mxu0 0.0
        %5410 = vmatpush1.msra.mxu0 0.0
        %5411 = vmatprep.subr.mxu0 0.0
        %5412 = vmatpush1.msra.mxu0 0.0
        %5413 = vmatprep.subr.mxu0 0.0
        %5414 = vmatpush1.msra.mxu0 0.0
        %5415 = vmatprep.subr.mxu0 0.0
        %5416 = vmatpush1.msra.mxu0 0.0
        %5417 = vmatprep.subr.mxu0 0.0
        %5418 = vmatpush1.msra.mxu0 0.0
        %5419 = vmatprep.subr.mxu0 0.0
        %5420 = vmatpush1.msra.mxu0 0.0
        %5421 = vmatprep.subr.mxu0 0.0
        %5422 = vmatpush1.msra.mxu0 0.0
        %5423 = vmatprep.subr.mxu0 0.0
        %5424 = vmatpush1.msra.mxu0 0.0
        %5425 = vmatprep.subr.mxu0 0.0
        %5426 = vmatpush1.msra.mxu0 0.0
        %5427 = vmatprep.subr.mxu0 0.0
        %5428 = vmatpush1.msra.mxu0 0.0
        %5429 = vmatprep.subr.mxu0 0.0
        %5430 = vmatpush1.msra.mxu0 0.0
        %5431 = vmatprep.subr.mxu0 0.0
        %5432 = vmatpush1.msra.mxu0 0.0
        %5433 = vmatprep.subr.mxu0 0.0
        %5434 = vmatpush1.msra.mxu0 %v4266
        %5435 = vmatprep.subr.mxu0 0.0
        %5436 = vmatpush2.msra.mxu0 0.0
        %5437 = vmatprep.subr.mxu0 0.0
        %5438 = vmatpush2.msra.mxu0 0.0
        %5439 = vmatprep.subr.mxu0 0.0
        %5440 = vmatpush2.msra.mxu0 0.0
        %5441 = vmatprep.subr.mxu0 0.0
        %5442 = vmatpush2.msra.mxu0 0.0
        %5443 = vmatprep.subr.mxu0 0.0
        %5444 = vmatpush2.msra.mxu0 0.0
        %5445 = vmatprep.subr.mxu0 0.0
        %5446 = vmatpush2.msra.mxu0 0.0
        %5447 = vmatprep.subr.mxu0 0.0
        %5448 = vmatpush2.msra.mxu0 0.0
        %5449 = vmatprep.subr.mxu0 0.0
        %5450 = vmatpush2.msra.mxu0 0.0
        %5451 = vmatprep.subr.mxu0 0.0
        %5452 = vmatpush2.msra.mxu0 0.0
        %5453 = vmatprep.subr.mxu0 0.0
        %5454 = vmatpush2.msra.mxu0 0.0
        %5455 = vmatprep.subr.mxu0 0.0
        %5456 = vmatpush2.msra.mxu0 0.0
        %5457 = vmatprep.subr.mxu0 0.0
        %5458 = vmatpush2.msra.mxu0 0.0
        %5459 = vmatprep.subr.mxu0 0.0
        %5460 = vmatpush2.msra.mxu0 0.0
        %5461 = vmatprep.subr.mxu0 0.0
        %5462 = vmatpush2.msra.mxu0 0.0
        %5463 = vmatprep.subr.mxu0 0.0
        %5464 = vmatpush2.msra.mxu0 0.0
        %5465 = vmatprep.subr.mxu0 0.0
        %5466 = vmatpush2.msra.mxu0 0.0
        %5467 = vmatprep.mubr.f32.mxu0 0.0
        %5468 = vmatmul.mubr.f32.gmra.mxu0 %v5401
        %v5469 = vpop.f32.mrf.mxu0
        %v5470 = vadd.f32 0.0, %v5469
        %v5471 = vpop.f32.mrf.mxu0
        %5472 = vdwg.mxu0
        %v5473 = vadd.f32 %v5234, %v5470
        %v5475 = vlaneseq
        %v5476 = vshrl.u32 %v5475, 7
        %v5477 = vsub.s32 0, %v5476
        %v5478 = vrot.slane %v4267, %v5477
        %v5480 = vadd.f32 %v5473, %v5478
        %v5481 = vadd.f32 %v3088, %v5480
        %v5482 = vsel %vm1950, %v5481, 0.0
        %5483 = vadd.xlane.f32.xlu0 %v5482
        %v5484 = vpop.xlane.xlu0 %5483
        %v5485 = vmul.f32 %v5484, %v3068
        %v5486 = vsub.f32 %v5481, %v5485
        %v5487 = vmul.f32 %v5486, %v5486
        %v5488 = vsel %vm1950, %v5487, 0.0
        %5489 = vadd.xlane.f32.xlu0 %v5488
        %v5490 = vpop.xlane.xlu0 %5489
        %v5491 = vmul.f32 %v5490, %v3068
        %v5492 = vadd.f32 %v5491, 1e-05
        %v5493 = vrsqrt.pop %v5492
        %v5494 = vmul.f32 %v5486, %v5493
        %v5495 = vlaneseq
        %v5496 = vshrl.u32 %v5495, 7
        %v5497 = vsub.s32 0, %v5496
        %v5498 = vrot.slane %v4268, %v5497
        %v5499 = vmul.f32 %v5494, %v5498
        %v5500 = vlaneseq
        %v5501 = vshrl.u32 %v5500, 7
        %v5502 = vsub.s32 1, %v5501
        %v5503 = vrot.slane %v4268, %v5502
        %v5504 = vadd.f32 %v5499, %v5503
        %v5506 = vlaneseq
        %v5507 = vshrl.u32 %v5506, 7
        %v5508 = vsub.s32 0, %v5507
        %v5509 = vrot.slane %v4273, %v5508
        %v5512 = vsel %vm1950, %v5504, 0
        %5514 = vmatprep.subr.mxu0 0.0
        %5515 = vmatpush1.msra.mxu0 0.0
        %5516 = vmatprep.subr.mxu0 0.0
        %5517 = vmatpush1.msra.mxu0 0.0
        %5518 = vmatprep.subr.mxu0 0.0
        %5519 = vmatpush1.msra.mxu0 0.0
        %5520 = vmatprep.subr.mxu0 0.0
        %5521 = vmatpush1.msra.mxu0 0.0
        %5522 = vmatprep.subr.mxu0 0.0
        %5523 = vmatpush1.msra.mxu0 0.0
        %5524 = vmatprep.subr.mxu0 0.0
        %5525 = vmatpush1.msra.mxu0 0.0
        %5526 = vmatprep.subr.mxu0 0.0
        %5527 = vmatpush1.msra.mxu0 0.0
        %5528 = vmatprep.subr.mxu0 0.0
        %5529 = vmatpush1.msra.mxu0 0.0
        %5530 = vmatprep.subr.mxu0 0.0
        %5531 = vmatpush1.msra.mxu0 0.0
        %5532 = vmatprep.subr.mxu0 0.0
        %5533 = vmatpush1.msra.mxu0 0.0
        %5534 = vmatprep.subr.mxu0 0.0
        %5535 = vmatpush1.msra.mxu0 0.0
        %5536 = vmatprep.subr.mxu0 0.0
        %5537 = vmatpush1.msra.mxu0 0.0
        %5538 = vmatprep.subr.mxu0 0.0
        %5539 = vmatpush1.msra.mxu0 %v4272
        %5540 = vmatprep.subr.mxu0 0.0
        %5541 = vmatpush1.msra.mxu0 %v4271
        %5542 = vmatprep.subr.mxu0 0.0
        %5543 = vmatpush1.msra.mxu0 %v4270
        %5544 = vmatprep.subr.mxu0 0.0
        %5545 = vmatpush1.msra.mxu0 %v4269
        %5546 = vmatprep.subr.mxu0 0.0
        %5547 = vmatpush2.msra.mxu0 0.0
        %5548 = vmatprep.subr.mxu0 0.0
        %5549 = vmatpush2.msra.mxu0 0.0
        %5550 = vmatprep.subr.mxu0 0.0
        %5551 = vmatpush2.msra.mxu0 0.0
        %5552 = vmatprep.subr.mxu0 0.0
        %5553 = vmatpush2.msra.mxu0 0.0
        %5554 = vmatprep.subr.mxu0 0.0
        %5555 = vmatpush2.msra.mxu0 0.0
        %5556 = vmatprep.subr.mxu0 0.0
        %5557 = vmatpush2.msra.mxu0 0.0
        %5558 = vmatprep.subr.mxu0 0.0
        %5559 = vmatpush2.msra.mxu0 0.0
        %5560 = vmatprep.subr.mxu0 0.0
        %5561 = vmatpush2.msra.mxu0 0.0
        %5562 = vmatprep.subr.mxu0 0.0
        %5563 = vmatpush2.msra.mxu0 0.0
        %5564 = vmatprep.subr.mxu0 0.0
        %5565 = vmatpush2.msra.mxu0 0.0
        %5566 = vmatprep.subr.mxu0 0.0
        %5567 = vmatpush2.msra.mxu0 0.0
        %5568 = vmatprep.subr.mxu0 0.0
        %5569 = vmatpush2.msra.mxu0 0.0
        %5570 = vmatprep.subr.mxu0 0.0
        %5571 = vmatpush2.msra.mxu0 0.0
        %5572 = vmatprep.subr.mxu0 0.0
        %5573 = vmatpush2.msra.mxu0 0.0
        %5574 = vmatprep.subr.mxu0 0.0
        %5575 = vmatpush2.msra.mxu0 0.0
        %5576 = vmatprep.subr.mxu0 0.0
        %5577 = vmatpush2.msra.mxu0 0.0
        %5578 = vmatprep.mubr.f32.mxu0 0.0
        %5579 = vmatmul.mubr.f32.gmra.mxu0 %v5512
        %v5580 = vpop.f32.mrf.mxu0
        %v5581 = vadd.f32 %v5509, %v5580
        %v5582 = vpop.f32.mrf.mxu0
        %5583 = vdwg.mxu0
        %v5584 = vmax.f32 %v5581, 0.0
        %v5586 = vlaneseq
        %v5587 = vshrl.u32 %v5586, 7
        %v5588 = vsub.s32 0, %v5587
        %v5589 = vrot.slane %v4282, %v5588
        %vm5591 = vcmask 523264
        %v5593 = vsel %vm5591, %v5584, 0
        %5595 = vmatprep.subr.mxu0 0.0
        %5596 = vmatpush1.msra.mxu0 0.0
        %5597 = vmatprep.subr.mxu0 0.0
        %5598 = vmatpush1.msra.mxu0 0.0
        %5599 = vmatprep.subr.mxu0 0.0
        %5600 = vmatpush1.msra.mxu0 0.0
        %5601 = vmatprep.subr.mxu0 0.0
        %5602 = vmatpush1.msra.mxu0 0.0
        %5603 = vmatprep.subr.mxu0 0.0
        %5604 = vmatpush1.msra.mxu0 0.0
        %5605 = vmatprep.subr.mxu0 0.0
        %5606 = vmatpush1.msra.mxu0 0.0
        %5607 = vmatprep.subr.mxu0 0.0
        %5608 = vmatpush1.msra.mxu0 0.0
        %5609 = vmatprep.subr.mxu0 0.0
        %5610 = vmatpush1.msra.mxu0 0.0
        %5611 = vmatprep.subr.mxu0 0.0
        %5612 = vmatpush1.msra.mxu0 %v4281
        %5613 = vmatprep.subr.mxu0 0.0
        %5614 = vmatpush1.msra.mxu0 %v4280
        %5615 = vmatprep.subr.mxu0 0.0
        %5616 = vmatpush1.msra.mxu0 %v4279
        %5617 = vmatprep.subr.mxu0 0.0
        %5618 = vmatpush1.msra.mxu0 %v4278
        %5619 = vmatprep.subr.mxu0 0.0
        %5620 = vmatpush1.msra.mxu0 %v4277
        %5621 = vmatprep.subr.mxu0 0.0
        %5622 = vmatpush1.msra.mxu0 %v4276
        %5623 = vmatprep.subr.mxu0 0.0
        %5624 = vmatpush1.msra.mxu0 %v4275
        %5625 = vmatprep.subr.mxu0 0.0
        %5626 = vmatpush1.msra.mxu0 %v4274
        %5627 = vmatprep.subr.mxu0 0.0
        %5628 = vmatpush2.msra.mxu0 0.0
        %5629 = vmatprep.subr.mxu0 0.0
        %5630 = vmatpush2.msra.mxu0 0.0
        %5631 = vmatprep.subr.mxu0 0.0
        %5632 = vmatpush2.msra.mxu0 0.0
        %5633 = vmatprep.subr.mxu0 0.0
        %5634 = vmatpush2.msra.mxu0 0.0
        %5635 = vmatprep.subr.mxu0 0.0
        %5636 = vmatpush2.msra.mxu0 0.0
        %5637 = vmatprep.subr.mxu0 0.0
        %5638 = vmatpush2.msra.mxu0 0.0
        %5639 = vmatprep.subr.mxu0 0.0
        %5640 = vmatpush2.msra.mxu0 0.0
        %5641 = vmatprep.subr.mxu0 0.0
        %5642 = vmatpush2.msra.mxu0 0.0
        %5643 = vmatprep.subr.mxu0 0.0
        %5644 = vmatpush2.msra.mxu0 0.0
        %5645 = vmatprep.subr.mxu0 0.0
        %5646 = vmatpush2.msra.mxu0 0.0
        %5647 = vmatprep.subr.mxu0 0.0
        %5648 = vmatpush2.msra.mxu0 0.0
        %5649 = vmatprep.subr.mxu0 0.0
        %5650 = vmatpush2.msra.mxu0 0.0
        %5651 = vmatprep.subr.mxu0 0.0
        %5652 = vmatpush2.msra.mxu0 0.0
        %5653 = vmatprep.subr.mxu0 0.0
        %5654 = vmatpush2.msra.mxu0 0.0
        %5655 = vmatprep.subr.mxu0 0.0
        %5656 = vmatpush2.msra.mxu0 0.0
        %5657 = vmatprep.subr.mxu0 0.0
        %5658 = vmatpush2.msra.mxu0 0.0
        %5659 = vmatprep.mubr.f32.mxu0 0.0
        %5660 = vmatmul.mubr.f32.gmra.mxu0 %v5593
        %v5661 = vpop.f32.mrf.mxu0
        %v5662 = vadd.f32 %v5589, %v5661
        %v5663 = vpop.f32.mrf.mxu0
        %5664 = vdwg.mxu0
        %v5665 = vadd.f32 %v5504, %v5662
        %v5666 = vsel %vm1950, %v5665, 0.0
        %5667 = vadd.xlane.f32.xlu0 %v5666
        %v5668 = vpop.xlane.xlu0 %5667
        %v5669 = vmul.f32 %v5668, %v3068
        %v5670 = vsub.f32 %v5665, %v5669
        %v5671 = vmul.f32 %v5670, %v5670
        %v5672 = vsel %vm1950, %v5671, 0.0
        %5673 = vadd.xlane.f32.xlu0 %v5672
        %v5674 = vpop.xlane.xlu0 %5673
        %v5675 = vmul.f32 %v5674, %v3068
        %v5676 = vadd.f32 %v5675, 1e-05
        %v5677 = vrsqrt.pop %v5676
        %v5678 = vmul.f32 %v5670, %v5677
        %v5679 = vlaneseq
        %v5680 = vshrl.u32 %v5679, 7
        %v5681 = vsub.s32 0, %v5680
        %v5682 = vrot.slane %v4283, %v5681
        %v5683 = vmul.f32 %v5678, %v5682
        %v5684 = vlaneseq
        %v5685 = vshrl.u32 %v5684, 7
        %v5686 = vsub.s32 1, %v5685
        %v5687 = vrot.slane %v4283, %v5686
        %v5688 = vadd.f32 %v5683, %v5687
        %v5689 = vld [vmem:[#allocation41] sm:$0xff]
        %v5690 = vld [vmem:[#allocation41 + $0x8] sm:$0xff]
        %v5691 = vld [vmem:[#allocation41 + $0x10] sm:$0xff]
        %v5692 = vld [vmem:[#allocation41 + $0x18] sm:$0xff]
        %v5693 = vld [vmem:[#allocation43] sm:$0x1]
        %v5694 = vld [vmem:[#allocation44] sm:$0xff]
        %v5695 = vld [vmem:[#allocation44 + $0x8] sm:$0xff]
        %v5696 = vld [vmem:[#allocation44 + $0x10] sm:$0xff]
        %v5697 = vld [vmem:[#allocation44 + $0x18] sm:$0xff]
        %v5698 = vld [vmem:[#allocation46] sm:$0x1]
        %v5699 = vld [vmem:[%s73] sm:$0xff]
        %v5700 = vld [vmem:[%s73 + $0x8] sm:$0xff]
        %v5701 = vld [vmem:[%s73 + $0x10] sm:$0xff]
        %v5702 = vld [vmem:[%s73 + $0x18] sm:$0xff]
        %v5703 = vld [vmem:[#allocation47] sm:$0x1]
        %v5704 = vld [vmem:[#allocation49] sm:$0xff]
        %v5705 = vld [vmem:[#allocation49 + $0x8] sm:$0xff]
        %v5706 = vld [vmem:[#allocation49 + $0x10] sm:$0xff]
        %v5707 = vld [vmem:[#allocation49 + $0x18] sm:$0xff]
        %v5708 = vld [vmem:[#allocation50] sm:$0x1]
        %v5709 = vld [vmem:[%s81] sm:$0x3]
        %v5710 = vld [vmem:[#allocation52] sm:$0xff]
        %v5711 = vld [vmem:[#allocation52 + $0x8] sm:$0xff]
        %v5712 = vld [vmem:[#allocation52 + $0x10] sm:$0xff]
        %v5713 = vld [vmem:[#allocation52 + $0x18] sm:$0xff]
        %v5714 = vld [vmem:[%s85] sm:$0x1]
        %v5715 = vld [vmem:[%s87] sm:$0xff]
        %v5716 = vld [vmem:[%s87 + $0x8] sm:$0xff]
        %v5717 = vld [vmem:[%s87 + $0x10] sm:$0xff]
        %v5718 = vld [vmem:[%s87 + $0x18] sm:$0xff]
        %v5719 = vld [vmem:[%s87 + $0x20] sm:$0xff]
        %v5720 = vld [vmem:[%s87 + $0x28] sm:$0xff]
        %v5721 = vld [vmem:[%s87 + $0x30] sm:$0xff]
        %v5722 = vld [vmem:[%s87 + $0x38] sm:$0xff]
        %v5723 = vld [vmem:[%s89] sm:$0x1]
        %v5724 = vld [vmem:[%s91] sm:$0x3]
        %v5726 = vlaneseq
        %v5727 = vshrl.u32 %v5726, 7
        %v5728 = vsub.s32 0, %v5727
        %v5729 = vrot.slane %v5693, %v5728
        %5731 = vmatprep.subr.mxu0 0.0
        %5732 = vmatpush1.msra.mxu0 0.0
        %5733 = vmatprep.subr.mxu0 0.0
        %5734 = vmatpush1.msra.mxu0 0.0
        %5735 = vmatprep.subr.mxu0 0.0
        %5736 = vmatpush1.msra.mxu0 0.0
        %5737 = vmatprep.subr.mxu0 0.0
        %5738 = vmatpush1.msra.mxu0 0.0
        %5739 = vmatprep.subr.mxu0 0.0
        %5740 = vmatpush1.msra.mxu0 0.0
        %5741 = vmatprep.subr.mxu0 0.0
        %5742 = vmatpush1.msra.mxu0 0.0
        %5743 = vmatprep.subr.mxu0 0.0
        %5744 = vmatpush1.msra.mxu0 0.0
        %5745 = vmatprep.subr.mxu0 0.0
        %5746 = vmatpush1.msra.mxu0 0.0
        %5747 = vmatprep.subr.mxu0 0.0
        %5748 = vmatpush1.msra.mxu0 0.0
        %5749 = vmatprep.subr.mxu0 0.0
        %5750 = vmatpush1.msra.mxu0 0.0
        %5751 = vmatprep.subr.mxu0 0.0
        %5752 = vmatpush1.msra.mxu0 0.0
        %5753 = vmatprep.subr.mxu0 0.0
        %5754 = vmatpush1.msra.mxu0 0.0
        %5755 = vmatprep.subr.mxu0 0.0
        %5756 = vmatpush1.msra.mxu0 %v5692
        %5757 = vmatprep.subr.mxu0 0.0
        %5758 = vmatpush1.msra.mxu0 %v5691
        %5759 = vmatprep.subr.mxu0 0.0
        %5760 = vmatpush1.msra.mxu0 %v5690
        %5761 = vmatprep.subr.mxu0 0.0
        %5762 = vmatpush1.msra.mxu0 %v5689
        %5763 = vmatprep.subr.mxu0 0.0
        %5764 = vmatpush2.msra.mxu0 0.0
        %5765 = vmatprep.subr.mxu0 0.0
        %5766 = vmatpush2.msra.mxu0 0.0
        %5767 = vmatprep.subr.mxu0 0.0
        %5768 = vmatpush2.msra.mxu0 0.0
        %5769 = vmatprep.subr.mxu0 0.0
        %5770 = vmatpush2.msra.mxu0 0.0
        %5771 = vmatprep.subr.mxu0 0.0
        %5772 = vmatpush2.msra.mxu0 0.0
        %5773 = vmatprep.subr.mxu0 0.0
        %5774 = vmatpush2.msra.mxu0 0.0
        %5775 = vmatprep.subr.mxu0 0.0
        %5776 = vmatpush2.msra.mxu0 0.0
        %5777 = vmatprep.subr.mxu0 0.0
        %5778 = vmatpush2.msra.mxu0 0.0
        %5779 = vmatprep.subr.mxu0 0.0
        %5780 = vmatpush2.msra.mxu0 0.0
        %5781 = vmatprep.subr.mxu0 0.0
        %5782 = vmatpush2.msra.mxu0 0.0
        %5783 = vmatprep.subr.mxu0 0.0
        %5784 = vmatpush2.msra.mxu0 0.0
        %5785 = vmatprep.subr.mxu0 0.0
        %5786 = vmatpush2.msra.mxu0 0.0
        %5787 = vmatprep.subr.mxu0 0.0
        %5788 = vmatpush2.msra.mxu0 0.0
        %5789 = vmatprep.subr.mxu0 0.0
        %5790 = vmatpush2.msra.mxu0 0.0
        %5791 = vmatprep.subr.mxu0 0.0
        %5792 = vmatpush2.msra.mxu0 0.0
        %5793 = vmatprep.subr.mxu0 0.0
        %5794 = vmatpush2.msra.mxu0 0.0
        %5795 = vmatprep.mubr.f32.mxu0 0.0
        %5796 = vmatmul.mubr.f32.gmra.mxu0 %v4372
        %v5797 = vpop.f32.mrf.mxu0
        %v5798 = vadd.f32 %v5729, %v5797
        %v5799 = vpop.f32.mrf.mxu0
        %5800 = vdwg.mxu0
        %v5802 = vlaneseq
        %v5803 = vshrl.u32 %v5802, 7
        %v5804 = vsub.s32 0, %v5803
        %v5805 = vrot.slane %v5698, %v5804
        %5807 = vmatprep.subr.mxu0 0.0
        %5808 = vmatpush1.msra.mxu0 0.0
        %5809 = vmatprep.subr.mxu0 0.0
        %5810 = vmatpush1.msra.mxu0 0.0
        %5811 = vmatprep.subr.mxu0 0.0
        %5812 = vmatpush1.msra.mxu0 0.0
        %5813 = vmatprep.subr.mxu0 0.0
        %5814 = vmatpush1.msra.mxu0 0.0
        %5815 = vmatprep.subr.mxu0 0.0
        %5816 = vmatpush1.msra.mxu0 0.0
        %5817 = vmatprep.subr.mxu0 0.0
        %5818 = vmatpush1.msra.mxu0 0.0
        %5819 = vmatprep.subr.mxu0 0.0
        %5820 = vmatpush1.msra.mxu0 0.0
        %5821 = vmatprep.subr.mxu0 0.0
        %5822 = vmatpush1.msra.mxu0 0.0
        %5823 = vmatprep.subr.mxu0 0.0
        %5824 = vmatpush1.msra.mxu0 0.0
        %5825 = vmatprep.subr.mxu0 0.0
        %5826 = vmatpush1.msra.mxu0 0.0
        %5827 = vmatprep.subr.mxu0 0.0
        %5828 = vmatpush1.msra.mxu0 0.0
        %5829 = vmatprep.subr.mxu0 0.0
        %5830 = vmatpush1.msra.mxu0 0.0
        %5831 = vmatprep.subr.mxu0 0.0
        %5832 = vmatpush1.msra.mxu0 %v5697
        %5833 = vmatprep.subr.mxu0 0.0
        %5834 = vmatpush1.msra.mxu0 %v5696
        %5835 = vmatprep.subr.mxu0 0.0
        %5836 = vmatpush1.msra.mxu0 %v5695
        %5837 = vmatprep.subr.mxu0 0.0
        %5838 = vmatpush1.msra.mxu0 %v5694
        %5839 = vmatprep.subr.mxu0 0.0
        %5840 = vmatpush2.msra.mxu0 0.0
        %5841 = vmatprep.subr.mxu0 0.0
        %5842 = vmatpush2.msra.mxu0 0.0
        %5843 = vmatprep.subr.mxu0 0.0
        %5844 = vmatpush2.msra.mxu0 0.0
        %5845 = vmatprep.subr.mxu0 0.0
        %5846 = vmatpush2.msra.mxu0 0.0
        %5847 = vmatprep.subr.mxu0 0.0
        %5848 = vmatpush2.msra.mxu0 0.0
        %5849 = vmatprep.subr.mxu0 0.0
        %5850 = vmatpush2.msra.mxu0 0.0
        %5851 = vmatprep.subr.mxu0 0.0
        %5852 = vmatpush2.msra.mxu0 0.0
        %5853 = vmatprep.subr.mxu0 0.0
        %5854 = vmatpush2.msra.mxu0 0.0
        %5855 = vmatprep.subr.mxu0 0.0
        %5856 = vmatpush2.msra.mxu0 0.0
        %5857 = vmatprep.subr.mxu0 0.0
        %5858 = vmatpush2.msra.mxu0 0.0
        %5859 = vmatprep.subr.mxu0 0.0
        %5860 = vmatpush2.msra.mxu0 0.0
        %5861 = vmatprep.subr.mxu0 0.0
        %5862 = vmatpush2.msra.mxu0 0.0
        %5863 = vmatprep.subr.mxu0 0.0
        %5864 = vmatpush2.msra.mxu0 0.0
        %5865 = vmatprep.subr.mxu0 0.0
        %5866 = vmatpush2.msra.mxu0 0.0
        %5867 = vmatprep.subr.mxu0 0.0
        %5868 = vmatpush2.msra.mxu0 0.0
        %5869 = vmatprep.subr.mxu0 0.0
        %5870 = vmatpush2.msra.mxu0 0.0
        %5871 = vmatprep.mubr.f32.mxu0 0.0
        %5872 = vmatmul.mubr.f32.gmra.mxu0 %v4292
        %v5873 = vpop.f32.mrf.mxu0
        %v5874 = vadd.f32 %v5805, %v5873
        %v5875 = vpop.f32.mrf.mxu0
        %5876 = vdwg.mxu0
        %v5878 = vlaneseq
        %v5879 = vshrl.u32 %v5878, 7
        %v5880 = vsub.s32 0, %v5879
        %v5881 = vrot.slane %v5703, %v5880
        %v5884 = vsel %vm1950, %v3088, 0
        %5886 = vmatprep.subr.mxu0 0.0
        %5887 = vmatpush1.msra.mxu0 0.0
        %5888 = vmatprep.subr.mxu0 0.0
        %5889 = vmatpush1.msra.mxu0 0.0
        %5890 = vmatprep.subr.mxu0 0.0
        %5891 = vmatpush1.msra.mxu0 0.0
        %5892 = vmatprep.subr.mxu0 0.0
        %5893 = vmatpush1.msra.mxu0 0.0
        %5894 = vmatprep.subr.mxu0 0.0
        %5895 = vmatpush1.msra.mxu0 0.0
        %5896 = vmatprep.subr.mxu0 0.0
        %5897 = vmatpush1.msra.mxu0 0.0
        %5898 = vmatprep.subr.mxu0 0.0
        %5899 = vmatpush1.msra.mxu0 0.0
        %5900 = vmatprep.subr.mxu0 0.0
        %5901 = vmatpush1.msra.mxu0 0.0
        %5902 = vmatprep.subr.mxu0 0.0
        %5903 = vmatpush1.msra.mxu0 0.0
        %5904 = vmatprep.subr.mxu0 0.0
        %5905 = vmatpush1.msra.mxu0 0.0
        %5906 = vmatprep.subr.mxu0 0.0
        %5907 = vmatpush1.msra.mxu0 0.0
        %5908 = vmatprep.subr.mxu0 0.0
        %5909 = vmatpush1.msra.mxu0 0.0
        %5910 = vmatprep.subr.mxu0 0.0
        %5911 = vmatpush1.msra.mxu0 %v5702
        %5912 = vmatprep.subr.mxu0 0.0
        %5913 = vmatpush1.msra.mxu0 %v5701
        %5914 = vmatprep.subr.mxu0 0.0
        %5915 = vmatpush1.msra.mxu0 %v5700
        %5916 = vmatprep.subr.mxu0 0.0
        %5917 = vmatpush1.msra.mxu0 %v5699
        %5918 = vmatprep.subr.mxu0 0.0
        %5919 = vmatpush2.msra.mxu0 0.0
        %5920 = vmatprep.subr.mxu0 0.0
        %5921 = vmatpush2.msra.mxu0 0.0
        %5922 = vmatprep.subr.mxu0 0.0
        %5923 = vmatpush2.msra.mxu0 0.0
        %5924 = vmatprep.subr.mxu0 0.0
        %5925 = vmatpush2.msra.mxu0 0.0
        %5926 = vmatprep.subr.mxu0 0.0
        %5927 = vmatpush2.msra.mxu0 0.0
        %5928 = vmatprep.subr.mxu0 0.0
        %5929 = vmatpush2.msra.mxu0 0.0
        %5930 = vmatprep.subr.mxu0 0.0
        %5931 = vmatpush2.msra.mxu0 0.0
        %5932 = vmatprep.subr.mxu0 0.0
        %5933 = vmatpush2.msra.mxu0 0.0
        %5934 = vmatprep.subr.mxu0 0.0
        %5935 = vmatpush2.msra.mxu0 0.0
        %5936 = vmatprep.subr.mxu0 0.0
        %5937 = vmatpush2.msra.mxu0 0.0
        %5938 = vmatprep.subr.mxu0 0.0
        %5939 = vmatpush2.msra.mxu0 0.0
        %5940 = vmatprep.subr.mxu0 0.0
        %5941 = vmatpush2.msra.mxu0 0.0
        %5942 = vmatprep.subr.mxu0 0.0
        %5943 = vmatpush2.msra.mxu0 0.0
        %5944 = vmatprep.subr.mxu0 0.0
        %5945 = vmatpush2.msra.mxu0 0.0
        %5946 = vmatprep.subr.mxu0 0.0
        %5947 = vmatpush2.msra.mxu0 0.0
        %5948 = vmatprep.subr.mxu0 0.0
        %5949 = vmatpush2.msra.mxu0 0.0
        %5950 = vmatprep.mubr.f32.mxu0 0.0
        %5951 = vmatmul.mubr.f32.gmra.mxu0 %v5884
        %v5952 = vpop.f32.mrf.mxu0
        %v5953 = vadd.f32 %v5881, %v5952
        %v5954 = vpop.f32.mrf.mxu0
        %5955 = vdwg.mxu0
        %v5956 = vmul.f32 %v5798, 0.35355338
        %v5958 = vsel %vm2107, %v5956, 0
        %v5961 = vsel %vm2107, %v5874, 0
        %5963 = vmatprep.subr.mxu0 0.0
        %5964 = vmatpush1.xpose.msra.mxu0 0.0
        %5965 = vmatprep.subr.mxu0 0.0
        %5966 = vmatpush1.xpose.msra.mxu0 0.0
        %5967 = vmatprep.subr.mxu0 0.0
        %5968 = vmatpush1.xpose.msra.mxu0 0.0
        %5969 = vmatprep.subr.mxu0 0.0
        %5970 = vmatpush1.xpose.msra.mxu0 0.0
        %5971 = vmatprep.subr.mxu0 0.0
        %5972 = vmatpush1.xpose.msra.mxu0 0.0
        %5973 = vmatprep.subr.mxu0 0.0
        %5974 = vmatpush1.xpose.msra.mxu0 0.0
        %5975 = vmatprep.subr.mxu0 0.0
        %5976 = vmatpush1.xpose.msra.mxu0 0.0
        %5977 = vmatprep.subr.mxu0 0.0
        %5978 = vmatpush1.xpose.msra.mxu0 0.0
        %5979 = vmatprep.subr.mxu0 0.0
        %5980 = vmatpush1.xpose.msra.mxu0 0.0
        %5981 = vmatprep.subr.mxu0 0.0
        %5982 = vmatpush1.xpose.msra.mxu0 0.0
        %5983 = vmatprep.subr.mxu0 0.0
        %5984 = vmatpush1.xpose.msra.mxu0 0.0
        %5985 = vmatprep.subr.mxu0 0.0
        %5986 = vmatpush1.xpose.msra.mxu0 0.0
        %5987 = vmatprep.subr.mxu0 0.0
        %5988 = vmatpush1.xpose.msra.mxu0 0.0
        %5989 = vmatprep.subr.mxu0 0.0
        %5990 = vmatpush1.xpose.msra.mxu0 0.0
        %5991 = vmatprep.subr.mxu0 0.0
        %5992 = vmatpush1.xpose.msra.mxu0 0.0
        %5993 = vmatprep.subr.mxu0 0.0
        %5994 = vmatpush1.xpose.msra.mxu0 %v5961
        %5995 = vmatprep.subr.mxu0 0.0
        %5996 = vmatpush2.xpose.msra.mxu0 0.0
        %5997 = vmatprep.subr.mxu0 0.0
        %5998 = vmatpush2.xpose.msra.mxu0 0.0
        %5999 = vmatprep.subr.mxu0 0.0
        %6000 = vmatpush2.xpose.msra.mxu0 0.0
        %6001 = vmatprep.subr.mxu0 0.0
        %6002 = vmatpush2.xpose.msra.mxu0 0.0
        %6003 = vmatprep.subr.mxu0 0.0
        %6004 = vmatpush2.xpose.msra.mxu0 0.0
        %6005 = vmatprep.subr.mxu0 0.0
        %6006 = vmatpush2.xpose.msra.mxu0 0.0
        %6007 = vmatprep.subr.mxu0 0.0
        %6008 = vmatpush2.xpose.msra.mxu0 0.0
        %6009 = vmatprep.subr.mxu0 0.0
        %6010 = vmatpush2.xpose.msra.mxu0 0.0
        %6011 = vmatprep.subr.mxu0 0.0
        %6012 = vmatpush2.xpose.msra.mxu0 0.0
        %6013 = vmatprep.subr.mxu0 0.0
        %6014 = vmatpush2.xpose.msra.mxu0 0.0
        %6015 = vmatprep.subr.mxu0 0.0
        %6016 = vmatpush2.xpose.msra.mxu0 0.0
        %6017 = vmatprep.subr.mxu0 0.0
        %6018 = vmatpush2.xpose.msra.mxu0 0.0
        %6019 = vmatprep.subr.mxu0 0.0
        %6020 = vmatpush2.xpose.msra.mxu0 0.0
        %6021 = vmatprep.subr.mxu0 0.0
        %6022 = vmatpush2.xpose.msra.mxu0 0.0
        %6023 = vmatprep.subr.mxu0 0.0
        %6024 = vmatpush2.xpose.msra.mxu0 0.0
        %6025 = vmatprep.subr.mxu0 0.0
        %6026 = vmatpush2.xpose.msra.mxu0 0.0
        %6027 = vmatprep.mubr.f32.mxu0 0.0
        %6028 = vmatmul.mubr.f32.gmra.mxu0 %v5958
        %v6029 = vpop.f32.mrf.mxu0
        %v6030 = vadd.f32 0.0, %v6029
        %v6031 = vpop.f32.mrf.mxu0
        %6032 = vdwg.mxu0
        %v6033 = vsel %vm2107, %v6030, -inf
        %6034 = vmax.xlane.f32.xlu0 %v6033
        %v6035 = vpop.xlane.xlu0 %6034
        %v6036 = vsub.f32 %v6030, %v6035
        %v6037 = vmul.f32 %v6036, 1.442695
        %v6038 = vpow.pop %v6037
        %v6039 = vsel %vm2107, %v6038, 0.0
        %6040 = vadd.xlane.f32.xlu0 %v6039
        %v6041 = vpop.xlane.xlu0 %6040
        %v6042 = vrcp.pop %v6041
        %v6043 = vmul.f32 %v6038, %v6042
        %v6045 = vsel %vm2107, %v6043, 0
        %6047 = vmatprep.subr.mxu0 0.0
        %6048 = vmatpush1.msra.mxu0 0.0
        %6049 = vmatprep.subr.mxu0 0.0
        %6050 = vmatpush1.msra.mxu0 0.0
        %6051 = vmatprep.subr.mxu0 0.0
        %6052 = vmatpush1.msra.mxu0 0.0
        %6053 = vmatprep.subr.mxu0 0.0
        %6054 = vmatpush1.msra.mxu0 0.0
        %6055 = vmatprep.subr.mxu0 0.0
        %6056 = vmatpush1.msra.mxu0 0.0
        %6057 = vmatprep.subr.mxu0 0.0
        %6058 = vmatpush1.msra.mxu0 0.0
        %6059 = vmatprep.subr.mxu0 0.0
        %6060 = vmatpush1.msra.mxu0 0.0
        %6061 = vmatprep.subr.mxu0 0.0
        %6062 = vmatpush1.msra.mxu0 0.0
        %6063 = vmatprep.subr.mxu0 0.0
        %6064 = vmatpush1.msra.mxu0 0.0
        %6065 = vmatprep.subr.mxu0 0.0
        %6066 = vmatpush1.msra.mxu0 0.0
        %6067 = vmatprep.subr.mxu0 0.0
        %6068 = vmatpush1.msra.mxu0 0.0
        %6069 = vmatprep.subr.mxu0 0.0
        %6070 = vmatpush1.msra.mxu0 0.0
        %6071 = vmatprep.subr.mxu0 0.0
        %6072 = vmatpush1.msra.mxu0 0.0
        %6073 = vmatprep.subr.mxu0 0.0
        %6074 = vmatpush1.msra.mxu0 0.0
        %6075 = vmatprep.subr.mxu0 0.0
        %6076 = vmatpush1.msra.mxu0 0.0
        %6077 = vmatprep.subr.mxu0 0.0
        %6078 = vmatpush1.msra.mxu0 %v5953
        %6079 = vmatprep.subr.mxu0 0.0
        %6080 = vmatpush2.msra.mxu0 0.0
        %6081 = vmatprep.subr.mxu0 0.0
        %6082 = vmatpush2.msra.mxu0 0.0
        %6083 = vmatprep.subr.mxu0 0.0
        %6084 = vmatpush2.msra.mxu0 0.0
        %6085 = vmatprep.subr.mxu0 0.0
        %6086 = vmatpush2.msra.mxu0 0.0
        %6087 = vmatprep.subr.mxu0 0.0
        %6088 = vmatpush2.msra.mxu0 0.0
        %6089 = vmatprep.subr.mxu0 0.0
        %6090 = vmatpush2.msra.mxu0 0.0
        %6091 = vmatprep.subr.mxu0 0.0
        %6092 = vmatpush2.msra.mxu0 0.0
        %6093 = vmatprep.subr.mxu0 0.0
        %6094 = vmatpush2.msra.mxu0 0.0
        %6095 = vmatprep.subr.mxu0 0.0
        %6096 = vmatpush2.msra.mxu0 0.0
        %6097 = vmatprep.subr.mxu0 0.0
        %6098 = vmatpush2.msra.mxu0 0.0
        %6099 = vmatprep.subr.mxu0 0.0
        %6100 = vmatpush2.msra.mxu0 0.0
        %6101 = vmatprep.subr.mxu0 0.0
        %6102 = vmatpush2.msra.mxu0 0.0
        %6103 = vmatprep.subr.mxu0 0.0
        %6104 = vmatpush2.msra.mxu0 0.0
        %6105 = vmatprep.subr.mxu0 0.0
        %6106 = vmatpush2.msra.mxu0 0.0
        %6107 = vmatprep.subr.mxu0 0.0
        %6108 = vmatpush2.msra.mxu0 0.0
        %6109 = vmatprep.subr.mxu0 0.0
        %6110 = vmatpush2.msra.mxu0 0.0
        %6111 = vmatprep.mubr.f32.mxu0 0.0
        %6112 = vmatmul.mubr.f32.gmra.mxu0 %v6045
        %v6113 = vpop.f32.mrf.mxu0
        %v6114 = vadd.f32 0.0, %v6113
        %v6115 = vpop.f32.mrf.mxu0
        %6116 = vdwg.mxu0
        %6117 = vrot.lane.b32.xlu0 %v5956, 120
        %v6118 = vpop.permute.xlu0 %6117
        %6119 = vrot.lane.b32.xlu0 %v5874, 120
        %v6120 = vpop.permute.xlu0 %6119
        %v6121 = vsel %vm2107, %v6118, 0
        %v6123 = vsel %vm2107, %v6120, 0
        %6125 = vmatprep.subr.mxu0 0.0
        %6126 = vmatpush1.xpose.msra.mxu0 0.0
        %6127 = vmatprep.subr.mxu0 0.0
        %6128 = vmatpush1.xpose.msra.mxu0 0.0
        %6129 = vmatprep.subr.mxu0 0.0
        %6130 = vmatpush1.xpose.msra.mxu0 0.0
        %6131 = vmatprep.subr.mxu0 0.0
        %6132 = vmatpush1.xpose.msra.mxu0 0.0
        %6133 = vmatprep.subr.mxu0 0.0
        %6134 = vmatpush1.xpose.msra.mxu0 0.0
        %6135 = vmatprep.subr.mxu0 0.0
        %6136 = vmatpush1.xpose.msra.mxu0 0.0
        %6137 = vmatprep.subr.mxu0 0.0
        %6138 = vmatpush1.xpose.msra.mxu0 0.0
        %6139 = vmatprep.subr.mxu0 0.0
        %6140 = vmatpush1.xpose.msra.mxu0 0.0
        %6141 = vmatprep.subr.mxu0 0.0
        %6142 = vmatpush1.xpose.msra.mxu0 0.0
        %6143 = vmatprep.subr.mxu0 0.0
        %6144 = vmatpush1.xpose.msra.mxu0 0.0
        %6145 = vmatprep.subr.mxu0 0.0
        %6146 = vmatpush1.xpose.msra.mxu0 0.0
        %6147 = vmatprep.subr.mxu0 0.0
        %6148 = vmatpush1.xpose.msra.mxu0 0.0
        %6149 = vmatprep.subr.mxu0 0.0
        %6150 = vmatpush1.xpose.msra.mxu0 0.0
        %6151 = vmatprep.subr.mxu0 0.0
        %6152 = vmatpush1.xpose.msra.mxu0 0.0
        %6153 = vmatprep.subr.mxu0 0.0
        %6154 = vmatpush1.xpose.msra.mxu0 0.0
        %6155 = vmatprep.subr.mxu0 0.0
        %6156 = vmatpush1.xpose.msra.mxu0 %v6123
        %6157 = vmatprep.subr.mxu0 0.0
        %6158 = vmatpush2.xpose.msra.mxu0 0.0
        %6159 = vmatprep.subr.mxu0 0.0
        %6160 = vmatpush2.xpose.msra.mxu0 0.0
        %6161 = vmatprep.subr.mxu0 0.0
        %6162 = vmatpush2.xpose.msra.mxu0 0.0
        %6163 = vmatprep.subr.mxu0 0.0
        %6164 = vmatpush2.xpose.msra.mxu0 0.0
        %6165 = vmatprep.subr.mxu0 0.0
        %6166 = vmatpush2.xpose.msra.mxu0 0.0
        %6167 = vmatprep.subr.mxu0 0.0
        %6168 = vmatpush2.xpose.msra.mxu0 0.0
        %6169 = vmatprep.subr.mxu0 0.0
        %6170 = vmatpush2.xpose.msra.mxu0 0.0
        %6171 = vmatprep.subr.mxu0 0.0
        %6172 = vmatpush2.xpose.msra.mxu0 0.0
        %6173 = vmatprep.subr.mxu0 0.0
        %6174 = vmatpush2.xpose.msra.mxu0 0.0
        %6175 = vmatprep.subr.mxu0 0.0
        %6176 = vmatpush2.xpose.msra.mxu0 0.0
        %6177 = vmatprep.subr.mxu0 0.0
        %6178 = vmatpush2.xpose.msra.mxu0 0.0
        %6179 = vmatprep.subr.mxu0 0.0
        %6180 = vmatpush2.xpose.msra.mxu0 0.0
        %6181 = vmatprep.subr.mxu0 0.0
        %6182 = vmatpush2.xpose.msra.mxu0 0.0
        %6183 = vmatprep.subr.mxu0 0.0
        %6184 = vmatpush2.xpose.msra.mxu0 0.0
        %6185 = vmatprep.subr.mxu0 0.0
        %6186 = vmatpush2.xpose.msra.mxu0 0.0
        %6187 = vmatprep.subr.mxu0 0.0
        %6188 = vmatpush2.xpose.msra.mxu0 0.0
        %6189 = vmatprep.mubr.f32.mxu0 0.0
        %6190 = vmatmul.mubr.f32.gmra.mxu0 %v6121
        %v6191 = vpop.f32.mrf.mxu0
        %v6192 = vadd.f32 0.0, %v6191
        %v6193 = vpop.f32.mrf.mxu0
        %6194 = vdwg.mxu0
        %v6195 = vsel %vm2107, %v6192, -inf
        %6196 = vmax.xlane.f32.xlu0 %v6195
        %v6197 = vpop.xlane.xlu0 %6196
        %v6198 = vsub.f32 %v6192, %v6197
        %v6199 = vmul.f32 %v6198, 1.442695
        %v6200 = vpow.pop %v6199
        %v6201 = vsel %vm2107, %v6200, 0.0
        %6202 = vadd.xlane.f32.xlu0 %v6201
        %v6203 = vpop.xlane.xlu0 %6202
        %v6204 = vrcp.pop %v6203
        %v6205 = vmul.f32 %v6200, %v6204
        %6207 = vrot.lane.b32.xlu0 %v5953, 120
        %v6208 = vpop.permute.xlu0 %6207
        %v6211 = vsel %vm2107, %v6205, 0
        %6213 = vmatprep.subr.mxu0 0.0
        %6214 = vmatpush1.msra.mxu0 0.0
        %6215 = vmatprep.subr.mxu0 0.0
        %6216 = vmatpush1.msra.mxu0 0.0
        %6217 = vmatprep.subr.mxu0 0.0
        %6218 = vmatpush1.msra.mxu0 0.0
        %6219 = vmatprep.subr.mxu0 0.0
        %6220 = vmatpush1.msra.mxu0 0.0
        %6221 = vmatprep.subr.mxu0 0.0
        %6222 = vmatpush1.msra.mxu0 0.0
        %6223 = vmatprep.subr.mxu0 0.0
        %6224 = vmatpush1.msra.mxu0 0.0
        %6225 = vmatprep.subr.mxu0 0.0
        %6226 = vmatpush1.msra.mxu0 0.0
        %6227 = vmatprep.subr.mxu0 0.0
        %6228 = vmatpush1.msra.mxu0 0.0
        %6229 = vmatprep.subr.mxu0 0.0
        %6230 = vmatpush1.msra.mxu0 0.0
        %6231 = vmatprep.subr.mxu0 0.0
        %6232 = vmatpush1.msra.mxu0 0.0
        %6233 = vmatprep.subr.mxu0 0.0
        %6234 = vmatpush1.msra.mxu0 0.0
        %6235 = vmatprep.subr.mxu0 0.0
        %6236 = vmatpush1.msra.mxu0 0.0
        %6237 = vmatprep.subr.mxu0 0.0
        %6238 = vmatpush1.msra.mxu0 0.0
        %6239 = vmatprep.subr.mxu0 0.0
        %6240 = vmatpush1.msra.mxu0 0.0
        %6241 = vmatprep.subr.mxu0 0.0
        %6242 = vmatpush1.msra.mxu0 0.0
        %6243 = vmatprep.subr.mxu0 0.0
        %6244 = vmatpush1.msra.mxu0 %v6208
        %6245 = vmatprep.subr.mxu0 0.0
        %6246 = vmatpush2.msra.mxu0 0.0
        %6247 = vmatprep.subr.mxu0 0.0
        %6248 = vmatpush2.msra.mxu0 0.0
        %6249 = vmatprep.subr.mxu0 0.0
        %6250 = vmatpush2.msra.mxu0 0.0
        %6251 = vmatprep.subr.mxu0 0.0
        %6252 = vmatpush2.msra.mxu0 0.0
        %6253 = vmatprep.subr.mxu0 0.0
        %6254 = vmatpush2.msra.mxu0 0.0
        %6255 = vmatprep.subr.mxu0 0.0
        %6256 = vmatpush2.msra.mxu0 0.0
        %6257 = vmatprep.subr.mxu0 0.0
        %6258 = vmatpush2.msra.mxu0 0.0
        %6259 = vmatprep.subr.mxu0 0.0
        %6260 = vmatpush2.msra.mxu0 0.0
        %6261 = vmatprep.subr.mxu0 0.0
        %6262 = vmatpush2.msra.mxu0 0.0
        %6263 = vmatprep.subr.mxu0 0.0
        %6264 = vmatpush2.msra.mxu0 0.0
        %6265 = vmatprep.subr.mxu0 0.0
        %6266 = vmatpush2.msra.mxu0 0.0
        %6267 = vmatprep.subr.mxu0 0.0
        %6268 = vmatpush2.msra.mxu0 0.0
        %6269 = vmatprep.subr.mxu0 0.0
        %6270 = vmatpush2.msra.mxu0 0.0
        %6271 = vmatprep.subr.mxu0 0.0
        %6272 = vmatpush2.msra.mxu0 0.0
        %6273 = vmatprep.subr.mxu0 0.0
        %6274 = vmatpush2.msra.mxu0 0.0
        %6275 = vmatprep.subr.mxu0 0.0
        %6276 = vmatpush2.msra.mxu0 0.0
        %6277 = vmatprep.mubr.f32.mxu0 0.0
        %6278 = vmatmul.mubr.f32.gmra.mxu0 %v6211
        %v6279 = vpop.f32.mrf.mxu0
        %v6280 = vadd.f32 0.0, %v6279
        %v6281 = vpop.f32.mrf.mxu0
        %6282 = vdwg.mxu0
        %v6284 = vsel %vm2107, %v6280, 0
        %6286 = vmatprep.subr.mxu0 0.0
        %6287 = vmatpush1.msra.mxu0 0.0
        %6288 = vmatprep.subr.mxu0 0.0
        %6289 = vmatpush1.msra.mxu0 0.0
        %6290 = vmatprep.subr.mxu0 0.0
        %6291 = vmatpush1.msra.mxu0 0.0
        %6292 = vmatprep.subr.mxu0 0.0
        %6293 = vmatpush1.msra.mxu0 0.0
        %6294 = vmatprep.subr.mxu0 0.0
        %6295 = vmatpush1.msra.mxu0 0.0
        %6296 = vmatprep.subr.mxu0 0.0
        %6297 = vmatpush1.msra.mxu0 0.0
        %6298 = vmatprep.subr.mxu0 0.0
        %6299 = vmatpush1.msra.mxu0 0.0
        %6300 = vmatprep.subr.mxu0 0.0
        %6301 = vmatpush1.msra.mxu0 0.0
        %6302 = vmatprep.subr.mxu0 0.0
        %6303 = vmatpush1.msra.mxu0 0.0
        %6304 = vmatprep.subr.mxu0 0.0
        %6305 = vmatpush1.msra.mxu0 0.0
        %6306 = vmatprep.subr.mxu0 0.0
        %6307 = vmatpush1.msra.mxu0 0.0
        %6308 = vmatprep.subr.mxu0 0.0
        %6309 = vmatpush1.msra.mxu0 0.0
        %6310 = vmatprep.subr.mxu0 0.0
        %6311 = vmatpush1.msra.mxu0 0.0
        %6312 = vmatprep.subr.mxu0 0.0
        %6313 = vmatpush1.msra.mxu0 0.0
        %6314 = vmatprep.subr.mxu0 0.0
        %6315 = vmatpush1.msra.mxu0 0.0
        %6316 = vmatprep.subr.mxu0 0.0
        %6317 = vmatpush1.msra.mxu0 %v5705
        %6318 = vmatprep.subr.mxu0 0.0
        %6319 = vmatpush2.msra.mxu0 0.0
        %6320 = vmatprep.subr.mxu0 0.0
        %6321 = vmatpush2.msra.mxu0 0.0
        %6322 = vmatprep.subr.mxu0 0.0
        %6323 = vmatpush2.msra.mxu0 0.0
        %6324 = vmatprep.subr.mxu0 0.0
        %6325 = vmatpush2.msra.mxu0 0.0
        %6326 = vmatprep.subr.mxu0 0.0
        %6327 = vmatpush2.msra.mxu0 0.0
        %6328 = vmatprep.subr.mxu0 0.0
        %6329 = vmatpush2.msra.mxu0 0.0
        %6330 = vmatprep.subr.mxu0 0.0
        %6331 = vmatpush2.msra.mxu0 0.0
        %6332 = vmatprep.subr.mxu0 0.0
        %6333 = vmatpush2.msra.mxu0 0.0
        %6334 = vmatprep.subr.mxu0 0.0
        %6335 = vmatpush2.msra.mxu0 0.0
        %6336 = vmatprep.subr.mxu0 0.0
        %6337 = vmatpush2.msra.mxu0 0.0
        %6338 = vmatprep.subr.mxu0 0.0
        %6339 = vmatpush2.msra.mxu0 0.0
        %6340 = vmatprep.subr.mxu0 0.0
        %6341 = vmatpush2.msra.mxu0 0.0
        %6342 = vmatprep.subr.mxu0 0.0
        %6343 = vmatpush2.msra.mxu0 0.0
        %6344 = vmatprep.subr.mxu0 0.0
        %6345 = vmatpush2.msra.mxu0 0.0
        %6346 = vmatprep.subr.mxu0 0.0
        %6347 = vmatpush2.msra.mxu0 0.0
        %6348 = vmatprep.subr.mxu0 0.0
        %6349 = vmatpush2.msra.mxu0 0.0
        %6350 = vmatprep.mubr.f32.mxu0 0.0
        %6351 = vmatmul.mubr.f32.gmra.mxu0 %v6284
        %v6352 = vpop.f32.mrf.mxu0
        %v6353 = vadd.f32 0.0, %v6352
        %v6354 = vpop.f32.mrf.mxu0
        %6355 = vdwg.mxu0
        %v6357 = vsel %vm2107, %v6114, 0
        %6359 = vmatprep.subr.mxu0 0.0
        %6360 = vmatpush1.msra.mxu0 0.0
        %6361 = vmatprep.subr.mxu0 0.0
        %6362 = vmatpush1.msra.mxu0 0.0
        %6363 = vmatprep.subr.mxu0 0.0
        %6364 = vmatpush1.msra.mxu0 0.0
        %6365 = vmatprep.subr.mxu0 0.0
        %6366 = vmatpush1.msra.mxu0 0.0
        %6367 = vmatprep.subr.mxu0 0.0
        %6368 = vmatpush1.msra.mxu0 0.0
        %6369 = vmatprep.subr.mxu0 0.0
        %6370 = vmatpush1.msra.mxu0 0.0
        %6371 = vmatprep.subr.mxu0 0.0
        %6372 = vmatpush1.msra.mxu0 0.0
        %6373 = vmatprep.subr.mxu0 0.0
        %6374 = vmatpush1.msra.mxu0 0.0
        %6375 = vmatprep.subr.mxu0 0.0
        %6376 = vmatpush1.msra.mxu0 0.0
        %6377 = vmatprep.subr.mxu0 0.0
        %6378 = vmatpush1.msra.mxu0 0.0
        %6379 = vmatprep.subr.mxu0 0.0
        %6380 = vmatpush1.msra.mxu0 0.0
        %6381 = vmatprep.subr.mxu0 0.0
        %6382 = vmatpush1.msra.mxu0 0.0
        %6383 = vmatprep.subr.mxu0 0.0
        %6384 = vmatpush1.msra.mxu0 0.0
        %6385 = vmatprep.subr.mxu0 0.0
        %6386 = vmatpush1.msra.mxu0 0.0
        %6387 = vmatprep.subr.mxu0 0.0
        %6388 = vmatpush1.msra.mxu0 0.0
        %6389 = vmatprep.subr.mxu0 0.0
        %6390 = vmatpush1.msra.mxu0 %v5704
        %6391 = vmatprep.subr.mxu0 0.0
        %6392 = vmatpush2.msra.mxu0 0.0
        %6393 = vmatprep.subr.mxu0 0.0
        %6394 = vmatpush2.msra.mxu0 0.0
        %6395 = vmatprep.subr.mxu0 0.0
        %6396 = vmatpush2.msra.mxu0 0.0
        %6397 = vmatprep.subr.mxu0 0.0
        %6398 = vmatpush2.msra.mxu0 0.0
        %6399 = vmatprep.subr.mxu0 0.0
        %6400 = vmatpush2.msra.mxu0 0.0
        %6401 = vmatprep.subr.mxu0 0.0
        %6402 = vmatpush2.msra.mxu0 0.0
        %6403 = vmatprep.subr.mxu0 0.0
        %6404 = vmatpush2.msra.mxu0 0.0
        %6405 = vmatprep.subr.mxu0 0.0
        %6406 = vmatpush2.msra.mxu0 0.0
        %6407 = vmatprep.subr.mxu0 0.0
        %6408 = vmatpush2.msra.mxu0 0.0
        %6409 = vmatprep.subr.mxu0 0.0
        %6410 = vmatpush2.msra.mxu0 0.0
        %6411 = vmatprep.subr.mxu0 0.0
        %6412 = vmatpush2.msra.mxu0 0.0
        %6413 = vmatprep.subr.mxu0 0.0
        %6414 = vmatpush2.msra.mxu0 0.0
        %6415 = vmatprep.subr.mxu0 0.0
        %6416 = vmatpush2.msra.mxu0 0.0
        %6417 = vmatprep.subr.mxu0 0.0
        %6418 = vmatpush2.msra.mxu0 0.0
        %6419 = vmatprep.subr.mxu0 0.0
        %6420 = vmatpush2.msra.mxu0 0.0
        %6421 = vmatprep.subr.mxu0 0.0
        %6422 = vmatpush2.msra.mxu0 0.0
        %6423 = vmatprep.mubr.f32.mxu0 0.0
        %6424 = vmatmul.mubr.f32.gmra.mxu0 %v6357
        %v6425 = vpop.f32.mrf.mxu0
        %v6426 = vadd.f32 %v6353, %v6425
        %v6427 = vpop.f32.mrf.mxu0
        %6428 = vdwg.mxu0
        %6429 = vrot.lane.b32.xlu0 %v5956, 112
        %v6430 = vpop.permute.xlu0 %6429
        %6431 = vrot.lane.b32.xlu0 %v5874, 112
        %v6432 = vpop.permute.xlu0 %6431
        %v6433 = vsel %vm2107, %v6430, 0
        %v6435 = vsel %vm2107, %v6432, 0
        %6437 = vmatprep.subr.mxu0 0.0
        %6438 = vmatpush1.xpose.msra.mxu0 0.0
        %6439 = vmatprep.subr.mxu0 0.0
        %6440 = vmatpush1.xpose.msra.mxu0 0.0
        %6441 = vmatprep.subr.mxu0 0.0
        %6442 = vmatpush1.xpose.msra.mxu0 0.0
        %6443 = vmatprep.subr.mxu0 0.0
        %6444 = vmatpush1.xpose.msra.mxu0 0.0
        %6445 = vmatprep.subr.mxu0 0.0
        %6446 = vmatpush1.xpose.msra.mxu0 0.0
        %6447 = vmatprep.subr.mxu0 0.0
        %6448 = vmatpush1.xpose.msra.mxu0 0.0
        %6449 = vmatprep.subr.mxu0 0.0
        %6450 = vmatpush1.xpose.msra.mxu0 0.0
        %6451 = vmatprep.subr.mxu0 0.0
        %6452 = vmatpush1.xpose.msra.mxu0 0.0
        %6453 = vmatprep.subr.mxu0 0.0
        %6454 = vmatpush1.xpose.msra.mxu0 0.0
        %6455 = vmatprep.subr.mxu0 0.0
        %6456 = vmatpush1.xpose.msra.mxu0 0.0
        %6457 = vmatprep.subr.mxu0 0.0
        %6458 = vmatpush1.xpose.msra.mxu0 0.0
        %6459 = vmatprep.subr.mxu0 0.0
        %6460 = vmatpush1.xpose.msra.mxu0 0.0
        %6461 = vmatprep.subr.mxu0 0.0
        %6462 = vmatpush1.xpose.msra.mxu0 0.0
        %6463 = vmatprep.subr.mxu0 0.0
        %6464 = vmatpush1.xpose.msra.mxu0 0.0
        %6465 = vmatprep.subr.mxu0 0.0
        %6466 = vmatpush1.xpose.msra.mxu0 0.0
        %6467 = vmatprep.subr.mxu0 0.0
        %6468 = vmatpush1.xpose.msra.mxu0 %v6435
        %6469 = vmatprep.subr.mxu0 0.0
        %6470 = vmatpush2.xpose.msra.mxu0 0.0
        %6471 = vmatprep.subr.mxu0 0.0
        %6472 = vmatpush2.xpose.msra.mxu0 0.0
        %6473 = vmatprep.subr.mxu0 0.0
        %6474 = vmatpush2.xpose.msra.mxu0 0.0
        %6475 = vmatprep.subr.mxu0 0.0
        %6476 = vmatpush2.xpose.msra.mxu0 0.0
        %6477 = vmatprep.subr.mxu0 0.0
        %6478 = vmatpush2.xpose.msra.mxu0 0.0
        %6479 = vmatprep.subr.mxu0 0.0
        %6480 = vmatpush2.xpose.msra.mxu0 0.0
        %6481 = vmatprep.subr.mxu0 0.0
        %6482 = vmatpush2.xpose.msra.mxu0 0.0
        %6483 = vmatprep.subr.mxu0 0.0
        %6484 = vmatpush2.xpose.msra.mxu0 0.0
        %6485 = vmatprep.subr.mxu0 0.0
        %6486 = vmatpush2.xpose.msra.mxu0 0.0
        %6487 = vmatprep.subr.mxu0 0.0
        %6488 = vmatpush2.xpose.msra.mxu0 0.0
        %6489 = vmatprep.subr.mxu0 0.0
        %6490 = vmatpush2.xpose.msra.mxu0 0.0
        %6491 = vmatprep.subr.mxu0 0.0
        %6492 = vmatpush2.xpose.msra.mxu0 0.0
        %6493 = vmatprep.subr.mxu0 0.0
        %6494 = vmatpush2.xpose.msra.mxu0 0.0
        %6495 = vmatprep.subr.mxu0 0.0
        %6496 = vmatpush2.xpose.msra.mxu0 0.0
        %6497 = vmatprep.subr.mxu0 0.0
        %6498 = vmatpush2.xpose.msra.mxu0 0.0
        %6499 = vmatprep.subr.mxu0 0.0
        %6500 = vmatpush2.xpose.msra.mxu0 0.0
        %6501 = vmatprep.mubr.f32.mxu0 0.0
        %6502 = vmatmul.mubr.f32.gmra.mxu0 %v6433
        %v6503 = vpop.f32.mrf.mxu0
        %v6504 = vadd.f32 0.0, %v6503
        %v6505 = vpop.f32.mrf.mxu0
        %6506 = vdwg.mxu0
        %v6507 = vsel %vm2107, %v6504, -inf
        %6508 = vmax.xlane.f32.xlu0 %v6507
        %v6509 = vpop.xlane.xlu0 %6508
        %v6510 = vsub.f32 %v6504, %v6509
        %v6511 = vmul.f32 %v6510, 1.442695
        %v6512 = vpow.pop %v6511
        %v6513 = vsel %vm2107, %v6512, 0.0
        %6514 = vadd.xlane.f32.xlu0 %v6513
        %v6515 = vpop.xlane.xlu0 %6514
        %v6516 = vrcp.pop %v6515
        %v6517 = vmul.f32 %v6512, %v6516
        %6518 = vrot.lane.b32.xlu0 %v5953, 112
        %v6519 = vpop.permute.xlu0 %6518
        %v6522 = vsel %vm2107, %v6517, 0
        %6524 = vmatprep.subr.mxu0 0.0
        %6525 = vmatpush1.msra.mxu0 0.0
        %6526 = vmatprep.subr.mxu0 0.0
        %6527 = vmatpush1.msra.mxu0 0.0
        %6528 = vmatprep.subr.mxu0 0.0
        %6529 = vmatpush1.msra.mxu0 0.0
        %6530 = vmatprep.subr.mxu0 0.0
        %6531 = vmatpush1.msra.mxu0 0.0
        %6532 = vmatprep.subr.mxu0 0.0
        %6533 = vmatpush1.msra.mxu0 0.0
        %6534 = vmatprep.subr.mxu0 0.0
        %6535 = vmatpush1.msra.mxu0 0.0
        %6536 = vmatprep.subr.mxu0 0.0
        %6537 = vmatpush1.msra.mxu0 0.0
        %6538 = vmatprep.subr.mxu0 0.0
        %6539 = vmatpush1.msra.mxu0 0.0
        %6540 = vmatprep.subr.mxu0 0.0
        %6541 = vmatpush1.msra.mxu0 0.0
        %6542 = vmatprep.subr.mxu0 0.0
        %6543 = vmatpush1.msra.mxu0 0.0
        %6544 = vmatprep.subr.mxu0 0.0
        %6545 = vmatpush1.msra.mxu0 0.0
        %6546 = vmatprep.subr.mxu0 0.0
        %6547 = vmatpush1.msra.mxu0 0.0
        %6548 = vmatprep.subr.mxu0 0.0
        %6549 = vmatpush1.msra.mxu0 0.0
        %6550 = vmatprep.subr.mxu0 0.0
        %6551 = vmatpush1.msra.mxu0 0.0
        %6552 = vmatprep.subr.mxu0 0.0
        %6553 = vmatpush1.msra.mxu0 0.0
        %6554 = vmatprep.subr.mxu0 0.0
        %6555 = vmatpush1.msra.mxu0 %v6519
        %6556 = vmatprep.subr.mxu0 0.0
        %6557 = vmatpush2.msra.mxu0 0.0
        %6558 = vmatprep.subr.mxu0 0.0
        %6559 = vmatpush2.msra.mxu0 0.0
        %6560 = vmatprep.subr.mxu0 0.0
        %6561 = vmatpush2.msra.mxu0 0.0
        %6562 = vmatprep.subr.mxu0 0.0
        %6563 = vmatpush2.msra.mxu0 0.0
        %6564 = vmatprep.subr.mxu0 0.0
        %6565 = vmatpush2.msra.mxu0 0.0
        %6566 = vmatprep.subr.mxu0 0.0
        %6567 = vmatpush2.msra.mxu0 0.0
        %6568 = vmatprep.subr.mxu0 0.0
        %6569 = vmatpush2.msra.mxu0 0.0
        %6570 = vmatprep.subr.mxu0 0.0
        %6571 = vmatpush2.msra.mxu0 0.0
        %6572 = vmatprep.subr.mxu0 0.0
        %6573 = vmatpush2.msra.mxu0 0.0
        %6574 = vmatprep.subr.mxu0 0.0
        %6575 = vmatpush2.msra.mxu0 0.0
        %6576 = vmatprep.subr.mxu0 0.0
        %6577 = vmatpush2.msra.mxu0 0.0
        %6578 = vmatprep.subr.mxu0 0.0
        %6579 = vmatpush2.msra.mxu0 0.0
        %6580 = vmatprep.subr.mxu0 0.0
        %6581 = vmatpush2.msra.mxu0 0.0
        %6582 = vmatprep.subr.mxu0 0.0
        %6583 = vmatpush2.msra.mxu0 0.0
        %6584 = vmatprep.subr.mxu0 0.0
        %6585 = vmatpush2.msra.mxu0 0.0
        %6586 = vmatprep.subr.mxu0 0.0
        %6587 = vmatpush2.msra.mxu0 0.0
        %6588 = vmatprep.mubr.f32.mxu0 0.0
        %6589 = vmatmul.mubr.f32.gmra.mxu0 %v6522
        %v6590 = vpop.f32.mrf.mxu0
        %v6591 = vadd.f32 0.0, %v6590
        %v6592 = vpop.f32.mrf.mxu0
        %6593 = vdwg.mxu0
        %v6595 = vsel %vm2107, %v6591, 0
        %6597 = vmatprep.subr.mxu0 0.0
        %6598 = vmatpush1.msra.mxu0 0.0
        %6599 = vmatprep.subr.mxu0 0.0
        %6600 = vmatpush1.msra.mxu0 0.0
        %6601 = vmatprep.subr.mxu0 0.0
        %6602 = vmatpush1.msra.mxu0 0.0
        %6603 = vmatprep.subr.mxu0 0.0
        %6604 = vmatpush1.msra.mxu0 0.0
        %6605 = vmatprep.subr.mxu0 0.0
        %6606 = vmatpush1.msra.mxu0 0.0
        %6607 = vmatprep.subr.mxu0 0.0
        %6608 = vmatpush1.msra.mxu0 0.0
        %6609 = vmatprep.subr.mxu0 0.0
        %6610 = vmatpush1.msra.mxu0 0.0
        %6611 = vmatprep.subr.mxu0 0.0
        %6612 = vmatpush1.msra.mxu0 0.0
        %6613 = vmatprep.subr.mxu0 0.0
        %6614 = vmatpush1.msra.mxu0 0.0
        %6615 = vmatprep.subr.mxu0 0.0
        %6616 = vmatpush1.msra.mxu0 0.0
        %6617 = vmatprep.subr.mxu0 0.0
        %6618 = vmatpush1.msra.mxu0 0.0
        %6619 = vmatprep.subr.mxu0 0.0
        %6620 = vmatpush1.msra.mxu0 0.0
        %6621 = vmatprep.subr.mxu0 0.0
        %6622 = vmatpush1.msra.mxu0 0.0
        %6623 = vmatprep.subr.mxu0 0.0
        %6624 = vmatpush1.msra.mxu0 0.0
        %6625 = vmatprep.subr.mxu0 0.0
        %6626 = vmatpush1.msra.mxu0 0.0
        %6627 = vmatprep.subr.mxu0 0.0
        %6628 = vmatpush1.msra.mxu0 %v5706
        %6629 = vmatprep.subr.mxu0 0.0
        %6630 = vmatpush2.msra.mxu0 0.0
        %6631 = vmatprep.subr.mxu0 0.0
        %6632 = vmatpush2.msra.mxu0 0.0
        %6633 = vmatprep.subr.mxu0 0.0
        %6634 = vmatpush2.msra.mxu0 0.0
        %6635 = vmatprep.subr.mxu0 0.0
        %6636 = vmatpush2.msra.mxu0 0.0
        %6637 = vmatprep.subr.mxu0 0.0
        %6638 = vmatpush2.msra.mxu0 0.0
        %6639 = vmatprep.subr.mxu0 0.0
        %6640 = vmatpush2.msra.mxu0 0.0
        %6641 = vmatprep.subr.mxu0 0.0
        %6642 = vmatpush2.msra.mxu0 0.0
        %6643 = vmatprep.subr.mxu0 0.0
        %6644 = vmatpush2.msra.mxu0 0.0
        %6645 = vmatprep.subr.mxu0 0.0
        %6646 = vmatpush2.msra.mxu0 0.0
        %6647 = vmatprep.subr.mxu0 0.0
        %6648 = vmatpush2.msra.mxu0 0.0
        %6649 = vmatprep.subr.mxu0 0.0
        %6650 = vmatpush2.msra.mxu0 0.0
        %6651 = vmatprep.subr.mxu0 0.0
        %6652 = vmatpush2.msra.mxu0 0.0
        %6653 = vmatprep.subr.mxu0 0.0
        %6654 = vmatpush2.msra.mxu0 0.0
        %6655 = vmatprep.subr.mxu0 0.0
        %6656 = vmatpush2.msra.mxu0 0.0
        %6657 = vmatprep.subr.mxu0 0.0
        %6658 = vmatpush2.msra.mxu0 0.0
        %6659 = vmatprep.subr.mxu0 0.0
        %6660 = vmatpush2.msra.mxu0 0.0
        %6661 = vmatprep.mubr.f32.mxu0 0.0
        %6662 = vmatmul.mubr.f32.gmra.mxu0 %v6595
        %v6663 = vpop.f32.mrf.mxu0
        %v6664 = vadd.f32 0.0, %v6663
        %v6665 = vpop.f32.mrf.mxu0
        %6666 = vdwg.mxu0
        %v6667 = vadd.f32 %v6426, %v6664
        %6668 = vrot.lane.b32.xlu0 %v5956, 104
        %v6669 = vpop.permute.xlu0 %6668
        %6670 = vrot.lane.b32.xlu0 %v5874, 104
        %v6671 = vpop.permute.xlu0 %6670
        %v6672 = vsel %vm2107, %v6669, 0
        %v6674 = vsel %vm2107, %v6671, 0
        %6676 = vmatprep.subr.mxu0 0.0
        %6677 = vmatpush1.xpose.msra.mxu0 0.0
        %6678 = vmatprep.subr.mxu0 0.0
        %6679 = vmatpush1.xpose.msra.mxu0 0.0
        %6680 = vmatprep.subr.mxu0 0.0
        %6681 = vmatpush1.xpose.msra.mxu0 0.0
        %6682 = vmatprep.subr.mxu0 0.0
        %6683 = vmatpush1.xpose.msra.mxu0 0.0
        %6684 = vmatprep.subr.mxu0 0.0
        %6685 = vmatpush1.xpose.msra.mxu0 0.0
        %6686 = vmatprep.subr.mxu0 0.0
        %6687 = vmatpush1.xpose.msra.mxu0 0.0
        %6688 = vmatprep.subr.mxu0 0.0
        %6689 = vmatpush1.xpose.msra.mxu0 0.0
        %6690 = vmatprep.subr.mxu0 0.0
        %6691 = vmatpush1.xpose.msra.mxu0 0.0
        %6692 = vmatprep.subr.mxu0 0.0
        %6693 = vmatpush1.xpose.msra.mxu0 0.0
        %6694 = vmatprep.subr.mxu0 0.0
        %6695 = vmatpush1.xpose.msra.mxu0 0.0
        %6696 = vmatprep.subr.mxu0 0.0
        %6697 = vmatpush1.xpose.msra.mxu0 0.0
        %6698 = vmatprep.subr.mxu0 0.0
        %6699 = vmatpush1.xpose.msra.mxu0 0.0
        %6700 = vmatprep.subr.mxu0 0.0
        %6701 = vmatpush1.xpose.msra.mxu0 0.0
        %6702 = vmatprep.subr.mxu0 0.0
        %6703 = vmatpush1.xpose.msra.mxu0 0.0
        %6704 = vmatprep.subr.mxu0 0.0
        %6705 = vmatpush1.xpose.msra.mxu0 0.0
        %6706 = vmatprep.subr.mxu0 0.0
        %6707 = vmatpush1.xpose.msra.mxu0 %v6674
        %6708 = vmatprep.subr.mxu0 0.0
        %6709 = vmatpush2.xpose.msra.mxu0 0.0
        %6710 = vmatprep.subr.mxu0 0.0
        %6711 = vmatpush2.xpose.msra.mxu0 0.0
        %6712 = vmatprep.subr.mxu0 0.0
        %6713 = vmatpush2.xpose.msra.mxu0 0.0
        %6714 = vmatprep.subr.mxu0 0.0
        %6715 = vmatpush2.xpose.msra.mxu0 0.0
        %6716 = vmatprep.subr.mxu0 0.0
        %6717 = vmatpush2.xpose.msra.mxu0 0.0
        %6718 = vmatprep.subr.mxu0 0.0
        %6719 = vmatpush2.xpose.msra.mxu0 0.0
        %6720 = vmatprep.subr.mxu0 0.0
        %6721 = vmatpush2.xpose.msra.mxu0 0.0
        %6722 = vmatprep.subr.mxu0 0.0
        %6723 = vmatpush2.xpose.msra.mxu0 0.0
        %6724 = vmatprep.subr.mxu0 0.0
        %6725 = vmatpush2.xpose.msra.mxu0 0.0
        %6726 = vmatprep.subr.mxu0 0.0
        %6727 = vmatpush2.xpose.msra.mxu0 0.0
        %6728 = vmatprep.subr.mxu0 0.0
        %6729 = vmatpush2.xpose.msra.mxu0 0.0
        %6730 = vmatprep.subr.mxu0 0.0
        %6731 = vmatpush2.xpose.msra.mxu0 0.0
        %6732 = vmatprep.subr.mxu0 0.0
        %6733 = vmatpush2.xpose.msra.mxu0 0.0
        %6734 = vmatprep.subr.mxu0 0.0
        %6735 = vmatpush2.xpose.msra.mxu0 0.0
        %6736 = vmatprep.subr.mxu0 0.0
        %6737 = vmatpush2.xpose.msra.mxu0 0.0
        %6738 = vmatprep.subr.mxu0 0.0
        %6739 = vmatpush2.xpose.msra.mxu0 0.0
        %6740 = vmatprep.mubr.f32.mxu0 0.0
        %6741 = vmatmul.mubr.f32.gmra.mxu0 %v6672
        %v6742 = vpop.f32.mrf.mxu0
        %v6743 = vadd.f32 0.0, %v6742
        %v6744 = vpop.f32.mrf.mxu0
        %6745 = vdwg.mxu0
        %v6746 = vsel %vm2107, %v6743, -inf
        %6747 = vmax.xlane.f32.xlu0 %v6746
        %v6748 = vpop.xlane.xlu0 %6747
        %v6749 = vsub.f32 %v6743, %v6748
        %v6750 = vmul.f32 %v6749, 1.442695
        %v6751 = vpow.pop %v6750
        %v6752 = vsel %vm2107, %v6751, 0.0
        %6753 = vadd.xlane.f32.xlu0 %v6752
        %v6754 = vpop.xlane.xlu0 %6753
        %v6755 = vrcp.pop %v6754
        %v6756 = vmul.f32 %v6751, %v6755
        %6757 = vrot.lane.b32.xlu0 %v5953, 104
        %v6758 = vpop.permute.xlu0 %6757
        %v6761 = vsel %vm2107, %v6756, 0
        %6763 = vmatprep.subr.mxu0 0.0
        %6764 = vmatpush1.msra.mxu0 0.0
        %6765 = vmatprep.subr.mxu0 0.0
        %6766 = vmatpush1.msra.mxu0 0.0
        %6767 = vmatprep.subr.mxu0 0.0
        %6768 = vmatpush1.msra.mxu0 0.0
        %6769 = vmatprep.subr.mxu0 0.0
        %6770 = vmatpush1.msra.mxu0 0.0
        %6771 = vmatprep.subr.mxu0 0.0
        %6772 = vmatpush1.msra.mxu0 0.0
        %6773 = vmatprep.subr.mxu0 0.0
        %6774 = vmatpush1.msra.mxu0 0.0
        %6775 = vmatprep.subr.mxu0 0.0
        %6776 = vmatpush1.msra.mxu0 0.0
        %6777 = vmatprep.subr.mxu0 0.0
        %6778 = vmatpush1.msra.mxu0 0.0
        %6779 = vmatprep.subr.mxu0 0.0
        %6780 = vmatpush1.msra.mxu0 0.0
        %6781 = vmatprep.subr.mxu0 0.0
        %6782 = vmatpush1.msra.mxu0 0.0
        %6783 = vmatprep.subr.mxu0 0.0
        %6784 = vmatpush1.msra.mxu0 0.0
        %6785 = vmatprep.subr.mxu0 0.0
        %6786 = vmatpush1.msra.mxu0 0.0
        %6787 = vmatprep.subr.mxu0 0.0
        %6788 = vmatpush1.msra.mxu0 0.0
        %6789 = vmatprep.subr.mxu0 0.0
        %6790 = vmatpush1.msra.mxu0 0.0
        %6791 = vmatprep.subr.mxu0 0.0
        %6792 = vmatpush1.msra.mxu0 0.0
        %6793 = vmatprep.subr.mxu0 0.0
        %6794 = vmatpush1.msra.mxu0 %v6758
        %6795 = vmatprep.subr.mxu0 0.0
        %6796 = vmatpush2.msra.mxu0 0.0
        %6797 = vmatprep.subr.mxu0 0.0
        %6798 = vmatpush2.msra.mxu0 0.0
        %6799 = vmatprep.subr.mxu0 0.0
        %6800 = vmatpush2.msra.mxu0 0.0
        %6801 = vmatprep.subr.mxu0 0.0
        %6802 = vmatpush2.msra.mxu0 0.0
        %6803 = vmatprep.subr.mxu0 0.0
        %6804 = vmatpush2.msra.mxu0 0.0
        %6805 = vmatprep.subr.mxu0 0.0
        %6806 = vmatpush2.msra.mxu0 0.0
        %6807 = vmatprep.subr.mxu0 0.0
        %6808 = vmatpush2.msra.mxu0 0.0
        %6809 = vmatprep.subr.mxu0 0.0
        %6810 = vmatpush2.msra.mxu0 0.0
        %6811 = vmatprep.subr.mxu0 0.0
        %6812 = vmatpush2.msra.mxu0 0.0
        %6813 = vmatprep.subr.mxu0 0.0
        %6814 = vmatpush2.msra.mxu0 0.0
        %6815 = vmatprep.subr.mxu0 0.0
        %6816 = vmatpush2.msra.mxu0 0.0
        %6817 = vmatprep.subr.mxu0 0.0
        %6818 = vmatpush2.msra.mxu0 0.0
        %6819 = vmatprep.subr.mxu0 0.0
        %6820 = vmatpush2.msra.mxu0 0.0
        %6821 = vmatprep.subr.mxu0 0.0
        %6822 = vmatpush2.msra.mxu0 0.0
        %6823 = vmatprep.subr.mxu0 0.0
        %6824 = vmatpush2.msra.mxu0 0.0
        %6825 = vmatprep.subr.mxu0 0.0
        %6826 = vmatpush2.msra.mxu0 0.0
        %6827 = vmatprep.mubr.f32.mxu0 0.0
        %6828 = vmatmul.mubr.f32.gmra.mxu0 %v6761
        %v6829 = vpop.f32.mrf.mxu0
        %v6830 = vadd.f32 0.0, %v6829
        %v6831 = vpop.f32.mrf.mxu0
        %6832 = vdwg.mxu0
        %v6834 = vsel %vm2107, %v6830, 0
        %6836 = vmatprep.subr.mxu0 0.0
        %6837 = vmatpush1.msra.mxu0 0.0
        %6838 = vmatprep.subr.mxu0 0.0
        %6839 = vmatpush1.msra.mxu0 0.0
        %6840 = vmatprep.subr.mxu0 0.0
        %6841 = vmatpush1.msra.mxu0 0.0
        %6842 = vmatprep.subr.mxu0 0.0
        %6843 = vmatpush1.msra.mxu0 0.0
        %6844 = vmatprep.subr.mxu0 0.0
        %6845 = vmatpush1.msra.mxu0 0.0
        %6846 = vmatprep.subr.mxu0 0.0
        %6847 = vmatpush1.msra.mxu0 0.0
        %6848 = vmatprep.subr.mxu0 0.0
        %6849 = vmatpush1.msra.mxu0 0.0
        %6850 = vmatprep.subr.mxu0 0.0
        %6851 = vmatpush1.msra.mxu0 0.0
        %6852 = vmatprep.subr.mxu0 0.0
        %6853 = vmatpush1.msra.mxu0 0.0
        %6854 = vmatprep.subr.mxu0 0.0
        %6855 = vmatpush1.msra.mxu0 0.0
        %6856 = vmatprep.subr.mxu0 0.0
        %6857 = vmatpush1.msra.mxu0 0.0
        %6858 = vmatprep.subr.mxu0 0.0
        %6859 = vmatpush1.msra.mxu0 0.0
        %6860 = vmatprep.subr.mxu0 0.0
        %6861 = vmatpush1.msra.mxu0 0.0
        %6862 = vmatprep.subr.mxu0 0.0
        %6863 = vmatpush1.msra.mxu0 0.0
        %6864 = vmatprep.subr.mxu0 0.0
        %6865 = vmatpush1.msra.mxu0 0.0
        %6866 = vmatprep.subr.mxu0 0.0
        %6867 = vmatpush1.msra.mxu0 %v5707
        %6868 = vmatprep.subr.mxu0 0.0
        %6869 = vmatpush2.msra.mxu0 0.0
        %6870 = vmatprep.subr.mxu0 0.0
        %6871 = vmatpush2.msra.mxu0 0.0
        %6872 = vmatprep.subr.mxu0 0.0
        %6873 = vmatpush2.msra.mxu0 0.0
        %6874 = vmatprep.subr.mxu0 0.0
        %6875 = vmatpush2.msra.mxu0 0.0
        %6876 = vmatprep.subr.mxu0 0.0
        %6877 = vmatpush2.msra.mxu0 0.0
        %6878 = vmatprep.subr.mxu0 0.0
        %6879 = vmatpush2.msra.mxu0 0.0
        %6880 = vmatprep.subr.mxu0 0.0
        %6881 = vmatpush2.msra.mxu0 0.0
        %6882 = vmatprep.subr.mxu0 0.0
        %6883 = vmatpush2.msra.mxu0 0.0
        %6884 = vmatprep.subr.mxu0 0.0
        %6885 = vmatpush2.msra.mxu0 0.0
        %6886 = vmatprep.subr.mxu0 0.0
        %6887 = vmatpush2.msra.mxu0 0.0
        %6888 = vmatprep.subr.mxu0 0.0
        %6889 = vmatpush2.msra.mxu0 0.0
        %6890 = vmatprep.subr.mxu0 0.0
        %6891 = vmatpush2.msra.mxu0 0.0
        %6892 = vmatprep.subr.mxu0 0.0
        %6893 = vmatpush2.msra.mxu0 0.0
        %6894 = vmatprep.subr.mxu0 0.0
        %6895 = vmatpush2.msra.mxu0 0.0
        %6896 = vmatprep.subr.mxu0 0.0
        %6897 = vmatpush2.msra.mxu0 0.0
        %6898 = vmatprep.subr.mxu0 0.0
        %6899 = vmatpush2.msra.mxu0 0.0
        %6900 = vmatprep.mubr.f32.mxu0 0.0
        %6901 = vmatmul.mubr.f32.gmra.mxu0 %v6834
        %v6902 = vpop.f32.mrf.mxu0
        %v6903 = vadd.f32 0.0, %v6902
        %v6904 = vpop.f32.mrf.mxu0
        %6905 = vdwg.mxu0
        %v6906 = vadd.f32 %v6667, %v6903
        %v6908 = vlaneseq
        %v6909 = vshrl.u32 %v6908, 7
        %v6910 = vsub.s32 0, %v6909
        %v6911 = vrot.slane %v5708, %v6910
        %v6913 = vadd.f32 %v6906, %v6911
        %v6914 = vadd.f32 %v4247, %v6913
        %v6915 = vsel %vm1950, %v6914, 0.0
        %6916 = vadd.xlane.f32.xlu0 %v6915
        %v6917 = vpop.xlane.xlu0 %6916
        %v6918 = vmul.f32 %v6917, %v3068
        %v6919 = vsub.f32 %v6914, %v6918
        %v6920 = vmul.f32 %v6919, %v6919
        %v6921 = vsel %vm1950, %v6920, 0.0
        %6922 = vadd.xlane.f32.xlu0 %v6921
        %v6923 = vpop.xlane.xlu0 %6922
        %v6924 = vmul.f32 %v6923, %v3068
        %v6925 = vadd.f32 %v6924, 1e-05
        %v6926 = vrsqrt.pop %v6925
        %v6927 = vmul.f32 %v6919, %v6926
        %v6928 = vlaneseq
        %v6929 = vshrl.u32 %v6928, 7
        %v6930 = vsub.s32 0, %v6929
        %v6931 = vrot.slane %v5709, %v6930
        %v6932 = vmul.f32 %v6927, %v6931
        %v6933 = vlaneseq
        %v6934 = vshrl.u32 %v6933, 7
        %v6935 = vsub.s32 1, %v6934
        %v6936 = vrot.slane %v5709, %v6935
        %v6937 = vadd.f32 %v6932, %v6936
        %v6939 = vlaneseq
        %v6940 = vshrl.u32 %v6939, 7
        %v6941 = vsub.s32 0, %v6940
        %v6942 = vrot.slane %v5714, %v6941
        %v6945 = vsel %vm1950, %v6937, 0
        %6947 = vmatprep.subr.mxu0 0.0
        %6948 = vmatpush1.msra.mxu0 0.0
        %6949 = vmatprep.subr.mxu0 0.0
        %6950 = vmatpush1.msra.mxu0 0.0
        %6951 = vmatprep.subr.mxu0 0.0
        %6952 = vmatpush1.msra.mxu0 0.0
        %6953 = vmatprep.subr.mxu0 0.0
        %6954 = vmatpush1.msra.mxu0 0.0
        %6955 = vmatprep.subr.mxu0 0.0
        %6956 = vmatpush1.msra.mxu0 0.0
        %6957 = vmatprep.subr.mxu0 0.0
        %6958 = vmatpush1.msra.mxu0 0.0
        %6959 = vmatprep.subr.mxu0 0.0
        %6960 = vmatpush1.msra.mxu0 0.0
        %6961 = vmatprep.subr.mxu0 0.0
        %6962 = vmatpush1.msra.mxu0 0.0
        %6963 = vmatprep.subr.mxu0 0.0
        %6964 = vmatpush1.msra.mxu0 0.0
        %6965 = vmatprep.subr.mxu0 0.0
        %6966 = vmatpush1.msra.mxu0 0.0
        %6967 = vmatprep.subr.mxu0 0.0
        %6968 = vmatpush1.msra.mxu0 0.0
        %6969 = vmatprep.subr.mxu0 0.0
        %6970 = vmatpush1.msra.mxu0 0.0
        %6971 = vmatprep.subr.mxu0 0.0
        %6972 = vmatpush1.msra.mxu0 %v5713
        %6973 = vmatprep.subr.mxu0 0.0
        %6974 = vmatpush1.msra.mxu0 %v5712
        %6975 = vmatprep.subr.mxu0 0.0
        %6976 = vmatpush1.msra.mxu0 %v5711
        %6977 = vmatprep.subr.mxu0 0.0
        %6978 = vmatpush1.msra.mxu0 %v5710
        %6979 = vmatprep.subr.mxu0 0.0
        %6980 = vmatpush2.msra.mxu0 0.0
        %6981 = vmatprep.subr.mxu0 0.0
        %6982 = vmatpush2.msra.mxu0 0.0
        %6983 = vmatprep.subr.mxu0 0.0
        %6984 = vmatpush2.msra.mxu0 0.0
        %6985 = vmatprep.subr.mxu0 0.0
        %6986 = vmatpush2.msra.mxu0 0.0
        %6987 = vmatprep.subr.mxu0 0.0
        %6988 = vmatpush2.msra.mxu0 0.0
        %6989 = vmatprep.subr.mxu0 0.0
        %6990 = vmatpush2.msra.mxu0 0.0
        %6991 = vmatprep.subr.mxu0 0.0
        %6992 = vmatpush2.msra.mxu0 0.0
        %6993 = vmatprep.subr.mxu0 0.0
        %6994 = vmatpush2.msra.mxu0 0.0
        %6995 = vmatprep.subr.mxu0 0.0
        %6996 = vmatpush2.msra.mxu0 0.0
        %6997 = vmatprep.subr.mxu0 0.0
        %6998 = vmatpush2.msra.mxu0 0.0
        %6999 = vmatprep.subr.mxu0 0.0
        %7000 = vmatpush2.msra.mxu0 0.0
        %7001 = vmatprep.subr.mxu0 0.0
        %7002 = vmatpush2.msra.mxu0 0.0
        %7003 = vmatprep.subr.mxu0 0.0
        %7004 = vmatpush2.msra.mxu0 0.0
        %7005 = vmatprep.subr.mxu0 0.0
        %7006 = vmatpush2.msra.mxu0 0.0
        %7007 = vmatprep.subr.mxu0 0.0
        %7008 = vmatpush2.msra.mxu0 0.0
        %7009 = vmatprep.subr.mxu0 0.0
        %7010 = vmatpush2.msra.mxu0 0.0
        %7011 = vmatprep.mubr.f32.mxu0 0.0
        %7012 = vmatmul.mubr.f32.gmra.mxu0 %v6945
        %v7013 = vpop.f32.mrf.mxu0
        %v7014 = vadd.f32 %v6942, %v7013
        %v7015 = vpop.f32.mrf.mxu0
        %7016 = vdwg.mxu0
        %v7017 = vmax.f32 %v7014, 0.0
        %v7019 = vlaneseq
        %v7020 = vshrl.u32 %v7019, 7
        %v7021 = vsub.s32 0, %v7020
        %v7022 = vrot.slane %v5723, %v7021
        %v7025 = vsel %vm5591, %v7017, 0
        %7027 = vmatprep.subr.mxu0 0.0
        %7028 = vmatpush1.msra.mxu0 0.0
        %7029 = vmatprep.subr.mxu0 0.0
        %7030 = vmatpush1.msra.mxu0 0.0
        %7031 = vmatprep.subr.mxu0 0.0
        %7032 = vmatpush1.msra.mxu0 0.0
        %7033 = vmatprep.subr.mxu0 0.0
        %7034 = vmatpush1.msra.mxu0 0.0
        %7035 = vmatprep.subr.mxu0 0.0
        %7036 = vmatpush1.msra.mxu0 0.0
        %7037 = vmatprep.subr.mxu0 0.0
        %7038 = vmatpush1.msra.mxu0 0.0
        %7039 = vmatprep.subr.mxu0 0.0
        %7040 = vmatpush1.msra.mxu0 0.0
        %7041 = vmatprep.subr.mxu0 0.0
        %7042 = vmatpush1.msra.mxu0 0.0
        %7043 = vmatprep.subr.mxu0 0.0
        %7044 = vmatpush1.msra.mxu0 %v5722
        %7045 = vmatprep.subr.mxu0 0.0
        %7046 = vmatpush1.msra.mxu0 %v5721
        %7047 = vmatprep.subr.mxu0 0.0
        %7048 = vmatpush1.msra.mxu0 %v5720
        %7049 = vmatprep.subr.mxu0 0.0
        %7050 = vmatpush1.msra.mxu0 %v5719
        %7051 = vmatprep.subr.mxu0 0.0
        %7052 = vmatpush1.msra.mxu0 %v5718
        %7053 = vmatprep.subr.mxu0 0.0
        %7054 = vmatpush1.msra.mxu0 %v5717
        %7055 = vmatprep.subr.mxu0 0.0
        %7056 = vmatpush1.msra.mxu0 %v5716
        %7057 = vmatprep.subr.mxu0 0.0
        %7058 = vmatpush1.msra.mxu0 %v5715
        %7059 = vmatprep.subr.mxu0 0.0
        %7060 = vmatpush2.msra.mxu0 0.0
        %7061 = vmatprep.subr.mxu0 0.0
        %7062 = vmatpush2.msra.mxu0 0.0
        %7063 = vmatprep.subr.mxu0 0.0
        %7064 = vmatpush2.msra.mxu0 0.0
        %7065 = vmatprep.subr.mxu0 0.0
        %7066 = vmatpush2.msra.mxu0 0.0
        %7067 = vmatprep.subr.mxu0 0.0
        %7068 = vmatpush2.msra.mxu0 0.0
        %7069 = vmatprep.subr.mxu0 0.0
        %7070 = vmatpush2.msra.mxu0 0.0
        %7071 = vmatprep.subr.mxu0 0.0
        %7072 = vmatpush2.msra.mxu0 0.0
        %7073 = vmatprep.subr.mxu0 0.0
        %7074 = vmatpush2.msra.mxu0 0.0
        %7075 = vmatprep.subr.mxu0 0.0
        %7076 = vmatpush2.msra.mxu0 0.0
        %7077 = vmatprep.subr.mxu0 0.0
        %7078 = vmatpush2.msra.mxu0 0.0
        %7079 = vmatprep.subr.mxu0 0.0
        %7080 = vmatpush2.msra.mxu0 0.0
        %7081 = vmatprep.subr.mxu0 0.0
        %7082 = vmatpush2.msra.mxu0 0.0
        %7083 = vmatprep.subr.mxu0 0.0
        %7084 = vmatpush2.msra.mxu0 0.0
        %7085 = vmatprep.subr.mxu0 0.0
        %7086 = vmatpush2.msra.mxu0 0.0
        %7087 = vmatprep.subr.mxu0 0.0
        %7088 = vmatpush2.msra.mxu0 0.0
        %7089 = vmatprep.subr.mxu0 0.0
        %7090 = vmatpush2.msra.mxu0 0.0
        %7091 = vmatprep.mubr.f32.mxu0 0.0
        %7092 = vmatmul.mubr.f32.gmra.mxu0 %v7025
        %v7093 = vpop.f32.mrf.mxu0
        %v7094 = vadd.f32 %v7022, %v7093
        %v7095 = vpop.f32.mrf.mxu0
        %7096 = vdwg.mxu0
        %v7097 = vadd.f32 %v6937, %v7094
        %v7098 = vsel %vm1950, %v7097, 0.0
        %7099 = vadd.xlane.f32.xlu0 %v7098
        %v7100 = vpop.xlane.xlu0 %7099
        %v7101 = vmul.f32 %v7100, %v3068
        %v7102 = vsub.f32 %v7097, %v7101
        %v7103 = vmul.f32 %v7102, %v7102
        %v7104 = vsel %vm1950, %v7103, 0.0
        %7105 = vadd.xlane.f32.xlu0 %v7104
        %v7106 = vpop.xlane.xlu0 %7105
        %v7107 = vmul.f32 %v7106, %v3068
        %v7108 = vadd.f32 %v7107, 1e-05
        %v7109 = vrsqrt.pop %v7108
        %v7110 = vmul.f32 %v7102, %v7109
        %v7111 = vlaneseq
        %v7112 = vshrl.u32 %v7111, 7
        %v7113 = vsub.s32 0, %v7112
        %v7114 = vrot.slane %v5724, %v7113
        %v7115 = vmul.f32 %v7110, %v7114
        %v7116 = vlaneseq
        %v7117 = vshrl.u32 %v7116, 7
        %v7118 = vsub.s32 1, %v7117
        %v7119 = vrot.slane %v5724, %v7118
        %v7120 = vadd.f32 %v7115, %v7119
        %7121 = vst.msk [vmem:[%s1915] sm:$0xff] %vm1950, %v5688
        %7122 = vst.msk [vmem:[%s1922] sm:$0xff] %vm1950, %v7120
        %s7123 = sand.u32 %s1130, 1
        %s7124 = scalar_lea.sflag [#allocation4], %s7123
        %s7125 = sand.u32 %s1130, 1
        %s7126 = smul.addr %s7125, 8
        %s7127 = scalar_lea.vmem [#allocation53], %s7126
        %s7128 = sand.u32 %s1156, 1
        %s7129 = scalar_lea.sflag [#allocation55], %s7128
        %s7130 = sand.u32 %s1156, 1
        %s7131 = smul.addr %s7130, 8
        %s7132 = scalar_lea.vmem [#allocation54], %s7131
        // Predicated region
        $region337: #{tpu_custom_call.1} parent=203 // pred_check
          %p7133 = pneg %p1140
        $region338: #{tpu_custom_call.1} parent=203 // pred_check_branch
          %7135 = sbr.rel (%p7133) target = $region340
        $region339: #{tpu_custom_call.1} parent=203 // pred_region
          %s7137 = ssub.s32 128, 128
          %7138 = vsyncadd %s7124, %s7137
          %s7139 = smul.addr %s136, 128
          %s7140 = scalar_lea.hbm %s93, %s7139
          %s7142 = sshll.u32 %s7127, 4
          %s7143 = int_to_ptr.vmem [resolvable:$true] %s7142
          %7145 = dma.vmem_to_hbm [thread:$0]  %s7143, 128, %s7140, %s7124
        $region340: #{tpu_custom_call.1} parent=203 // pred_fallthru
          _
        // Predicated region
        $region341: #{tpu_custom_call.1} parent=203 // pred_check
          %p7146 = pneg %p1166
        $region342: #{tpu_custom_call.1} parent=203 // pred_check_branch
          %7148 = sbr.rel (%p7146) target = $region344
        $region343: #{tpu_custom_call.1} parent=203 // pred_region
          %s7150 = ssub.s32 128, 128
          %7151 = vsyncadd %s7129, %s7150
          %s7152 = smul.addr %s136, 128
          %s7153 = scalar_lea.hbm %s95, %s7152
          %s7155 = sshll.u32 %s7132, 4
          %s7156 = int_to_ptr.vmem [resolvable:$true] %s7155
          %7158 = dma.vmem_to_hbm [thread:$0]  %s7156, 128, %s7153, %s7129
        $region344: #{tpu_custom_call.1} parent=203 // pred_fallthru
          _
      $region204: #{tpu_custom_call.1} parent=5 // pred_fallthru
        _
      %p7159 = scmp.le.s32.totalorder 2, %s131
      // Predicated region
      $region345: #{tpu_custom_call.1} parent=5 // pred_check
        %p7160 = pneg %p7159
      $region346: #{tpu_custom_call.1} parent=5 // pred_check_branch
        %7162 = sbr.rel (%p7160) target = $region348
      $region347: #{tpu_custom_call.1} parent=5 // pred_region
        %s7163 = ssub.s32 %s131, 2
        // Predicated region
        $region349: #{tpu_custom_call.1} parent=347 // pred_check
          %p7164 = pneg %p1146
        $region350: #{tpu_custom_call.1} parent=347 // pred_check_branch
          %7166 = sbr.rel (%p7164) target = $region352
        $region351: #{tpu_custom_call.1} parent=347 // pred_region
          %s7167 = sand.u32 %s1131, 1
          %s7168 = scalar_lea.sflag [#allocation4], %s7167
          %s7169 = sand.u32 %s1131, 1
          %s7170 = smul.addr %s7169, 8
          %s7171 = scalar_lea.vmem [#allocation53], %s7170
          %7172 = dma.done %s7168, 128
        $region352: #{tpu_custom_call.1} parent=347 // pred_fallthru
          _
        // Predicated region
        $region353: #{tpu_custom_call.1} parent=347 // pred_check
          %p7173 = pneg %p1172
        $region354: #{tpu_custom_call.1} parent=347 // pred_check_branch
          %7175 = sbr.rel (%p7173) target = $region356
        $region355: #{tpu_custom_call.1} parent=347 // pred_region
          %s7176 = sand.u32 %s1157, 1
          %s7177 = scalar_lea.sflag [#allocation55], %s7176
          %s7178 = sand.u32 %s1157, 1
          %s7179 = smul.addr %s7178, 8
          %s7180 = scalar_lea.vmem [#allocation54], %s7179
          %7181 = dma.done %s7177, 128
        $region356: #{tpu_custom_call.1} parent=347 // pred_fallthru
          _
      $region348: #{tpu_custom_call.1} parent=5 // pred_fallthru
        _
    $region6: #{tpu_custom_call.1} parent=1 // loop_footer
      %s135 = sadd.s32 1, %s131
    $region7: #{tpu_custom_call.1} parent=1 // loop_footer_branch
      %130 = sbr.rel target = $region3
    $region8: #{tpu_custom_call.1} parent=1 // loop_exit
      _
    %7182 = vsyncpa [#allocation3], 1
    %s7183 = scalar_lea.sflag [#allocation3], 1
    %7184 = vsyncpa %s7183, 1
    %7185 = vsyncpa [#allocation6], 1
    %s7186 = scalar_lea.sflag [#allocation6], 1
    %7187 = vsyncpa %s7186, 1
    %7188 = vsyncpa [#allocation9], 1
    %s7189 = scalar_lea.sflag [#allocation9], 1
    %7190 = vsyncpa %s7189, 1
    %7191 = vsyncpa [#allocation12], 1
    %7192 = vsyncpa [#allocation15], 1
    %7193 = vsyncpa [#allocation18], 1
    %7194 = vsyncpa [#allocation21], 1
    %7195 = vsyncpa [#allocation24], 1
    %7196 = vsyncpa [#allocation27], 1
    %7197 = vsyncpa [#allocation30], 1
    %7198 = vsyncpa [#allocation33], 1
    %7199 = vsyncpa [#allocation36], 1
    %7200 = vsyncpa [#allocation39], 1
    %7201 = vsyncpa [#allocation42], 1
    %7202 = vsyncpa [#allocation45], 1
    %7203 = vsyncpa [#allocation48], 1
    %7204 = vsyncpa [#allocation51], 1
    %7205 = vsyncpa [#allocation4], 1
    %s7206 = scalar_lea.sflag [#allocation4], 1
    %7207 = vsyncpa %s7206, 1
    %7208 = vsyncpa [#allocation55], 1
    %s7209 = scalar_lea.sflag [#allocation55], 1
    %7210 = vsyncpa %s7209, 1

</llo_original>
